<compile_context>
chip_gen: v7x
topology: tpu7x:2x2x1
jax: 0.10.0
libtpu: 0.0.40
codegen_flags: <defaults>
</compile_context>

<pallas_src>
import functools

import jax
import jax.numpy as jnp
from jax import lax
from jax.experimental import pallas as pl
from jax.experimental.pallas import tpu as pltpu

EPS = 1e-5
MM_DT = jnp.bfloat16          # matmul operand dtype (MXU); BN/elementwise stay f32
LANE = 128
VMEM_LIMIT = 32 * 1024 * 1024


def _round_up(c, m=LANE):
    return ((c + m - 1) // m) * m


def _pad_cols(a, c):
    if a.shape[-1] == c:
        return a
    return jnp.pad(a, ((0, 0), (0, c - a.shape[-1])))


def _row_shift(a, s, n):
    """b[r] = a[(r + s) % n] for a static int shift (wrap rows are masked by caller)."""
    s = s % n
    if s == 0:
        return a
    return jnp.concatenate([a[s:], a[:s]], axis=0)


def _row_stats(o):
    """Per-channel partial [sum | sumsq] over the row axis -> (1, 2*C) f32."""
    return jnp.concatenate([jnp.sum(o, axis=0, keepdims=True),
                            jnp.sum(o * o, axis=0, keepdims=True)], axis=1)


# --------------------------- kernels (one image tile per grid step) ----------

def conv1x1_stats_kernel(x_ref, w_ref, o_ref, st_ref):
    o = jnp.dot(x_ref[...].astype(MM_DT), w_ref[...],
                preferred_element_type=jnp.float32)
    o_ref[...] = o
    st_ref[0] = _row_stats(o)


def bn_relu_conv1x1_stats_kernel(x_ref, scale_ref, shift_ref, w_ref, o_ref, st_ref):
    a = jnp.maximum(x_ref[...] * scale_ref[...] + shift_ref[...], 0.0)
    o = jnp.dot(a.astype(MM_DT), w_ref[...], preferred_element_type=jnp.float32)
    o_ref[...] = o
    st_ref[0] = _row_stats(o)


def bn_relu_conv3x3_stats_kernel(H, W, x_ref, scale_ref, shift_ref, w_ref,
                                 mask_ref, o_ref, st_ref):
    HW = H * W
    # previous BN (global stats folded into scale/shift) + ReLU, in f32.
    a = jnp.maximum(x_ref[...] * scale_ref[...] + shift_ref[...], 0.0)   # (HW, C1p)
    acc = None
    k = 0
    for ky in range(3):
        for kx in range(3):
            dy, dx = ky - 1, kx - 1
            src = _row_shift(a, dy * W + dx, HW)
            if dy or dx:
                src = src * mask_ref[k]          # (HW, 1) precomputed boundary mask
            p = jnp.dot(src.astype(MM_DT), w_ref[k],
                        preferred_element_type=jnp.float32)
            acc = p if acc is None else acc + p
            k += 1
    o_ref[...] = acc
    st_ref[0] = _row_stats(acc)


def bn_residual_relu_stats_kernel(x_ref, o3_ref, scale_ref, shift_ref, y_ref, st_ref):
    y = jnp.maximum(o3_ref[...] * scale_ref[...] + shift_ref[...] + x_ref[...], 0.0)
    y_ref[...] = y
    st_ref[0] = _row_stats(y)


def affine_kernel(y_ref, scale_ref, shift_ref, o_ref):
    o_ref[...] = y_ref[...] * scale_ref[...] + shift_ref[...]


# --------------------------- wrapper ------------------------------------------

def _finalize_bn(part_stats, gamma_row, beta_row, n_rows):
    """Combine per-tile [sum|sumsq] partials into BN (scale, shift), shape (1, Cp)."""
    tot = jnp.sum(part_stats[:, 0, :], axis=0)            # (2*Cp,)
    cp = gamma_row.shape[-1]
    mean = tot[:cp] / n_rows
    var = tot[cp:] / n_rows - mean * mean
    scale = gamma_row[0] * lax.rsqrt(var + EPS)
    shift = beta_row[0] - mean * scale
    return scale[None, :], shift[None, :]


@functools.partial(jax.jit, static_argnames=("lw_norm",))
def bottleneck_forward(x_nchw, params, lw_norm=True):
    N, Cin, H, W = x_nchw.shape
    C1 = params["conv1_w"].shape[0]
    Cout = params["conv3_w"].shape[0]
    assert Cin == Cout, "identity residual requires Cin == Cout (stride=1, no downsample)"
    HW = H * W
    rows = N * HW
    assert HW % 8 == 0, "per-image row tile must be sublane aligned"
    Cinp, C1p, Coutp = _round_up(Cin), _round_up(C1), _round_up(Cout)
    f32 = jnp.float32

    # Activations: NCHW -> lane-dense (rows, Cinp) channels-last slab, f32.
    x2d = jnp.transpose(x_nchw, (0, 2, 3, 1)).astype(f32).reshape(rows, Cin)
    x2d = _pad_cols(x2d, Cinp)

    # Conv weights -> lane-dense matmul layouts, zero-padded, bf16 MXU operands.
    w1 = jnp.transpose(params["conv1_w"][:, :, 0, 0], (1, 0)).astype(f32)
    w1 = jnp.pad(_pad_cols(w1, C1p), ((0, Cinp - Cin), (0, 0))).astype(MM_DT)      # (Cinp, C1p)

    w2t = jnp.transpose(params["conv2_w"], (2, 3, 1, 0)).reshape(9, C1, C1).astype(f32)
    w2 = jnp.zeros((9, C1p, C1p), f32).at[:, :C1, :C1].set(w2t).astype(MM_DT)      # (9, C1p, C1p)

    w3 = jnp.transpose(params["conv3_w"][:, :, 0, 0], (1, 0)).astype(f32)
    w3 = jnp.pad(_pad_cols(w3, Coutp), ((0, C1p - C1), (0, 0))).astype(MM_DT)      # (C1p, Coutp)

    # Precomputed 3x3 boundary masks (one per tap), shared across image tiles.
    hh = jnp.arange(HW, dtype=jnp.int32) // W
    ww = jnp.arange(HW, dtype=jnp.int32) % W
    taps = []
    for ky in range(3):
        for kx in range(3):
            dy, dx = ky - 1, kx - 1
            taps.append((hh + dy >= 0) & (hh + dy < H) & (ww + dx >= 0) & (ww + dx < W))
    mask = jnp.stack(taps, 0).astype(f32).reshape(9, HW, 1)

    def bnrow(name, cp):
        return _pad_cols(params[name].reshape(1, -1).astype(f32), cp)

    tile = lambda cp: pl.BlockSpec((HW, cp), lambda i: (i, 0))
    stats = lambda cp: pl.BlockSpec((1, 1, 2 * cp), lambda i: (i, 0, 0))

    def full(arr):
        nd = arr.ndim
        return pl.BlockSpec(arr.shape, lambda i, _nd=nd: (0,) * _nd)

    comp = pltpu.CompilerParams(dimension_semantics=("parallel",),
                                vmem_limit_bytes=VMEM_LIMIT)

    def cost(flops, nbytes):
        return pl.CostEstimate(flops=flops, transcendentals=0, bytes_accessed=nbytes)

    # ---- pass 1: conv1 (1x1) + per-tile BN1 partial stats ------------------
    o1, st1 = pl.pallas_call(
        conv1x1_stats_kernel,
        grid=(N,),
        in_specs=[tile(Cinp), full(w1)],
        out_specs=(tile(C1p), stats(C1p)),
        out_shape=(jax.ShapeDtypeStruct((rows, C1p), f32),
                   jax.ShapeDtypeStruct((N, 1, 2 * C1p), f32)),
        compiler_params=comp,
        cost_estimate=cost(2 * rows * Cinp * C1p, 4 * rows * (Cinp + C1p)),
    )(x2d, w1)
    s1, t1 = _finalize_bn(st1, bnrow("bn1_g", C1p), bnrow("bn1_b", C1p), rows)

    # ---- pass 2: BN1+ReLU fused into conv2 (3x3, 9 per-tap matmuls) + BN2 stats
    o2, st2 = pl.pallas_call(
        functools.partial(bn_relu_conv3x3_stats_kernel, H, W),
        grid=(N,),
        in_specs=[tile(C1p), full(s1), full(t1), full(w2), full(mask)],
        out_specs=(tile(C1p), stats(C1p)),
        out_shape=(jax.ShapeDtypeStruct((rows, C1p), f32),
                   jax.ShapeDtypeStruct((N, 1, 2 * C1p), f32)),
        compiler_params=comp,
        cost_estimate=cost(2 * rows * 9 * C1p * C1p, 4 * rows * 2 * C1p),
    )(o1, s1, t1, w2, mask)
    s2, t2 = _finalize_bn(st2, bnrow("bn2_g", C1p), bnrow("bn2_b", C1p), rows)

    # ---- pass 3: BN2+ReLU fused into conv3 (1x1) + BN3 stats ---------------
    o3, st3 = pl.pallas_call(
        bn_relu_conv1x1_stats_kernel,
        grid=(N,),
        in_specs=[tile(C1p), full(s2), full(t2), full(w3)],
        out_specs=(tile(Coutp), stats(Coutp)),
        out_shape=(jax.ShapeDtypeStruct((rows, Coutp), f32),
                   jax.ShapeDtypeStruct((N, 1, 2 * Coutp), f32)),
        compiler_params=comp,
        cost_estimate=cost(2 * rows * C1p * Coutp, 4 * rows * (C1p + Coutp)),
    )(o2, s2, t2, w3)
    s3, t3 = _finalize_bn(st3, bnrow("bn3_g", Coutp), bnrow("bn3_b", Coutp), rows)

    # ---- pass 4: BN3 + identity residual + ReLU (+ lw-norm partial stats) --
    y, st4 = pl.pallas_call(
        bn_residual_relu_stats_kernel,
        grid=(N,),
        in_specs=[tile(Cinp), tile(Coutp), full(s3), full(t3)],
        out_specs=(tile(Coutp), stats(Coutp)),
        out_shape=(jax.ShapeDtypeStruct((rows, Coutp), f32),
                   jax.ShapeDtypeStruct((N, 1, 2 * Coutp), f32)),
        compiler_params=comp,
        cost_estimate=cost(3 * rows * Coutp, 4 * rows * 3 * Coutp),
    )(x2d, o3, s3, t3)

    # ---- pass 5 (optional): layer-wise BN normalize -------------------------
    if lw_norm:
        sn, tn = _finalize_bn(st4, bnrow("norm_g", Coutp), bnrow("norm_b", Coutp), rows)
        y = pl.pallas_call(
            affine_kernel,
            grid=(N,),
            in_specs=[tile(Coutp), full(sn), full(tn)],
            out_specs=tile(Coutp),
            out_shape=jax.ShapeDtypeStruct((rows, Coutp), f32),
            compiler_params=comp,
            cost_estimate=cost(2 * rows * Coutp, 4 * rows * 2 * Coutp),
        )(y, sn, tn)

    out = y[:, :Cout].reshape(N, H, W, Cout)
    return jnp.transpose(out, (0, 3, 1, 2))                  # back to NCHW


def ref_forward(x_nchw, params, lw_norm=True, matmul_dtype=jnp.float32):
    """Pure-JAX reference (PyTorch training-mode BN).  matmul_dtype controls the
    dot-operand precision so the kernel can be checked both tightly (bf16) and
    loosely (f32)."""
    x = jnp.transpose(x_nchw, (0, 2, 3, 1)).astype(jnp.float32)

    def bn(o, g, b):
        mean = o.mean(axis=(0, 1, 2))
        var = o.var(axis=(0, 1, 2))
        return (o - mean) / jnp.sqrt(var + EPS) * g + b

    def mm(a):
        return a.astype(matmul_dtype)

    w1 = jnp.transpose(params["conv1_w"][:, :, 0, 0], (1, 0))
    o = jnp.einsum("nhwc,cd->nhwd", mm(x), mm(w1),
                   preferred_element_type=jnp.float32)
    o = jax.nn.relu(bn(o, params["bn1_g"], params["bn1_b"]))
    w2 = jnp.transpose(params["conv2_w"], (2, 3, 1, 0))       # HWIO
    o = lax.conv_general_dilated(mm(o), mm(w2), (1, 1), "SAME",
                                 dimension_numbers=("NHWC", "HWIO", "NHWC"),
                                 preferred_element_type=jnp.float32)
    o = jax.nn.relu(bn(o, params["bn2_g"], params["bn2_b"]))
    w3 = jnp.transpose(params["conv3_w"][:, :, 0, 0], (1, 0))
    o = jnp.einsum("nhwc,cd->nhwd", mm(o), mm(w3),
                   preferred_element_type=jnp.float32)
    o = bn(o, params["bn3_g"], params["bn3_b"])
    o = jax.nn.relu(o + x)
    if lw_norm:
        o = bn(o, params["norm_g"], params["norm_b"])
    return jnp.transpose(o, (0, 3, 1, 2))


if __name__ == "__main__":
    # Shapes consistent with the module: inplanes = planes * expansion so the
    # identity residual is valid (stride=1, downsample=None), base_width=64,
    # slim_factor=1 -> width = planes.
    N, Hs, Ws = 2, 16, 16
    planes = 4
    expansion = 4
    inplanes = planes * expansion
    width = planes
    Cout = planes * expansion
    LW_NORM = True

    key = jax.random.PRNGKey(0)
    ks = jax.random.split(key, 12)
    params = {
        "conv1_w": 0.1 * jax.random.normal(ks[0], (width, inplanes, 1, 1), jnp.float32),
        "conv2_w": 0.1 * jax.random.normal(ks[1], (width, width, 3, 3), jnp.float32),
        "conv3_w": 0.1 * jax.random.normal(ks[2], (Cout, width, 1, 1), jnp.float32),
        "bn1_g": 1.0 + 0.1 * jax.random.normal(ks[3], (width,), jnp.float32),
        "bn1_b": 0.1 * jax.random.normal(ks[4], (width,), jnp.float32),
        "bn2_g": 1.0 + 0.1 * jax.random.normal(ks[5], (width,), jnp.float32),
        "bn2_b": 0.1 * jax.random.normal(ks[6], (width,), jnp.float32),
        "bn3_g": 1.0 + 0.1 * jax.random.normal(ks[7], (Cout,), jnp.float32),
        "bn3_b": 0.1 * jax.random.normal(ks[8], (Cout,), jnp.float32),
        "norm_g": 1.0 + 0.1 * jax.random.normal(ks[9], (Cout,), jnp.float32),
        "norm_b": 0.1 * jax.random.normal(ks[10], (Cout,), jnp.float32),
    }
    x = jax.random.normal(ks[11], (N, inplanes, Hs, Ws), jnp.float32)

    out = jax.block_until_ready(bottleneck_forward(x, params, lw_norm=LW_NORM))
    assert out.shape == (N, Cout, Hs, Ws), out.shape

    # Tight check: reference with the same matmul precision (bf16 operands,
    # f32 accumulation) -> validates taps, masks, shifts and the two-phase BN.
    ref_mm = ref_forward(x, params, lw_norm=LW_NORM, matmul_dtype=MM_DT)
    err_mm = float(jnp.max(jnp.abs(out - ref_mm)))
    assert jnp.allclose(out, ref_mm, rtol=2e-2, atol=2e-2), err_mm

    # Loose check: full-f32 PyTorch-equivalent reference -> bounds bf16 drift.
    ref32 = ref_forward(x, params, lw_norm=LW_NORM, matmul_dtype=jnp.float32)
    err32 = float(jnp.max(jnp.abs(out - ref32)))
    assert jnp.allclose(out, ref32, rtol=5e-2, atol=5e-2), err32

    print("KERNEL_OK")
</pallas_src>

<mosaic_0001>
module attributes {stable_mosaic.version = 11 : i64} {
  func.func @conv1x1_stats_kernel(%arg0: i32, %arg1: memref<256x128xf32, #tpu.memory_space<vmem>>, %arg2: memref<128x128xbf16, #tpu.memory_space<vmem>>, %arg3: memref<256x128xf32, #tpu.memory_space<vmem>>, %arg4: memref<1x1x256xf32, #tpu.memory_space<vmem>>) attributes {dimension_semantics = [#tpu.dimension_semantics<parallel>], iteration_bounds = array<i64: 2>, scalar_prefetch = 0 : i64, scratch_operands = 0 : i64, tpu.core_type = #tpu.core_type<tc>, window_params = [{transform_indices = @transform_0, window_bounds = array<i64: 256, 128>}, {pipeline_mode = #tpu.pipeline_mode<synchronous>, transform_indices = @transform_1, window_bounds = array<i64: 128, 128>}, {transform_indices = @transform_2, window_bounds = array<i64: 256, 128>}, {transform_indices = @transform_3, window_bounds = array<i64: 1, 1, 256>}]} {
    %c0 = arith.constant 0 : index
    %c0_0 = arith.constant 0 : index
    %0 = vector.load %arg1[%c0, %c0_0] : memref<256x128xf32, #tpu.memory_space<vmem>>, vector<256x128xf32>
    %1 = arith.truncf %0 : vector<256x128xf32> to vector<256x128xbf16>
    %c0_1 = arith.constant 0 : index
    %c0_2 = arith.constant 0 : index
    %2 = vector.load %arg2[%c0_1, %c0_2] : memref<128x128xbf16, #tpu.memory_space<vmem>>, vector<128x128xbf16>
    %cst = arith.constant dense<0.000000e+00> : vector<256x128xf32>
    %3 = tpu.matmul %1, %2, %cst {dimension_numbers = #tpu.dot_dimension_numbers<[1], [0], [0], [1], [0, 0, 1, 1], [], []>} : vector<256x128xbf16>, vector<128x128xbf16>, vector<256x128xf32> -> vector<256x128xf32>
    %c0_3 = arith.constant 0 : index
    %c0_4 = arith.constant 0 : index
    %4 = vector.load %arg3[%c0_3, %c0_4] : memref<256x128xf32, #tpu.memory_space<vmem>>, vector<256x128xf32>
    tpu.vector_store %arg3[%c0_3, %c0_4], %3 {strides = array<i32>} : memref<256x128xf32, #tpu.memory_space<vmem>>, vector<256x128xf32>,
    %cst_5 = arith.constant dense<0.000000e+00> : vector<128xf32>
    %5 = vector.multi_reduction <add>, %3, %cst_5 [0] : vector<256x128xf32> to vector<128xf32>
    %6 = vector.shape_cast %5 : vector<128xf32> to vector<1x128xf32>
    %7 = arith.mulf %3, %3 : vector<256x128xf32>
    %cst_6 = arith.constant dense<0.000000e+00> : vector<128xf32>
    %8 = vector.multi_reduction <add>, %7, %cst_6 [0] : vector<256x128xf32> to vector<128xf32>
    %9 = vector.shape_cast %8 : vector<128xf32> to vector<1x128xf32>
    %10 = tpu.concatenate %6, %9 in 1 : vector<1x128xf32>, vector<1x128xf32> -> vector<1x256xf32>
    %c0_7 = arith.constant 0 : index
    %c0_8 = arith.constant 0 : index
    %c0_9 = arith.constant 0 : index
    %11 = vector.load %arg4[%c0_7, %c0_8, %c0_9] : memref<1x1x256xf32, #tpu.memory_space<vmem>>, vector<1x1x256xf32>
    %12 = vector.shape_cast %11 : vector<1x1x256xf32> to vector<1x256xf32>
    %13 = vector.shape_cast %10 : vector<1x256xf32> to vector<1x1x256xf32>
    tpu.vector_store %arg4[%c0_7, %c0_8, %c0_9], %13 {strides = array<i32>} : memref<1x1x256xf32, #tpu.memory_space<vmem>>, vector<1x1x256xf32>,
    return
  }
  func.func @transform_0(%arg0: i32) -> (i32, i32) {
    %c0_i32 = arith.constant 0 : i32
    %c0_i32_0 = arith.constant 0 : i32
    return %arg0, %c0_i32 : i32, i32
  }
  func.func @transform_1(%arg0: i32) -> (i32, i32) {
    %c0_i32 = arith.constant 0 : i32
    %c0_i32_0 = arith.constant 0 : i32
    %c0_i32_1 = arith.constant 0 : i32
    return %c0_i32, %c0_i32_0 : i32, i32
  }
  func.func @transform_2(%arg0: i32) -> (i32, i32) {
    %c0_i32 = arith.constant 0 : i32
    %c0_i32_0 = arith.constant 0 : i32
    return %arg0, %c0_i32 : i32, i32
  }
  func.func @transform_3(%arg0: i32) -> (i32, i32, i32) {
    %c0_i32 = arith.constant 0 : i32
    %c0_i32_0 = arith.constant 0 : i32
    %c0_i32_1 = arith.constant 0 : i32
    return %arg0, %c0_i32, %c0_i32_0 : i32, i32, i32
  }
}

module attributes {stable_mosaic.version = 11 : i64} {
  func.func @bn_relu_conv3x3_stats_kernel(%arg0: i32, %arg1: memref<256x128xf32, #tpu.memory_space<vmem>>, %arg2: memref<1x128xf32, #tpu.memory_space<vmem>>, %arg3: memref<1x128xf32, #tpu.memory_space<vmem>>, %arg4: memref<9x128x128xbf16, #tpu.memory_space<vmem>>, %arg5: memref<9x256x1xf32, #tpu.memory_space<vmem>>, %arg6: memref<256x128xf32, #tpu.memory_space<vmem>>, %arg7: memref<1x1x256xf32, #tpu.memory_space<vmem>>) attributes {dimension_semantics = [#tpu.dimension_semantics<parallel>], iteration_bounds = array<i64: 2>, scalar_prefetch = 0 : i64, scratch_operands = 0 : i64, tpu.core_type = #tpu.core_type<tc>, window_params = [{transform_indices = @transform_0, window_bounds = array<i64: 256, 128>}, {pipeline_mode = #tpu.pipeline_mode<synchronous>, transform_indices = @transform_1, window_bounds = array<i64: 1, 128>}, {pipeline_mode = #tpu.pipeline_mode<synchronous>, transform_indices = @transform_2, window_bounds = array<i64: 1, 128>}, {pipeline_mode = #tpu.pipeline_mode<synchronous>, transform_indices = @transform_3, window_bounds = array<i64: 9, 128, 128>}, {pipeline_mode = #tpu.pipeline_mode<synchronous>, transform_indices = @transform_4, window_bounds = array<i64: 9, 256, 1>}, {transform_indices = @transform_5, window_bounds = array<i64: 256, 128>}, {transform_indices = @transform_6, window_bounds = array<i64: 1, 1, 256>}]} {
    %c0 = arith.constant 0 : index
    %c0_0 = arith.constant 0 : index
    %0 = vector.load %arg1[%c0, %c0_0] : memref<256x128xf32, #tpu.memory_space<vmem>>, vector<256x128xf32>
    %c0_1 = arith.constant 0 : index
    %c0_2 = arith.constant 0 : index
    %1 = vector.load %arg2[%c0_1, %c0_2] : memref<1x128xf32, #tpu.memory_space<vmem>>, vector<1x128xf32>
    %2 = vector.broadcast %1 : vector<1x128xf32> to vector<256x128xf32>
    %3 = arith.mulf %0, %2 : vector<256x128xf32>
    %c0_3 = arith.constant 0 : index
    %c0_4 = arith.constant 0 : index
    %4 = vector.load %arg3[%c0_3, %c0_4] : memref<1x128xf32, #tpu.memory_space<vmem>>, vector<1x128xf32>
    %5 = vector.broadcast %4 : vector<1x128xf32> to vector<256x128xf32>
    %6 = arith.addf %3, %5 : vector<256x128xf32>
    %cst = arith.constant 0.000000e+00 : f32
    %7 = vector.broadcast %cst : f32 to vector<256x128xf32>
    %8 = arith.maximumf %6, %7 : vector<256x128xf32>
    %9 = vector.extract_strided_slice %8 {offsets = [239, 0], sizes = [17, 128], strides = [1, 1]} : vector<256x128xf32> to vector<17x128xf32>
    %10 = vector.extract_strided_slice %8 {offsets = [0, 0], sizes = [239, 128], strides = [1, 1]} : vector<256x128xf32> to vector<239x128xf32>
    %11 = tpu.concatenate %9, %10 in 0 : vector<17x128xf32>, vector<239x128xf32> -> vector<256x128xf32>
    %c0_5 = arith.constant 0 : index
    %c0_6 = arith.constant 0 : index
    %c0_7 = arith.constant 0 : index
    %12 = vector.load %arg5[%c0_5, %c0_6, %c0_7] : memref<9x256x1xf32, #tpu.memory_space<vmem>>, vector<1x256x1xf32>
    %13 = vector.shape_cast %12 : vector<1x256x1xf32> to vector<256x1xf32>
    %14 = vector.broadcast %13 : vector<256x1xf32> to vector<256x128xf32>
    %15 = arith.mulf %11, %14 : vector<256x128xf32>
    %16 = arith.truncf %15 : vector<256x128xf32> to vector<256x128xbf16>
    %c0_8 = arith.constant 0 : index
    %c0_9 = arith.constant 0 : index
    %c0_10 = arith.constant 0 : index
    %17 = vector.load %arg4[%c0_8, %c0_9, %c0_10] : memref<9x128x128xbf16, #tpu.memory_space<vmem>>, vector<1x128x128xbf16>
    %18 = vector.shape_cast %17 : vector<1x128x128xbf16> to vector<128x128xbf16>
    %cst_11 = arith.constant dense<0.000000e+00> : vector<256x128xf32>
    %19 = tpu.matmul %16, %18, %cst_11 {dimension_numbers = #tpu.dot_dimension_numbers<[1], [0], [0], [1], [0, 0, 1, 1], [], []>} : vector<256x128xbf16>, vector<128x128xbf16>, vector<256x128xf32> -> vector<256x128xf32>
    %20 = vector.extract_strided_slice %8 {offsets = [240, 0], sizes = [16, 128], strides = [1, 1]} : vector<256x128xf32> to vector<16x128xf32>
    %21 = vector.extract_strided_slice %8 {offsets = [0, 0], sizes = [240, 128], strides = [1, 1]} : vector<256x128xf32> to vector<240x128xf32>
    %22 = tpu.concatenate %20, %21 in 0 : vector<16x128xf32>, vector<240x128xf32> -> vector<256x128xf32>
    %c1 = arith.constant 1 : index
    %c0_12 = arith.constant 0 : index
    %c0_13 = arith.constant 0 : index
    %23 = vector.load %arg5[%c1, %c0_12, %c0_13] : memref<9x256x1xf32, #tpu.memory_space<vmem>>, vector<1x256x1xf32>
    %24 = vector.shape_cast %23 : vector<1x256x1xf32> to vector<256x1xf32>
    %25 = vector.broadcast %24 : vector<256x1xf32> to vector<256x128xf32>
    %26 = arith.mulf %22, %25 : vector<256x128xf32>
    %27 = arith.truncf %26 : vector<256x128xf32> to vector<256x128xbf16>
    %c1_14 = arith.constant 1 : index
    %c0_15 = arith.constant 0 : index
    %c0_16 = arith.constant 0 : index
    %28 = vector.load %arg4[%c1_14, %c0_15, %c0_16] : memref<9x128x128xbf16, #tpu.memory_space<vmem>>, vector<1x128x128xbf16>
    %29 = vector.shape_cast %28 : vector<1x128x128xbf16> to vector<128x128xbf16>
    %cst_17 = arith.constant dense<0.000000e+00> : vector<256x128xf32>
    %30 = tpu.matmul %27, %29, %cst_17 {dimension_numbers = #tpu.dot_dimension_numbers<[1], [0], [0], [1], [0, 0, 1, 1], [], []>} : vector<256x128xbf16>, vector<128x128xbf16>, vector<256x128xf32> -> vector<256x128xf32>
    %31 = arith.addf %19, %30 : vector<256x128xf32>
    %32 = vector.extract_strided_slice %8 {offsets = [241, 0], sizes = [15, 128], strides = [1, 1]} : vector<256x128xf32> to vector<15x128xf32>
    %33 = vector.extract_strided_slice %8 {offsets = [0, 0], sizes = [241, 128], strides = [1, 1]} : vector<256x128xf32> to vector<241x128xf32>
    %34 = tpu.concatenate %32, %33 in 0 : vector<15x128xf32>, vector<241x128xf32> -> vector<256x128xf32>
    %c2 = arith.constant 2 : index
    %c0_18 = arith.constant 0 : index
    %c0_19 = arith.constant 0 : index
    %35 = vector.load %arg5[%c2, %c0_18, %c0_19] : memref<9x256x1xf32, #tpu.memory_space<vmem>>, vector<1x256x1xf32>
    %36 = vector.shape_cast %35 : vector<1x256x1xf32> to vector<256x1xf32>
    %37 = vector.broadcast %36 : vector<256x1xf32> to vector<256x128xf32>
    %38 = arith.mulf %34, %37 : vector<256x128xf32>
    %39 = arith.truncf %38 : vector<256x128xf32> to vector<256x128xbf16>
    %c2_20 = arith.constant 2 : index
    %c0_21 = arith.constant 0 : index
    %c0_22 = arith.constant 0 : index
    %40 = vector.load %arg4[%c2_20, %c0_21, %c0_22] : memref<9x128x128xbf16, #tpu.memory_space<vmem>>, vector<1x128x128xbf16>
    %41 = vector.shape_cast %40 : vector<1x128x128xbf16> to vector<128x128xbf16>
    %cst_23 = arith.constant dense<0.000000e+00> : vector<256x128xf32>
    %42 = tpu.matmul %39, %41, %cst_23 {dimension_numbers = #tpu.dot_dimension_numbers<[1], [0], [0], [1], [0, 0, 1, 1], [], []>} : vector<256x128xbf16>, vector<128x128xbf16>, vector<256x128xf32> -> vector<256x128xf32>
    %43 = arith.addf %31, %42 : vector<256x128xf32>
    %44 = vector.extract_strided_slice %8 {offsets = [255, 0], sizes = [1, 128], strides = [1, 1]} : vector<256x128xf32> to vector<1x128xf32>
    %45 = vector.extract_strided_slice %8 {offsets = [0, 0], sizes = [255, 128], strides = [1, 1]} : vector<256x128xf32> to vector<255x128xf32>
    %46 = tpu.concatenate %44, %45 in 0 : vector<1x128xf32>, vector<255x128xf32> -> vector<256x128xf32>
    %c3 = arith.constant 3 : index
    %c0_24 = arith.constant 0 : index
    %c0_25 = arith.constant 0 : index
    %47 = vector.load %arg5[%c3, %c0_24, %c0_25] : memref<9x256x1xf32, #tpu.memory_space<vmem>>, vector<1x256x1xf32>
    %48 = vector.shape_cast %47 : vector<1x256x1xf32> to vector<256x1xf32>
    %49 = vector.broadcast %48 : vector<256x1xf32> to vector<256x128xf32>
    %50 = arith.mulf %46, %49 : vector<256x128xf32>
    %51 = arith.truncf %50 : vector<256x128xf32> to vector<256x128xbf16>
    %c3_26 = arith.constant 3 : index
    %c0_27 = arith.constant 0 : index
    %c0_28 = arith.constant 0 : index
    %52 = vector.load %arg4[%c3_26, %c0_27, %c0_28] : memref<9x128x128xbf16, #tpu.memory_space<vmem>>, vector<1x128x128xbf16>
    %53 = vector.shape_cast %52 : vector<1x128x128xbf16> to vector<128x128xbf16>
    %cst_29 = arith.constant dense<0.000000e+00> : vector<256x128xf32>
    %54 = tpu.matmul %51, %53, %cst_29 {dimension_numbers = #tpu.dot_dimension_numbers<[1], [0], [0], [1], [0, 0, 1, 1], [], []>} : vector<256x128xbf16>, vector<128x128xbf16>, vector<256x128xf32> -> vector<256x128xf32>
    %55 = arith.addf %43, %54 : vector<256x128xf32>
    %56 = arith.truncf %8 : vector<256x128xf32> to vector<256x128xbf16>
    %c4 = arith.constant 4 : index
    %c0_30 = arith.constant 0 : index
    %c0_31 = arith.constant 0 : index
    %57 = vector.load %arg4[%c4, %c0_30, %c0_31] : memref<9x128x128xbf16, #tpu.memory_space<vmem>>, vector<1x128x128xbf16>
    %58 = vector.shape_cast %57 : vector<1x128x128xbf16> to vector<128x128xbf16>
    %cst_32 = arith.constant dense<0.000000e+00> : vector<256x128xf32>
    %59 = tpu.matmul %56, %58, %cst_32 {dimension_numbers = #tpu.dot_dimension_numbers<[1], [0], [0], [1], [0, 0, 1, 1], [], []>} : vector<256x128xbf16>, vector<128x128xbf16>, vector<256x128xf32> -> vector<256x128xf32>
    %60 = arith.addf %55, %59 : vector<256x128xf32>
    %61 = vector.extract_strided_slice %8 {offsets = [1, 0], sizes = [255, 128], strides = [1, 1]} : vector<256x128xf32> to vector<255x128xf32>
    %62 = vector.extract_strided_slice %8 {offsets = [0, 0], sizes = [1, 128], strides = [1, 1]} : vector<256x128xf32> to vector<1x128xf32>
    %63 = tpu.concatenate %61, %62 in 0 : vector<255x128xf32>, vector<1x128xf32> -> vector<256x128xf32>
    %c5 = arith.constant 5 : index
    %c0_33 = arith.constant 0 : index
    %c0_34 = arith.constant 0 : index
    %64 = vector.load %arg5[%c5, %c0_33, %c0_34] : memref<9x256x1xf32, #tpu.memory_space<vmem>>, vector<1x256x1xf32>
    %65 = vector.shape_cast %64 : vector<1x256x1xf32> to vector<256x1xf32>
    %66 = vector.broadcast %65 : vector<256x1xf32> to vector<256x128xf32>
    %67 = arith.mulf %63, %66 : vector<256x128xf32>
    %68 = arith.truncf %67 : vector<256x128xf32> to vector<256x128xbf16>
    %c5_35 = arith.constant 5 : index
    %c0_36 = arith.constant 0 : index
    %c0_37 = arith.constant 0 : index
    %69 = vector.load %arg4[%c5_35, %c0_36, %c0_37] : memref<9x128x128xbf16, #tpu.memory_space<vmem>>, vector<1x128x128xbf16>
    %70 = vector.shape_cast %69 : vector<1x128x128xbf16> to vector<128x128xbf16>
    %cst_38 = arith.constant dense<0.000000e+00> : vector<256x128xf32>
    %71 = tpu.matmul %68, %70, %cst_38 {dimension_numbers = #tpu.dot_dimension_numbers<[1], [0], [0], [1], [0, 0, 1, 1], [], []>} : vector<256x128xbf16>, vector<128x128xbf16>, vector<256x128xf32> -> vector<256x128xf32>
    %72 = arith.addf %60, %71 : vector<256x128xf32>
    %73 = vector.extract_strided_slice %8 {offsets = [15, 0], sizes = [241, 128], strides = [1, 1]} : vector<256x128xf32> to vector<241x128xf32>
    %74 = vector.extract_strided_slice %8 {offsets = [0, 0], sizes = [15, 128], strides = [1, 1]} : vector<256x128xf32> to vector<15x128xf32>
    %75 = tpu.concatenate %73, %74 in 0 : vector<241x128xf32>, vector<15x128xf32> -> vector<256x128xf32>
    %c6 = arith.constant 6 : index
    %c0_39 = arith.constant 0 : index
    %c0_40 = arith.constant 0 : index
    %76 = vector.load %arg5[%c6, %c0_39, %c0_40] : memref<9x256x1xf32, #tpu.memory_space<vmem>>, vector<1x256x1xf32>
    %77 = vector.shape_cast %76 : vector<1x256x1xf32> to vector<256x1xf32>
    %78 = vector.broadcast %77 : vector<256x1xf32> to vector<256x128xf32>
    %79 = arith.mulf %75, %78 : vector<256x128xf32>
    %80 = arith.truncf %79 : vector<256x128xf32> to vector<256x128xbf16>
    %c6_41 = arith.constant 6 : index
    %c0_42 = arith.constant 0 : index
    %c0_43 = arith.constant 0 : index
    %81 = vector.load %arg4[%c6_41, %c0_42, %c0_43] : memref<9x128x128xbf16, #tpu.memory_space<vmem>>, vector<1x128x128xbf16>
    %82 = vector.shape_cast %81 : vector<1x128x128xbf16> to vector<128x128xbf16>
    %cst_44 = arith.constant dense<0.000000e+00> : vector<256x128xf32>
    %83 = tpu.matmul %80, %82, %cst_44 {dimension_numbers = #tpu.dot_dimension_numbers<[1], [0], [0], [1], [0, 0, 1, 1], [], []>} : vector<256x128xbf16>, vector<128x128xbf16>, vector<256x128xf32> -> vector<256x128xf32>
    %84 = arith.addf %72, %83 : vector<256x128xf32>
    %85 = vector.extract_strided_slice %8 {offsets = [16, 0], sizes = [240, 128], strides = [1, 1]} : vector<256x128xf32> to vector<240x128xf32>
    %86 = vector.extract_strided_slice %8 {offsets = [0, 0], sizes = [16, 128], strides = [1, 1]} : vector<256x128xf32> to vector<16x128xf32>
    %87 = tpu.concatenate %85, %86 in 0 : vector<240x128xf32>, vector<16x128xf32> -> vector<256x128xf32>
    %c7 = arith.constant 7 : index
    %c0_45 = arith.constant 0 : index
    %c0_46 = arith.constant 0 : index
    %88 = vector.load %arg5[%c7, %c0_45, %c0_46] : memref<9x256x1xf32, #tpu.memory_space<vmem>>, vector<1x256x1xf32>
    %89 = vector.shape_cast %88 : vector<1x256x1xf32> to vector<256x1xf32>
    %90 = vector.broadcast %89 : vector<256x1xf32> to vector<256x128xf32>
    %91 = arith.mulf %87, %90 : vector<256x128xf32>
    %92 = arith.truncf %91 : vector<256x128xf32> to vector<256x128xbf16>
    %c7_47 = arith.constant 7 : index
    %c0_48 = arith.constant 0 : index
    %c0_49 = arith.constant 0 : index
    %93 = vector.load %arg4[%c7_47, %c0_48, %c0_49] : memref<9x128x128xbf16, #tpu.memory_space<vmem>>, vector<1x128x128xbf16>
    %94 = vector.shape_cast %93 : vector<1x128x128xbf16> to vector<128x128xbf16>
    %cst_50 = arith.constant dense<0.000000e+00> : vector<256x128xf32>
    %95 = tpu.matmul %92, %94, %cst_50 {dimension_numbers = #tpu.dot_dimension_numbers<[1], [0], [0], [1], [0, 0, 1, 1], [], []>} : vector<256x128xbf16>, vector<128x128xbf16>, vector<256x128xf32> -> vector<256x128xf32>
    %96 = arith.addf %84, %95 : vector<256x128xf32>
    %97 = vector.extract_strided_slice %8 {offsets = [17, 0], sizes = [239, 128], strides = [1, 1]} : vector<256x128xf32> to vector<239x128xf32>
    %98 = vector.extract_strided_slice %8 {offsets = [0, 0], sizes = [17, 128], strides = [1, 1]} : vector<256x128xf32> to vector<17x128xf32>
    %99 = tpu.concatenate %97, %98 in 0 : vector<239x128xf32>, vector<17x128xf32> -> vector<256x128xf32>
    %c8 = arith.constant 8 : index
    %c0_51 = arith.constant 0 : index
    %c0_52 = arith.constant 0 : index
    %100 = vector.load %arg5[%c8, %c0_51, %c0_52] : memref<9x256x1xf32, #tpu.memory_space<vmem>>, vector<1x256x1xf32>
    %101 = vector.shape_cast %100 : vector<1x256x1xf32> to vector<256x1xf32>
    %102 = vector.broadcast %101 : vector<256x1xf32> to vector<256x128xf32>
    %103 = arith.mulf %99, %102 : vector<256x128xf32>
    %104 = arith.truncf %103 : vector<256x128xf32> to vector<256x128xbf16>
    %c8_53 = arith.constant 8 : index
    %c0_54 = arith.constant 0 : index
    %c0_55 = arith.constant 0 : index
    %105 = vector.load %arg4[%c8_53, %c0_54, %c0_55] : memref<9x128x128xbf16, #tpu.memory_space<vmem>>, vector<1x128x128xbf16>
    %106 = vector.shape_cast %105 : vector<1x128x128xbf16> to vector<128x128xbf16>
    %cst_56 = arith.constant dense<0.000000e+00> : vector<256x128xf32>
    %107 = tpu.matmul %104, %106, %cst_56 {dimension_numbers = #tpu.dot_dimension_numbers<[1], [0], [0], [1], [0, 0, 1, 1], [], []>} : vector<256x128xbf16>, vector<128x128xbf16>, vector<256x128xf32> -> vector<256x128xf32>
    %108 = arith.addf %96, %107 : vector<256x128xf32>
    %c0_57 = arith.constant 0 : index
    %c0_58 = arith.constant 0 : index
    %109 = vector.load %arg6[%c0_57, %c0_58] : memref<256x128xf32, #tpu.memory_space<vmem>>, vector<256x128xf32>
    tpu.vector_store %arg6[%c0_57, %c0_58], %108 {strides = array<i32>} : memref<256x128xf32, #tpu.memory_space<vmem>>, vector<256x128xf32>,
    %cst_59 = arith.constant dense<0.000000e+00> : vector<128xf32>
    %110 = vector.multi_reduction <add>, %108, %cst_59 [0] : vector<256x128xf32> to vector<128xf32>
    %111 = vector.shape_cast %110 : vector<128xf32> to vector<1x128xf32>
    %112 = arith.mulf %108, %108 : vector<256x128xf32>
    %cst_60 = arith.constant dense<0.000000e+00> : vector<128xf32>
    %113 = vector.multi_reduction <add>, %112, %cst_60 [0] : vector<256x128xf32> to vector<128xf32>
    %114 = vector.shape_cast %113 : vector<128xf32> to vector<1x128xf32>
    %115 = tpu.concatenate %111, %114 in 1 : vector<1x128xf32>, vector<1x128xf32> -> vector<1x256xf32>
    %c0_61 = arith.constant 0 : index
    %c0_62 = arith.constant 0 : index
    %c0_63 = arith.constant 0 : index
    %116 = vector.load %arg7[%c0_61, %c0_62, %c0_63] : memref<1x1x256xf32, #tpu.memory_space<vmem>>, vector<1x1x256xf32>
    %117 = vector.shape_cast %116 : vector<1x1x256xf32> to vector<1x256xf32>
    %118 = vector.shape_cast %115 : vector<1x256xf32> to vector<1x1x256xf32>
    tpu.vector_store %arg7[%c0_61, %c0_62, %c0_63], %118 {strides = array<i32>} : memref<1x1x256xf32, #tpu.memory_space<vmem>>, vector<1x1x256xf32>,
    return
  }
  func.func @transform_0(%arg0: i32) -> (i32, i32) {
    %c0_i32 = arith.constant 0 : i32
    %c0_i32_0 = arith.constant 0 : i32
    return %arg0, %c0_i32 : i32, i32
  }
  func.func @transform_1(%arg0: i32) -> (i32, i32) {
    %c0_i32 = arith.constant 0 : i32
    %c0_i32_0 = arith.constant 0 : i32
    %c0_i32_1 = arith.constant 0 : i32
    return %c0_i32, %c0_i32_0 : i32, i32
  }
  func.func @transform_2(%arg0: i32) -> (i32, i32) {
    %c0_i32 = arith.constant 0 : i32
    %c0_i32_0 = arith.constant 0 : i32
    %c0_i32_1 = arith.constant 0 : i32
    return %c0_i32, %c0_i32_0 : i32, i32
  }
  func.func @transform_3(%arg0: i32) -> (i32, i32, i32) {
    %c0_i32 = arith.constant 0 : i32
    %c0_i32_0 = arith.constant 0 : i32
    %c0_i32_1 = arith.constant 0 : i32
    %c0_i32_2 = arith.constant 0 : i32
    return %c0_i32, %c0_i32_0, %c0_i32_1 : i32, i32, i32
  }
  func.func @transform_4(%arg0: i32) -> (i32, i32, i32) {
    %c0_i32 = arith.constant 0 : i32
    %c0_i32_0 = arith.constant 0 : i32
    %c0_i32_1 = arith.constant 0 : i32
    %c0_i32_2 = arith.constant 0 : i32
    return %c0_i32, %c0_i32_0, %c0_i32_1 : i32, i32, i32
  }
  func.func @transform_5(%arg0: i32) -> (i32, i32) {
    %c0_i32 = arith.constant 0 : i32
    %c0_i32_0 = arith.constant 0 : i32
    return %arg0, %c0_i32 : i32, i32
  }
  func.func @transform_6(%arg0: i32) -> (i32, i32, i32) {
    %c0_i32 = arith.constant 0 : i32
    %c0_i32_0 = arith.constant 0 : i32
    %c0_i32_1 = arith.constant 0 : i32
    return %arg0, %c0_i32, %c0_i32_0 : i32, i32, i32
  }
}

module attributes {stable_mosaic.version = 11 : i64} {
  func.func @bn_relu_conv1x1_stats_kernel(%arg0: i32, %arg1: memref<256x128xf32, #tpu.memory_space<vmem>>, %arg2: memref<1x128xf32, #tpu.memory_space<vmem>>, %arg3: memref<1x128xf32, #tpu.memory_space<vmem>>, %arg4: memref<128x128xbf16, #tpu.memory_space<vmem>>, %arg5: memref<256x128xf32, #tpu.memory_space<vmem>>, %arg6: memref<1x1x256xf32, #tpu.memory_space<vmem>>) attributes {dimension_semantics = [#tpu.dimension_semantics<parallel>], iteration_bounds = array<i64: 2>, scalar_prefetch = 0 : i64, scratch_operands = 0 : i64, tpu.core_type = #tpu.core_type<tc>, window_params = [{transform_indices = @transform_0, window_bounds = array<i64: 256, 128>}, {pipeline_mode = #tpu.pipeline_mode<synchronous>, transform_indices = @transform_1, window_bounds = array<i64: 1, 128>}, {pipeline_mode = #tpu.pipeline_mode<synchronous>, transform_indices = @transform_2, window_bounds = array<i64: 1, 128>}, {pipeline_mode = #tpu.pipeline_mode<synchronous>, transform_indices = @transform_3, window_bounds = array<i64: 128, 128>}, {transform_indices = @transform_4, window_bounds = array<i64: 256, 128>}, {transform_indices = @transform_5, window_bounds = array<i64: 1, 1, 256>}]} {
    %c0 = arith.constant 0 : index
    %c0_0 = arith.constant 0 : index
    %0 = vector.load %arg1[%c0, %c0_0] : memref<256x128xf32, #tpu.memory_space<vmem>>, vector<256x128xf32>
    %c0_1 = arith.constant 0 : index
    %c0_2 = arith.constant 0 : index
    %1 = vector.load %arg2[%c0_1, %c0_2] : memref<1x128xf32, #tpu.memory_space<vmem>>, vector<1x128xf32>
    %2 = vector.broadcast %1 : vector<1x128xf32> to vector<256x128xf32>
    %3 = arith.mulf %0, %2 : vector<256x128xf32>
    %c0_3 = arith.constant 0 : index
    %c0_4 = arith.constant 0 : index
    %4 = vector.load %arg3[%c0_3, %c0_4] : memref<1x128xf32, #tpu.memory_space<vmem>>, vector<1x128xf32>
    %5 = vector.broadcast %4 : vector<1x128xf32> to vector<256x128xf32>
    %6 = arith.addf %3, %5 : vector<256x128xf32>
    %cst = arith.constant 0.000000e+00 : f32
    %7 = vector.broadcast %cst : f32 to vector<256x128xf32>
    %8 = arith.maximumf %6, %7 : vector<256x128xf32>
    %9 = arith.truncf %8 : vector<256x128xf32> to vector<256x128xbf16>
    %c0_5 = arith.constant 0 : index
    %c0_6 = arith.constant 0 : index
    %10 = vector.load %arg4[%c0_5, %c0_6] : memref<128x128xbf16, #tpu.memory_space<vmem>>, vector<128x128xbf16>
    %cst_7 = arith.constant dense<0.000000e+00> : vector<256x128xf32>
    %11 = tpu.matmul %9, %10, %cst_7 {dimension_numbers = #tpu.dot_dimension_numbers<[1], [0], [0], [1], [0, 0, 1, 1], [], []>} : vector<256x128xbf16>, vector<128x128xbf16>, vector<256x128xf32> -> vector<256x128xf32>
    %c0_8 = arith.constant 0 : index
    %c0_9 = arith.constant 0 : index
    %12 = vector.load %arg5[%c0_8, %c0_9] : memref<256x128xf32, #tpu.memory_space<vmem>>, vector<256x128xf32>
    tpu.vector_store %arg5[%c0_8, %c0_9], %11 {strides = array<i32>} : memref<256x128xf32, #tpu.memory_space<vmem>>, vector<256x128xf32>,
    %cst_10 = arith.constant dense<0.000000e+00> : vector<128xf32>
    %13 = vector.multi_reduction <add>, %11, %cst_10 [0] : vector<256x128xf32> to vector<128xf32>
    %14 = vector.shape_cast %13 : vector<128xf32> to vector<1x128xf32>
    %15 = arith.mulf %11, %11 : vector<256x128xf32>
    %cst_11 = arith.constant dense<0.000000e+00> : vector<128xf32>
    %16 = vector.multi_reduction <add>, %15, %cst_11 [0] : vector<256x128xf32> to vector<128xf32>
    %17 = vector.shape_cast %16 : vector<128xf32> to vector<1x128xf32>
    %18 = tpu.concatenate %14, %17 in 1 : vector<1x128xf32>, vector<1x128xf32> -> vector<1x256xf32>
    %c0_12 = arith.constant 0 : index
    %c0_13 = arith.constant 0 : index
    %c0_14 = arith.constant 0 : index
    %19 = vector.load %arg6[%c0_12, %c0_13, %c0_14] : memref<1x1x256xf32, #tpu.memory_space<vmem>>, vector<1x1x256xf32>
    %20 = vector.shape_cast %19 : vector<1x1x256xf32> to vector<1x256xf32>
    %21 = vector.shape_cast %18 : vector<1x256xf32> to vector<1x1x256xf32>
    tpu.vector_store %arg6[%c0_12, %c0_13, %c0_14], %21 {strides = array<i32>} : memref<1x1x256xf32, #tpu.memory_space<vmem>>, vector<1x1x256xf32>,
    return
  }
  func.func @transform_0(%arg0: i32) -> (i32, i32) {
    %c0_i32 = arith.constant 0 : i32
    %c0_i32_0 = arith.constant 0 : i32
    return %arg0, %c0_i32 : i32, i32
  }
  func.func @transform_1(%arg0: i32) -> (i32, i32) {
    %c0_i32 = arith.constant 0 : i32
    %c0_i32_0 = arith.constant 0 : i32
    %c0_i32_1 = arith.constant 0 : i32
    return %c0_i32, %c0_i32_0 : i32, i32
  }
  func.func @transform_2(%arg0: i32) -> (i32, i32) {
    %c0_i32 = arith.constant 0 : i32
    %c0_i32_0 = arith.constant 0 : i32
    %c0_i32_1 = arith.constant 0 : i32
    return %c0_i32, %c0_i32_0 : i32, i32
  }
  func.func @transform_3(%arg0: i32) -> (i32, i32) {
    %c0_i32 = arith.constant 0 : i32
    %c0_i32_0 = arith.constant 0 : i32
    %c0_i32_1 = arith.constant 0 : i32
    return %c0_i32, %c0_i32_0 : i32, i32
  }
  func.func @transform_4(%arg0: i32) -> (i32, i32) {
    %c0_i32 = arith.constant 0 : i32
    %c0_i32_0 = arith.constant 0 : i32
    return %arg0, %c0_i32 : i32, i32
  }
  func.func @transform_5(%arg0: i32) -> (i32, i32, i32) {
    %c0_i32 = arith.constant 0 : i32
    %c0_i32_0 = arith.constant 0 : i32
    %c0_i32_1 = arith.constant 0 : i32
    return %arg0, %c0_i32, %c0_i32_0 : i32, i32, i32
  }
}

module attributes {stable_mosaic.version = 11 : i64} {
  func.func @bn_residual_relu_stats_kernel(%arg0: i32, %arg1: memref<256x128xf32, #tpu.memory_space<vmem>>, %arg2: memref<256x128xf32, #tpu.memory_space<vmem>>, %arg3: memref<1x128xf32, #tpu.memory_space<vmem>>, %arg4: memref<1x128xf32, #tpu.memory_space<vmem>>, %arg5: memref<256x128xf32, #tpu.memory_space<vmem>>, %arg6: memref<1x1x256xf32, #tpu.memory_space<vmem>>) attributes {dimension_semantics = [#tpu.dimension_semantics<parallel>], iteration_bounds = array<i64: 2>, scalar_prefetch = 0 : i64, scratch_operands = 0 : i64, tpu.core_type = #tpu.core_type<tc>, window_params = [{transform_indices = @transform_0, window_bounds = array<i64: 256, 128>}, {transform_indices = @transform_1, window_bounds = array<i64: 256, 128>}, {pipeline_mode = #tpu.pipeline_mode<synchronous>, transform_indices = @transform_2, window_bounds = array<i64: 1, 128>}, {pipeline_mode = #tpu.pipeline_mode<synchronous>, transform_indices = @transform_3, window_bounds = array<i64: 1, 128>}, {transform_indices = @transform_4, window_bounds = array<i64: 256, 128>}, {transform_indices = @transform_5, window_bounds = array<i64: 1, 1, 256>}]} {
    %c0 = arith.constant 0 : index
    %c0_0 = arith.constant 0 : index
    %0 = vector.load %arg2[%c0, %c0_0] : memref<256x128xf32, #tpu.memory_space<vmem>>, vector<256x128xf32>
    %c0_1 = arith.constant 0 : index
    %c0_2 = arith.constant 0 : index
    %1 = vector.load %arg3[%c0_1, %c0_2] : memref<1x128xf32, #tpu.memory_space<vmem>>, vector<1x128xf32>
    %2 = vector.broadcast %1 : vector<1x128xf32> to vector<256x128xf32>
    %3 = arith.mulf %0, %2 : vector<256x128xf32>
    %c0_3 = arith.constant 0 : index
    %c0_4 = arith.constant 0 : index
    %4 = vector.load %arg4[%c0_3, %c0_4] : memref<1x128xf32, #tpu.memory_space<vmem>>, vector<1x128xf32>
    %5 = vector.broadcast %4 : vector<1x128xf32> to vector<256x128xf32>
    %6 = arith.addf %3, %5 : vector<256x128xf32>
    %c0_5 = arith.constant 0 : index
    %c0_6 = arith.constant 0 : index
    %7 = vector.load %arg1[%c0_5, %c0_6] : memref<256x128xf32, #tpu.memory_space<vmem>>, vector<256x128xf32>
    %8 = arith.addf %6, %7 : vector<256x128xf32>
    %cst = arith.constant 0.000000e+00 : f32
    %9 = vector.broadcast %cst : f32 to vector<256x128xf32>
    %10 = arith.maximumf %8, %9 : vector<256x128xf32>
    %c0_7 = arith.constant 0 : index
    %c0_8 = arith.constant 0 : index
    %11 = vector.load %arg5[%c0_7, %c0_8] : memref<256x128xf32, #tpu.memory_space<vmem>>, vector<256x128xf32>
    tpu.vector_store %arg5[%c0_7, %c0_8], %10 {strides = array<i32>} : memref<256x128xf32, #tpu.memory_space<vmem>>, vector<256x128xf32>,
    %cst_9 = arith.constant dense<0.000000e+00> : vector<128xf32>
    %12 = vector.multi_reduction <add>, %10, %cst_9 [0] : vector<256x128xf32> to vector<128xf32>
    %13 = vector.shape_cast %12 : vector<128xf32> to vector<1x128xf32>
    %14 = arith.mulf %10, %10 : vector<256x128xf32>
    %cst_10 = arith.constant dense<0.000000e+00> : vector<128xf32>
    %15 = vector.multi_reduction <add>, %14, %cst_10 [0] : vector<256x128xf32> to vector<128xf32>
    %16 = vector.shape_cast %15 : vector<128xf32> to vector<1x128xf32>
    %17 = tpu.concatenate %13, %16 in 1 : vector<1x128xf32>, vector<1x128xf32> -> vector<1x256xf32>
    %c0_11 = arith.constant 0 : index
    %c0_12 = arith.constant 0 : index
    %c0_13 = arith.constant 0 : index
    %18 = vector.load %arg6[%c0_11, %c0_12, %c0_13] : memref<1x1x256xf32, #tpu.memory_space<vmem>>, vector<1x1x256xf32>
    %19 = vector.shape_cast %18 : vector<1x1x256xf32> to vector<1x256xf32>
    %20 = vector.shape_cast %17 : vector<1x256xf32> to vector<1x1x256xf32>
    tpu.vector_store %arg6[%c0_11, %c0_12, %c0_13], %20 {strides = array<i32>} : memref<1x1x256xf32, #tpu.memory_space<vmem>>, vector<1x1x256xf32>,
    return
  }
  func.func @transform_0(%arg0: i32) -> (i32, i32) {
    %c0_i32 = arith.constant 0 : i32
    %c0_i32_0 = arith.constant 0 : i32
    return %arg0, %c0_i32 : i32, i32
  }
  func.func @transform_1(%arg0: i32) -> (i32, i32) {
    %c0_i32 = arith.constant 0 : i32
    %c0_i32_0 = arith.constant 0 : i32
    return %arg0, %c0_i32 : i32, i32
  }
  func.func @transform_2(%arg0: i32) -> (i32, i32) {
    %c0_i32 = arith.constant 0 : i32
    %c0_i32_0 = arith.constant 0 : i32
    %c0_i32_1 = arith.constant 0 : i32
    return %c0_i32, %c0_i32_0 : i32, i32
  }
  func.func @transform_3(%arg0: i32) -> (i32, i32) {
    %c0_i32 = arith.constant 0 : i32
    %c0_i32_0 = arith.constant 0 : i32
    %c0_i32_1 = arith.constant 0 : i32
    return %c0_i32, %c0_i32_0 : i32, i32
  }
  func.func @transform_4(%arg0: i32) -> (i32, i32) {
    %c0_i32 = arith.constant 0 : i32
    %c0_i32_0 = arith.constant 0 : i32
    return %arg0, %c0_i32 : i32, i32
  }
  func.func @transform_5(%arg0: i32) -> (i32, i32, i32) {
    %c0_i32 = arith.constant 0 : i32
    %c0_i32_0 = arith.constant 0 : i32
    %c0_i32_1 = arith.constant 0 : i32
    return %arg0, %c0_i32, %c0_i32_0 : i32, i32, i32
  }
}

module attributes {stable_mosaic.version = 11 : i64} {
  func.func @affine_kernel(%arg0: i32, %arg1: memref<256x128xf32, #tpu.memory_space<vmem>>, %arg2: memref<1x128xf32, #tpu.memory_space<vmem>>, %arg3: memref<1x128xf32, #tpu.memory_space<vmem>>, %arg4: memref<256x128xf32, #tpu.memory_space<vmem>>) attributes {dimension_semantics = [#tpu.dimension_semantics<parallel>], iteration_bounds = array<i64: 2>, scalar_prefetch = 0 : i64, scratch_operands = 0 : i64, tpu.core_type = #tpu.core_type<tc>, window_params = [{transform_indices = @transform_0, window_bounds = array<i64: 256, 128>}, {pipeline_mode = #tpu.pipeline_mode<synchronous>, transform_indices = @transform_1, window_bounds = array<i64: 1, 128>}, {pipeline_mode = #tpu.pipeline_mode<synchronous>, transform_indices = @transform_2, window_bounds = array<i64: 1, 128>}, {transform_indices = @transform_3, window_bounds = array<i64: 256, 128>}]} {
    %c0 = arith.constant 0 : index
    %c0_0 = arith.constant 0 : index
    %0 = vector.load %arg1[%c0, %c0_0] : memref<256x128xf32, #tpu.memory_space<vmem>>, vector<256x128xf32>
    %c0_1 = arith.constant 0 : index
    %c0_2 = arith.constant 0 : index
    %1 = vector.load %arg2[%c0_1, %c0_2] : memref<1x128xf32, #tpu.memory_space<vmem>>, vector<1x128xf32>
    %2 = vector.broadcast %1 : vector<1x128xf32> to vector<256x128xf32>
    %3 = arith.mulf %0, %2 : vector<256x128xf32>
    %c0_3 = arith.constant 0 : index
    %c0_4 = arith.constant 0 : index
    %4 = vector.load %arg3[%c0_3, %c0_4] : memref<1x128xf32, #tpu.memory_space<vmem>>, vector<1x128xf32>
    %5 = vector.broadcast %4 : vector<1x128xf32> to vector<256x128xf32>
    %6 = arith.addf %3, %5 : vector<256x128xf32>
    %c0_5 = arith.constant 0 : index
    %c0_6 = arith.constant 0 : index
    %7 = vector.load %arg4[%c0_5, %c0_6] : memref<256x128xf32, #tpu.memory_space<vmem>>, vector<256x128xf32>
    tpu.vector_store %arg4[%c0_5, %c0_6], %6 {strides = array<i32>} : memref<256x128xf32, #tpu.memory_space<vmem>>, vector<256x128xf32>,
    return
  }
  func.func @transform_0(%arg0: i32) -> (i32, i32) {
    %c0_i32 = arith.constant 0 : i32
    %c0_i32_0 = arith.constant 0 : i32
    return %arg0, %c0_i32 : i32, i32
  }
  func.func @transform_1(%arg0: i32) -> (i32, i32) {
    %c0_i32 = arith.constant 0 : i32
    %c0_i32_0 = arith.constant 0 : i32
    %c0_i32_1 = arith.constant 0 : i32
    return %c0_i32, %c0_i32_0 : i32, i32
  }
  func.func @transform_2(%arg0: i32) -> (i32, i32) {
    %c0_i32 = arith.constant 0 : i32
    %c0_i32_0 = arith.constant 0 : i32
    %c0_i32_1 = arith.constant 0 : i32
    return %c0_i32, %c0_i32_0 : i32, i32
  }
  func.func @transform_3(%arg0: i32) -> (i32, i32) {
    %c0_i32 = arith.constant 0 : i32
    %c0_i32_0 = arith.constant 0 : i32
    return %arg0, %c0_i32 : i32, i32
  }
}

</mosaic_0001>

<llo_original>
// kernel: bottleneck_forward.5
$region0: #{bottleneck_forward.5}
  #allocation0 [shape = 'u32[]', space=smem, size = 0x4, offset = 0x4, fixed_abs, tag = 'smem constant byte address 0x4 - core index']
  #allocation1 [shape = 'u32[144,128]{1,0:T(1,128)}', space=vmem, size = 0x12000, scoped, tag = 'internal scratch']
  %s0 = inlined_call_operand.vmem [shape: f32[512,128], index: 0, kind: input, shape index: {}]
  %s1 = inlined_call_operand.vmem [shape: bf16[128,128], index: 1, kind: input, shape index: {}]
  %s2 = inlined_call_operand.vmem [shape: f32[512,128], index: 2, kind: output, shape index: {0}]
  %s3 = inlined_call_operand.vmem [shape: f32[2,1,256], index: 3, kind: output, shape index: {1}]
  %4 = xla_tuple %s2, %s3
  %s5 = sld [smem:[#allocation0]]
  $region49: #{bottleneck_forward.5} parent=0
    _
  %s7 = ssub.s32 1, %s5
  %s8 = scalar_select 0, %s7, %s5
  loop: start=0, step=1, limit=4
  $region2: #{bottleneck_forward.5} parent=0 // loop_pre_header
    _
  $region3: #{bottleneck_forward.5} parent=0 // loop_header
    %s10 = sphi 0, %s14
    %p11 = scmp.ge.s32.totalorder %s10, 4
    %s20 = sphi 0, %s22
    %s23 = sphi 0, %s20
    %s24 = sphi 0, %s23
    %s40 = sphi 0, %s24
    %s44 = sphi 0, %s44
    %s46 = sphi 0, %s44
    %s47 = sphi 0, %s46
    %s61 = sphi 0, %s47
    %s67 = sphi 0, %s69
    %s70 = sphi 0, %s67
    %s71 = sphi 0, %s70
    %s87 = sphi 0, %s71
    %s93 = sphi 0, %s95
    %s96 = sphi 0, %s93
    %s97 = sphi 0, %s96
    %s113 = sphi 0, %s97
  $region4: #{bottleneck_forward.5} parent=0 // loop_header_branch
    %13 = sbr.rel (%p11) target = $region8
  $region5: #{bottleneck_forward.5} parent=0 // loop_body
    %s15 = ssub.s32 %s10, 1
    %s16 = ssub.s32 %s10, 2
    %s17 = sadd.s32 %s10, 1
    %s18 = ssub.s32 %s10, %s17
    %p19 = scmp.eq.s32.totalorder %s18, 0
    %s21 = sadd.s32 %s20, 1
    %s22 = scalar_select %p19, %s20, %s21
    %p25 = pneg %p19
    %p26 = scmp.eq.s32.totalorder %s10, 1
    %p27 = por %p25, %p26
    %p28 = scmp.ne.s32.totalorder %s20, %s23
    %p29 = scmp.eq.s32.totalorder %s10, 0
    %p30 = por %p28, %p29
    %p31 = scmp.ne.s32.totalorder %s20, %s23
    %p32 = scmp.eq.s32.totalorder %s15, 1
    %p33 = por %p31, %p32
    %p34 = scmp.ne.s32.totalorder %s23, %s24
    %p35 = scmp.eq.s32.totalorder %s15, 0
    %p36 = por %p34, %p35
    %p37 = scmp.ne.s32.totalorder %s23, %s24
    %p38 = scmp.eq.s32.totalorder %s16, 1
    %p39 = por %p37, %p38
    %p41 = scmp.ne.s32.totalorder %s24, %s40
    %p42 = scmp.eq.s32.totalorder %s16, 0
    %p43 = por %p41, %p42
    %s45 = sadd.s32 %s44, 1
    %p48 = scmp.eq.s32.totalorder %s10, 1
    %p49 = scmp.ne.s32.totalorder %s44, %s46
    %p50 = scmp.eq.s32.totalorder %s10, 0
    %p51 = por %p49, %p50
    %p52 = scmp.ne.s32.totalorder %s44, %s46
    %p53 = scmp.eq.s32.totalorder %s15, 1
    %p54 = por %p52, %p53
    %p55 = scmp.ne.s32.totalorder %s46, %s47
    %p56 = scmp.eq.s32.totalorder %s15, 0
    %p57 = por %p55, %p56
    %p58 = scmp.ne.s32.totalorder %s46, %s47
    %p59 = scmp.eq.s32.totalorder %s16, 1
    %p60 = por %p58, %p59
    %p62 = scmp.ne.s32.totalorder %s47, %s61
    %p63 = scmp.eq.s32.totalorder %s16, 0
    %p64 = por %p62, %p63
    %s65 = ssub.s32 %s10, %s17
    %p66 = scmp.eq.s32.totalorder %s65, 0
    %s68 = sadd.s32 %s67, 1
    %s69 = scalar_select %p66, %s67, %s68
    %p72 = pneg %p66
    %p73 = scmp.eq.s32.totalorder %s10, 1
    %p74 = por %p72, %p73
    %p75 = scmp.ne.s32.totalorder %s67, %s70
    %p76 = scmp.eq.s32.totalorder %s10, 0
    %p77 = por %p75, %p76
    %p78 = scmp.ne.s32.totalorder %s67, %s70
    %p79 = scmp.eq.s32.totalorder %s15, 1
    %p80 = por %p78, %p79
    %p81 = scmp.ne.s32.totalorder %s70, %s71
    %p82 = scmp.eq.s32.totalorder %s15, 0
    %p83 = por %p81, %p82
    %p84 = scmp.ne.s32.totalorder %s70, %s71
    %p85 = scmp.eq.s32.totalorder %s16, 1
    %p86 = por %p84, %p85
    %p88 = scmp.ne.s32.totalorder %s71, %s87
    %p89 = scmp.eq.s32.totalorder %s16, 0
    %p90 = por %p88, %p89
    %s91 = ssub.s32 %s10, %s17
    %p92 = scmp.eq.s32.totalorder %s91, 0
    %s94 = sadd.s32 %s93, 1
    %s95 = scalar_select %p92, %s93, %s94
    %p98 = pneg %p92
    %p99 = scmp.eq.s32.totalorder %s10, 1
    %p100 = por %p98, %p99
    %p101 = scmp.ne.s32.totalorder %s93, %s96
    %p102 = scmp.eq.s32.totalorder %s10, 0
    %p103 = por %p101, %p102
    %p104 = scmp.ne.s32.totalorder %s93, %s96
    %p105 = scmp.eq.s32.totalorder %s15, 1
    %p106 = por %p104, %p105
    %p107 = scmp.ne.s32.totalorder %s96, %s97
    %p108 = scmp.eq.s32.totalorder %s15, 0
    %p109 = por %p107, %p108
    %p110 = scmp.ne.s32.totalorder %s96, %s97
    %p111 = scmp.eq.s32.totalorder %s16, 1
    %p112 = por %p110, %p111
    %p114 = scmp.ne.s32.totalorder %s97, %s113
    %p115 = scmp.eq.s32.totalorder %s16, 0
    %p116 = por %p114, %p115
    %p117 = scmp.le.s32.totalorder 1, %s10
    %p118 = scmp.lt.s32.totalorder %s10, 3
    %p119 = pnand %p117, %p118
    %p120 = pneg %p119
    // Predicated region
    $region9: #{bottleneck_forward.5} parent=5 // pred_check
      _
    $region10: #{bottleneck_forward.5} parent=5 // pred_check_branch
      %122 = sbr.rel (%p119) target = $region12
    $region11: #{bottleneck_forward.5} parent=5 // pred_region
      %s123 = ssub.s32 %s10, 1
      // Predicated region
      $region13: #{bottleneck_forward.5} parent=11 // pred_check
        %p124 = pneg %p57
      $region14: #{bottleneck_forward.5} parent=11 // pred_check_branch
        %126 = sbr.rel (%p124) target = $region16
      $region15: #{bottleneck_forward.5} parent=11 // pred_region
        _
      $region16: #{bottleneck_forward.5} parent=11 // pred_fallthru
        _
    $region12: #{bottleneck_forward.5} parent=5 // pred_fallthru
      _
    %p127 = scmp.lt.s32.totalorder %s10, 2
    // Predicated region
    $region17: #{bottleneck_forward.5} parent=5 // pred_check
      %p128 = pneg %p127
    $region18: #{bottleneck_forward.5} parent=5 // pred_check_branch
      %130 = sbr.rel (%p128) target = $region20
    $region19: #{bottleneck_forward.5} parent=5 // pred_region
      // Predicated region
      $region21: #{bottleneck_forward.5} parent=19 // pred_check
        %p131 = pneg %p30
      $region22: #{bottleneck_forward.5} parent=19 // pred_check_branch
        %133 = sbr.rel (%p131) target = $region24
      $region23: #{bottleneck_forward.5} parent=19 // pred_region
        %s134 = smul.u32 32, %s10
        %p135 = scmp.lt.s32.totalorder %s134, 63
        %s136 = scalar_select %p135, %s134, 63
        %s137 = smul.addr %s136, 8
        %s138 = scalar_lea.vmem %s0, %s137
        %s139 = smul.u32 32, %s10
      $region24: #{bottleneck_forward.5} parent=19 // pred_fallthru
        _
    $region20: #{bottleneck_forward.5} parent=5 // pred_fallthru
      _
    %p140 = scmp.le.s32.totalorder 1, %s10
    %p141 = scmp.lt.s32.totalorder %s10, 3
    %p142 = pnand %p140, %p141
    %p143 = pneg %p142
    // Predicated region
    $region25: #{bottleneck_forward.5} parent=5 // pred_check
      _
    $region26: #{bottleneck_forward.5} parent=5 // pred_check_branch
      %145 = sbr.rel (%p142) target = $region28
    $region27: #{bottleneck_forward.5} parent=5 // pred_region
      %s146 = ssub.s32 %s10, 1
      %s147 = smul.u32 32, %s15
      %p148 = scmp.lt.s32.totalorder %s147, 63
      %s149 = scalar_select %p148, %s147, 63
      %s150 = smul.addr %s149, 8
      %s151 = scalar_lea.vmem %s0, %s150
      %p152 = pneg %p36
      %p153 = pneg %p33
      %p154 = pneg %p57
      %p155 = pneg %p54
      %p156 = pneg %p83
      %p157 = pneg %p80
      %s158 = smul.u32 32, %s15
      %p159 = scmp.lt.s32.totalorder %s158, 63
      %s160 = scalar_select %p159, %s158, 63
      %s161 = smul.addr %s160, 8
      %s162 = scalar_lea.vmem %s2, %s161
      %p163 = pneg %p109
      %p164 = pneg %p106
      %p165 = scmp.lt.s32.totalorder %s15, 1
      %s166 = scalar_select %p165, %s15, 1
      %s167 = smul.addr %s166, 2
      %s168 = scalar_lea.vmem %s3, %s167
      %s169 = smul.u32 32, %s15
      %p170 = scmp.lt.s32.totalorder %s169, 63
      %s171 = scalar_select %p170, %s169, 63
      %s172 = smul.addr %s171, 8
      %s173 = scalar_lea.vmem %s0, %s172
      %s174 = smul.u32 32, %s15
      %s175 = smul.u32 32, %s15
      %p176 = scmp.lt.s32.totalorder %s175, 63
      %s177 = scalar_select %p176, %s175, 63
      %s178 = smul.addr %s177, 8
      %s179 = scalar_lea.vmem %s2, %s178
      %s180 = smul.u32 32, %s15
      %p181 = scmp.lt.s32.totalorder %s15, 1
      %s182 = scalar_select %p181, %s15, 1
      %s183 = smul.addr %s182, 2
      %s184 = scalar_lea.vmem %s3, %s183
      %v186 = vld [vmem:[%s173] sm:$0xff]
      %v187 = vld [vmem:[%s173 + $0x8] sm:$0xff]
      %v188 = vld [vmem:[%s173 + $0x10] sm:$0xff]
      %v189 = vld [vmem:[%s173 + $0x18] sm:$0xff]
      %v190 = vld [vmem:[%s173 + $0x20] sm:$0xff]
      %v191 = vld [vmem:[%s173 + $0x28] sm:$0xff]
      %v192 = vld [vmem:[%s173 + $0x30] sm:$0xff]
      %v193 = vld [vmem:[%s173 + $0x38] sm:$0xff]
      %v194 = vld [vmem:[%s173 + $0x40] sm:$0xff]
      %v195 = vld [vmem:[%s173 + $0x48] sm:$0xff]
      %v196 = vld [vmem:[%s173 + $0x50] sm:$0xff]
      %v197 = vld [vmem:[%s173 + $0x58] sm:$0xff]
      %v198 = vld [vmem:[%s173 + $0x60] sm:$0xff]
      %v199 = vld [vmem:[%s173 + $0x68] sm:$0xff]
      %v200 = vld [vmem:[%s173 + $0x70] sm:$0xff]
      %v201 = vld [vmem:[%s173 + $0x78] sm:$0xff]
      %v202 = vld [vmem:[%s173 + $0x80] sm:$0xff]
      %v203 = vld [vmem:[%s173 + $0x88] sm:$0xff]
      %v204 = vld [vmem:[%s173 + $0x90] sm:$0xff]
      %v205 = vld [vmem:[%s173 + $0x98] sm:$0xff]
      %v206 = vld [vmem:[%s173 + $0xa0] sm:$0xff]
      %v207 = vld [vmem:[%s173 + $0xa8] sm:$0xff]
      %v208 = vld [vmem:[%s173 + $0xb0] sm:$0xff]
      %v209 = vld [vmem:[%s173 + $0xb8] sm:$0xff]
      %v210 = vld [vmem:[%s173 + $0xc0] sm:$0xff]
      %v211 = vld [vmem:[%s173 + $0xc8] sm:$0xff]
      %v212 = vld [vmem:[%s173 + $0xd0] sm:$0xff]
      %v213 = vld [vmem:[%s173 + $0xd8] sm:$0xff]
      %v214 = vld [vmem:[%s173 + $0xe0] sm:$0xff]
      %v215 = vld [vmem:[%s173 + $0xe8] sm:$0xff]
      %v216 = vld [vmem:[%s173 + $0xf0] sm:$0xff]
      %v217 = vld [vmem:[%s173 + $0xf8] sm:$0xff]
      %v218 = vpack.c.bf16 %v187, %v186
      %v219 = vpack.c.bf16 %v189, %v188
      %v220 = vpack.c.bf16 %v191, %v190
      %v221 = vpack.c.bf16 %v193, %v192
      %v222 = vpack.c.bf16 %v195, %v194
      %v223 = vpack.c.bf16 %v197, %v196
      %v224 = vpack.c.bf16 %v199, %v198
      %v225 = vpack.c.bf16 %v201, %v200
      %v226 = vpack.c.bf16 %v203, %v202
      %v227 = vpack.c.bf16 %v205, %v204
      %v228 = vpack.c.bf16 %v207, %v206
      %v229 = vpack.c.bf16 %v209, %v208
      %v230 = vpack.c.bf16 %v211, %v210
      %v231 = vpack.c.bf16 %v213, %v212
      %v232 = vpack.c.bf16 %v215, %v214
      %v233 = vpack.c.bf16 %v217, %v216
      %v234 = vld [vmem:[%s1] sm:$0xf]
      %v235 = vld [vmem:[%s1 + $0x4] sm:$0xf]
      %v236 = vld [vmem:[%s1 + $0x8] sm:$0xf]
      %v237 = vld [vmem:[%s1 + $0xc] sm:$0xf]
      %v238 = vld [vmem:[%s1 + $0x10] sm:$0xf]
      %v239 = vld [vmem:[%s1 + $0x14] sm:$0xf]
      %v240 = vld [vmem:[%s1 + $0x18] sm:$0xf]
      %v241 = vld [vmem:[%s1 + $0x1c] sm:$0xf]
      %v242 = vld [vmem:[%s1 + $0x20] sm:$0xf]
      %v243 = vld [vmem:[%s1 + $0x24] sm:$0xf]
      %v244 = vld [vmem:[%s1 + $0x28] sm:$0xf]
      %v245 = vld [vmem:[%s1 + $0x2c] sm:$0xf]
      %v246 = vld [vmem:[%s1 + $0x30] sm:$0xf]
      %v247 = vld [vmem:[%s1 + $0x34] sm:$0xf]
      %v248 = vld [vmem:[%s1 + $0x38] sm:$0xf]
      %v249 = vld [vmem:[%s1 + $0x3c] sm:$0xf]
      %v266 = vunpack.c.l.b16 %v234
      %v267 = vunpack.c.l.b16 %v235
      %v268 = vunpack.c.l.b16 %v236
      %v269 = vunpack.c.l.b16 %v237
      %v270 = vunpack.c.l.b16 %v238
      %v271 = vunpack.c.l.b16 %v239
      %v272 = vunpack.c.l.b16 %v240
      %v273 = vunpack.c.l.b16 %v241
      %v274 = vunpack.c.l.b16 %v242
      %v275 = vunpack.c.l.b16 %v243
      %v276 = vunpack.c.l.b16 %v244
      %v277 = vunpack.c.l.b16 %v245
      %v278 = vunpack.c.l.b16 %v246
      %v279 = vunpack.c.l.b16 %v247
      %v280 = vunpack.c.l.b16 %v248
      %v281 = vunpack.c.l.b16 %v249
      %v282 = vpack.c.b16 %v267, %v266
      %v283 = vpack.c.b16 %v269, %v268
      %v284 = vpack.c.b16 %v271, %v270
      %v285 = vpack.c.b16 %v273, %v272
      %v286 = vpack.c.b16 %v275, %v274
      %v287 = vpack.c.b16 %v277, %v276
      %v288 = vpack.c.b16 %v279, %v278
      %v289 = vpack.c.b16 %v281, %v280
      %298 = vmatprep.subr.bf16.mxu0 0
      %299 = vmatpush1.bf16.msra.mxu0 %v282
      %300 = vmatprep.subr.bf16.mxu0 0
      %301 = vmatpush1.bf16.msra.mxu0 %v283
      %302 = vmatprep.subr.bf16.mxu0 0
      %303 = vmatpush1.bf16.msra.mxu0 %v284
      %304 = vmatprep.subr.bf16.mxu0 0
      %305 = vmatpush1.bf16.msra.mxu0 %v285
      %306 = vmatprep.subr.bf16.mxu0 0
      %307 = vmatpush1.bf16.msra.mxu0 %v286
      %308 = vmatprep.subr.bf16.mxu0 0
      %309 = vmatpush1.bf16.msra.mxu0 %v287
      %310 = vmatprep.subr.bf16.mxu0 0
      %311 = vmatpush1.bf16.msra.mxu0 %v288
      %312 = vmatprep.subr.bf16.mxu0 0
      %313 = vmatpush1.bf16.msra.mxu0 %v289
      %314 = vmatprep.subr.bf16.mxu0 0
      %315 = vmatpush1.bf16.msra.mxu0 0
      %316 = vmatprep.subr.bf16.mxu0 0
      %317 = vmatpush1.bf16.msra.mxu0 0
      %318 = vmatprep.subr.bf16.mxu0 0
      %319 = vmatpush1.bf16.msra.mxu0 0
      %320 = vmatprep.subr.bf16.mxu0 0
      %321 = vmatpush1.bf16.msra.mxu0 0
      %322 = vmatprep.subr.bf16.mxu0 0
      %323 = vmatpush1.bf16.msra.mxu0 0
      %324 = vmatprep.subr.bf16.mxu0 0
      %325 = vmatpush1.bf16.msra.mxu0 0
      %326 = vmatprep.subr.bf16.mxu0 0
      %327 = vmatpush1.bf16.msra.mxu0 0
      %328 = vmatprep.subr.bf16.mxu0 0
      %329 = vmatpush1.bf16.msra.mxu0 0
      %330 = vmatprep.mubr.bf16.mxu0 0
      %331 = vmatmul.mubr.bf16.gmra.mrb[0].mxu0 %v218
      %v332 = vpop.f32.mrb[0].mxu0
      %v333 = vadd.f32 0.0, %v332
      %v334 = vpop.f32.mrb[0].mxu0
      %v335 = vpop.f32.mrb[0].mxu0
      %v336 = vadd.f32 0.0, %v335
      %v337 = vpop.f32.mrb[0].mxu0
      %338 = vmatprep.mubr.bf16.mxu0 0
      %339 = vmatmul.mubr.bf16.gmra.mrb[0].mxu0 %v219
      %v340 = vpop.f32.mrb[0].mxu0
      %v341 = vadd.f32 0.0, %v340
      %v342 = vpop.f32.mrb[0].mxu0
      %v343 = vpop.f32.mrb[0].mxu0
      %v344 = vadd.f32 0.0, %v343
      %v345 = vpop.f32.mrb[0].mxu0
      %346 = vmatprep.mubr.bf16.mxu0 0
      %347 = vmatmul.mubr.bf16.gmra.mrb[0].mxu0 %v220
      %v348 = vpop.f32.mrb[0].mxu0
      %v349 = vadd.f32 0.0, %v348
      %v350 = vpop.f32.mrb[0].mxu0
      %v351 = vpop.f32.mrb[0].mxu0
      %v352 = vadd.f32 0.0, %v351
      %v353 = vpop.f32.mrb[0].mxu0
      %354 = vmatprep.mubr.bf16.mxu0 0
      %355 = vmatmul.mubr.bf16.gmra.mrb[0].mxu0 %v221
      %v356 = vpop.f32.mrb[0].mxu0
      %v357 = vadd.f32 0.0, %v356
      %v358 = vpop.f32.mrb[0].mxu0
      %v359 = vpop.f32.mrb[0].mxu0
      %v360 = vadd.f32 0.0, %v359
      %v361 = vpop.f32.mrb[0].mxu0
      %362 = vmatprep.mubr.bf16.mxu0 0
      %363 = vmatmul.mubr.bf16.gmra.mrb[0].mxu0 %v222
      %v364 = vpop.f32.mrb[0].mxu0
      %v365 = vadd.f32 0.0, %v364
      %v366 = vpop.f32.mrb[0].mxu0
      %v367 = vpop.f32.mrb[0].mxu0
      %v368 = vadd.f32 0.0, %v367
      %v369 = vpop.f32.mrb[0].mxu0
      %370 = vmatprep.mubr.bf16.mxu0 0
      %371 = vmatmul.mubr.bf16.gmra.mrb[0].mxu0 %v223
      %v372 = vpop.f32.mrb[0].mxu0
      %v373 = vadd.f32 0.0, %v372
      %v374 = vpop.f32.mrb[0].mxu0
      %v375 = vpop.f32.mrb[0].mxu0
      %v376 = vadd.f32 0.0, %v375
      %v377 = vpop.f32.mrb[0].mxu0
      %378 = vmatprep.mubr.bf16.mxu0 0
      %379 = vmatmul.mubr.bf16.gmra.mrb[0].mxu0 %v224
      %v380 = vpop.f32.mrb[0].mxu0
      %v381 = vadd.f32 0.0, %v380
      %v382 = vpop.f32.mrb[0].mxu0
      %v383 = vpop.f32.mrb[0].mxu0
      %v384 = vadd.f32 0.0, %v383
      %v385 = vpop.f32.mrb[0].mxu0
      %386 = vmatprep.mubr.bf16.mxu0 0
      %387 = vmatmul.mubr.bf16.gmra.mrb[0].mxu0 %v225
      %v388 = vpop.f32.mrb[0].mxu0
      %v389 = vadd.f32 0.0, %v388
      %v390 = vpop.f32.mrb[0].mxu0
      %v391 = vpop.f32.mrb[0].mxu0
      %v392 = vadd.f32 0.0, %v391
      %v393 = vpop.f32.mrb[0].mxu0
      %394 = vmatprep.mubr.bf16.mxu0 0
      %395 = vmatmul.mubr.bf16.gmra.mrb[0].mxu0 %v226
      %v396 = vpop.f32.mrb[0].mxu0
      %v397 = vadd.f32 0.0, %v396
      %v398 = vpop.f32.mrb[0].mxu0
      %v399 = vpop.f32.mrb[0].mxu0
      %v400 = vadd.f32 0.0, %v399
      %v401 = vpop.f32.mrb[0].mxu0
      %402 = vmatprep.mubr.bf16.mxu0 0
      %403 = vmatmul.mubr.bf16.gmra.mrb[0].mxu0 %v227
      %v404 = vpop.f32.mrb[0].mxu0
      %v405 = vadd.f32 0.0, %v404
      %v406 = vpop.f32.mrb[0].mxu0
      %v407 = vpop.f32.mrb[0].mxu0
      %v408 = vadd.f32 0.0, %v407
      %v409 = vpop.f32.mrb[0].mxu0
      %410 = vmatprep.mubr.bf16.mxu0 0
      %411 = vmatmul.mubr.bf16.gmra.mrb[0].mxu0 %v228
      %v412 = vpop.f32.mrb[0].mxu0
      %v413 = vadd.f32 0.0, %v412
      %v414 = vpop.f32.mrb[0].mxu0
      %v415 = vpop.f32.mrb[0].mxu0
      %v416 = vadd.f32 0.0, %v415
      %v417 = vpop.f32.mrb[0].mxu0
      %418 = vmatprep.mubr.bf16.mxu0 0
      %419 = vmatmul.mubr.bf16.gmra.mrb[0].mxu0 %v229
      %v420 = vpop.f32.mrb[0].mxu0
      %v421 = vadd.f32 0.0, %v420
      %v422 = vpop.f32.mrb[0].mxu0
      %v423 = vpop.f32.mrb[0].mxu0
      %v424 = vadd.f32 0.0, %v423
      %v425 = vpop.f32.mrb[0].mxu0
      %426 = vmatprep.mubr.bf16.mxu0 0
      %427 = vmatmul.mubr.bf16.gmra.mrb[0].mxu0 %v230
      %v428 = vpop.f32.mrb[0].mxu0
      %v429 = vadd.f32 0.0, %v428
      %v430 = vpop.f32.mrb[0].mxu0
      %v431 = vpop.f32.mrb[0].mxu0
      %v432 = vadd.f32 0.0, %v431
      %v433 = vpop.f32.mrb[0].mxu0
      %434 = vmatprep.mubr.bf16.mxu0 0
      %435 = vmatmul.mubr.bf16.gmra.mrb[0].mxu0 %v231
      %v436 = vpop.f32.mrb[0].mxu0
      %v437 = vadd.f32 0.0, %v436
      %v438 = vpop.f32.mrb[0].mxu0
      %v439 = vpop.f32.mrb[0].mxu0
      %v440 = vadd.f32 0.0, %v439
      %v441 = vpop.f32.mrb[0].mxu0
      %442 = vmatprep.mubr.bf16.mxu0 0
      %443 = vmatmul.mubr.bf16.gmra.mrb[0].mxu0 %v232
      %v444 = vpop.f32.mrb[0].mxu0
      %v445 = vadd.f32 0.0, %v444
      %v446 = vpop.f32.mrb[0].mxu0
      %v447 = vpop.f32.mrb[0].mxu0
      %v448 = vadd.f32 0.0, %v447
      %v449 = vpop.f32.mrb[0].mxu0
      %450 = vmatprep.mubr.bf16.mxu0 0
      %451 = vmatmul.mubr.bf16.gmra.mrb[0].mxu0 %v233
      %v452 = vpop.f32.mrb[0].mxu0
      %v453 = vadd.f32 0.0, %v452
      %v454 = vpop.f32.mrb[0].mxu0
      %v455 = vpop.f32.mrb[0].mxu0
      %v456 = vadd.f32 0.0, %v455
      %v457 = vpop.f32.mrb[0].mxu0
      %458 = vdwg.mxu0
      %459 = vst [vmem:[%s179] sm:$0xff] %v333
      %460 = vst [vmem:[%s179 + $0x8] sm:$0xff] %v336
      %461 = vst [vmem:[%s179 + $0x10] sm:$0xff] %v341
      %462 = vst [vmem:[%s179 + $0x18] sm:$0xff] %v344
      %463 = vst [vmem:[%s179 + $0x20] sm:$0xff] %v349
      %464 = vst [vmem:[%s179 + $0x28] sm:$0xff] %v352
      %465 = vst [vmem:[%s179 + $0x30] sm:$0xff] %v357
      %466 = vst [vmem:[%s179 + $0x38] sm:$0xff] %v360
      %467 = vst [vmem:[%s179 + $0x40] sm:$0xff] %v365
      %468 = vst [vmem:[%s179 + $0x48] sm:$0xff] %v368
      %469 = vst [vmem:[%s179 + $0x50] sm:$0xff] %v373
      %470 = vst [vmem:[%s179 + $0x58] sm:$0xff] %v376
      %471 = vst [vmem:[%s179 + $0x60] sm:$0xff] %v381
      %472 = vst [vmem:[%s179 + $0x68] sm:$0xff] %v384
      %473 = vst [vmem:[%s179 + $0x70] sm:$0xff] %v389
      %474 = vst [vmem:[%s179 + $0x78] sm:$0xff] %v392
      %475 = vst [vmem:[%s179 + $0x80] sm:$0xff] %v397
      %476 = vst [vmem:[%s179 + $0x88] sm:$0xff] %v400
      %477 = vst [vmem:[%s179 + $0x90] sm:$0xff] %v405
      %478 = vst [vmem:[%s179 + $0x98] sm:$0xff] %v408
      %479 = vst [vmem:[%s179 + $0xa0] sm:$0xff] %v413
      %480 = vst [vmem:[%s179 + $0xa8] sm:$0xff] %v416
      %481 = vst [vmem:[%s179 + $0xb0] sm:$0xff] %v421
      %482 = vst [vmem:[%s179 + $0xb8] sm:$0xff] %v424
      %483 = vst [vmem:[%s179 + $0xc0] sm:$0xff] %v429
      %484 = vst [vmem:[%s179 + $0xc8] sm:$0xff] %v432
      %485 = vst [vmem:[%s179 + $0xd0] sm:$0xff] %v437
      %486 = vst [vmem:[%s179 + $0xd8] sm:$0xff] %v440
      %487 = vst [vmem:[%s179 + $0xe0] sm:$0xff] %v445
      %488 = vst [vmem:[%s179 + $0xe8] sm:$0xff] %v448
      %489 = vst [vmem:[%s179 + $0xf0] sm:$0xff] %v453
      %490 = vst [vmem:[%s179 + $0xf8] sm:$0xff] %v456
      %v491 = vadd.f32 %v333, %v336
      %v492 = vadd.f32 %v491, %v341
      %v493 = vadd.f32 %v492, %v344
      %v494 = vadd.f32 %v493, %v349
      %v495 = vadd.f32 %v494, %v352
      %v496 = vadd.f32 %v495, %v357
      %v497 = vadd.f32 %v496, %v360
      %v498 = vadd.f32 %v497, %v365
      %v499 = vadd.f32 %v498, %v368
      %v500 = vadd.f32 %v499, %v373
      %v501 = vadd.f32 %v500, %v376
      %v502 = vadd.f32 %v501, %v381
      %v503 = vadd.f32 %v502, %v384
      %v504 = vadd.f32 %v503, %v389
      %v505 = vadd.f32 %v504, %v392
      %v506 = vadd.f32 %v505, %v397
      %v507 = vadd.f32 %v506, %v400
      %v508 = vadd.f32 %v507, %v405
      %v509 = vadd.f32 %v508, %v408
      %v510 = vadd.f32 %v509, %v413
      %v511 = vadd.f32 %v510, %v416
      %v512 = vadd.f32 %v511, %v421
      %v513 = vadd.f32 %v512, %v424
      %v514 = vadd.f32 %v513, %v429
      %v515 = vadd.f32 %v514, %v432
      %v516 = vadd.f32 %v515, %v437
      %v517 = vadd.f32 %v516, %v440
      %v518 = vadd.f32 %v517, %v445
      %v519 = vadd.f32 %v518, %v448
      %v520 = vadd.f32 %v519, %v453
      %v521 = vadd.f32 %v520, %v456
      %v522 = vrot.slane %v521, 4
      %v523 = vadd.f32 %v521, %v522
      %v524 = vrot.slane %v523, 2
      %v525 = vadd.f32 %v523, %v524
      %v526 = vrot.slane %v525, 1
      %v527 = vadd.f32 %v525, %v526
      %v528 = vmul.f32 %v333, %v333
      %v529 = vmul.f32 %v336, %v336
      %v530 = vmul.f32 %v341, %v341
      %v531 = vmul.f32 %v344, %v344
      %v532 = vmul.f32 %v349, %v349
      %v533 = vmul.f32 %v352, %v352
      %v534 = vmul.f32 %v357, %v357
      %v535 = vmul.f32 %v360, %v360
      %v536 = vmul.f32 %v365, %v365
      %v537 = vmul.f32 %v368, %v368
      %v538 = vmul.f32 %v373, %v373
      %v539 = vmul.f32 %v376, %v376
      %v540 = vmul.f32 %v381, %v381
      %v541 = vmul.f32 %v384, %v384
      %v542 = vmul.f32 %v389, %v389
      %v543 = vmul.f32 %v392, %v392
      %v544 = vmul.f32 %v397, %v397
      %v545 = vmul.f32 %v400, %v400
      %v546 = vmul.f32 %v405, %v405
      %v547 = vmul.f32 %v408, %v408
      %v548 = vmul.f32 %v413, %v413
      %v549 = vmul.f32 %v416, %v416
      %v550 = vmul.f32 %v421, %v421
      %v551 = vmul.f32 %v424, %v424
      %v552 = vmul.f32 %v429, %v429
      %v553 = vmul.f32 %v432, %v432
      %v554 = vmul.f32 %v437, %v437
      %v555 = vmul.f32 %v440, %v440
      %v556 = vmul.f32 %v445, %v445
      %v557 = vmul.f32 %v448, %v448
      %v558 = vmul.f32 %v453, %v453
      %v559 = vmul.f32 %v456, %v456
      %v560 = vadd.f32 %v528, %v529
      %v561 = vadd.f32 %v560, %v530
      %v562 = vadd.f32 %v561, %v531
      %v563 = vadd.f32 %v562, %v532
      %v564 = vadd.f32 %v563, %v533
      %v565 = vadd.f32 %v564, %v534
      %v566 = vadd.f32 %v565, %v535
      %v567 = vadd.f32 %v566, %v536
      %v568 = vadd.f32 %v567, %v537
      %v569 = vadd.f32 %v568, %v538
      %v570 = vadd.f32 %v569, %v539
      %v571 = vadd.f32 %v570, %v540
      %v572 = vadd.f32 %v571, %v541
      %v573 = vadd.f32 %v572, %v542
      %v574 = vadd.f32 %v573, %v543
      %v575 = vadd.f32 %v574, %v544
      %v576 = vadd.f32 %v575, %v545
      %v577 = vadd.f32 %v576, %v546
      %v578 = vadd.f32 %v577, %v547
      %v579 = vadd.f32 %v578, %v548
      %v580 = vadd.f32 %v579, %v549
      %v581 = vadd.f32 %v580, %v550
      %v582 = vadd.f32 %v581, %v551
      %v583 = vadd.f32 %v582, %v552
      %v584 = vadd.f32 %v583, %v553
      %v585 = vadd.f32 %v584, %v554
      %v586 = vadd.f32 %v585, %v555
      %v587 = vadd.f32 %v586, %v556
      %v588 = vadd.f32 %v587, %v557
      %v589 = vadd.f32 %v588, %v558
      %v590 = vadd.f32 %v589, %v559
      %v591 = vrot.slane %v590, 4
      %v592 = vadd.f32 %v590, %v591
      %v593 = vrot.slane %v592, 2
      %v594 = vadd.f32 %v592, %v593
      %v595 = vrot.slane %v594, 1
      %v596 = vadd.f32 %v594, %v595
      %v599 = vcombine.low %v527, %v596
      %v601 = vunpack.c.l.s4 1966171168
      %v602 = vunpack.c.0.s8 %v601
      %v603 = vlaneseq
      %v604 = vshrl.u32 %v603, 7
      %v605 = vsub.s32 %v602, %v604
      %v606 = vrot.slane %v599, %v605
      %v608 = vunpack.c.l.s4 1966171168
      %v609 = vunpack.c.0.s8 %v608
      %v610 = vlaneseq
      %v611 = vshrl.u32 %v610, 7
      %v612 = vsub.s32 %v609, %v611
      %v613 = vrot.slane %v606, %v612
      %v615 = vlaneseq
      %vm616 = vcmp.ge.s32.totalorder %v615, 0
      %vm617 = vcmp.lt.s32.totalorder %v615, 256
      %vm618 = vmand %vm616, %vm617
      %619 = vst.msk [vmem:[%s184] sm:$0x3] %vm618, %v613
      %s620 = smul.u32 32, %s15
      %p621 = scmp.lt.s32.totalorder %s620, 63
      %s622 = scalar_select %p621, %s620, 63
      %s623 = smul.addr %s622, 8
      %s624 = scalar_lea.vmem %s2, %s623
      %p625 = scmp.lt.s32.totalorder %s15, 1
      %s626 = scalar_select %p625, %s15, 1
      %s627 = smul.addr %s626, 2
      %s628 = scalar_lea.vmem %s3, %s627
      // Predicated region
      $region29: #{bottleneck_forward.5} parent=27 // pred_check
        %p629 = pneg %p80
      $region30: #{bottleneck_forward.5} parent=27 // pred_check_branch
        %631 = sbr.rel (%p629) target = $region32
      $region31: #{bottleneck_forward.5} parent=27 // pred_region
        %s632 = smul.u32 32, %s15
      $region32: #{bottleneck_forward.5} parent=27 // pred_fallthru
        _
      // Predicated region
      $region33: #{bottleneck_forward.5} parent=27 // pred_check
        %p633 = pneg %p106
      $region34: #{bottleneck_forward.5} parent=27 // pred_check_branch
        %635 = sbr.rel (%p633) target = $region36
      $region35: #{bottleneck_forward.5} parent=27 // pred_region
        _
      $region36: #{bottleneck_forward.5} parent=27 // pred_fallthru
        _
    $region28: #{bottleneck_forward.5} parent=5 // pred_fallthru
      _
    %p636 = scmp.le.s32.totalorder 2, %s10
    // Predicated region
    $region37: #{bottleneck_forward.5} parent=5 // pred_check
      %p637 = pneg %p636
    $region38: #{bottleneck_forward.5} parent=5 // pred_check_branch
      %639 = sbr.rel (%p637) target = $region40
    $region39: #{bottleneck_forward.5} parent=5 // pred_region
      %s640 = ssub.s32 %s10, 2
      // Predicated region
      $region41: #{bottleneck_forward.5} parent=39 // pred_check
        %p641 = pneg %p86
      $region42: #{bottleneck_forward.5} parent=39 // pred_check_branch
        %643 = sbr.rel (%p641) target = $region44
      $region43: #{bottleneck_forward.5} parent=39 // pred_region
        %s644 = smul.u32 32, %s16
        %p645 = scmp.lt.s32.totalorder %s644, 63
        %s646 = scalar_select %p645, %s644, 63
        %s647 = smul.addr %s646, 8
        %s648 = scalar_lea.vmem %s2, %s647
      $region44: #{bottleneck_forward.5} parent=39 // pred_fallthru
        _
      // Predicated region
      $region45: #{bottleneck_forward.5} parent=39 // pred_check
        %p649 = pneg %p112
      $region46: #{bottleneck_forward.5} parent=39 // pred_check_branch
        %651 = sbr.rel (%p649) target = $region48
      $region47: #{bottleneck_forward.5} parent=39 // pred_region
        %p652 = scmp.lt.s32.totalorder %s16, 1
        %s653 = scalar_select %p652, %s16, 1
        %s654 = smul.addr %s653, 2
        %s655 = scalar_lea.vmem %s3, %s654
      $region48: #{bottleneck_forward.5} parent=39 // pred_fallthru
        _
    $region40: #{bottleneck_forward.5} parent=5 // pred_fallthru
      _
  $region6: #{bottleneck_forward.5} parent=0 // loop_footer
    %s14 = sadd.s32 1, %s10
  $region7: #{bottleneck_forward.5} parent=0 // loop_footer_branch
    %9 = sbr.rel target = $region3
  $region8: #{bottleneck_forward.5} parent=0 // loop_exit
    _

// kernel: bottleneck_forward.7
$region0: #{bottleneck_forward.7}
  #allocation0 [shape = 'u32[]', space=smem, size = 0x4, offset = 0x4, fixed_abs, tag = 'smem constant byte address 0x4 - core index']
  #allocation1 [shape = 'u32[144,128]{1,0:T(1,128)}', space=vmem, size = 0x12000, scoped, tag = 'internal scratch']
  %s0 = inlined_call_operand.vmem [shape: f32[512,128], index: 0, kind: input, shape index: {}]
  %s1 = inlined_call_operand.vmem [shape: f32[1,128], index: 1, kind: input, shape index: {}]
  %s2 = inlined_call_operand.vmem [shape: f32[1,128], index: 2, kind: input, shape index: {}]
  %s3 = inlined_call_operand.vmem [shape: bf16[128,128], index: 3, kind: input, shape index: {}]
  %s4 = inlined_call_operand.vmem [shape: f32[512,128], index: 4, kind: output, shape index: {0}]
  %s5 = inlined_call_operand.vmem [shape: f32[2,1,256], index: 5, kind: output, shape index: {1}]
  %6 = xla_tuple %s4, %s5
  %s7 = sld [smem:[#allocation0]]
  $region57: #{bottleneck_forward.7} parent=0
    _
  %s9 = ssub.s32 1, %s7
  %s10 = scalar_select 0, %s9, %s7
  loop: start=0, step=1, limit=4
  $region2: #{bottleneck_forward.7} parent=0 // loop_pre_header
    _
  $region3: #{bottleneck_forward.7} parent=0 // loop_header
    %s12 = sphi 0, %s16
    %p13 = scmp.ge.s32.totalorder %s12, 4
    %s22 = sphi 0, %s24
    %s25 = sphi 0, %s22
    %s26 = sphi 0, %s25
    %s42 = sphi 0, %s26
    %s46 = sphi 0, %s46
    %s48 = sphi 0, %s46
    %s49 = sphi 0, %s48
    %s63 = sphi 0, %s49
    %s67 = sphi 0, %s67
    %s69 = sphi 0, %s67
    %s70 = sphi 0, %s69
    %s84 = sphi 0, %s70
    %s88 = sphi 0, %s88
    %s90 = sphi 0, %s88
    %s91 = sphi 0, %s90
    %s105 = sphi 0, %s91
    %s111 = sphi 0, %s113
    %s114 = sphi 0, %s111
    %s115 = sphi 0, %s114
    %s131 = sphi 0, %s115
    %s137 = sphi 0, %s139
    %s140 = sphi 0, %s137
    %s141 = sphi 0, %s140
    %s157 = sphi 0, %s141
  $region4: #{bottleneck_forward.7} parent=0 // loop_header_branch
    %15 = sbr.rel (%p13) target = $region8
  $region5: #{bottleneck_forward.7} parent=0 // loop_body
    %s17 = ssub.s32 %s12, 1
    %s18 = ssub.s32 %s12, 2
    %s19 = sadd.s32 %s12, 1
    %s20 = ssub.s32 %s12, %s19
    %p21 = scmp.eq.s32.totalorder %s20, 0
    %s23 = sadd.s32 %s22, 1
    %s24 = scalar_select %p21, %s22, %s23
    %p27 = pneg %p21
    %p28 = scmp.eq.s32.totalorder %s12, 1
    %p29 = por %p27, %p28
    %p30 = scmp.ne.s32.totalorder %s22, %s25
    %p31 = scmp.eq.s32.totalorder %s12, 0
    %p32 = por %p30, %p31
    %p33 = scmp.ne.s32.totalorder %s22, %s25
    %p34 = scmp.eq.s32.totalorder %s17, 1
    %p35 = por %p33, %p34
    %p36 = scmp.ne.s32.totalorder %s25, %s26
    %p37 = scmp.eq.s32.totalorder %s17, 0
    %p38 = por %p36, %p37
    %p39 = scmp.ne.s32.totalorder %s25, %s26
    %p40 = scmp.eq.s32.totalorder %s18, 1
    %p41 = por %p39, %p40
    %p43 = scmp.ne.s32.totalorder %s26, %s42
    %p44 = scmp.eq.s32.totalorder %s18, 0
    %p45 = por %p43, %p44
    %s47 = sadd.s32 %s46, 1
    %p50 = scmp.eq.s32.totalorder %s12, 1
    %p51 = scmp.ne.s32.totalorder %s46, %s48
    %p52 = scmp.eq.s32.totalorder %s12, 0
    %p53 = por %p51, %p52
    %p54 = scmp.ne.s32.totalorder %s46, %s48
    %p55 = scmp.eq.s32.totalorder %s17, 1
    %p56 = por %p54, %p55
    %p57 = scmp.ne.s32.totalorder %s48, %s49
    %p58 = scmp.eq.s32.totalorder %s17, 0
    %p59 = por %p57, %p58
    %p60 = scmp.ne.s32.totalorder %s48, %s49
    %p61 = scmp.eq.s32.totalorder %s18, 1
    %p62 = por %p60, %p61
    %p64 = scmp.ne.s32.totalorder %s49, %s63
    %p65 = scmp.eq.s32.totalorder %s18, 0
    %p66 = por %p64, %p65
    %s68 = sadd.s32 %s67, 1
    %p71 = scmp.eq.s32.totalorder %s12, 1
    %p72 = scmp.ne.s32.totalorder %s67, %s69
    %p73 = scmp.eq.s32.totalorder %s12, 0
    %p74 = por %p72, %p73
    %p75 = scmp.ne.s32.totalorder %s67, %s69
    %p76 = scmp.eq.s32.totalorder %s17, 1
    %p77 = por %p75, %p76
    %p78 = scmp.ne.s32.totalorder %s69, %s70
    %p79 = scmp.eq.s32.totalorder %s17, 0
    %p80 = por %p78, %p79
    %p81 = scmp.ne.s32.totalorder %s69, %s70
    %p82 = scmp.eq.s32.totalorder %s18, 1
    %p83 = por %p81, %p82
    %p85 = scmp.ne.s32.totalorder %s70, %s84
    %p86 = scmp.eq.s32.totalorder %s18, 0
    %p87 = por %p85, %p86
    %s89 = sadd.s32 %s88, 1
    %p92 = scmp.eq.s32.totalorder %s12, 1
    %p93 = scmp.ne.s32.totalorder %s88, %s90
    %p94 = scmp.eq.s32.totalorder %s12, 0
    %p95 = por %p93, %p94
    %p96 = scmp.ne.s32.totalorder %s88, %s90
    %p97 = scmp.eq.s32.totalorder %s17, 1
    %p98 = por %p96, %p97
    %p99 = scmp.ne.s32.totalorder %s90, %s91
    %p100 = scmp.eq.s32.totalorder %s17, 0
    %p101 = por %p99, %p100
    %p102 = scmp.ne.s32.totalorder %s90, %s91
    %p103 = scmp.eq.s32.totalorder %s18, 1
    %p104 = por %p102, %p103
    %p106 = scmp.ne.s32.totalorder %s91, %s105
    %p107 = scmp.eq.s32.totalorder %s18, 0
    %p108 = por %p106, %p107
    %s109 = ssub.s32 %s12, %s19
    %p110 = scmp.eq.s32.totalorder %s109, 0
    %s112 = sadd.s32 %s111, 1
    %s113 = scalar_select %p110, %s111, %s112
    %p116 = pneg %p110
    %p117 = scmp.eq.s32.totalorder %s12, 1
    %p118 = por %p116, %p117
    %p119 = scmp.ne.s32.totalorder %s111, %s114
    %p120 = scmp.eq.s32.totalorder %s12, 0
    %p121 = por %p119, %p120
    %p122 = scmp.ne.s32.totalorder %s111, %s114
    %p123 = scmp.eq.s32.totalorder %s17, 1
    %p124 = por %p122, %p123
    %p125 = scmp.ne.s32.totalorder %s114, %s115
    %p126 = scmp.eq.s32.totalorder %s17, 0
    %p127 = por %p125, %p126
    %p128 = scmp.ne.s32.totalorder %s114, %s115
    %p129 = scmp.eq.s32.totalorder %s18, 1
    %p130 = por %p128, %p129
    %p132 = scmp.ne.s32.totalorder %s115, %s131
    %p133 = scmp.eq.s32.totalorder %s18, 0
    %p134 = por %p132, %p133
    %s135 = ssub.s32 %s12, %s19
    %p136 = scmp.eq.s32.totalorder %s135, 0
    %s138 = sadd.s32 %s137, 1
    %s139 = scalar_select %p136, %s137, %s138
    %p142 = pneg %p136
    %p143 = scmp.eq.s32.totalorder %s12, 1
    %p144 = por %p142, %p143
    %p145 = scmp.ne.s32.totalorder %s137, %s140
    %p146 = scmp.eq.s32.totalorder %s12, 0
    %p147 = por %p145, %p146
    %p148 = scmp.ne.s32.totalorder %s137, %s140
    %p149 = scmp.eq.s32.totalorder %s17, 1
    %p150 = por %p148, %p149
    %p151 = scmp.ne.s32.totalorder %s140, %s141
    %p152 = scmp.eq.s32.totalorder %s17, 0
    %p153 = por %p151, %p152
    %p154 = scmp.ne.s32.totalorder %s140, %s141
    %p155 = scmp.eq.s32.totalorder %s18, 1
    %p156 = por %p154, %p155
    %p158 = scmp.ne.s32.totalorder %s141, %s157
    %p159 = scmp.eq.s32.totalorder %s18, 0
    %p160 = por %p158, %p159
    %p161 = scmp.le.s32.totalorder 1, %s12
    %p162 = scmp.lt.s32.totalorder %s12, 3
    %p163 = pnand %p161, %p162
    %p164 = pneg %p163
    // Predicated region
    $region9: #{bottleneck_forward.7} parent=5 // pred_check
      _
    $region10: #{bottleneck_forward.7} parent=5 // pred_check_branch
      %166 = sbr.rel (%p163) target = $region12
    $region11: #{bottleneck_forward.7} parent=5 // pred_region
      %s167 = ssub.s32 %s12, 1
      // Predicated region
      $region13: #{bottleneck_forward.7} parent=11 // pred_check
        %p168 = pneg %p59
      $region14: #{bottleneck_forward.7} parent=11 // pred_check_branch
        %170 = sbr.rel (%p168) target = $region16
      $region15: #{bottleneck_forward.7} parent=11 // pred_region
        _
      $region16: #{bottleneck_forward.7} parent=11 // pred_fallthru
        _
      // Predicated region
      $region17: #{bottleneck_forward.7} parent=11 // pred_check
        %p171 = pneg %p80
      $region18: #{bottleneck_forward.7} parent=11 // pred_check_branch
        %173 = sbr.rel (%p171) target = $region20
      $region19: #{bottleneck_forward.7} parent=11 // pred_region
        _
      $region20: #{bottleneck_forward.7} parent=11 // pred_fallthru
        _
      // Predicated region
      $region21: #{bottleneck_forward.7} parent=11 // pred_check
        %p174 = pneg %p101
      $region22: #{bottleneck_forward.7} parent=11 // pred_check_branch
        %176 = sbr.rel (%p174) target = $region24
      $region23: #{bottleneck_forward.7} parent=11 // pred_region
        _
      $region24: #{bottleneck_forward.7} parent=11 // pred_fallthru
        _
    $region12: #{bottleneck_forward.7} parent=5 // pred_fallthru
      _
    %p177 = scmp.lt.s32.totalorder %s12, 2
    // Predicated region
    $region25: #{bottleneck_forward.7} parent=5 // pred_check
      %p178 = pneg %p177
    $region26: #{bottleneck_forward.7} parent=5 // pred_check_branch
      %180 = sbr.rel (%p178) target = $region28
    $region27: #{bottleneck_forward.7} parent=5 // pred_region
      // Predicated region
      $region29: #{bottleneck_forward.7} parent=27 // pred_check
        %p181 = pneg %p32
      $region30: #{bottleneck_forward.7} parent=27 // pred_check_branch
        %183 = sbr.rel (%p181) target = $region32
      $region31: #{bottleneck_forward.7} parent=27 // pred_region
        %s184 = smul.u32 32, %s12
        %p185 = scmp.lt.s32.totalorder %s184, 63
        %s186 = scalar_select %p185, %s184, 63
        %s187 = smul.addr %s186, 8
        %s188 = scalar_lea.vmem %s0, %s187
        %s189 = smul.u32 32, %s12
      $region32: #{bottleneck_forward.7} parent=27 // pred_fallthru
        _
    $region28: #{bottleneck_forward.7} parent=5 // pred_fallthru
      _
    %p190 = scmp.le.s32.totalorder 1, %s12
    %p191 = scmp.lt.s32.totalorder %s12, 3
    %p192 = pnand %p190, %p191
    %p193 = pneg %p192
    // Predicated region
    $region33: #{bottleneck_forward.7} parent=5 // pred_check
      _
    $region34: #{bottleneck_forward.7} parent=5 // pred_check_branch
      %195 = sbr.rel (%p192) target = $region36
    $region35: #{bottleneck_forward.7} parent=5 // pred_region
      %s196 = ssub.s32 %s12, 1
      %s197 = smul.u32 32, %s17
      %p198 = scmp.lt.s32.totalorder %s197, 63
      %s199 = scalar_select %p198, %s197, 63
      %s200 = smul.addr %s199, 8
      %s201 = scalar_lea.vmem %s0, %s200
      %p202 = pneg %p38
      %p203 = pneg %p35
      %p204 = pneg %p59
      %p205 = pneg %p56
      %p206 = pneg %p80
      %p207 = pneg %p77
      %p208 = pneg %p101
      %p209 = pneg %p98
      %p210 = pneg %p127
      %p211 = pneg %p124
      %s212 = smul.u32 32, %s17
      %p213 = scmp.lt.s32.totalorder %s212, 63
      %s214 = scalar_select %p213, %s212, 63
      %s215 = smul.addr %s214, 8
      %s216 = scalar_lea.vmem %s4, %s215
      %p217 = pneg %p153
      %p218 = pneg %p150
      %p219 = scmp.lt.s32.totalorder %s17, 1
      %s220 = scalar_select %p219, %s17, 1
      %s221 = smul.addr %s220, 2
      %s222 = scalar_lea.vmem %s5, %s221
      %s223 = smul.u32 32, %s17
      %p224 = scmp.lt.s32.totalorder %s223, 63
      %s225 = scalar_select %p224, %s223, 63
      %s226 = smul.addr %s225, 8
      %s227 = scalar_lea.vmem %s0, %s226
      %s228 = smul.u32 32, %s17
      %s229 = smul.u32 32, %s17
      %p230 = scmp.lt.s32.totalorder %s229, 63
      %s231 = scalar_select %p230, %s229, 63
      %s232 = smul.addr %s231, 8
      %s233 = scalar_lea.vmem %s4, %s232
      %s234 = smul.u32 32, %s17
      %p235 = scmp.lt.s32.totalorder %s17, 1
      %s236 = scalar_select %p235, %s17, 1
      %s237 = smul.addr %s236, 2
      %s238 = scalar_lea.vmem %s5, %s237
      %v240 = vld [vmem:[%s227] sm:$0xff]
      %v241 = vld [vmem:[%s227 + $0x8] sm:$0xff]
      %v242 = vld [vmem:[%s227 + $0x10] sm:$0xff]
      %v243 = vld [vmem:[%s227 + $0x18] sm:$0xff]
      %v244 = vld [vmem:[%s227 + $0x20] sm:$0xff]
      %v245 = vld [vmem:[%s227 + $0x28] sm:$0xff]
      %v246 = vld [vmem:[%s227 + $0x30] sm:$0xff]
      %v247 = vld [vmem:[%s227 + $0x38] sm:$0xff]
      %v248 = vld [vmem:[%s227 + $0x40] sm:$0xff]
      %v249 = vld [vmem:[%s227 + $0x48] sm:$0xff]
      %v250 = vld [vmem:[%s227 + $0x50] sm:$0xff]
      %v251 = vld [vmem:[%s227 + $0x58] sm:$0xff]
      %v252 = vld [vmem:[%s227 + $0x60] sm:$0xff]
      %v253 = vld [vmem:[%s227 + $0x68] sm:$0xff]
      %v254 = vld [vmem:[%s227 + $0x70] sm:$0xff]
      %v255 = vld [vmem:[%s227 + $0x78] sm:$0xff]
      %v256 = vld [vmem:[%s227 + $0x80] sm:$0xff]
      %v257 = vld [vmem:[%s227 + $0x88] sm:$0xff]
      %v258 = vld [vmem:[%s227 + $0x90] sm:$0xff]
      %v259 = vld [vmem:[%s227 + $0x98] sm:$0xff]
      %v260 = vld [vmem:[%s227 + $0xa0] sm:$0xff]
      %v261 = vld [vmem:[%s227 + $0xa8] sm:$0xff]
      %v262 = vld [vmem:[%s227 + $0xb0] sm:$0xff]
      %v263 = vld [vmem:[%s227 + $0xb8] sm:$0xff]
      %v264 = vld [vmem:[%s227 + $0xc0] sm:$0xff]
      %v265 = vld [vmem:[%s227 + $0xc8] sm:$0xff]
      %v266 = vld [vmem:[%s227 + $0xd0] sm:$0xff]
      %v267 = vld [vmem:[%s227 + $0xd8] sm:$0xff]
      %v268 = vld [vmem:[%s227 + $0xe0] sm:$0xff]
      %v269 = vld [vmem:[%s227 + $0xe8] sm:$0xff]
      %v270 = vld [vmem:[%s227 + $0xf0] sm:$0xff]
      %v271 = vld [vmem:[%s227 + $0xf8] sm:$0xff]
      %v272 = vld [vmem:[%s1] sm:$0x1]
      %v274 = vlaneseq
      %v275 = vshrl.u32 %v274, 7
      %v276 = vsub.s32 0, %v275
      %v277 = vrot.slane %v272, %v276
      %v279 = vmul.f32 %v240, %v277
      %v280 = vmul.f32 %v241, %v277
      %v281 = vmul.f32 %v242, %v277
      %v282 = vmul.f32 %v243, %v277
      %v283 = vmul.f32 %v244, %v277
      %v284 = vmul.f32 %v245, %v277
      %v285 = vmul.f32 %v246, %v277
      %v286 = vmul.f32 %v247, %v277
      %v287 = vmul.f32 %v248, %v277
      %v288 = vmul.f32 %v249, %v277
      %v289 = vmul.f32 %v250, %v277
      %v290 = vmul.f32 %v251, %v277
      %v291 = vmul.f32 %v252, %v277
      %v292 = vmul.f32 %v253, %v277
      %v293 = vmul.f32 %v254, %v277
      %v294 = vmul.f32 %v255, %v277
      %v295 = vmul.f32 %v256, %v277
      %v296 = vmul.f32 %v257, %v277
      %v297 = vmul.f32 %v258, %v277
      %v298 = vmul.f32 %v259, %v277
      %v299 = vmul.f32 %v260, %v277
      %v300 = vmul.f32 %v261, %v277
      %v301 = vmul.f32 %v262, %v277
      %v302 = vmul.f32 %v263, %v277
      %v303 = vmul.f32 %v264, %v277
      %v304 = vmul.f32 %v265, %v277
      %v305 = vmul.f32 %v266, %v277
      %v306 = vmul.f32 %v267, %v277
      %v307 = vmul.f32 %v268, %v277
      %v308 = vmul.f32 %v269, %v277
      %v309 = vmul.f32 %v270, %v277
      %v310 = vmul.f32 %v271, %v277
      %v311 = vld [vmem:[%s2] sm:$0x1]
      %v313 = vlaneseq
      %v314 = vshrl.u32 %v313, 7
      %v315 = vsub.s32 0, %v314
      %v316 = vrot.slane %v311, %v315
      %v318 = vadd.f32 %v279, %v316
      %v319 = vadd.f32 %v280, %v316
      %v320 = vadd.f32 %v281, %v316
      %v321 = vadd.f32 %v282, %v316
      %v322 = vadd.f32 %v283, %v316
      %v323 = vadd.f32 %v284, %v316
      %v324 = vadd.f32 %v285, %v316
      %v325 = vadd.f32 %v286, %v316
      %v326 = vadd.f32 %v287, %v316
      %v327 = vadd.f32 %v288, %v316
      %v328 = vadd.f32 %v289, %v316
      %v329 = vadd.f32 %v290, %v316
      %v330 = vadd.f32 %v291, %v316
      %v331 = vadd.f32 %v292, %v316
      %v332 = vadd.f32 %v293, %v316
      %v333 = vadd.f32 %v294, %v316
      %v334 = vadd.f32 %v295, %v316
      %v335 = vadd.f32 %v296, %v316
      %v336 = vadd.f32 %v297, %v316
      %v337 = vadd.f32 %v298, %v316
      %v338 = vadd.f32 %v299, %v316
      %v339 = vadd.f32 %v300, %v316
      %v340 = vadd.f32 %v301, %v316
      %v341 = vadd.f32 %v302, %v316
      %v342 = vadd.f32 %v303, %v316
      %v343 = vadd.f32 %v304, %v316
      %v344 = vadd.f32 %v305, %v316
      %v345 = vadd.f32 %v306, %v316
      %v346 = vadd.f32 %v307, %v316
      %v347 = vadd.f32 %v308, %v316
      %v348 = vadd.f32 %v309, %v316
      %v349 = vadd.f32 %v310, %v316
      %v350 = vmax.f32 %v318, 0.0
      %v351 = vmax.f32 %v319, 0.0
      %v352 = vmax.f32 %v320, 0.0
      %v353 = vmax.f32 %v321, 0.0
      %v354 = vmax.f32 %v322, 0.0
      %v355 = vmax.f32 %v323, 0.0
      %v356 = vmax.f32 %v324, 0.0
      %v357 = vmax.f32 %v325, 0.0
      %v358 = vmax.f32 %v326, 0.0
      %v359 = vmax.f32 %v327, 0.0
      %v360 = vmax.f32 %v328, 0.0
      %v361 = vmax.f32 %v329, 0.0
      %v362 = vmax.f32 %v330, 0.0
      %v363 = vmax.f32 %v331, 0.0
      %v364 = vmax.f32 %v332, 0.0
      %v365 = vmax.f32 %v333, 0.0
      %v366 = vmax.f32 %v334, 0.0
      %v367 = vmax.f32 %v335, 0.0
      %v368 = vmax.f32 %v336, 0.0
      %v369 = vmax.f32 %v337, 0.0
      %v370 = vmax.f32 %v338, 0.0
      %v371 = vmax.f32 %v339, 0.0
      %v372 = vmax.f32 %v340, 0.0
      %v373 = vmax.f32 %v341, 0.0
      %v374 = vmax.f32 %v342, 0.0
      %v375 = vmax.f32 %v343, 0.0
      %v376 = vmax.f32 %v344, 0.0
      %v377 = vmax.f32 %v345, 0.0
      %v378 = vmax.f32 %v346, 0.0
      %v379 = vmax.f32 %v347, 0.0
      %v380 = vmax.f32 %v348, 0.0
      %v381 = vmax.f32 %v349, 0.0
      %v382 = vpack.c.bf16 %v351, %v350
      %v383 = vpack.c.bf16 %v353, %v352
      %v384 = vpack.c.bf16 %v355, %v354
      %v385 = vpack.c.bf16 %v357, %v356
      %v386 = vpack.c.bf16 %v359, %v358
      %v387 = vpack.c.bf16 %v361, %v360
      %v388 = vpack.c.bf16 %v363, %v362
      %v389 = vpack.c.bf16 %v365, %v364
      %v390 = vpack.c.bf16 %v367, %v366
      %v391 = vpack.c.bf16 %v369, %v368
      %v392 = vpack.c.bf16 %v371, %v370
      %v393 = vpack.c.bf16 %v373, %v372
      %v394 = vpack.c.bf16 %v375, %v374
      %v395 = vpack.c.bf16 %v377, %v376
      %v396 = vpack.c.bf16 %v379, %v378
      %v397 = vpack.c.bf16 %v381, %v380
      %v398 = vld [vmem:[%s3] sm:$0xf]
      %v399 = vld [vmem:[%s3 + $0x4] sm:$0xf]
      %v400 = vld [vmem:[%s3 + $0x8] sm:$0xf]
      %v401 = vld [vmem:[%s3 + $0xc] sm:$0xf]
      %v402 = vld [vmem:[%s3 + $0x10] sm:$0xf]
      %v403 = vld [vmem:[%s3 + $0x14] sm:$0xf]
      %v404 = vld [vmem:[%s3 + $0x18] sm:$0xf]
      %v405 = vld [vmem:[%s3 + $0x1c] sm:$0xf]
      %v406 = vld [vmem:[%s3 + $0x20] sm:$0xf]
      %v407 = vld [vmem:[%s3 + $0x24] sm:$0xf]
      %v408 = vld [vmem:[%s3 + $0x28] sm:$0xf]
      %v409 = vld [vmem:[%s3 + $0x2c] sm:$0xf]
      %v410 = vld [vmem:[%s3 + $0x30] sm:$0xf]
      %v411 = vld [vmem:[%s3 + $0x34] sm:$0xf]
      %v412 = vld [vmem:[%s3 + $0x38] sm:$0xf]
      %v413 = vld [vmem:[%s3 + $0x3c] sm:$0xf]
      %v430 = vunpack.c.l.b16 %v398
      %v431 = vunpack.c.l.b16 %v399
      %v432 = vunpack.c.l.b16 %v400
      %v433 = vunpack.c.l.b16 %v401
      %v434 = vunpack.c.l.b16 %v402
      %v435 = vunpack.c.l.b16 %v403
      %v436 = vunpack.c.l.b16 %v404
      %v437 = vunpack.c.l.b16 %v405
      %v438 = vunpack.c.l.b16 %v406
      %v439 = vunpack.c.l.b16 %v407
      %v440 = vunpack.c.l.b16 %v408
      %v441 = vunpack.c.l.b16 %v409
      %v442 = vunpack.c.l.b16 %v410
      %v443 = vunpack.c.l.b16 %v411
      %v444 = vunpack.c.l.b16 %v412
      %v445 = vunpack.c.l.b16 %v413
      %v446 = vpack.c.b16 %v431, %v430
      %v447 = vpack.c.b16 %v433, %v432
      %v448 = vpack.c.b16 %v435, %v434
      %v449 = vpack.c.b16 %v437, %v436
      %v450 = vpack.c.b16 %v439, %v438
      %v451 = vpack.c.b16 %v441, %v440
      %v452 = vpack.c.b16 %v443, %v442
      %v453 = vpack.c.b16 %v445, %v444
      %462 = vmatprep.subr.bf16.mxu0 0
      %463 = vmatpush1.bf16.msra.mxu0 %v446
      %464 = vmatprep.subr.bf16.mxu0 0
      %465 = vmatpush1.bf16.msra.mxu0 %v447
      %466 = vmatprep.subr.bf16.mxu0 0
      %467 = vmatpush1.bf16.msra.mxu0 %v448
      %468 = vmatprep.subr.bf16.mxu0 0
      %469 = vmatpush1.bf16.msra.mxu0 %v449
      %470 = vmatprep.subr.bf16.mxu0 0
      %471 = vmatpush1.bf16.msra.mxu0 %v450
      %472 = vmatprep.subr.bf16.mxu0 0
      %473 = vmatpush1.bf16.msra.mxu0 %v451
      %474 = vmatprep.subr.bf16.mxu0 0
      %475 = vmatpush1.bf16.msra.mxu0 %v452
      %476 = vmatprep.subr.bf16.mxu0 0
      %477 = vmatpush1.bf16.msra.mxu0 %v453
      %478 = vmatprep.subr.bf16.mxu0 0
      %479 = vmatpush1.bf16.msra.mxu0 0
      %480 = vmatprep.subr.bf16.mxu0 0
      %481 = vmatpush1.bf16.msra.mxu0 0
      %482 = vmatprep.subr.bf16.mxu0 0
      %483 = vmatpush1.bf16.msra.mxu0 0
      %484 = vmatprep.subr.bf16.mxu0 0
      %485 = vmatpush1.bf16.msra.mxu0 0
      %486 = vmatprep.subr.bf16.mxu0 0
      %487 = vmatpush1.bf16.msra.mxu0 0
      %488 = vmatprep.subr.bf16.mxu0 0
      %489 = vmatpush1.bf16.msra.mxu0 0
      %490 = vmatprep.subr.bf16.mxu0 0
      %491 = vmatpush1.bf16.msra.mxu0 0
      %492 = vmatprep.subr.bf16.mxu0 0
      %493 = vmatpush1.bf16.msra.mxu0 0
      %494 = vmatprep.mubr.bf16.mxu0 0
      %495 = vmatmul.mubr.bf16.gmra.mrb[0].mxu0 %v382
      %v496 = vpop.f32.mrb[0].mxu0
      %v497 = vadd.f32 0.0, %v496
      %v498 = vpop.f32.mrb[0].mxu0
      %v499 = vpop.f32.mrb[0].mxu0
      %v500 = vadd.f32 0.0, %v499
      %v501 = vpop.f32.mrb[0].mxu0
      %502 = vmatprep.mubr.bf16.mxu0 0
      %503 = vmatmul.mubr.bf16.gmra.mrb[0].mxu0 %v383
      %v504 = vpop.f32.mrb[0].mxu0
      %v505 = vadd.f32 0.0, %v504
      %v506 = vpop.f32.mrb[0].mxu0
      %v507 = vpop.f32.mrb[0].mxu0
      %v508 = vadd.f32 0.0, %v507
      %v509 = vpop.f32.mrb[0].mxu0
      %510 = vmatprep.mubr.bf16.mxu0 0
      %511 = vmatmul.mubr.bf16.gmra.mrb[0].mxu0 %v384
      %v512 = vpop.f32.mrb[0].mxu0
      %v513 = vadd.f32 0.0, %v512
      %v514 = vpop.f32.mrb[0].mxu0
      %v515 = vpop.f32.mrb[0].mxu0
      %v516 = vadd.f32 0.0, %v515
      %v517 = vpop.f32.mrb[0].mxu0
      %518 = vmatprep.mubr.bf16.mxu0 0
      %519 = vmatmul.mubr.bf16.gmra.mrb[0].mxu0 %v385
      %v520 = vpop.f32.mrb[0].mxu0
      %v521 = vadd.f32 0.0, %v520
      %v522 = vpop.f32.mrb[0].mxu0
      %v523 = vpop.f32.mrb[0].mxu0
      %v524 = vadd.f32 0.0, %v523
      %v525 = vpop.f32.mrb[0].mxu0
      %526 = vmatprep.mubr.bf16.mxu0 0
      %527 = vmatmul.mubr.bf16.gmra.mrb[0].mxu0 %v386
      %v528 = vpop.f32.mrb[0].mxu0
      %v529 = vadd.f32 0.0, %v528
      %v530 = vpop.f32.mrb[0].mxu0
      %v531 = vpop.f32.mrb[0].mxu0
      %v532 = vadd.f32 0.0, %v531
      %v533 = vpop.f32.mrb[0].mxu0
      %534 = vmatprep.mubr.bf16.mxu0 0
      %535 = vmatmul.mubr.bf16.gmra.mrb[0].mxu0 %v387
      %v536 = vpop.f32.mrb[0].mxu0
      %v537 = vadd.f32 0.0, %v536
      %v538 = vpop.f32.mrb[0].mxu0
      %v539 = vpop.f32.mrb[0].mxu0
      %v540 = vadd.f32 0.0, %v539
      %v541 = vpop.f32.mrb[0].mxu0
      %542 = vmatprep.mubr.bf16.mxu0 0
      %543 = vmatmul.mubr.bf16.gmra.mrb[0].mxu0 %v388
      %v544 = vpop.f32.mrb[0].mxu0
      %v545 = vadd.f32 0.0, %v544
      %v546 = vpop.f32.mrb[0].mxu0
      %v547 = vpop.f32.mrb[0].mxu0
      %v548 = vadd.f32 0.0, %v547
      %v549 = vpop.f32.mrb[0].mxu0
      %550 = vmatprep.mubr.bf16.mxu0 0
      %551 = vmatmul.mubr.bf16.gmra.mrb[0].mxu0 %v389
      %v552 = vpop.f32.mrb[0].mxu0
      %v553 = vadd.f32 0.0, %v552
      %v554 = vpop.f32.mrb[0].mxu0
      %v555 = vpop.f32.mrb[0].mxu0
      %v556 = vadd.f32 0.0, %v555
      %v557 = vpop.f32.mrb[0].mxu0
      %558 = vmatprep.mubr.bf16.mxu0 0
      %559 = vmatmul.mubr.bf16.gmra.mrb[0].mxu0 %v390
      %v560 = vpop.f32.mrb[0].mxu0
      %v561 = vadd.f32 0.0, %v560
      %v562 = vpop.f32.mrb[0].mxu0
      %v563 = vpop.f32.mrb[0].mxu0
      %v564 = vadd.f32 0.0, %v563
      %v565 = vpop.f32.mrb[0].mxu0
      %566 = vmatprep.mubr.bf16.mxu0 0
      %567 = vmatmul.mubr.bf16.gmra.mrb[0].mxu0 %v391
      %v568 = vpop.f32.mrb[0].mxu0
      %v569 = vadd.f32 0.0, %v568
      %v570 = vpop.f32.mrb[0].mxu0
      %v571 = vpop.f32.mrb[0].mxu0
      %v572 = vadd.f32 0.0, %v571
      %v573 = vpop.f32.mrb[0].mxu0
      %574 = vmatprep.mubr.bf16.mxu0 0
      %575 = vmatmul.mubr.bf16.gmra.mrb[0].mxu0 %v392
      %v576 = vpop.f32.mrb[0].mxu0
      %v577 = vadd.f32 0.0, %v576
      %v578 = vpop.f32.mrb[0].mxu0
      %v579 = vpop.f32.mrb[0].mxu0
      %v580 = vadd.f32 0.0, %v579
      %v581 = vpop.f32.mrb[0].mxu0
      %582 = vmatprep.mubr.bf16.mxu0 0
      %583 = vmatmul.mubr.bf16.gmra.mrb[0].mxu0 %v393
      %v584 = vpop.f32.mrb[0].mxu0
      %v585 = vadd.f32 0.0, %v584
      %v586 = vpop.f32.mrb[0].mxu0
      %v587 = vpop.f32.mrb[0].mxu0
      %v588 = vadd.f32 0.0, %v587
      %v589 = vpop.f32.mrb[0].mxu0
      %590 = vmatprep.mubr.bf16.mxu0 0
      %591 = vmatmul.mubr.bf16.gmra.mrb[0].mxu0 %v394
      %v592 = vpop.f32.mrb[0].mxu0
      %v593 = vadd.f32 0.0, %v592
      %v594 = vpop.f32.mrb[0].mxu0
      %v595 = vpop.f32.mrb[0].mxu0
      %v596 = vadd.f32 0.0, %v595
      %v597 = vpop.f32.mrb[0].mxu0
      %598 = vmatprep.mubr.bf16.mxu0 0
      %599 = vmatmul.mubr.bf16.gmra.mrb[0].mxu0 %v395
      %v600 = vpop.f32.mrb[0].mxu0
      %v601 = vadd.f32 0.0, %v600
      %v602 = vpop.f32.mrb[0].mxu0
      %v603 = vpop.f32.mrb[0].mxu0
      %v604 = vadd.f32 0.0, %v603
      %v605 = vpop.f32.mrb[0].mxu0
      %606 = vmatprep.mubr.bf16.mxu0 0
      %607 = vmatmul.mubr.bf16.gmra.mrb[0].mxu0 %v396
      %v608 = vpop.f32.mrb[0].mxu0
      %v609 = vadd.f32 0.0, %v608
      %v610 = vpop.f32.mrb[0].mxu0
      %v611 = vpop.f32.mrb[0].mxu0
      %v612 = vadd.f32 0.0, %v611
      %v613 = vpop.f32.mrb[0].mxu0
      %614 = vmatprep.mubr.bf16.mxu0 0
      %615 = vmatmul.mubr.bf16.gmra.mrb[0].mxu0 %v397
      %v616 = vpop.f32.mrb[0].mxu0
      %v617 = vadd.f32 0.0, %v616
      %v618 = vpop.f32.mrb[0].mxu0
      %v619 = vpop.f32.mrb[0].mxu0
      %v620 = vadd.f32 0.0, %v619
      %v621 = vpop.f32.mrb[0].mxu0
      %622 = vdwg.mxu0
      %623 = vst [vmem:[%s233] sm:$0xff] %v497
      %624 = vst [vmem:[%s233 + $0x8] sm:$0xff] %v500
      %625 = vst [vmem:[%s233 + $0x10] sm:$0xff] %v505
      %626 = vst [vmem:[%s233 + $0x18] sm:$0xff] %v508
      %627 = vst [vmem:[%s233 + $0x20] sm:$0xff] %v513
      %628 = vst [vmem:[%s233 + $0x28] sm:$0xff] %v516
      %629 = vst [vmem:[%s233 + $0x30] sm:$0xff] %v521
      %630 = vst [vmem:[%s233 + $0x38] sm:$0xff] %v524
      %631 = vst [vmem:[%s233 + $0x40] sm:$0xff] %v529
      %632 = vst [vmem:[%s233 + $0x48] sm:$0xff] %v532
      %633 = vst [vmem:[%s233 + $0x50] sm:$0xff] %v537
      %634 = vst [vmem:[%s233 + $0x58] sm:$0xff] %v540
      %635 = vst [vmem:[%s233 + $0x60] sm:$0xff] %v545
      %636 = vst [vmem:[%s233 + $0x68] sm:$0xff] %v548
      %637 = vst [vmem:[%s233 + $0x70] sm:$0xff] %v553
      %638 = vst [vmem:[%s233 + $0x78] sm:$0xff] %v556
      %639 = vst [vmem:[%s233 + $0x80] sm:$0xff] %v561
      %640 = vst [vmem:[%s233 + $0x88] sm:$0xff] %v564
      %641 = vst [vmem:[%s233 + $0x90] sm:$0xff] %v569
      %642 = vst [vmem:[%s233 + $0x98] sm:$0xff] %v572
      %643 = vst [vmem:[%s233 + $0xa0] sm:$0xff] %v577
      %644 = vst [vmem:[%s233 + $0xa8] sm:$0xff] %v580
      %645 = vst [vmem:[%s233 + $0xb0] sm:$0xff] %v585
      %646 = vst [vmem:[%s233 + $0xb8] sm:$0xff] %v588
      %647 = vst [vmem:[%s233 + $0xc0] sm:$0xff] %v593
      %648 = vst [vmem:[%s233 + $0xc8] sm:$0xff] %v596
      %649 = vst [vmem:[%s233 + $0xd0] sm:$0xff] %v601
      %650 = vst [vmem:[%s233 + $0xd8] sm:$0xff] %v604
      %651 = vst [vmem:[%s233 + $0xe0] sm:$0xff] %v609
      %652 = vst [vmem:[%s233 + $0xe8] sm:$0xff] %v612
      %653 = vst [vmem:[%s233 + $0xf0] sm:$0xff] %v617
      %654 = vst [vmem:[%s233 + $0xf8] sm:$0xff] %v620
      %v655 = vadd.f32 %v497, %v500
      %v656 = vadd.f32 %v655, %v505
      %v657 = vadd.f32 %v656, %v508
      %v658 = vadd.f32 %v657, %v513
      %v659 = vadd.f32 %v658, %v516
      %v660 = vadd.f32 %v659, %v521
      %v661 = vadd.f32 %v660, %v524
      %v662 = vadd.f32 %v661, %v529
      %v663 = vadd.f32 %v662, %v532
      %v664 = vadd.f32 %v663, %v537
      %v665 = vadd.f32 %v664, %v540
      %v666 = vadd.f32 %v665, %v545
      %v667 = vadd.f32 %v666, %v548
      %v668 = vadd.f32 %v667, %v553
      %v669 = vadd.f32 %v668, %v556
      %v670 = vadd.f32 %v669, %v561
      %v671 = vadd.f32 %v670, %v564
      %v672 = vadd.f32 %v671, %v569
      %v673 = vadd.f32 %v672, %v572
      %v674 = vadd.f32 %v673, %v577
      %v675 = vadd.f32 %v674, %v580
      %v676 = vadd.f32 %v675, %v585
      %v677 = vadd.f32 %v676, %v588
      %v678 = vadd.f32 %v677, %v593
      %v679 = vadd.f32 %v678, %v596
      %v680 = vadd.f32 %v679, %v601
      %v681 = vadd.f32 %v680, %v604
      %v682 = vadd.f32 %v681, %v609
      %v683 = vadd.f32 %v682, %v612
      %v684 = vadd.f32 %v683, %v617
      %v685 = vadd.f32 %v684, %v620
      %v686 = vrot.slane %v685, 4
      %v687 = vadd.f32 %v685, %v686
      %v688 = vrot.slane %v687, 2
      %v689 = vadd.f32 %v687, %v688
      %v690 = vrot.slane %v689, 1
      %v691 = vadd.f32 %v689, %v690
      %v692 = vmul.f32 %v497, %v497
      %v693 = vmul.f32 %v500, %v500
      %v694 = vmul.f32 %v505, %v505
      %v695 = vmul.f32 %v508, %v508
      %v696 = vmul.f32 %v513, %v513
      %v697 = vmul.f32 %v516, %v516
      %v698 = vmul.f32 %v521, %v521
      %v699 = vmul.f32 %v524, %v524
      %v700 = vmul.f32 %v529, %v529
      %v701 = vmul.f32 %v532, %v532
      %v702 = vmul.f32 %v537, %v537
      %v703 = vmul.f32 %v540, %v540
      %v704 = vmul.f32 %v545, %v545
      %v705 = vmul.f32 %v548, %v548
      %v706 = vmul.f32 %v553, %v553
      %v707 = vmul.f32 %v556, %v556
      %v708 = vmul.f32 %v561, %v561
      %v709 = vmul.f32 %v564, %v564
      %v710 = vmul.f32 %v569, %v569
      %v711 = vmul.f32 %v572, %v572
      %v712 = vmul.f32 %v577, %v577
      %v713 = vmul.f32 %v580, %v580
      %v714 = vmul.f32 %v585, %v585
      %v715 = vmul.f32 %v588, %v588
      %v716 = vmul.f32 %v593, %v593
      %v717 = vmul.f32 %v596, %v596
      %v718 = vmul.f32 %v601, %v601
      %v719 = vmul.f32 %v604, %v604
      %v720 = vmul.f32 %v609, %v609
      %v721 = vmul.f32 %v612, %v612
      %v722 = vmul.f32 %v617, %v617
      %v723 = vmul.f32 %v620, %v620
      %v724 = vadd.f32 %v692, %v693
      %v725 = vadd.f32 %v724, %v694
      %v726 = vadd.f32 %v725, %v695
      %v727 = vadd.f32 %v726, %v696
      %v728 = vadd.f32 %v727, %v697
      %v729 = vadd.f32 %v728, %v698
      %v730 = vadd.f32 %v729, %v699
      %v731 = vadd.f32 %v730, %v700
      %v732 = vadd.f32 %v731, %v701
      %v733 = vadd.f32 %v732, %v702
      %v734 = vadd.f32 %v733, %v703
      %v735 = vadd.f32 %v734, %v704
      %v736 = vadd.f32 %v735, %v705
      %v737 = vadd.f32 %v736, %v706
      %v738 = vadd.f32 %v737, %v707
      %v739 = vadd.f32 %v738, %v708
      %v740 = vadd.f32 %v739, %v709
      %v741 = vadd.f32 %v740, %v710
      %v742 = vadd.f32 %v741, %v711
      %v743 = vadd.f32 %v742, %v712
      %v744 = vadd.f32 %v743, %v713
      %v745 = vadd.f32 %v744, %v714
      %v746 = vadd.f32 %v745, %v715
      %v747 = vadd.f32 %v746, %v716
      %v748 = vadd.f32 %v747, %v717
      %v749 = vadd.f32 %v748, %v718
      %v750 = vadd.f32 %v749, %v719
      %v751 = vadd.f32 %v750, %v720
      %v752 = vadd.f32 %v751, %v721
      %v753 = vadd.f32 %v752, %v722
      %v754 = vadd.f32 %v753, %v723
      %v755 = vrot.slane %v754, 4
      %v756 = vadd.f32 %v754, %v755
      %v757 = vrot.slane %v756, 2
      %v758 = vadd.f32 %v756, %v757
      %v759 = vrot.slane %v758, 1
      %v760 = vadd.f32 %v758, %v759
      %v763 = vcombine.low %v691, %v760
      %v765 = vunpack.c.l.s4 1966171168
      %v766 = vunpack.c.0.s8 %v765
      %v767 = vlaneseq
      %v768 = vshrl.u32 %v767, 7
      %v769 = vsub.s32 %v766, %v768
      %v770 = vrot.slane %v763, %v769
      %v772 = vunpack.c.l.s4 1966171168
      %v773 = vunpack.c.0.s8 %v772
      %v774 = vlaneseq
      %v775 = vshrl.u32 %v774, 7
      %v776 = vsub.s32 %v773, %v775
      %v777 = vrot.slane %v770, %v776
      %v779 = vlaneseq
      %vm780 = vcmp.ge.s32.totalorder %v779, 0
      %vm781 = vcmp.lt.s32.totalorder %v779, 256
      %vm782 = vmand %vm780, %vm781
      %783 = vst.msk [vmem:[%s238] sm:$0x3] %vm782, %v777
      %s784 = smul.u32 32, %s17
      %p785 = scmp.lt.s32.totalorder %s784, 63
      %s786 = scalar_select %p785, %s784, 63
      %s787 = smul.addr %s786, 8
      %s788 = scalar_lea.vmem %s4, %s787
      %p789 = scmp.lt.s32.totalorder %s17, 1
      %s790 = scalar_select %p789, %s17, 1
      %s791 = smul.addr %s790, 2
      %s792 = scalar_lea.vmem %s5, %s791
      // Predicated region
      $region37: #{bottleneck_forward.7} parent=35 // pred_check
        %p793 = pneg %p124
      $region38: #{bottleneck_forward.7} parent=35 // pred_check_branch
        %795 = sbr.rel (%p793) target = $region40
      $region39: #{bottleneck_forward.7} parent=35 // pred_region
        %s796 = smul.u32 32, %s17
      $region40: #{bottleneck_forward.7} parent=35 // pred_fallthru
        _
      // Predicated region
      $region41: #{bottleneck_forward.7} parent=35 // pred_check
        %p797 = pneg %p150
      $region42: #{bottleneck_forward.7} parent=35 // pred_check_branch
        %799 = sbr.rel (%p797) target = $region44
      $region43: #{bottleneck_forward.7} parent=35 // pred_region
        _
      $region44: #{bottleneck_forward.7} parent=35 // pred_fallthru
        _
    $region36: #{bottleneck_forward.7} parent=5 // pred_fallthru
      _
    %p800 = scmp.le.s32.totalorder 2, %s12
    // Predicated region
    $region45: #{bottleneck_forward.7} parent=5 // pred_check
      %p801 = pneg %p800
    $region46: #{bottleneck_forward.7} parent=5 // pred_check_branch
      %803 = sbr.rel (%p801) target = $region48
    $region47: #{bottleneck_forward.7} parent=5 // pred_region
      %s804 = ssub.s32 %s12, 2
      // Predicated region
      $region49: #{bottleneck_forward.7} parent=47 // pred_check
        %p805 = pneg %p130
      $region50: #{bottleneck_forward.7} parent=47 // pred_check_branch
        %807 = sbr.rel (%p805) target = $region52
      $region51: #{bottleneck_forward.7} parent=47 // pred_region
        %s808 = smul.u32 32, %s18
        %p809 = scmp.lt.s32.totalorder %s808, 63
        %s810 = scalar_select %p809, %s808, 63
        %s811 = smul.addr %s810, 8
        %s812 = scalar_lea.vmem %s4, %s811
      $region52: #{bottleneck_forward.7} parent=47 // pred_fallthru
        _
      // Predicated region
      $region53: #{bottleneck_forward.7} parent=47 // pred_check
        %p813 = pneg %p156
      $region54: #{bottleneck_forward.7} parent=47 // pred_check_branch
        %815 = sbr.rel (%p813) target = $region56
      $region55: #{bottleneck_forward.7} parent=47 // pred_region
        %p816 = scmp.lt.s32.totalorder %s18, 1
        %s817 = scalar_select %p816, %s18, 1
        %s818 = smul.addr %s817, 2
        %s819 = scalar_lea.vmem %s5, %s818
      $region56: #{bottleneck_forward.7} parent=47 // pred_fallthru
        _
    $region48: #{bottleneck_forward.7} parent=5 // pred_fallthru
      _
  $region6: #{bottleneck_forward.7} parent=0 // loop_footer
    %s16 = sadd.s32 1, %s12
  $region7: #{bottleneck_forward.7} parent=0 // loop_footer_branch
    %11 = sbr.rel target = $region3
  $region8: #{bottleneck_forward.7} parent=0 // loop_exit
    _

// kernel: bottleneck_forward.9
$region0: #{bottleneck_forward.9}
  #allocation0 [shape = 'u32[]', space=smem, size = 0x4, offset = 0x4, fixed_abs, tag = 'smem constant byte address 0x4 - core index']
  #allocation1 [shape = 'u32[144,128]{1,0:T(1,128)}', space=vmem, size = 0x12000, scoped, tag = 'internal scratch']
  %s0 = inlined_call_operand.vmem [shape: f32[512,128], index: 0, kind: input, shape index: {}]
  %s1 = inlined_call_operand.vmem [shape: f32[1,128], index: 1, kind: input, shape index: {}]
  %s2 = inlined_call_operand.vmem [shape: f32[1,128], index: 2, kind: input, shape index: {}]
  %s3 = inlined_call_operand.vmem [shape: f32[512,128], index: 3, kind: output, shape index: {}]
  %s4 = sld [smem:[#allocation0]]
  $region45: #{bottleneck_forward.9} parent=0
    _
  %s6 = ssub.s32 1, %s4
  %s7 = scalar_select 0, %s6, %s4
  loop: start=0, step=1, limit=4
  $region2: #{bottleneck_forward.9} parent=0 // loop_pre_header
    _
  $region3: #{bottleneck_forward.9} parent=0 // loop_header
    %s9 = sphi 0, %s13
    %p10 = scmp.ge.s32.totalorder %s9, 4
    %s19 = sphi 0, %s21
    %s22 = sphi 0, %s19
    %s23 = sphi 0, %s22
    %s39 = sphi 0, %s23
    %s43 = sphi 0, %s43
    %s45 = sphi 0, %s43
    %s46 = sphi 0, %s45
    %s60 = sphi 0, %s46
    %s64 = sphi 0, %s64
    %s66 = sphi 0, %s64
    %s67 = sphi 0, %s66
    %s81 = sphi 0, %s67
    %s87 = sphi 0, %s89
    %s90 = sphi 0, %s87
    %s91 = sphi 0, %s90
    %s107 = sphi 0, %s91
  $region4: #{bottleneck_forward.9} parent=0 // loop_header_branch
    %12 = sbr.rel (%p10) target = $region8
  $region5: #{bottleneck_forward.9} parent=0 // loop_body
    %s14 = ssub.s32 %s9, 1
    %s15 = ssub.s32 %s9, 2
    %s16 = sadd.s32 %s9, 1
    %s17 = ssub.s32 %s9, %s16
    %p18 = scmp.eq.s32.totalorder %s17, 0
    %s20 = sadd.s32 %s19, 1
    %s21 = scalar_select %p18, %s19, %s20
    %p24 = pneg %p18
    %p25 = scmp.eq.s32.totalorder %s9, 1
    %p26 = por %p24, %p25
    %p27 = scmp.ne.s32.totalorder %s19, %s22
    %p28 = scmp.eq.s32.totalorder %s9, 0
    %p29 = por %p27, %p28
    %p30 = scmp.ne.s32.totalorder %s19, %s22
    %p31 = scmp.eq.s32.totalorder %s14, 1
    %p32 = por %p30, %p31
    %p33 = scmp.ne.s32.totalorder %s22, %s23
    %p34 = scmp.eq.s32.totalorder %s14, 0
    %p35 = por %p33, %p34
    %p36 = scmp.ne.s32.totalorder %s22, %s23
    %p37 = scmp.eq.s32.totalorder %s15, 1
    %p38 = por %p36, %p37
    %p40 = scmp.ne.s32.totalorder %s23, %s39
    %p41 = scmp.eq.s32.totalorder %s15, 0
    %p42 = por %p40, %p41
    %s44 = sadd.s32 %s43, 1
    %p47 = scmp.eq.s32.totalorder %s9, 1
    %p48 = scmp.ne.s32.totalorder %s43, %s45
    %p49 = scmp.eq.s32.totalorder %s9, 0
    %p50 = por %p48, %p49
    %p51 = scmp.ne.s32.totalorder %s43, %s45
    %p52 = scmp.eq.s32.totalorder %s14, 1
    %p53 = por %p51, %p52
    %p54 = scmp.ne.s32.totalorder %s45, %s46
    %p55 = scmp.eq.s32.totalorder %s14, 0
    %p56 = por %p54, %p55
    %p57 = scmp.ne.s32.totalorder %s45, %s46
    %p58 = scmp.eq.s32.totalorder %s15, 1
    %p59 = por %p57, %p58
    %p61 = scmp.ne.s32.totalorder %s46, %s60
    %p62 = scmp.eq.s32.totalorder %s15, 0
    %p63 = por %p61, %p62
    %s65 = sadd.s32 %s64, 1
    %p68 = scmp.eq.s32.totalorder %s9, 1
    %p69 = scmp.ne.s32.totalorder %s64, %s66
    %p70 = scmp.eq.s32.totalorder %s9, 0
    %p71 = por %p69, %p70
    %p72 = scmp.ne.s32.totalorder %s64, %s66
    %p73 = scmp.eq.s32.totalorder %s14, 1
    %p74 = por %p72, %p73
    %p75 = scmp.ne.s32.totalorder %s66, %s67
    %p76 = scmp.eq.s32.totalorder %s14, 0
    %p77 = por %p75, %p76
    %p78 = scmp.ne.s32.totalorder %s66, %s67
    %p79 = scmp.eq.s32.totalorder %s15, 1
    %p80 = por %p78, %p79
    %p82 = scmp.ne.s32.totalorder %s67, %s81
    %p83 = scmp.eq.s32.totalorder %s15, 0
    %p84 = por %p82, %p83
    %s85 = ssub.s32 %s9, %s16
    %p86 = scmp.eq.s32.totalorder %s85, 0
    %s88 = sadd.s32 %s87, 1
    %s89 = scalar_select %p86, %s87, %s88
    %p92 = pneg %p86
    %p93 = scmp.eq.s32.totalorder %s9, 1
    %p94 = por %p92, %p93
    %p95 = scmp.ne.s32.totalorder %s87, %s90
    %p96 = scmp.eq.s32.totalorder %s9, 0
    %p97 = por %p95, %p96
    %p98 = scmp.ne.s32.totalorder %s87, %s90
    %p99 = scmp.eq.s32.totalorder %s14, 1
    %p100 = por %p98, %p99
    %p101 = scmp.ne.s32.totalorder %s90, %s91
    %p102 = scmp.eq.s32.totalorder %s14, 0
    %p103 = por %p101, %p102
    %p104 = scmp.ne.s32.totalorder %s90, %s91
    %p105 = scmp.eq.s32.totalorder %s15, 1
    %p106 = por %p104, %p105
    %p108 = scmp.ne.s32.totalorder %s91, %s107
    %p109 = scmp.eq.s32.totalorder %s15, 0
    %p110 = por %p108, %p109
    %p111 = scmp.le.s32.totalorder 1, %s9
    %p112 = scmp.lt.s32.totalorder %s9, 3
    %p113 = pnand %p111, %p112
    %p114 = pneg %p113
    // Predicated region
    $region9: #{bottleneck_forward.9} parent=5 // pred_check
      _
    $region10: #{bottleneck_forward.9} parent=5 // pred_check_branch
      %116 = sbr.rel (%p113) target = $region12
    $region11: #{bottleneck_forward.9} parent=5 // pred_region
      %s117 = ssub.s32 %s9, 1
      // Predicated region
      $region13: #{bottleneck_forward.9} parent=11 // pred_check
        %p118 = pneg %p56
      $region14: #{bottleneck_forward.9} parent=11 // pred_check_branch
        %120 = sbr.rel (%p118) target = $region16
      $region15: #{bottleneck_forward.9} parent=11 // pred_region
        _
      $region16: #{bottleneck_forward.9} parent=11 // pred_fallthru
        _
      // Predicated region
      $region17: #{bottleneck_forward.9} parent=11 // pred_check
        %p121 = pneg %p77
      $region18: #{bottleneck_forward.9} parent=11 // pred_check_branch
        %123 = sbr.rel (%p121) target = $region20
      $region19: #{bottleneck_forward.9} parent=11 // pred_region
        _
      $region20: #{bottleneck_forward.9} parent=11 // pred_fallthru
        _
    $region12: #{bottleneck_forward.9} parent=5 // pred_fallthru
      _
    %p124 = scmp.lt.s32.totalorder %s9, 2
    // Predicated region
    $region21: #{bottleneck_forward.9} parent=5 // pred_check
      %p125 = pneg %p124
    $region22: #{bottleneck_forward.9} parent=5 // pred_check_branch
      %127 = sbr.rel (%p125) target = $region24
    $region23: #{bottleneck_forward.9} parent=5 // pred_region
      // Predicated region
      $region25: #{bottleneck_forward.9} parent=23 // pred_check
        %p128 = pneg %p29
      $region26: #{bottleneck_forward.9} parent=23 // pred_check_branch
        %130 = sbr.rel (%p128) target = $region28
      $region27: #{bottleneck_forward.9} parent=23 // pred_region
        %s131 = smul.u32 32, %s9
        %p132 = scmp.lt.s32.totalorder %s131, 63
        %s133 = scalar_select %p132, %s131, 63
        %s134 = smul.addr %s133, 8
        %s135 = scalar_lea.vmem %s0, %s134
        %s136 = smul.u32 32, %s9
      $region28: #{bottleneck_forward.9} parent=23 // pred_fallthru
        _
    $region24: #{bottleneck_forward.9} parent=5 // pred_fallthru
      _
    %p137 = scmp.le.s32.totalorder 1, %s9
    %p138 = scmp.lt.s32.totalorder %s9, 3
    %p139 = pnand %p137, %p138
    %p140 = pneg %p139
    // Predicated region
    $region29: #{bottleneck_forward.9} parent=5 // pred_check
      _
    $region30: #{bottleneck_forward.9} parent=5 // pred_check_branch
      %142 = sbr.rel (%p139) target = $region32
    $region31: #{bottleneck_forward.9} parent=5 // pred_region
      %s143 = ssub.s32 %s9, 1
      %s144 = smul.u32 32, %s14
      %p145 = scmp.lt.s32.totalorder %s144, 63
      %s146 = scalar_select %p145, %s144, 63
      %s147 = smul.addr %s146, 8
      %s148 = scalar_lea.vmem %s0, %s147
      %p149 = pneg %p35
      %p150 = pneg %p32
      %p151 = pneg %p56
      %p152 = pneg %p53
      %p153 = pneg %p77
      %p154 = pneg %p74
      %p155 = pneg %p103
      %p156 = pneg %p100
      %s157 = smul.u32 32, %s14
      %p158 = scmp.lt.s32.totalorder %s157, 63
      %s159 = scalar_select %p158, %s157, 63
      %s160 = smul.addr %s159, 8
      %s161 = scalar_lea.vmem %s3, %s160
      %s162 = smul.u32 32, %s14
      %p163 = scmp.lt.s32.totalorder %s162, 63
      %s164 = scalar_select %p163, %s162, 63
      %s165 = smul.addr %s164, 8
      %s166 = scalar_lea.vmem %s0, %s165
      %s167 = smul.u32 32, %s14
      %s168 = smul.u32 32, %s14
      %p169 = scmp.lt.s32.totalorder %s168, 63
      %s170 = scalar_select %p169, %s168, 63
      %s171 = smul.addr %s170, 8
      %s172 = scalar_lea.vmem %s3, %s171
      %s173 = smul.u32 32, %s14
      %v174 = vld [vmem:[%s166] sm:$0xff]
      %v175 = vld [vmem:[%s166 + $0x8] sm:$0xff]
      %v176 = vld [vmem:[%s166 + $0x10] sm:$0xff]
      %v177 = vld [vmem:[%s166 + $0x18] sm:$0xff]
      %v178 = vld [vmem:[%s166 + $0x20] sm:$0xff]
      %v179 = vld [vmem:[%s166 + $0x28] sm:$0xff]
      %v180 = vld [vmem:[%s166 + $0x30] sm:$0xff]
      %v181 = vld [vmem:[%s166 + $0x38] sm:$0xff]
      %v182 = vld [vmem:[%s166 + $0x40] sm:$0xff]
      %v183 = vld [vmem:[%s166 + $0x48] sm:$0xff]
      %v184 = vld [vmem:[%s166 + $0x50] sm:$0xff]
      %v185 = vld [vmem:[%s166 + $0x58] sm:$0xff]
      %v186 = vld [vmem:[%s166 + $0x60] sm:$0xff]
      %v187 = vld [vmem:[%s166 + $0x68] sm:$0xff]
      %v188 = vld [vmem:[%s166 + $0x70] sm:$0xff]
      %v189 = vld [vmem:[%s166 + $0x78] sm:$0xff]
      %v190 = vld [vmem:[%s166 + $0x80] sm:$0xff]
      %v191 = vld [vmem:[%s166 + $0x88] sm:$0xff]
      %v192 = vld [vmem:[%s166 + $0x90] sm:$0xff]
      %v193 = vld [vmem:[%s166 + $0x98] sm:$0xff]
      %v194 = vld [vmem:[%s166 + $0xa0] sm:$0xff]
      %v195 = vld [vmem:[%s166 + $0xa8] sm:$0xff]
      %v196 = vld [vmem:[%s166 + $0xb0] sm:$0xff]
      %v197 = vld [vmem:[%s166 + $0xb8] sm:$0xff]
      %v198 = vld [vmem:[%s166 + $0xc0] sm:$0xff]
      %v199 = vld [vmem:[%s166 + $0xc8] sm:$0xff]
      %v200 = vld [vmem:[%s166 + $0xd0] sm:$0xff]
      %v201 = vld [vmem:[%s166 + $0xd8] sm:$0xff]
      %v202 = vld [vmem:[%s166 + $0xe0] sm:$0xff]
      %v203 = vld [vmem:[%s166 + $0xe8] sm:$0xff]
      %v204 = vld [vmem:[%s166 + $0xf0] sm:$0xff]
      %v205 = vld [vmem:[%s166 + $0xf8] sm:$0xff]
      %v206 = vld [vmem:[%s1] sm:$0x1]
      %v208 = vlaneseq
      %v209 = vshrl.u32 %v208, 7
      %v210 = vsub.s32 0, %v209
      %v211 = vrot.slane %v206, %v210
      %v213 = vmul.f32 %v174, %v211
      %v214 = vmul.f32 %v175, %v211
      %v215 = vmul.f32 %v176, %v211
      %v216 = vmul.f32 %v177, %v211
      %v217 = vmul.f32 %v178, %v211
      %v218 = vmul.f32 %v179, %v211
      %v219 = vmul.f32 %v180, %v211
      %v220 = vmul.f32 %v181, %v211
      %v221 = vmul.f32 %v182, %v211
      %v222 = vmul.f32 %v183, %v211
      %v223 = vmul.f32 %v184, %v211
      %v224 = vmul.f32 %v185, %v211
      %v225 = vmul.f32 %v186, %v211
      %v226 = vmul.f32 %v187, %v211
      %v227 = vmul.f32 %v188, %v211
      %v228 = vmul.f32 %v189, %v211
      %v229 = vmul.f32 %v190, %v211
      %v230 = vmul.f32 %v191, %v211
      %v231 = vmul.f32 %v192, %v211
      %v232 = vmul.f32 %v193, %v211
      %v233 = vmul.f32 %v194, %v211
      %v234 = vmul.f32 %v195, %v211
      %v235 = vmul.f32 %v196, %v211
      %v236 = vmul.f32 %v197, %v211
      %v237 = vmul.f32 %v198, %v211
      %v238 = vmul.f32 %v199, %v211
      %v239 = vmul.f32 %v200, %v211
      %v240 = vmul.f32 %v201, %v211
      %v241 = vmul.f32 %v202, %v211
      %v242 = vmul.f32 %v203, %v211
      %v243 = vmul.f32 %v204, %v211
      %v244 = vmul.f32 %v205, %v211
      %v245 = vld [vmem:[%s2] sm:$0x1]
      %v247 = vlaneseq
      %v248 = vshrl.u32 %v247, 7
      %v249 = vsub.s32 0, %v248
      %v250 = vrot.slane %v245, %v249
      %v252 = vadd.f32 %v213, %v250
      %v253 = vadd.f32 %v214, %v250
      %v254 = vadd.f32 %v215, %v250
      %v255 = vadd.f32 %v216, %v250
      %v256 = vadd.f32 %v217, %v250
      %v257 = vadd.f32 %v218, %v250
      %v258 = vadd.f32 %v219, %v250
      %v259 = vadd.f32 %v220, %v250
      %v260 = vadd.f32 %v221, %v250
      %v261 = vadd.f32 %v222, %v250
      %v262 = vadd.f32 %v223, %v250
      %v263 = vadd.f32 %v224, %v250
      %v264 = vadd.f32 %v225, %v250
      %v265 = vadd.f32 %v226, %v250
      %v266 = vadd.f32 %v227, %v250
      %v267 = vadd.f32 %v228, %v250
      %v268 = vadd.f32 %v229, %v250
      %v269 = vadd.f32 %v230, %v250
      %v270 = vadd.f32 %v231, %v250
      %v271 = vadd.f32 %v232, %v250
      %v272 = vadd.f32 %v233, %v250
      %v273 = vadd.f32 %v234, %v250
      %v274 = vadd.f32 %v235, %v250
      %v275 = vadd.f32 %v236, %v250
      %v276 = vadd.f32 %v237, %v250
      %v277 = vadd.f32 %v238, %v250
      %v278 = vadd.f32 %v239, %v250
      %v279 = vadd.f32 %v240, %v250
      %v280 = vadd.f32 %v241, %v250
      %v281 = vadd.f32 %v242, %v250
      %v282 = vadd.f32 %v243, %v250
      %v283 = vadd.f32 %v244, %v250
      %284 = vst [vmem:[%s172] sm:$0xff] %v252
      %285 = vst [vmem:[%s172 + $0x8] sm:$0xff] %v253
      %286 = vst [vmem:[%s172 + $0x10] sm:$0xff] %v254
      %287 = vst [vmem:[%s172 + $0x18] sm:$0xff] %v255
      %288 = vst [vmem:[%s172 + $0x20] sm:$0xff] %v256
      %289 = vst [vmem:[%s172 + $0x28] sm:$0xff] %v257
      %290 = vst [vmem:[%s172 + $0x30] sm:$0xff] %v258
      %291 = vst [vmem:[%s172 + $0x38] sm:$0xff] %v259
      %292 = vst [vmem:[%s172 + $0x40] sm:$0xff] %v260
      %293 = vst [vmem:[%s172 + $0x48] sm:$0xff] %v261
      %294 = vst [vmem:[%s172 + $0x50] sm:$0xff] %v262
      %295 = vst [vmem:[%s172 + $0x58] sm:$0xff] %v263
      %296 = vst [vmem:[%s172 + $0x60] sm:$0xff] %v264
      %297 = vst [vmem:[%s172 + $0x68] sm:$0xff] %v265
      %298 = vst [vmem:[%s172 + $0x70] sm:$0xff] %v266
      %299 = vst [vmem:[%s172 + $0x78] sm:$0xff] %v267
      %300 = vst [vmem:[%s172 + $0x80] sm:$0xff] %v268
      %301 = vst [vmem:[%s172 + $0x88] sm:$0xff] %v269
      %302 = vst [vmem:[%s172 + $0x90] sm:$0xff] %v270
      %303 = vst [vmem:[%s172 + $0x98] sm:$0xff] %v271
      %304 = vst [vmem:[%s172 + $0xa0] sm:$0xff] %v272
      %305 = vst [vmem:[%s172 + $0xa8] sm:$0xff] %v273
      %306 = vst [vmem:[%s172 + $0xb0] sm:$0xff] %v274
      %307 = vst [vmem:[%s172 + $0xb8] sm:$0xff] %v275
      %308 = vst [vmem:[%s172 + $0xc0] sm:$0xff] %v276
      %309 = vst [vmem:[%s172 + $0xc8] sm:$0xff] %v277
      %310 = vst [vmem:[%s172 + $0xd0] sm:$0xff] %v278
      %311 = vst [vmem:[%s172 + $0xd8] sm:$0xff] %v279
      %312 = vst [vmem:[%s172 + $0xe0] sm:$0xff] %v280
      %313 = vst [vmem:[%s172 + $0xe8] sm:$0xff] %v281
      %314 = vst [vmem:[%s172 + $0xf0] sm:$0xff] %v282
      %315 = vst [vmem:[%s172 + $0xf8] sm:$0xff] %v283
      %s316 = smul.u32 32, %s14
      %p317 = scmp.lt.s32.totalorder %s316, 63
      %s318 = scalar_select %p317, %s316, 63
      %s319 = smul.addr %s318, 8
      %s320 = scalar_lea.vmem %s3, %s319
      // Predicated region
      $region33: #{bottleneck_forward.9} parent=31 // pred_check
        %p321 = pneg %p100
      $region34: #{bottleneck_forward.9} parent=31 // pred_check_branch
        %323 = sbr.rel (%p321) target = $region36
      $region35: #{bottleneck_forward.9} parent=31 // pred_region
        %s324 = smul.u32 32, %s14
      $region36: #{bottleneck_forward.9} parent=31 // pred_fallthru
        _
    $region32: #{bottleneck_forward.9} parent=5 // pred_fallthru
      _
    %p325 = scmp.le.s32.totalorder 2, %s9
    // Predicated region
    $region37: #{bottleneck_forward.9} parent=5 // pred_check
      %p326 = pneg %p325
    $region38: #{bottleneck_forward.9} parent=5 // pred_check_branch
      %328 = sbr.rel (%p326) target = $region40
    $region39: #{bottleneck_forward.9} parent=5 // pred_region
      %s329 = ssub.s32 %s9, 2
      // Predicated region
      $region41: #{bottleneck_forward.9} parent=39 // pred_check
        %p330 = pneg %p106
      $region42: #{bottleneck_forward.9} parent=39 // pred_check_branch
        %332 = sbr.rel (%p330) target = $region44
      $region43: #{bottleneck_forward.9} parent=39 // pred_region
        %s333 = smul.u32 32, %s15
        %p334 = scmp.lt.s32.totalorder %s333, 63
        %s335 = scalar_select %p334, %s333, 63
        %s336 = smul.addr %s335, 8
        %s337 = scalar_lea.vmem %s3, %s336
      $region44: #{bottleneck_forward.9} parent=39 // pred_fallthru
        _
    $region40: #{bottleneck_forward.9} parent=5 // pred_fallthru
      _
  $region6: #{bottleneck_forward.9} parent=0 // loop_footer
    %s13 = sadd.s32 1, %s9
  $region7: #{bottleneck_forward.9} parent=0 // loop_footer_branch
    %8 = sbr.rel target = $region3
  $region8: #{bottleneck_forward.9} parent=0 // loop_exit
    _

// kernel: bottleneck_forward.8
$region0: #{bottleneck_forward.8}
  #allocation0 [shape = 'u32[]', space=smem, size = 0x4, offset = 0x4, fixed_abs, tag = 'smem constant byte address 0x4 - core index']
  #allocation1 [shape = 'u32[144,128]{1,0:T(1,128)}', space=vmem, size = 0x12000, scoped, tag = 'internal scratch']
  %s0 = inlined_call_operand.vmem [shape: f32[512,128], index: 0, kind: input, shape index: {}]
  %s1 = inlined_call_operand.vmem [shape: f32[512,128], index: 1, kind: input, shape index: {}]
  %s2 = inlined_call_operand.vmem [shape: f32[1,128], index: 2, kind: input, shape index: {}]
  %s3 = inlined_call_operand.vmem [shape: f32[1,128], index: 3, kind: input, shape index: {}]
  %s4 = inlined_call_operand.vmem [shape: f32[512,128], index: 4, kind: output, shape index: {0}]
  %s5 = inlined_call_operand.vmem [shape: f32[2,1,256], index: 5, kind: output, shape index: {1}]
  %6 = xla_tuple %s4, %s5
  %s7 = sld [smem:[#allocation0]]
  $region57: #{bottleneck_forward.8} parent=0
    _
  %s9 = ssub.s32 1, %s7
  %s10 = scalar_select 0, %s9, %s7
  loop: start=0, step=1, limit=4
  $region2: #{bottleneck_forward.8} parent=0 // loop_pre_header
    _
  $region3: #{bottleneck_forward.8} parent=0 // loop_header
    %s12 = sphi 0, %s16
    %p13 = scmp.ge.s32.totalorder %s12, 4
    %s22 = sphi 0, %s24
    %s25 = sphi 0, %s22
    %s26 = sphi 0, %s25
    %s42 = sphi 0, %s26
    %s48 = sphi 0, %s50
    %s51 = sphi 0, %s48
    %s52 = sphi 0, %s51
    %s68 = sphi 0, %s52
    %s72 = sphi 0, %s72
    %s74 = sphi 0, %s72
    %s75 = sphi 0, %s74
    %s89 = sphi 0, %s75
    %s93 = sphi 0, %s93
    %s95 = sphi 0, %s93
    %s96 = sphi 0, %s95
    %s110 = sphi 0, %s96
    %s116 = sphi 0, %s118
    %s119 = sphi 0, %s116
    %s120 = sphi 0, %s119
    %s136 = sphi 0, %s120
    %s142 = sphi 0, %s144
    %s145 = sphi 0, %s142
    %s146 = sphi 0, %s145
    %s162 = sphi 0, %s146
  $region4: #{bottleneck_forward.8} parent=0 // loop_header_branch
    %15 = sbr.rel (%p13) target = $region8
  $region5: #{bottleneck_forward.8} parent=0 // loop_body
    %s17 = ssub.s32 %s12, 1
    %s18 = ssub.s32 %s12, 2
    %s19 = sadd.s32 %s12, 1
    %s20 = ssub.s32 %s12, %s19
    %p21 = scmp.eq.s32.totalorder %s20, 0
    %s23 = sadd.s32 %s22, 1
    %s24 = scalar_select %p21, %s22, %s23
    %p27 = pneg %p21
    %p28 = scmp.eq.s32.totalorder %s12, 1
    %p29 = por %p27, %p28
    %p30 = scmp.ne.s32.totalorder %s22, %s25
    %p31 = scmp.eq.s32.totalorder %s12, 0
    %p32 = por %p30, %p31
    %p33 = scmp.ne.s32.totalorder %s22, %s25
    %p34 = scmp.eq.s32.totalorder %s17, 1
    %p35 = por %p33, %p34
    %p36 = scmp.ne.s32.totalorder %s25, %s26
    %p37 = scmp.eq.s32.totalorder %s17, 0
    %p38 = por %p36, %p37
    %p39 = scmp.ne.s32.totalorder %s25, %s26
    %p40 = scmp.eq.s32.totalorder %s18, 1
    %p41 = por %p39, %p40
    %p43 = scmp.ne.s32.totalorder %s26, %s42
    %p44 = scmp.eq.s32.totalorder %s18, 0
    %p45 = por %p43, %p44
    %s46 = ssub.s32 %s12, %s19
    %p47 = scmp.eq.s32.totalorder %s46, 0
    %s49 = sadd.s32 %s48, 1
    %s50 = scalar_select %p47, %s48, %s49
    %p53 = pneg %p47
    %p54 = scmp.eq.s32.totalorder %s12, 1
    %p55 = por %p53, %p54
    %p56 = scmp.ne.s32.totalorder %s48, %s51
    %p57 = scmp.eq.s32.totalorder %s12, 0
    %p58 = por %p56, %p57
    %p59 = scmp.ne.s32.totalorder %s48, %s51
    %p60 = scmp.eq.s32.totalorder %s17, 1
    %p61 = por %p59, %p60
    %p62 = scmp.ne.s32.totalorder %s51, %s52
    %p63 = scmp.eq.s32.totalorder %s17, 0
    %p64 = por %p62, %p63
    %p65 = scmp.ne.s32.totalorder %s51, %s52
    %p66 = scmp.eq.s32.totalorder %s18, 1
    %p67 = por %p65, %p66
    %p69 = scmp.ne.s32.totalorder %s52, %s68
    %p70 = scmp.eq.s32.totalorder %s18, 0
    %p71 = por %p69, %p70
    %s73 = sadd.s32 %s72, 1
    %p76 = scmp.eq.s32.totalorder %s12, 1
    %p77 = scmp.ne.s32.totalorder %s72, %s74
    %p78 = scmp.eq.s32.totalorder %s12, 0
    %p79 = por %p77, %p78
    %p80 = scmp.ne.s32.totalorder %s72, %s74
    %p81 = scmp.eq.s32.totalorder %s17, 1
    %p82 = por %p80, %p81
    %p83 = scmp.ne.s32.totalorder %s74, %s75
    %p84 = scmp.eq.s32.totalorder %s17, 0
    %p85 = por %p83, %p84
    %p86 = scmp.ne.s32.totalorder %s74, %s75
    %p87 = scmp.eq.s32.totalorder %s18, 1
    %p88 = por %p86, %p87
    %p90 = scmp.ne.s32.totalorder %s75, %s89
    %p91 = scmp.eq.s32.totalorder %s18, 0
    %p92 = por %p90, %p91
    %s94 = sadd.s32 %s93, 1
    %p97 = scmp.eq.s32.totalorder %s12, 1
    %p98 = scmp.ne.s32.totalorder %s93, %s95
    %p99 = scmp.eq.s32.totalorder %s12, 0
    %p100 = por %p98, %p99
    %p101 = scmp.ne.s32.totalorder %s93, %s95
    %p102 = scmp.eq.s32.totalorder %s17, 1
    %p103 = por %p101, %p102
    %p104 = scmp.ne.s32.totalorder %s95, %s96
    %p105 = scmp.eq.s32.totalorder %s17, 0
    %p106 = por %p104, %p105
    %p107 = scmp.ne.s32.totalorder %s95, %s96
    %p108 = scmp.eq.s32.totalorder %s18, 1
    %p109 = por %p107, %p108
    %p111 = scmp.ne.s32.totalorder %s96, %s110
    %p112 = scmp.eq.s32.totalorder %s18, 0
    %p113 = por %p111, %p112
    %s114 = ssub.s32 %s12, %s19
    %p115 = scmp.eq.s32.totalorder %s114, 0
    %s117 = sadd.s32 %s116, 1
    %s118 = scalar_select %p115, %s116, %s117
    %p121 = pneg %p115
    %p122 = scmp.eq.s32.totalorder %s12, 1
    %p123 = por %p121, %p122
    %p124 = scmp.ne.s32.totalorder %s116, %s119
    %p125 = scmp.eq.s32.totalorder %s12, 0
    %p126 = por %p124, %p125
    %p127 = scmp.ne.s32.totalorder %s116, %s119
    %p128 = scmp.eq.s32.totalorder %s17, 1
    %p129 = por %p127, %p128
    %p130 = scmp.ne.s32.totalorder %s119, %s120
    %p131 = scmp.eq.s32.totalorder %s17, 0
    %p132 = por %p130, %p131
    %p133 = scmp.ne.s32.totalorder %s119, %s120
    %p134 = scmp.eq.s32.totalorder %s18, 1
    %p135 = por %p133, %p134
    %p137 = scmp.ne.s32.totalorder %s120, %s136
    %p138 = scmp.eq.s32.totalorder %s18, 0
    %p139 = por %p137, %p138
    %s140 = ssub.s32 %s12, %s19
    %p141 = scmp.eq.s32.totalorder %s140, 0
    %s143 = sadd.s32 %s142, 1
    %s144 = scalar_select %p141, %s142, %s143
    %p147 = pneg %p141
    %p148 = scmp.eq.s32.totalorder %s12, 1
    %p149 = por %p147, %p148
    %p150 = scmp.ne.s32.totalorder %s142, %s145
    %p151 = scmp.eq.s32.totalorder %s12, 0
    %p152 = por %p150, %p151
    %p153 = scmp.ne.s32.totalorder %s142, %s145
    %p154 = scmp.eq.s32.totalorder %s17, 1
    %p155 = por %p153, %p154
    %p156 = scmp.ne.s32.totalorder %s145, %s146
    %p157 = scmp.eq.s32.totalorder %s17, 0
    %p158 = por %p156, %p157
    %p159 = scmp.ne.s32.totalorder %s145, %s146
    %p160 = scmp.eq.s32.totalorder %s18, 1
    %p161 = por %p159, %p160
    %p163 = scmp.ne.s32.totalorder %s146, %s162
    %p164 = scmp.eq.s32.totalorder %s18, 0
    %p165 = por %p163, %p164
    %p166 = scmp.le.s32.totalorder 1, %s12
    %p167 = scmp.lt.s32.totalorder %s12, 3
    %p168 = pnand %p166, %p167
    %p169 = pneg %p168
    // Predicated region
    $region9: #{bottleneck_forward.8} parent=5 // pred_check
      _
    $region10: #{bottleneck_forward.8} parent=5 // pred_check_branch
      %171 = sbr.rel (%p168) target = $region12
    $region11: #{bottleneck_forward.8} parent=5 // pred_region
      %s172 = ssub.s32 %s12, 1
      // Predicated region
      $region13: #{bottleneck_forward.8} parent=11 // pred_check
        %p173 = pneg %p85
      $region14: #{bottleneck_forward.8} parent=11 // pred_check_branch
        %175 = sbr.rel (%p173) target = $region16
      $region15: #{bottleneck_forward.8} parent=11 // pred_region
        _
      $region16: #{bottleneck_forward.8} parent=11 // pred_fallthru
        _
      // Predicated region
      $region17: #{bottleneck_forward.8} parent=11 // pred_check
        %p176 = pneg %p106
      $region18: #{bottleneck_forward.8} parent=11 // pred_check_branch
        %178 = sbr.rel (%p176) target = $region20
      $region19: #{bottleneck_forward.8} parent=11 // pred_region
        _
      $region20: #{bottleneck_forward.8} parent=11 // pred_fallthru
        _
    $region12: #{bottleneck_forward.8} parent=5 // pred_fallthru
      _
    %p179 = scmp.lt.s32.totalorder %s12, 2
    // Predicated region
    $region21: #{bottleneck_forward.8} parent=5 // pred_check
      %p180 = pneg %p179
    $region22: #{bottleneck_forward.8} parent=5 // pred_check_branch
      %182 = sbr.rel (%p180) target = $region24
    $region23: #{bottleneck_forward.8} parent=5 // pred_region
      // Predicated region
      $region25: #{bottleneck_forward.8} parent=23 // pred_check
        %p183 = pneg %p32
      $region26: #{bottleneck_forward.8} parent=23 // pred_check_branch
        %185 = sbr.rel (%p183) target = $region28
      $region27: #{bottleneck_forward.8} parent=23 // pred_region
        %s186 = smul.u32 32, %s12
        %p187 = scmp.lt.s32.totalorder %s186, 63
        %s188 = scalar_select %p187, %s186, 63
        %s189 = smul.addr %s188, 8
        %s190 = scalar_lea.vmem %s0, %s189
        %s191 = smul.u32 32, %s12
      $region28: #{bottleneck_forward.8} parent=23 // pred_fallthru
        _
      // Predicated region
      $region29: #{bottleneck_forward.8} parent=23 // pred_check
        %p192 = pneg %p58
      $region30: #{bottleneck_forward.8} parent=23 // pred_check_branch
        %194 = sbr.rel (%p192) target = $region32
      $region31: #{bottleneck_forward.8} parent=23 // pred_region
        %s195 = smul.u32 32, %s12
        %p196 = scmp.lt.s32.totalorder %s195, 63
        %s197 = scalar_select %p196, %s195, 63
        %s198 = smul.addr %s197, 8
        %s199 = scalar_lea.vmem %s1, %s198
        %s200 = smul.u32 32, %s12
      $region32: #{bottleneck_forward.8} parent=23 // pred_fallthru
        _
    $region24: #{bottleneck_forward.8} parent=5 // pred_fallthru
      _
    %p201 = scmp.le.s32.totalorder 1, %s12
    %p202 = scmp.lt.s32.totalorder %s12, 3
    %p203 = pnand %p201, %p202
    %p204 = pneg %p203
    // Predicated region
    $region33: #{bottleneck_forward.8} parent=5 // pred_check
      _
    $region34: #{bottleneck_forward.8} parent=5 // pred_check_branch
      %206 = sbr.rel (%p203) target = $region36
    $region35: #{bottleneck_forward.8} parent=5 // pred_region
      %s207 = ssub.s32 %s12, 1
      %s208 = smul.u32 32, %s17
      %p209 = scmp.lt.s32.totalorder %s208, 63
      %s210 = scalar_select %p209, %s208, 63
      %s211 = smul.addr %s210, 8
      %s212 = scalar_lea.vmem %s0, %s211
      %p213 = pneg %p38
      %p214 = pneg %p35
      %s215 = smul.u32 32, %s17
      %p216 = scmp.lt.s32.totalorder %s215, 63
      %s217 = scalar_select %p216, %s215, 63
      %s218 = smul.addr %s217, 8
      %s219 = scalar_lea.vmem %s1, %s218
      %p220 = pneg %p64
      %p221 = pneg %p61
      %p222 = pneg %p85
      %p223 = pneg %p82
      %p224 = pneg %p106
      %p225 = pneg %p103
      %p226 = pneg %p132
      %p227 = pneg %p129
      %s228 = smul.u32 32, %s17
      %p229 = scmp.lt.s32.totalorder %s228, 63
      %s230 = scalar_select %p229, %s228, 63
      %s231 = smul.addr %s230, 8
      %s232 = scalar_lea.vmem %s4, %s231
      %p233 = pneg %p158
      %p234 = pneg %p155
      %p235 = scmp.lt.s32.totalorder %s17, 1
      %s236 = scalar_select %p235, %s17, 1
      %s237 = smul.addr %s236, 2
      %s238 = scalar_lea.vmem %s5, %s237
      %s239 = smul.u32 32, %s17
      %p240 = scmp.lt.s32.totalorder %s239, 63
      %s241 = scalar_select %p240, %s239, 63
      %s242 = smul.addr %s241, 8
      %s243 = scalar_lea.vmem %s0, %s242
      %s244 = smul.u32 32, %s17
      %s245 = smul.u32 32, %s17
      %p246 = scmp.lt.s32.totalorder %s245, 63
      %s247 = scalar_select %p246, %s245, 63
      %s248 = smul.addr %s247, 8
      %s249 = scalar_lea.vmem %s1, %s248
      %s250 = smul.u32 32, %s17
      %s251 = smul.u32 32, %s17
      %p252 = scmp.lt.s32.totalorder %s251, 63
      %s253 = scalar_select %p252, %s251, 63
      %s254 = smul.addr %s253, 8
      %s255 = scalar_lea.vmem %s4, %s254
      %s256 = smul.u32 32, %s17
      %p257 = scmp.lt.s32.totalorder %s17, 1
      %s258 = scalar_select %p257, %s17, 1
      %s259 = smul.addr %s258, 2
      %s260 = scalar_lea.vmem %s5, %s259
      %v261 = vld [vmem:[%s249] sm:$0xff]
      %v262 = vld [vmem:[%s249 + $0x8] sm:$0xff]
      %v263 = vld [vmem:[%s249 + $0x10] sm:$0xff]
      %v264 = vld [vmem:[%s249 + $0x18] sm:$0xff]
      %v265 = vld [vmem:[%s249 + $0x20] sm:$0xff]
      %v266 = vld [vmem:[%s249 + $0x28] sm:$0xff]
      %v267 = vld [vmem:[%s249 + $0x30] sm:$0xff]
      %v268 = vld [vmem:[%s249 + $0x38] sm:$0xff]
      %v269 = vld [vmem:[%s249 + $0x40] sm:$0xff]
      %v270 = vld [vmem:[%s249 + $0x48] sm:$0xff]
      %v271 = vld [vmem:[%s249 + $0x50] sm:$0xff]
      %v272 = vld [vmem:[%s249 + $0x58] sm:$0xff]
      %v273 = vld [vmem:[%s249 + $0x60] sm:$0xff]
      %v274 = vld [vmem:[%s249 + $0x68] sm:$0xff]
      %v275 = vld [vmem:[%s249 + $0x70] sm:$0xff]
      %v276 = vld [vmem:[%s249 + $0x78] sm:$0xff]
      %v277 = vld [vmem:[%s249 + $0x80] sm:$0xff]
      %v278 = vld [vmem:[%s249 + $0x88] sm:$0xff]
      %v279 = vld [vmem:[%s249 + $0x90] sm:$0xff]
      %v280 = vld [vmem:[%s249 + $0x98] sm:$0xff]
      %v281 = vld [vmem:[%s249 + $0xa0] sm:$0xff]
      %v282 = vld [vmem:[%s249 + $0xa8] sm:$0xff]
      %v283 = vld [vmem:[%s249 + $0xb0] sm:$0xff]
      %v284 = vld [vmem:[%s249 + $0xb8] sm:$0xff]
      %v285 = vld [vmem:[%s249 + $0xc0] sm:$0xff]
      %v286 = vld [vmem:[%s249 + $0xc8] sm:$0xff]
      %v287 = vld [vmem:[%s249 + $0xd0] sm:$0xff]
      %v288 = vld [vmem:[%s249 + $0xd8] sm:$0xff]
      %v289 = vld [vmem:[%s249 + $0xe0] sm:$0xff]
      %v290 = vld [vmem:[%s249 + $0xe8] sm:$0xff]
      %v291 = vld [vmem:[%s249 + $0xf0] sm:$0xff]
      %v292 = vld [vmem:[%s249 + $0xf8] sm:$0xff]
      %v293 = vld [vmem:[%s2] sm:$0x1]
      %v295 = vlaneseq
      %v296 = vshrl.u32 %v295, 7
      %v297 = vsub.s32 0, %v296
      %v298 = vrot.slane %v293, %v297
      %v300 = vmul.f32 %v261, %v298
      %v301 = vmul.f32 %v262, %v298
      %v302 = vmul.f32 %v263, %v298
      %v303 = vmul.f32 %v264, %v298
      %v304 = vmul.f32 %v265, %v298
      %v305 = vmul.f32 %v266, %v298
      %v306 = vmul.f32 %v267, %v298
      %v307 = vmul.f32 %v268, %v298
      %v308 = vmul.f32 %v269, %v298
      %v309 = vmul.f32 %v270, %v298
      %v310 = vmul.f32 %v271, %v298
      %v311 = vmul.f32 %v272, %v298
      %v312 = vmul.f32 %v273, %v298
      %v313 = vmul.f32 %v274, %v298
      %v314 = vmul.f32 %v275, %v298
      %v315 = vmul.f32 %v276, %v298
      %v316 = vmul.f32 %v277, %v298
      %v317 = vmul.f32 %v278, %v298
      %v318 = vmul.f32 %v279, %v298
      %v319 = vmul.f32 %v280, %v298
      %v320 = vmul.f32 %v281, %v298
      %v321 = vmul.f32 %v282, %v298
      %v322 = vmul.f32 %v283, %v298
      %v323 = vmul.f32 %v284, %v298
      %v324 = vmul.f32 %v285, %v298
      %v325 = vmul.f32 %v286, %v298
      %v326 = vmul.f32 %v287, %v298
      %v327 = vmul.f32 %v288, %v298
      %v328 = vmul.f32 %v289, %v298
      %v329 = vmul.f32 %v290, %v298
      %v330 = vmul.f32 %v291, %v298
      %v331 = vmul.f32 %v292, %v298
      %v332 = vld [vmem:[%s3] sm:$0x1]
      %v334 = vlaneseq
      %v335 = vshrl.u32 %v334, 7
      %v336 = vsub.s32 0, %v335
      %v337 = vrot.slane %v332, %v336
      %v339 = vadd.f32 %v300, %v337
      %v340 = vadd.f32 %v301, %v337
      %v341 = vadd.f32 %v302, %v337
      %v342 = vadd.f32 %v303, %v337
      %v343 = vadd.f32 %v304, %v337
      %v344 = vadd.f32 %v305, %v337
      %v345 = vadd.f32 %v306, %v337
      %v346 = vadd.f32 %v307, %v337
      %v347 = vadd.f32 %v308, %v337
      %v348 = vadd.f32 %v309, %v337
      %v349 = vadd.f32 %v310, %v337
      %v350 = vadd.f32 %v311, %v337
      %v351 = vadd.f32 %v312, %v337
      %v352 = vadd.f32 %v313, %v337
      %v353 = vadd.f32 %v314, %v337
      %v354 = vadd.f32 %v315, %v337
      %v355 = vadd.f32 %v316, %v337
      %v356 = vadd.f32 %v317, %v337
      %v357 = vadd.f32 %v318, %v337
      %v358 = vadd.f32 %v319, %v337
      %v359 = vadd.f32 %v320, %v337
      %v360 = vadd.f32 %v321, %v337
      %v361 = vadd.f32 %v322, %v337
      %v362 = vadd.f32 %v323, %v337
      %v363 = vadd.f32 %v324, %v337
      %v364 = vadd.f32 %v325, %v337
      %v365 = vadd.f32 %v326, %v337
      %v366 = vadd.f32 %v327, %v337
      %v367 = vadd.f32 %v328, %v337
      %v368 = vadd.f32 %v329, %v337
      %v369 = vadd.f32 %v330, %v337
      %v370 = vadd.f32 %v331, %v337
      %v371 = vld [vmem:[%s243] sm:$0xff]
      %v372 = vld [vmem:[%s243 + $0x8] sm:$0xff]
      %v373 = vld [vmem:[%s243 + $0x10] sm:$0xff]
      %v374 = vld [vmem:[%s243 + $0x18] sm:$0xff]
      %v375 = vld [vmem:[%s243 + $0x20] sm:$0xff]
      %v376 = vld [vmem:[%s243 + $0x28] sm:$0xff]
      %v377 = vld [vmem:[%s243 + $0x30] sm:$0xff]
      %v378 = vld [vmem:[%s243 + $0x38] sm:$0xff]
      %v379 = vld [vmem:[%s243 + $0x40] sm:$0xff]
      %v380 = vld [vmem:[%s243 + $0x48] sm:$0xff]
      %v381 = vld [vmem:[%s243 + $0x50] sm:$0xff]
      %v382 = vld [vmem:[%s243 + $0x58] sm:$0xff]
      %v383 = vld [vmem:[%s243 + $0x60] sm:$0xff]
      %v384 = vld [vmem:[%s243 + $0x68] sm:$0xff]
      %v385 = vld [vmem:[%s243 + $0x70] sm:$0xff]
      %v386 = vld [vmem:[%s243 + $0x78] sm:$0xff]
      %v387 = vld [vmem:[%s243 + $0x80] sm:$0xff]
      %v388 = vld [vmem:[%s243 + $0x88] sm:$0xff]
      %v389 = vld [vmem:[%s243 + $0x90] sm:$0xff]
      %v390 = vld [vmem:[%s243 + $0x98] sm:$0xff]
      %v391 = vld [vmem:[%s243 + $0xa0] sm:$0xff]
      %v392 = vld [vmem:[%s243 + $0xa8] sm:$0xff]
      %v393 = vld [vmem:[%s243 + $0xb0] sm:$0xff]
      %v394 = vld [vmem:[%s243 + $0xb8] sm:$0xff]
      %v395 = vld [vmem:[%s243 + $0xc0] sm:$0xff]
      %v396 = vld [vmem:[%s243 + $0xc8] sm:$0xff]
      %v397 = vld [vmem:[%s243 + $0xd0] sm:$0xff]
      %v398 = vld [vmem:[%s243 + $0xd8] sm:$0xff]
      %v399 = vld [vmem:[%s243 + $0xe0] sm:$0xff]
      %v400 = vld [vmem:[%s243 + $0xe8] sm:$0xff]
      %v401 = vld [vmem:[%s243 + $0xf0] sm:$0xff]
      %v402 = vld [vmem:[%s243 + $0xf8] sm:$0xff]
      %v403 = vadd.f32 %v339, %v371
      %v404 = vadd.f32 %v340, %v372
      %v405 = vadd.f32 %v341, %v373
      %v406 = vadd.f32 %v342, %v374
      %v407 = vadd.f32 %v343, %v375
      %v408 = vadd.f32 %v344, %v376
      %v409 = vadd.f32 %v345, %v377
      %v410 = vadd.f32 %v346, %v378
      %v411 = vadd.f32 %v347, %v379
      %v412 = vadd.f32 %v348, %v380
      %v413 = vadd.f32 %v349, %v381
      %v414 = vadd.f32 %v350, %v382
      %v415 = vadd.f32 %v351, %v383
      %v416 = vadd.f32 %v352, %v384
      %v417 = vadd.f32 %v353, %v385
      %v418 = vadd.f32 %v354, %v386
      %v419 = vadd.f32 %v355, %v387
      %v420 = vadd.f32 %v356, %v388
      %v421 = vadd.f32 %v357, %v389
      %v422 = vadd.f32 %v358, %v390
      %v423 = vadd.f32 %v359, %v391
      %v424 = vadd.f32 %v360, %v392
      %v425 = vadd.f32 %v361, %v393
      %v426 = vadd.f32 %v362, %v394
      %v427 = vadd.f32 %v363, %v395
      %v428 = vadd.f32 %v364, %v396
      %v429 = vadd.f32 %v365, %v397
      %v430 = vadd.f32 %v366, %v398
      %v431 = vadd.f32 %v367, %v399
      %v432 = vadd.f32 %v368, %v400
      %v433 = vadd.f32 %v369, %v401
      %v434 = vadd.f32 %v370, %v402
      %v435 = vmax.f32 %v403, 0.0
      %v436 = vmax.f32 %v404, 0.0
      %v437 = vmax.f32 %v405, 0.0
      %v438 = vmax.f32 %v406, 0.0
      %v439 = vmax.f32 %v407, 0.0
      %v440 = vmax.f32 %v408, 0.0
      %v441 = vmax.f32 %v409, 0.0
      %v442 = vmax.f32 %v410, 0.0
      %v443 = vmax.f32 %v411, 0.0
      %v444 = vmax.f32 %v412, 0.0
      %v445 = vmax.f32 %v413, 0.0
      %v446 = vmax.f32 %v414, 0.0
      %v447 = vmax.f32 %v415, 0.0
      %v448 = vmax.f32 %v416, 0.0
      %v449 = vmax.f32 %v417, 0.0
      %v450 = vmax.f32 %v418, 0.0
      %v451 = vmax.f32 %v419, 0.0
      %v452 = vmax.f32 %v420, 0.0
      %v453 = vmax.f32 %v421, 0.0
      %v454 = vmax.f32 %v422, 0.0
      %v455 = vmax.f32 %v423, 0.0
      %v456 = vmax.f32 %v424, 0.0
      %v457 = vmax.f32 %v425, 0.0
      %v458 = vmax.f32 %v426, 0.0
      %v459 = vmax.f32 %v427, 0.0
      %v460 = vmax.f32 %v428, 0.0
      %v461 = vmax.f32 %v429, 0.0
      %v462 = vmax.f32 %v430, 0.0
      %v463 = vmax.f32 %v431, 0.0
      %v464 = vmax.f32 %v432, 0.0
      %v465 = vmax.f32 %v433, 0.0
      %v466 = vmax.f32 %v434, 0.0
      %467 = vst [vmem:[%s255] sm:$0xff] %v435
      %468 = vst [vmem:[%s255 + $0x8] sm:$0xff] %v436
      %469 = vst [vmem:[%s255 + $0x10] sm:$0xff] %v437
      %470 = vst [vmem:[%s255 + $0x18] sm:$0xff] %v438
      %471 = vst [vmem:[%s255 + $0x20] sm:$0xff] %v439
      %472 = vst [vmem:[%s255 + $0x28] sm:$0xff] %v440
      %473 = vst [vmem:[%s255 + $0x30] sm:$0xff] %v441
      %474 = vst [vmem:[%s255 + $0x38] sm:$0xff] %v442
      %475 = vst [vmem:[%s255 + $0x40] sm:$0xff] %v443
      %476 = vst [vmem:[%s255 + $0x48] sm:$0xff] %v444
      %477 = vst [vmem:[%s255 + $0x50] sm:$0xff] %v445
      %478 = vst [vmem:[%s255 + $0x58] sm:$0xff] %v446
      %479 = vst [vmem:[%s255 + $0x60] sm:$0xff] %v447
      %480 = vst [vmem:[%s255 + $0x68] sm:$0xff] %v448
      %481 = vst [vmem:[%s255 + $0x70] sm:$0xff] %v449
      %482 = vst [vmem:[%s255 + $0x78] sm:$0xff] %v450
      %483 = vst [vmem:[%s255 + $0x80] sm:$0xff] %v451
      %484 = vst [vmem:[%s255 + $0x88] sm:$0xff] %v452
      %485 = vst [vmem:[%s255 + $0x90] sm:$0xff] %v453
      %486 = vst [vmem:[%s255 + $0x98] sm:$0xff] %v454
      %487 = vst [vmem:[%s255 + $0xa0] sm:$0xff] %v455
      %488 = vst [vmem:[%s255 + $0xa8] sm:$0xff] %v456
      %489 = vst [vmem:[%s255 + $0xb0] sm:$0xff] %v457
      %490 = vst [vmem:[%s255 + $0xb8] sm:$0xff] %v458
      %491 = vst [vmem:[%s255 + $0xc0] sm:$0xff] %v459
      %492 = vst [vmem:[%s255 + $0xc8] sm:$0xff] %v460
      %493 = vst [vmem:[%s255 + $0xd0] sm:$0xff] %v461
      %494 = vst [vmem:[%s255 + $0xd8] sm:$0xff] %v462
      %495 = vst [vmem:[%s255 + $0xe0] sm:$0xff] %v463
      %496 = vst [vmem:[%s255 + $0xe8] sm:$0xff] %v464
      %497 = vst [vmem:[%s255 + $0xf0] sm:$0xff] %v465
      %498 = vst [vmem:[%s255 + $0xf8] sm:$0xff] %v466
      %v499 = vadd.f32 %v435, %v436
      %v500 = vadd.f32 %v499, %v437
      %v501 = vadd.f32 %v500, %v438
      %v502 = vadd.f32 %v501, %v439
      %v503 = vadd.f32 %v502, %v440
      %v504 = vadd.f32 %v503, %v441
      %v505 = vadd.f32 %v504, %v442
      %v506 = vadd.f32 %v505, %v443
      %v507 = vadd.f32 %v506, %v444
      %v508 = vadd.f32 %v507, %v445
      %v509 = vadd.f32 %v508, %v446
      %v510 = vadd.f32 %v509, %v447
      %v511 = vadd.f32 %v510, %v448
      %v512 = vadd.f32 %v511, %v449
      %v513 = vadd.f32 %v512, %v450
      %v514 = vadd.f32 %v513, %v451
      %v515 = vadd.f32 %v514, %v452
      %v516 = vadd.f32 %v515, %v453
      %v517 = vadd.f32 %v516, %v454
      %v518 = vadd.f32 %v517, %v455
      %v519 = vadd.f32 %v518, %v456
      %v520 = vadd.f32 %v519, %v457
      %v521 = vadd.f32 %v520, %v458
      %v522 = vadd.f32 %v521, %v459
      %v523 = vadd.f32 %v522, %v460
      %v524 = vadd.f32 %v523, %v461
      %v525 = vadd.f32 %v524, %v462
      %v526 = vadd.f32 %v525, %v463
      %v527 = vadd.f32 %v526, %v464
      %v528 = vadd.f32 %v527, %v465
      %v529 = vadd.f32 %v528, %v466
      %v530 = vrot.slane %v529, 4
      %v531 = vadd.f32 %v529, %v530
      %v532 = vrot.slane %v531, 2
      %v533 = vadd.f32 %v531, %v532
      %v534 = vrot.slane %v533, 1
      %v535 = vadd.f32 %v533, %v534
      %v536 = vmul.f32 %v435, %v435
      %v537 = vmul.f32 %v436, %v436
      %v538 = vmul.f32 %v437, %v437
      %v539 = vmul.f32 %v438, %v438
      %v540 = vmul.f32 %v439, %v439
      %v541 = vmul.f32 %v440, %v440
      %v542 = vmul.f32 %v441, %v441
      %v543 = vmul.f32 %v442, %v442
      %v544 = vmul.f32 %v443, %v443
      %v545 = vmul.f32 %v444, %v444
      %v546 = vmul.f32 %v445, %v445
      %v547 = vmul.f32 %v446, %v446
      %v548 = vmul.f32 %v447, %v447
      %v549 = vmul.f32 %v448, %v448
      %v550 = vmul.f32 %v449, %v449
      %v551 = vmul.f32 %v450, %v450
      %v552 = vmul.f32 %v451, %v451
      %v553 = vmul.f32 %v452, %v452
      %v554 = vmul.f32 %v453, %v453
      %v555 = vmul.f32 %v454, %v454
      %v556 = vmul.f32 %v455, %v455
      %v557 = vmul.f32 %v456, %v456
      %v558 = vmul.f32 %v457, %v457
      %v559 = vmul.f32 %v458, %v458
      %v560 = vmul.f32 %v459, %v459
      %v561 = vmul.f32 %v460, %v460
      %v562 = vmul.f32 %v461, %v461
      %v563 = vmul.f32 %v462, %v462
      %v564 = vmul.f32 %v463, %v463
      %v565 = vmul.f32 %v464, %v464
      %v566 = vmul.f32 %v465, %v465
      %v567 = vmul.f32 %v466, %v466
      %v568 = vadd.f32 %v536, %v537
      %v569 = vadd.f32 %v568, %v538
      %v570 = vadd.f32 %v569, %v539
      %v571 = vadd.f32 %v570, %v540
      %v572 = vadd.f32 %v571, %v541
      %v573 = vadd.f32 %v572, %v542
      %v574 = vadd.f32 %v573, %v543
      %v575 = vadd.f32 %v574, %v544
      %v576 = vadd.f32 %v575, %v545
      %v577 = vadd.f32 %v576, %v546
      %v578 = vadd.f32 %v577, %v547
      %v579 = vadd.f32 %v578, %v548
      %v580 = vadd.f32 %v579, %v549
      %v581 = vadd.f32 %v580, %v550
      %v582 = vadd.f32 %v581, %v551
      %v583 = vadd.f32 %v582, %v552
      %v584 = vadd.f32 %v583, %v553
      %v585 = vadd.f32 %v584, %v554
      %v586 = vadd.f32 %v585, %v555
      %v587 = vadd.f32 %v586, %v556
      %v588 = vadd.f32 %v587, %v557
      %v589 = vadd.f32 %v588, %v558
      %v590 = vadd.f32 %v589, %v559
      %v591 = vadd.f32 %v590, %v560
      %v592 = vadd.f32 %v591, %v561
      %v593 = vadd.f32 %v592, %v562
      %v594 = vadd.f32 %v593, %v563
      %v595 = vadd.f32 %v594, %v564
      %v596 = vadd.f32 %v595, %v565
      %v597 = vadd.f32 %v596, %v566
      %v598 = vadd.f32 %v597, %v567
      %v599 = vrot.slane %v598, 4
      %v600 = vadd.f32 %v598, %v599
      %v601 = vrot.slane %v600, 2
      %v602 = vadd.f32 %v600, %v601
      %v603 = vrot.slane %v602, 1
      %v604 = vadd.f32 %v602, %v603
      %v607 = vcombine.low %v535, %v604
      %v609 = vunpack.c.l.s4 1966171168
      %v610 = vunpack.c.0.s8 %v609
      %v611 = vlaneseq
      %v612 = vshrl.u32 %v611, 7
      %v613 = vsub.s32 %v610, %v612
      %v614 = vrot.slane %v607, %v613
      %v616 = vunpack.c.l.s4 1966171168
      %v617 = vunpack.c.0.s8 %v616
      %v618 = vlaneseq
      %v619 = vshrl.u32 %v618, 7
      %v620 = vsub.s32 %v617, %v619
      %v621 = vrot.slane %v614, %v620
      %v623 = vlaneseq
      %vm624 = vcmp.ge.s32.totalorder %v623, 0
      %vm625 = vcmp.lt.s32.totalorder %v623, 256
      %vm626 = vmand %vm624, %vm625
      %627 = vst.msk [vmem:[%s260] sm:$0x3] %vm626, %v621
      %s628 = smul.u32 32, %s17
      %p629 = scmp.lt.s32.totalorder %s628, 63
      %s630 = scalar_select %p629, %s628, 63
      %s631 = smul.addr %s630, 8
      %s632 = scalar_lea.vmem %s4, %s631
      %p633 = scmp.lt.s32.totalorder %s17, 1
      %s634 = scalar_select %p633, %s17, 1
      %s635 = smul.addr %s634, 2
      %s636 = scalar_lea.vmem %s5, %s635
      // Predicated region
      $region37: #{bottleneck_forward.8} parent=35 // pred_check
        %p637 = pneg %p129
      $region38: #{bottleneck_forward.8} parent=35 // pred_check_branch
        %639 = sbr.rel (%p637) target = $region40
      $region39: #{bottleneck_forward.8} parent=35 // pred_region
        %s640 = smul.u32 32, %s17
      $region40: #{bottleneck_forward.8} parent=35 // pred_fallthru
        _
      // Predicated region
      $region41: #{bottleneck_forward.8} parent=35 // pred_check
        %p641 = pneg %p155
      $region42: #{bottleneck_forward.8} parent=35 // pred_check_branch
        %643 = sbr.rel (%p641) target = $region44
      $region43: #{bottleneck_forward.8} parent=35 // pred_region
        _
      $region44: #{bottleneck_forward.8} parent=35 // pred_fallthru
        _
    $region36: #{bottleneck_forward.8} parent=5 // pred_fallthru
      _
    %p644 = scmp.le.s32.totalorder 2, %s12
    // Predicated region
    $region45: #{bottleneck_forward.8} parent=5 // pred_check
      %p645 = pneg %p644
    $region46: #{bottleneck_forward.8} parent=5 // pred_check_branch
      %647 = sbr.rel (%p645) target = $region48
    $region47: #{bottleneck_forward.8} parent=5 // pred_region
      %s648 = ssub.s32 %s12, 2
      // Predicated region
      $region49: #{bottleneck_forward.8} parent=47 // pred_check
        %p649 = pneg %p135
      $region50: #{bottleneck_forward.8} parent=47 // pred_check_branch
        %651 = sbr.rel (%p649) target = $region52
      $region51: #{bottleneck_forward.8} parent=47 // pred_region
        %s652 = smul.u32 32, %s18
        %p653 = scmp.lt.s32.totalorder %s652, 63
        %s654 = scalar_select %p653, %s652, 63
        %s655 = smul.addr %s654, 8
        %s656 = scalar_lea.vmem %s4, %s655
      $region52: #{bottleneck_forward.8} parent=47 // pred_fallthru
        _
      // Predicated region
      $region53: #{bottleneck_forward.8} parent=47 // pred_check
        %p657 = pneg %p161
      $region54: #{bottleneck_forward.8} parent=47 // pred_check_branch
        %659 = sbr.rel (%p657) target = $region56
      $region55: #{bottleneck_forward.8} parent=47 // pred_region
        %p660 = scmp.lt.s32.totalorder %s18, 1
        %s661 = scalar_select %p660, %s18, 1
        %s662 = smul.addr %s661, 2
        %s663 = scalar_lea.vmem %s5, %s662
      $region56: #{bottleneck_forward.8} parent=47 // pred_fallthru
        _
    $region48: #{bottleneck_forward.8} parent=5 // pred_fallthru
      _
  $region6: #{bottleneck_forward.8} parent=0 // loop_footer
    %s16 = sadd.s32 1, %s12
  $region7: #{bottleneck_forward.8} parent=0 // loop_footer_branch
    %11 = sbr.rel target = $region3
  $region8: #{bottleneck_forward.8} parent=0 // loop_exit
    _

// kernel: bottleneck_forward.6
$region0: #{bottleneck_forward.6}
  #allocation0 [shape = 'u32[]', space=smem, size = 0x4, offset = 0x4, fixed_abs, tag = 'smem constant byte address 0x4 - core index']
  #allocation1 [shape = 'u32[144,128]{1,0:T(1,128)}', space=vmem, size = 0x12000, scoped, tag = 'internal scratch']
  %s0 = inlined_call_operand.vmem [shape: f32[512,128], index: 0, kind: input, shape index: {}]
  %s1 = inlined_call_operand.vmem [shape: f32[1,128], index: 1, kind: input, shape index: {}]
  %s2 = inlined_call_operand.vmem [shape: f32[1,128], index: 2, kind: input, shape index: {}]
  %s3 = inlined_call_operand.vmem [shape: bf16[9,128,128], index: 3, kind: input, shape index: {}]
  %s4 = inlined_call_operand.vmem [shape: f32[9,256,1], index: 4, kind: input, shape index: {}]
  %s5 = inlined_call_operand.vmem [shape: f32[512,128], index: 5, kind: output, shape index: {0}]
  %s6 = inlined_call_operand.vmem [shape: f32[2,1,256], index: 6, kind: output, shape index: {1}]
  %7 = xla_tuple %s5, %s6
  %s8 = sld [smem:[#allocation0]]
  $region61: #{bottleneck_forward.6} parent=0
    _
  %s10 = ssub.s32 1, %s8
  %s11 = scalar_select 0, %s10, %s8
  loop: start=0, step=1, limit=4
  $region2: #{bottleneck_forward.6} parent=0 // loop_pre_header
    _
  $region3: #{bottleneck_forward.6} parent=0 // loop_header
    %s13 = sphi 0, %s17
    %p14 = scmp.ge.s32.totalorder %s13, 4
    %s23 = sphi 0, %s25
    %s26 = sphi 0, %s23
    %s27 = sphi 0, %s26
    %s43 = sphi 0, %s27
    %s47 = sphi 0, %s47
    %s49 = sphi 0, %s47
    %s50 = sphi 0, %s49
    %s64 = sphi 0, %s50
    %s68 = sphi 0, %s68
    %s70 = sphi 0, %s68
    %s71 = sphi 0, %s70
    %s85 = sphi 0, %s71
    %s89 = sphi 0, %s89
    %s91 = sphi 0, %s89
    %s92 = sphi 0, %s91
    %s106 = sphi 0, %s92
    %s110 = sphi 0, %s110
    %s112 = sphi 0, %s110
    %s113 = sphi 0, %s112
    %s127 = sphi 0, %s113
    %s133 = sphi 0, %s135
    %s136 = sphi 0, %s133
    %s137 = sphi 0, %s136
    %s153 = sphi 0, %s137
    %s159 = sphi 0, %s161
    %s162 = sphi 0, %s159
    %s163 = sphi 0, %s162
    %s179 = sphi 0, %s163
  $region4: #{bottleneck_forward.6} parent=0 // loop_header_branch
    %16 = sbr.rel (%p14) target = $region8
  $region5: #{bottleneck_forward.6} parent=0 // loop_body
    %s18 = ssub.s32 %s13, 1
    %s19 = ssub.s32 %s13, 2
    %s20 = sadd.s32 %s13, 1
    %s21 = ssub.s32 %s13, %s20
    %p22 = scmp.eq.s32.totalorder %s21, 0
    %s24 = sadd.s32 %s23, 1
    %s25 = scalar_select %p22, %s23, %s24
    %p28 = pneg %p22
    %p29 = scmp.eq.s32.totalorder %s13, 1
    %p30 = por %p28, %p29
    %p31 = scmp.ne.s32.totalorder %s23, %s26
    %p32 = scmp.eq.s32.totalorder %s13, 0
    %p33 = por %p31, %p32
    %p34 = scmp.ne.s32.totalorder %s23, %s26
    %p35 = scmp.eq.s32.totalorder %s18, 1
    %p36 = por %p34, %p35
    %p37 = scmp.ne.s32.totalorder %s26, %s27
    %p38 = scmp.eq.s32.totalorder %s18, 0
    %p39 = por %p37, %p38
    %p40 = scmp.ne.s32.totalorder %s26, %s27
    %p41 = scmp.eq.s32.totalorder %s19, 1
    %p42 = por %p40, %p41
    %p44 = scmp.ne.s32.totalorder %s27, %s43
    %p45 = scmp.eq.s32.totalorder %s19, 0
    %p46 = por %p44, %p45
    %s48 = sadd.s32 %s47, 1
    %p51 = scmp.eq.s32.totalorder %s13, 1
    %p52 = scmp.ne.s32.totalorder %s47, %s49
    %p53 = scmp.eq.s32.totalorder %s13, 0
    %p54 = por %p52, %p53
    %p55 = scmp.ne.s32.totalorder %s47, %s49
    %p56 = scmp.eq.s32.totalorder %s18, 1
    %p57 = por %p55, %p56
    %p58 = scmp.ne.s32.totalorder %s49, %s50
    %p59 = scmp.eq.s32.totalorder %s18, 0
    %p60 = por %p58, %p59
    %p61 = scmp.ne.s32.totalorder %s49, %s50
    %p62 = scmp.eq.s32.totalorder %s19, 1
    %p63 = por %p61, %p62
    %p65 = scmp.ne.s32.totalorder %s50, %s64
    %p66 = scmp.eq.s32.totalorder %s19, 0
    %p67 = por %p65, %p66
    %s69 = sadd.s32 %s68, 1
    %p72 = scmp.eq.s32.totalorder %s13, 1
    %p73 = scmp.ne.s32.totalorder %s68, %s70
    %p74 = scmp.eq.s32.totalorder %s13, 0
    %p75 = por %p73, %p74
    %p76 = scmp.ne.s32.totalorder %s68, %s70
    %p77 = scmp.eq.s32.totalorder %s18, 1
    %p78 = por %p76, %p77
    %p79 = scmp.ne.s32.totalorder %s70, %s71
    %p80 = scmp.eq.s32.totalorder %s18, 0
    %p81 = por %p79, %p80
    %p82 = scmp.ne.s32.totalorder %s70, %s71
    %p83 = scmp.eq.s32.totalorder %s19, 1
    %p84 = por %p82, %p83
    %p86 = scmp.ne.s32.totalorder %s71, %s85
    %p87 = scmp.eq.s32.totalorder %s19, 0
    %p88 = por %p86, %p87
    %s90 = sadd.s32 %s89, 1
    %p93 = scmp.eq.s32.totalorder %s13, 1
    %p94 = scmp.ne.s32.totalorder %s89, %s91
    %p95 = scmp.eq.s32.totalorder %s13, 0
    %p96 = por %p94, %p95
    %p97 = scmp.ne.s32.totalorder %s89, %s91
    %p98 = scmp.eq.s32.totalorder %s18, 1
    %p99 = por %p97, %p98
    %p100 = scmp.ne.s32.totalorder %s91, %s92
    %p101 = scmp.eq.s32.totalorder %s18, 0
    %p102 = por %p100, %p101
    %p103 = scmp.ne.s32.totalorder %s91, %s92
    %p104 = scmp.eq.s32.totalorder %s19, 1
    %p105 = por %p103, %p104
    %p107 = scmp.ne.s32.totalorder %s92, %s106
    %p108 = scmp.eq.s32.totalorder %s19, 0
    %p109 = por %p107, %p108
    %s111 = sadd.s32 %s110, 1
    %p114 = scmp.eq.s32.totalorder %s13, 1
    %p115 = scmp.ne.s32.totalorder %s110, %s112
    %p116 = scmp.eq.s32.totalorder %s13, 0
    %p117 = por %p115, %p116
    %p118 = scmp.ne.s32.totalorder %s110, %s112
    %p119 = scmp.eq.s32.totalorder %s18, 1
    %p120 = por %p118, %p119
    %p121 = scmp.ne.s32.totalorder %s112, %s113
    %p122 = scmp.eq.s32.totalorder %s18, 0
    %p123 = por %p121, %p122
    %p124 = scmp.ne.s32.totalorder %s112, %s113
    %p125 = scmp.eq.s32.totalorder %s19, 1
    %p126 = por %p124, %p125
    %p128 = scmp.ne.s32.totalorder %s113, %s127
    %p129 = scmp.eq.s32.totalorder %s19, 0
    %p130 = por %p128, %p129
    %s131 = ssub.s32 %s13, %s20
    %p132 = scmp.eq.s32.totalorder %s131, 0
    %s134 = sadd.s32 %s133, 1
    %s135 = scalar_select %p132, %s133, %s134
    %p138 = pneg %p132
    %p139 = scmp.eq.s32.totalorder %s13, 1
    %p140 = por %p138, %p139
    %p141 = scmp.ne.s32.totalorder %s133, %s136
    %p142 = scmp.eq.s32.totalorder %s13, 0
    %p143 = por %p141, %p142
    %p144 = scmp.ne.s32.totalorder %s133, %s136
    %p145 = scmp.eq.s32.totalorder %s18, 1
    %p146 = por %p144, %p145
    %p147 = scmp.ne.s32.totalorder %s136, %s137
    %p148 = scmp.eq.s32.totalorder %s18, 0
    %p149 = por %p147, %p148
    %p150 = scmp.ne.s32.totalorder %s136, %s137
    %p151 = scmp.eq.s32.totalorder %s19, 1
    %p152 = por %p150, %p151
    %p154 = scmp.ne.s32.totalorder %s137, %s153
    %p155 = scmp.eq.s32.totalorder %s19, 0
    %p156 = por %p154, %p155
    %s157 = ssub.s32 %s13, %s20
    %p158 = scmp.eq.s32.totalorder %s157, 0
    %s160 = sadd.s32 %s159, 1
    %s161 = scalar_select %p158, %s159, %s160
    %p164 = pneg %p158
    %p165 = scmp.eq.s32.totalorder %s13, 1
    %p166 = por %p164, %p165
    %p167 = scmp.ne.s32.totalorder %s159, %s162
    %p168 = scmp.eq.s32.totalorder %s13, 0
    %p169 = por %p167, %p168
    %p170 = scmp.ne.s32.totalorder %s159, %s162
    %p171 = scmp.eq.s32.totalorder %s18, 1
    %p172 = por %p170, %p171
    %p173 = scmp.ne.s32.totalorder %s162, %s163
    %p174 = scmp.eq.s32.totalorder %s18, 0
    %p175 = por %p173, %p174
    %p176 = scmp.ne.s32.totalorder %s162, %s163
    %p177 = scmp.eq.s32.totalorder %s19, 1
    %p178 = por %p176, %p177
    %p180 = scmp.ne.s32.totalorder %s163, %s179
    %p181 = scmp.eq.s32.totalorder %s19, 0
    %p182 = por %p180, %p181
    %p183 = scmp.le.s32.totalorder 1, %s13
    %p184 = scmp.lt.s32.totalorder %s13, 3
    %p185 = pnand %p183, %p184
    %p186 = pneg %p185
    // Predicated region
    $region9: #{bottleneck_forward.6} parent=5 // pred_check
      _
    $region10: #{bottleneck_forward.6} parent=5 // pred_check_branch
      %188 = sbr.rel (%p185) target = $region12
    $region11: #{bottleneck_forward.6} parent=5 // pred_region
      %s189 = ssub.s32 %s13, 1
      // Predicated region
      $region13: #{bottleneck_forward.6} parent=11 // pred_check
        %p190 = pneg %p60
      $region14: #{bottleneck_forward.6} parent=11 // pred_check_branch
        %192 = sbr.rel (%p190) target = $region16
      $region15: #{bottleneck_forward.6} parent=11 // pred_region
        _
      $region16: #{bottleneck_forward.6} parent=11 // pred_fallthru
        _
      // Predicated region
      $region17: #{bottleneck_forward.6} parent=11 // pred_check
        %p193 = pneg %p81
      $region18: #{bottleneck_forward.6} parent=11 // pred_check_branch
        %195 = sbr.rel (%p193) target = $region20
      $region19: #{bottleneck_forward.6} parent=11 // pred_region
        _
      $region20: #{bottleneck_forward.6} parent=11 // pred_fallthru
        _
      // Predicated region
      $region21: #{bottleneck_forward.6} parent=11 // pred_check
        %p196 = pneg %p102
      $region22: #{bottleneck_forward.6} parent=11 // pred_check_branch
        %198 = sbr.rel (%p196) target = $region24
      $region23: #{bottleneck_forward.6} parent=11 // pred_region
        _
      $region24: #{bottleneck_forward.6} parent=11 // pred_fallthru
        _
      // Predicated region
      $region25: #{bottleneck_forward.6} parent=11 // pred_check
        %p199 = pneg %p123
      $region26: #{bottleneck_forward.6} parent=11 // pred_check_branch
        %201 = sbr.rel (%p199) target = $region28
      $region27: #{bottleneck_forward.6} parent=11 // pred_region
        _
      $region28: #{bottleneck_forward.6} parent=11 // pred_fallthru
        _
    $region12: #{bottleneck_forward.6} parent=5 // pred_fallthru
      _
    %p202 = scmp.lt.s32.totalorder %s13, 2
    // Predicated region
    $region29: #{bottleneck_forward.6} parent=5 // pred_check
      %p203 = pneg %p202
    $region30: #{bottleneck_forward.6} parent=5 // pred_check_branch
      %205 = sbr.rel (%p203) target = $region32
    $region31: #{bottleneck_forward.6} parent=5 // pred_region
      // Predicated region
      $region33: #{bottleneck_forward.6} parent=31 // pred_check
        %p206 = pneg %p33
      $region34: #{bottleneck_forward.6} parent=31 // pred_check_branch
        %208 = sbr.rel (%p206) target = $region36
      $region35: #{bottleneck_forward.6} parent=31 // pred_region
        %s209 = smul.u32 32, %s13
        %p210 = scmp.lt.s32.totalorder %s209, 63
        %s211 = scalar_select %p210, %s209, 63
        %s212 = smul.addr %s211, 8
        %s213 = scalar_lea.vmem %s0, %s212
        %s214 = smul.u32 32, %s13
      $region36: #{bottleneck_forward.6} parent=31 // pred_fallthru
        _
    $region32: #{bottleneck_forward.6} parent=5 // pred_fallthru
      _
    %p215 = scmp.le.s32.totalorder 1, %s13
    %p216 = scmp.lt.s32.totalorder %s13, 3
    %p217 = pnand %p215, %p216
    %p218 = pneg %p217
    // Predicated region
    $region37: #{bottleneck_forward.6} parent=5 // pred_check
      _
    $region38: #{bottleneck_forward.6} parent=5 // pred_check_branch
      %220 = sbr.rel (%p217) target = $region40
    $region39: #{bottleneck_forward.6} parent=5 // pred_region
      %s221 = ssub.s32 %s13, 1
      %s222 = smul.u32 32, %s18
      %p223 = scmp.lt.s32.totalorder %s222, 63
      %s224 = scalar_select %p223, %s222, 63
      %s225 = smul.addr %s224, 8
      %s226 = scalar_lea.vmem %s0, %s225
      %p227 = pneg %p39
      %p228 = pneg %p36
      %p229 = pneg %p60
      %p230 = pneg %p57
      %p231 = pneg %p81
      %p232 = pneg %p78
      %p233 = pneg %p102
      %p234 = pneg %p99
      %p235 = pneg %p123
      %p236 = pneg %p120
      %p237 = pneg %p149
      %p238 = pneg %p146
      %s239 = smul.u32 32, %s18
      %p240 = scmp.lt.s32.totalorder %s239, 63
      %s241 = scalar_select %p240, %s239, 63
      %s242 = smul.addr %s241, 8
      %s243 = scalar_lea.vmem %s5, %s242
      %p244 = pneg %p175
      %p245 = pneg %p172
      %p246 = scmp.lt.s32.totalorder %s18, 1
      %s247 = scalar_select %p246, %s18, 1
      %s248 = smul.addr %s247, 2
      %s249 = scalar_lea.vmem %s6, %s248
      %s250 = smul.u32 32, %s18
      %p251 = scmp.lt.s32.totalorder %s250, 63
      %s252 = scalar_select %p251, %s250, 63
      %s253 = smul.addr %s252, 8
      %s254 = scalar_lea.vmem %s0, %s253
      %s255 = smul.u32 32, %s18
      %s256 = smul.u32 32, %s18
      %p257 = scmp.lt.s32.totalorder %s256, 63
      %s258 = scalar_select %p257, %s256, 63
      %s259 = smul.addr %s258, 8
      %s260 = scalar_lea.vmem %s5, %s259
      %s261 = smul.u32 32, %s18
      %p262 = scmp.lt.s32.totalorder %s18, 1
      %s263 = scalar_select %p262, %s18, 1
      %s264 = smul.addr %s263, 2
      %s265 = scalar_lea.vmem %s6, %s264
      %v267 = vld [vmem:[%s254] sm:$0xff]
      %v268 = vld [vmem:[%s254 + $0x8] sm:$0xff]
      %v269 = vld [vmem:[%s254 + $0x10] sm:$0xff]
      %v270 = vld [vmem:[%s254 + $0x18] sm:$0xff]
      %v271 = vld [vmem:[%s254 + $0x20] sm:$0xff]
      %v272 = vld [vmem:[%s254 + $0x28] sm:$0xff]
      %v273 = vld [vmem:[%s254 + $0x30] sm:$0xff]
      %v274 = vld [vmem:[%s254 + $0x38] sm:$0xff]
      %v275 = vld [vmem:[%s254 + $0x40] sm:$0xff]
      %v276 = vld [vmem:[%s254 + $0x48] sm:$0xff]
      %v277 = vld [vmem:[%s254 + $0x50] sm:$0xff]
      %v278 = vld [vmem:[%s254 + $0x58] sm:$0xff]
      %v279 = vld [vmem:[%s254 + $0x60] sm:$0xff]
      %v280 = vld [vmem:[%s254 + $0x68] sm:$0xff]
      %v281 = vld [vmem:[%s254 + $0x70] sm:$0xff]
      %v282 = vld [vmem:[%s254 + $0x78] sm:$0xff]
      %v283 = vld [vmem:[%s254 + $0x80] sm:$0xff]
      %v284 = vld [vmem:[%s254 + $0x88] sm:$0xff]
      %v285 = vld [vmem:[%s254 + $0x90] sm:$0xff]
      %v286 = vld [vmem:[%s254 + $0x98] sm:$0xff]
      %v287 = vld [vmem:[%s254 + $0xa0] sm:$0xff]
      %v288 = vld [vmem:[%s254 + $0xa8] sm:$0xff]
      %v289 = vld [vmem:[%s254 + $0xb0] sm:$0xff]
      %v290 = vld [vmem:[%s254 + $0xb8] sm:$0xff]
      %v291 = vld [vmem:[%s254 + $0xc0] sm:$0xff]
      %v292 = vld [vmem:[%s254 + $0xc8] sm:$0xff]
      %v293 = vld [vmem:[%s254 + $0xd0] sm:$0xff]
      %v294 = vld [vmem:[%s254 + $0xd8] sm:$0xff]
      %v295 = vld [vmem:[%s254 + $0xe0] sm:$0xff]
      %v296 = vld [vmem:[%s254 + $0xe8] sm:$0xff]
      %v297 = vld [vmem:[%s254 + $0xf0] sm:$0xff]
      %v298 = vld [vmem:[%s254 + $0xf8] sm:$0xff]
      %v299 = vld [vmem:[%s1] sm:$0x1]
      %v301 = vlaneseq
      %v302 = vshrl.u32 %v301, 7
      %v303 = vsub.s32 0, %v302
      %v304 = vrot.slane %v299, %v303
      %v306 = vmul.f32 %v267, %v304
      %v307 = vmul.f32 %v268, %v304
      %v308 = vmul.f32 %v269, %v304
      %v309 = vmul.f32 %v270, %v304
      %v310 = vmul.f32 %v271, %v304
      %v311 = vmul.f32 %v272, %v304
      %v312 = vmul.f32 %v273, %v304
      %v313 = vmul.f32 %v274, %v304
      %v314 = vmul.f32 %v275, %v304
      %v315 = vmul.f32 %v276, %v304
      %v316 = vmul.f32 %v277, %v304
      %v317 = vmul.f32 %v278, %v304
      %v318 = vmul.f32 %v279, %v304
      %v319 = vmul.f32 %v280, %v304
      %v320 = vmul.f32 %v281, %v304
      %v321 = vmul.f32 %v282, %v304
      %v322 = vmul.f32 %v283, %v304
      %v323 = vmul.f32 %v284, %v304
      %v324 = vmul.f32 %v285, %v304
      %v325 = vmul.f32 %v286, %v304
      %v326 = vmul.f32 %v287, %v304
      %v327 = vmul.f32 %v288, %v304
      %v328 = vmul.f32 %v289, %v304
      %v329 = vmul.f32 %v290, %v304
      %v330 = vmul.f32 %v291, %v304
      %v331 = vmul.f32 %v292, %v304
      %v332 = vmul.f32 %v293, %v304
      %v333 = vmul.f32 %v294, %v304
      %v334 = vmul.f32 %v295, %v304
      %v335 = vmul.f32 %v296, %v304
      %v336 = vmul.f32 %v297, %v304
      %v337 = vmul.f32 %v298, %v304
      %v338 = vld [vmem:[%s2] sm:$0x1]
      %v340 = vlaneseq
      %v341 = vshrl.u32 %v340, 7
      %v342 = vsub.s32 0, %v341
      %v343 = vrot.slane %v338, %v342
      %v345 = vadd.f32 %v306, %v343
      %v346 = vadd.f32 %v307, %v343
      %v347 = vadd.f32 %v308, %v343
      %v348 = vadd.f32 %v309, %v343
      %v349 = vadd.f32 %v310, %v343
      %v350 = vadd.f32 %v311, %v343
      %v351 = vadd.f32 %v312, %v343
      %v352 = vadd.f32 %v313, %v343
      %v353 = vadd.f32 %v314, %v343
      %v354 = vadd.f32 %v315, %v343
      %v355 = vadd.f32 %v316, %v343
      %v356 = vadd.f32 %v317, %v343
      %v357 = vadd.f32 %v318, %v343
      %v358 = vadd.f32 %v319, %v343
      %v359 = vadd.f32 %v320, %v343
      %v360 = vadd.f32 %v321, %v343
      %v361 = vadd.f32 %v322, %v343
      %v362 = vadd.f32 %v323, %v343
      %v363 = vadd.f32 %v324, %v343
      %v364 = vadd.f32 %v325, %v343
      %v365 = vadd.f32 %v326, %v343
      %v366 = vadd.f32 %v327, %v343
      %v367 = vadd.f32 %v328, %v343
      %v368 = vadd.f32 %v329, %v343
      %v369 = vadd.f32 %v330, %v343
      %v370 = vadd.f32 %v331, %v343
      %v371 = vadd.f32 %v332, %v343
      %v372 = vadd.f32 %v333, %v343
      %v373 = vadd.f32 %v334, %v343
      %v374 = vadd.f32 %v335, %v343
      %v375 = vadd.f32 %v336, %v343
      %v376 = vadd.f32 %v337, %v343
      %v377 = vmax.f32 %v345, 0.0
      %v378 = vmax.f32 %v346, 0.0
      %v379 = vmax.f32 %v347, 0.0
      %v380 = vmax.f32 %v348, 0.0
      %v381 = vmax.f32 %v349, 0.0
      %v382 = vmax.f32 %v350, 0.0
      %v383 = vmax.f32 %v351, 0.0
      %v384 = vmax.f32 %v352, 0.0
      %v385 = vmax.f32 %v353, 0.0
      %v386 = vmax.f32 %v354, 0.0
      %v387 = vmax.f32 %v355, 0.0
      %v388 = vmax.f32 %v356, 0.0
      %v389 = vmax.f32 %v357, 0.0
      %v390 = vmax.f32 %v358, 0.0
      %v391 = vmax.f32 %v359, 0.0
      %v392 = vmax.f32 %v360, 0.0
      %v393 = vmax.f32 %v361, 0.0
      %v394 = vmax.f32 %v362, 0.0
      %v395 = vmax.f32 %v363, 0.0
      %v396 = vmax.f32 %v364, 0.0
      %v397 = vmax.f32 %v365, 0.0
      %v398 = vmax.f32 %v366, 0.0
      %v399 = vmax.f32 %v367, 0.0
      %v400 = vmax.f32 %v368, 0.0
      %v401 = vmax.f32 %v369, 0.0
      %v402 = vmax.f32 %v370, 0.0
      %v403 = vmax.f32 %v371, 0.0
      %v404 = vmax.f32 %v372, 0.0
      %v405 = vmax.f32 %v373, 0.0
      %v406 = vmax.f32 %v374, 0.0
      %v407 = vmax.f32 %v375, 0.0
      %v408 = vmax.f32 %v376, 0.0
      %vm412 = vcmask 1040384
      %v413 = vrot.slane %v406, 7
      %v414 = vrot.slane %v407, 7
      %v415 = vsel %vm412, %v413, %v414
      %v416 = vrot.slane %v408, 7
      %v417 = vsel %vm412, %v414, %v416
      %v450 = vrot.slane %v377, 7
      %v451 = vrot.slane %v378, 7
      %v452 = vsel %vm412, %v450, %v451
      %v453 = vrot.slane %v379, 7
      %v454 = vsel %vm412, %v451, %v453
      %v455 = vrot.slane %v380, 7
      %v456 = vsel %vm412, %v453, %v455
      %v457 = vrot.slane %v381, 7
      %v458 = vsel %vm412, %v455, %v457
      %v459 = vrot.slane %v382, 7
      %v460 = vsel %vm412, %v457, %v459
      %v461 = vrot.slane %v383, 7
      %v462 = vsel %vm412, %v459, %v461
      %v463 = vrot.slane %v384, 7
      %v464 = vsel %vm412, %v461, %v463
      %v465 = vrot.slane %v385, 7
      %v466 = vsel %vm412, %v463, %v465
      %v467 = vrot.slane %v386, 7
      %v468 = vsel %vm412, %v465, %v467
      %v469 = vrot.slane %v387, 7
      %v470 = vsel %vm412, %v467, %v469
      %v471 = vrot.slane %v388, 7
      %v472 = vsel %vm412, %v469, %v471
      %v473 = vrot.slane %v389, 7
      %v474 = vsel %vm412, %v471, %v473
      %v475 = vrot.slane %v390, 7
      %v476 = vsel %vm412, %v473, %v475
      %v477 = vrot.slane %v391, 7
      %v478 = vsel %vm412, %v475, %v477
      %v479 = vrot.slane %v392, 7
      %v480 = vsel %vm412, %v477, %v479
      %v481 = vrot.slane %v393, 7
      %v482 = vsel %vm412, %v479, %v481
      %v483 = vrot.slane %v394, 7
      %v484 = vsel %vm412, %v481, %v483
      %v485 = vrot.slane %v395, 7
      %v486 = vsel %vm412, %v483, %v485
      %v487 = vrot.slane %v396, 7
      %v488 = vsel %vm412, %v485, %v487
      %v489 = vrot.slane %v397, 7
      %v490 = vsel %vm412, %v487, %v489
      %v491 = vrot.slane %v398, 7
      %v492 = vsel %vm412, %v489, %v491
      %v493 = vrot.slane %v399, 7
      %v494 = vsel %vm412, %v491, %v493
      %v495 = vrot.slane %v400, 7
      %v496 = vsel %vm412, %v493, %v495
      %v497 = vrot.slane %v401, 7
      %v498 = vsel %vm412, %v495, %v497
      %v499 = vrot.slane %v402, 7
      %v500 = vsel %vm412, %v497, %v499
      %v501 = vrot.slane %v403, 7
      %v502 = vsel %vm412, %v499, %v501
      %v503 = vrot.slane %v404, 7
      %v504 = vsel %vm412, %v501, %v503
      %v505 = vrot.slane %v405, 7
      %v506 = vsel %vm412, %v503, %v505
      %v507 = vsel %vm412, %v505, %v413
      %v538 = vsel %vm412, %v416, %v450
      %v539 = vld [vmem:[%s4] sm:$0xff]
      %v540 = vld [vmem:[%s4 + $0x8] sm:$0xff]
      %v541 = vld [vmem:[%s4 + $0x10] sm:$0xff]
      %v542 = vld [vmem:[%s4 + $0x18] sm:$0xff]
      %v543 = vld [vmem:[%s4 + $0x20] sm:$0xff]
      %v544 = vld [vmem:[%s4 + $0x28] sm:$0xff]
      %v545 = vld [vmem:[%s4 + $0x30] sm:$0xff]
      %v546 = vld [vmem:[%s4 + $0x38] sm:$0xff]
      %v547 = vld [vmem:[%s4 + $0x40] sm:$0xff]
      %v548 = vld [vmem:[%s4 + $0x48] sm:$0xff]
      %v549 = vld [vmem:[%s4 + $0x50] sm:$0xff]
      %v550 = vld [vmem:[%s4 + $0x58] sm:$0xff]
      %v551 = vld [vmem:[%s4 + $0x60] sm:$0xff]
      %v552 = vld [vmem:[%s4 + $0x68] sm:$0xff]
      %v553 = vld [vmem:[%s4 + $0x70] sm:$0xff]
      %v554 = vld [vmem:[%s4 + $0x78] sm:$0xff]
      %v555 = vld [vmem:[%s4 + $0x80] sm:$0xff]
      %v556 = vld [vmem:[%s4 + $0x88] sm:$0xff]
      %v557 = vld [vmem:[%s4 + $0x90] sm:$0xff]
      %v558 = vld [vmem:[%s4 + $0x98] sm:$0xff]
      %v559 = vld [vmem:[%s4 + $0xa0] sm:$0xff]
      %v560 = vld [vmem:[%s4 + $0xa8] sm:$0xff]
      %v561 = vld [vmem:[%s4 + $0xb0] sm:$0xff]
      %v562 = vld [vmem:[%s4 + $0xb8] sm:$0xff]
      %v563 = vld [vmem:[%s4 + $0xc0] sm:$0xff]
      %v564 = vld [vmem:[%s4 + $0xc8] sm:$0xff]
      %v565 = vld [vmem:[%s4 + $0xd0] sm:$0xff]
      %v566 = vld [vmem:[%s4 + $0xd8] sm:$0xff]
      %v567 = vld [vmem:[%s4 + $0xe0] sm:$0xff]
      %v568 = vld [vmem:[%s4 + $0xe8] sm:$0xff]
      %v569 = vld [vmem:[%s4 + $0xf0] sm:$0xff]
      %v570 = vld [vmem:[%s4 + $0xf8] sm:$0xff]
      %572 = vset.pattern.permute.xlu0 0
      %573 = vperm.xlu0 %572, %v539
      %v574 = vpop.permute.xlu0 %573
      %577 = vset.pattern.permute.xlu0 0
      %578 = vperm.xlu0 %577, %v540
      %v579 = vpop.permute.xlu0 %578
      %582 = vset.pattern.permute.xlu0 0
      %583 = vperm.xlu0 %582, %v541
      %v584 = vpop.permute.xlu0 %583
      %587 = vset.pattern.permute.xlu0 0
      %588 = vperm.xlu0 %587, %v542
      %v589 = vpop.permute.xlu0 %588
      %592 = vset.pattern.permute.xlu0 0
      %593 = vperm.xlu0 %592, %v543
      %v594 = vpop.permute.xlu0 %593
      %597 = vset.pattern.permute.xlu0 0
      %598 = vperm.xlu0 %597, %v544
      %v599 = vpop.permute.xlu0 %598
      %602 = vset.pattern.permute.xlu0 0
      %603 = vperm.xlu0 %602, %v545
      %v604 = vpop.permute.xlu0 %603
      %607 = vset.pattern.permute.xlu0 0
      %608 = vperm.xlu0 %607, %v546
      %v609 = vpop.permute.xlu0 %608
      %612 = vset.pattern.permute.xlu0 0
      %613 = vperm.xlu0 %612, %v547
      %v614 = vpop.permute.xlu0 %613
      %617 = vset.pattern.permute.xlu0 0
      %618 = vperm.xlu0 %617, %v548
      %v619 = vpop.permute.xlu0 %618
      %622 = vset.pattern.permute.xlu0 0
      %623 = vperm.xlu0 %622, %v549
      %v624 = vpop.permute.xlu0 %623
      %627 = vset.pattern.permute.xlu0 0
      %628 = vperm.xlu0 %627, %v550
      %v629 = vpop.permute.xlu0 %628
      %632 = vset.pattern.permute.xlu0 0
      %633 = vperm.xlu0 %632, %v551
      %v634 = vpop.permute.xlu0 %633
      %637 = vset.pattern.permute.xlu0 0
      %638 = vperm.xlu0 %637, %v552
      %v639 = vpop.permute.xlu0 %638
      %642 = vset.pattern.permute.xlu0 0
      %643 = vperm.xlu0 %642, %v553
      %v644 = vpop.permute.xlu0 %643
      %647 = vset.pattern.permute.xlu0 0
      %648 = vperm.xlu0 %647, %v554
      %v649 = vpop.permute.xlu0 %648
      %652 = vset.pattern.permute.xlu0 0
      %653 = vperm.xlu0 %652, %v555
      %v654 = vpop.permute.xlu0 %653
      %657 = vset.pattern.permute.xlu0 0
      %658 = vperm.xlu0 %657, %v556
      %v659 = vpop.permute.xlu0 %658
      %662 = vset.pattern.permute.xlu0 0
      %663 = vperm.xlu0 %662, %v557
      %v664 = vpop.permute.xlu0 %663
      %667 = vset.pattern.permute.xlu0 0
      %668 = vperm.xlu0 %667, %v558
      %v669 = vpop.permute.xlu0 %668
      %672 = vset.pattern.permute.xlu0 0
      %673 = vperm.xlu0 %672, %v559
      %v674 = vpop.permute.xlu0 %673
      %677 = vset.pattern.permute.xlu0 0
      %678 = vperm.xlu0 %677, %v560
      %v679 = vpop.permute.xlu0 %678
      %682 = vset.pattern.permute.xlu0 0
      %683 = vperm.xlu0 %682, %v561
      %v684 = vpop.permute.xlu0 %683
      %687 = vset.pattern.permute.xlu0 0
      %688 = vperm.xlu0 %687, %v562
      %v689 = vpop.permute.xlu0 %688
      %692 = vset.pattern.permute.xlu0 0
      %693 = vperm.xlu0 %692, %v563
      %v694 = vpop.permute.xlu0 %693
      %697 = vset.pattern.permute.xlu0 0
      %698 = vperm.xlu0 %697, %v564
      %v699 = vpop.permute.xlu0 %698
      %702 = vset.pattern.permute.xlu0 0
      %703 = vperm.xlu0 %702, %v565
      %v704 = vpop.permute.xlu0 %703
      %707 = vset.pattern.permute.xlu0 0
      %708 = vperm.xlu0 %707, %v566
      %v709 = vpop.permute.xlu0 %708
      %712 = vset.pattern.permute.xlu0 0
      %713 = vperm.xlu0 %712, %v567
      %v714 = vpop.permute.xlu0 %713
      %717 = vset.pattern.permute.xlu0 0
      %718 = vperm.xlu0 %717, %v568
      %v719 = vpop.permute.xlu0 %718
      %722 = vset.pattern.permute.xlu0 0
      %723 = vperm.xlu0 %722, %v569
      %v724 = vpop.permute.xlu0 %723
      %727 = vset.pattern.permute.xlu0 0
      %728 = vperm.xlu0 %727, %v570
      %v729 = vpop.permute.xlu0 %728
      %v731 = vmul.f32 %v415, %v574
      %v732 = vmul.f32 %v417, %v579
      %v733 = vmul.f32 %v538, %v584
      %v734 = vmul.f32 %v452, %v589
      %v735 = vmul.f32 %v454, %v594
      %v736 = vmul.f32 %v456, %v599
      %v737 = vmul.f32 %v458, %v604
      %v738 = vmul.f32 %v460, %v609
      %v739 = vmul.f32 %v462, %v614
      %v740 = vmul.f32 %v464, %v619
      %v741 = vmul.f32 %v466, %v624
      %v742 = vmul.f32 %v468, %v629
      %v743 = vmul.f32 %v470, %v634
      %v744 = vmul.f32 %v472, %v639
      %v745 = vmul.f32 %v474, %v644
      %v746 = vmul.f32 %v476, %v649
      %v747 = vmul.f32 %v478, %v654
      %v748 = vmul.f32 %v480, %v659
      %v749 = vmul.f32 %v482, %v664
      %v750 = vmul.f32 %v484, %v669
      %v751 = vmul.f32 %v486, %v674
      %v752 = vmul.f32 %v488, %v679
      %v753 = vmul.f32 %v490, %v684
      %v754 = vmul.f32 %v492, %v689
      %v755 = vmul.f32 %v494, %v694
      %v756 = vmul.f32 %v496, %v699
      %v757 = vmul.f32 %v498, %v704
      %v758 = vmul.f32 %v500, %v709
      %v759 = vmul.f32 %v502, %v714
      %v760 = vmul.f32 %v504, %v719
      %v761 = vmul.f32 %v506, %v724
      %v762 = vmul.f32 %v507, %v729
      %v763 = vpack.c.bf16 %v732, %v731
      %v764 = vpack.c.bf16 %v734, %v733
      %v765 = vpack.c.bf16 %v736, %v735
      %v766 = vpack.c.bf16 %v738, %v737
      %v767 = vpack.c.bf16 %v740, %v739
      %v768 = vpack.c.bf16 %v742, %v741
      %v769 = vpack.c.bf16 %v744, %v743
      %v770 = vpack.c.bf16 %v746, %v745
      %v771 = vpack.c.bf16 %v748, %v747
      %v772 = vpack.c.bf16 %v750, %v749
      %v773 = vpack.c.bf16 %v752, %v751
      %v774 = vpack.c.bf16 %v754, %v753
      %v775 = vpack.c.bf16 %v756, %v755
      %v776 = vpack.c.bf16 %v758, %v757
      %v777 = vpack.c.bf16 %v760, %v759
      %v778 = vpack.c.bf16 %v762, %v761
      %v779 = vld [vmem:[%s3] sm:$0xf]
      %v780 = vld [vmem:[%s3 + $0x4] sm:$0xf]
      %v781 = vld [vmem:[%s3 + $0x8] sm:$0xf]
      %v782 = vld [vmem:[%s3 + $0xc] sm:$0xf]
      %v783 = vld [vmem:[%s3 + $0x10] sm:$0xf]
      %v784 = vld [vmem:[%s3 + $0x14] sm:$0xf]
      %v785 = vld [vmem:[%s3 + $0x18] sm:$0xf]
      %v786 = vld [vmem:[%s3 + $0x1c] sm:$0xf]
      %v787 = vld [vmem:[%s3 + $0x20] sm:$0xf]
      %v788 = vld [vmem:[%s3 + $0x24] sm:$0xf]
      %v789 = vld [vmem:[%s3 + $0x28] sm:$0xf]
      %v790 = vld [vmem:[%s3 + $0x2c] sm:$0xf]
      %v791 = vld [vmem:[%s3 + $0x30] sm:$0xf]
      %v792 = vld [vmem:[%s3 + $0x34] sm:$0xf]
      %v793 = vld [vmem:[%s3 + $0x38] sm:$0xf]
      %v794 = vld [vmem:[%s3 + $0x3c] sm:$0xf]
      %s795 = scalar_lea.vmem %s4, 256
      %v796 = vld [vmem:[%s795] sm:$0xff]
      %v797 = vld [vmem:[%s795 + $0x8] sm:$0xff]
      %v798 = vld [vmem:[%s795 + $0x10] sm:$0xff]
      %v799 = vld [vmem:[%s795 + $0x18] sm:$0xff]
      %v800 = vld [vmem:[%s795 + $0x20] sm:$0xff]
      %v801 = vld [vmem:[%s795 + $0x28] sm:$0xff]
      %v802 = vld [vmem:[%s795 + $0x30] sm:$0xff]
      %v803 = vld [vmem:[%s795 + $0x38] sm:$0xff]
      %v804 = vld [vmem:[%s795 + $0x40] sm:$0xff]
      %v805 = vld [vmem:[%s795 + $0x48] sm:$0xff]
      %v806 = vld [vmem:[%s795 + $0x50] sm:$0xff]
      %v807 = vld [vmem:[%s795 + $0x58] sm:$0xff]
      %v808 = vld [vmem:[%s795 + $0x60] sm:$0xff]
      %v809 = vld [vmem:[%s795 + $0x68] sm:$0xff]
      %v810 = vld [vmem:[%s795 + $0x70] sm:$0xff]
      %v811 = vld [vmem:[%s795 + $0x78] sm:$0xff]
      %v812 = vld [vmem:[%s795 + $0x80] sm:$0xff]
      %v813 = vld [vmem:[%s795 + $0x88] sm:$0xff]
      %v814 = vld [vmem:[%s795 + $0x90] sm:$0xff]
      %v815 = vld [vmem:[%s795 + $0x98] sm:$0xff]
      %v816 = vld [vmem:[%s795 + $0xa0] sm:$0xff]
      %v817 = vld [vmem:[%s795 + $0xa8] sm:$0xff]
      %v818 = vld [vmem:[%s795 + $0xb0] sm:$0xff]
      %v819 = vld [vmem:[%s795 + $0xb8] sm:$0xff]
      %v820 = vld [vmem:[%s795 + $0xc0] sm:$0xff]
      %v821 = vld [vmem:[%s795 + $0xc8] sm:$0xff]
      %v822 = vld [vmem:[%s795 + $0xd0] sm:$0xff]
      %v823 = vld [vmem:[%s795 + $0xd8] sm:$0xff]
      %v824 = vld [vmem:[%s795 + $0xe0] sm:$0xff]
      %v825 = vld [vmem:[%s795 + $0xe8] sm:$0xff]
      %v826 = vld [vmem:[%s795 + $0xf0] sm:$0xff]
      %v827 = vld [vmem:[%s795 + $0xf8] sm:$0xff]
      %829 = vset.pattern.permute.xlu0 0
      %830 = vperm.xlu0 %829, %v796
      %v831 = vpop.permute.xlu0 %830
      %834 = vset.pattern.permute.xlu0 0
      %835 = vperm.xlu0 %834, %v797
      %v836 = vpop.permute.xlu0 %835
      %839 = vset.pattern.permute.xlu0 0
      %840 = vperm.xlu0 %839, %v798
      %v841 = vpop.permute.xlu0 %840
      %844 = vset.pattern.permute.xlu0 0
      %845 = vperm.xlu0 %844, %v799
      %v846 = vpop.permute.xlu0 %845
      %849 = vset.pattern.permute.xlu0 0
      %850 = vperm.xlu0 %849, %v800
      %v851 = vpop.permute.xlu0 %850
      %854 = vset.pattern.permute.xlu0 0
      %855 = vperm.xlu0 %854, %v801
      %v856 = vpop.permute.xlu0 %855
      %859 = vset.pattern.permute.xlu0 0
      %860 = vperm.xlu0 %859, %v802
      %v861 = vpop.permute.xlu0 %860
      %864 = vset.pattern.permute.xlu0 0
      %865 = vperm.xlu0 %864, %v803
      %v866 = vpop.permute.xlu0 %865
      %869 = vset.pattern.permute.xlu0 0
      %870 = vperm.xlu0 %869, %v804
      %v871 = vpop.permute.xlu0 %870
      %874 = vset.pattern.permute.xlu0 0
      %875 = vperm.xlu0 %874, %v805
      %v876 = vpop.permute.xlu0 %875
      %879 = vset.pattern.permute.xlu0 0
      %880 = vperm.xlu0 %879, %v806
      %v881 = vpop.permute.xlu0 %880
      %884 = vset.pattern.permute.xlu0 0
      %885 = vperm.xlu0 %884, %v807
      %v886 = vpop.permute.xlu0 %885
      %889 = vset.pattern.permute.xlu0 0
      %890 = vperm.xlu0 %889, %v808
      %v891 = vpop.permute.xlu0 %890
      %894 = vset.pattern.permute.xlu0 0
      %895 = vperm.xlu0 %894, %v809
      %v896 = vpop.permute.xlu0 %895
      %899 = vset.pattern.permute.xlu0 0
      %900 = vperm.xlu0 %899, %v810
      %v901 = vpop.permute.xlu0 %900
      %904 = vset.pattern.permute.xlu0 0
      %905 = vperm.xlu0 %904, %v811
      %v906 = vpop.permute.xlu0 %905
      %909 = vset.pattern.permute.xlu0 0
      %910 = vperm.xlu0 %909, %v812
      %v911 = vpop.permute.xlu0 %910
      %914 = vset.pattern.permute.xlu0 0
      %915 = vperm.xlu0 %914, %v813
      %v916 = vpop.permute.xlu0 %915
      %919 = vset.pattern.permute.xlu0 0
      %920 = vperm.xlu0 %919, %v814
      %v921 = vpop.permute.xlu0 %920
      %924 = vset.pattern.permute.xlu0 0
      %925 = vperm.xlu0 %924, %v815
      %v926 = vpop.permute.xlu0 %925
      %929 = vset.pattern.permute.xlu0 0
      %930 = vperm.xlu0 %929, %v816
      %v931 = vpop.permute.xlu0 %930
      %934 = vset.pattern.permute.xlu0 0
      %935 = vperm.xlu0 %934, %v817
      %v936 = vpop.permute.xlu0 %935
      %939 = vset.pattern.permute.xlu0 0
      %940 = vperm.xlu0 %939, %v818
      %v941 = vpop.permute.xlu0 %940
      %944 = vset.pattern.permute.xlu0 0
      %945 = vperm.xlu0 %944, %v819
      %v946 = vpop.permute.xlu0 %945
      %949 = vset.pattern.permute.xlu0 0
      %950 = vperm.xlu0 %949, %v820
      %v951 = vpop.permute.xlu0 %950
      %954 = vset.pattern.permute.xlu0 0
      %955 = vperm.xlu0 %954, %v821
      %v956 = vpop.permute.xlu0 %955
      %959 = vset.pattern.permute.xlu0 0
      %960 = vperm.xlu0 %959, %v822
      %v961 = vpop.permute.xlu0 %960
      %964 = vset.pattern.permute.xlu0 0
      %965 = vperm.xlu0 %964, %v823
      %v966 = vpop.permute.xlu0 %965
      %969 = vset.pattern.permute.xlu0 0
      %970 = vperm.xlu0 %969, %v824
      %v971 = vpop.permute.xlu0 %970
      %974 = vset.pattern.permute.xlu0 0
      %975 = vperm.xlu0 %974, %v825
      %v976 = vpop.permute.xlu0 %975
      %979 = vset.pattern.permute.xlu0 0
      %980 = vperm.xlu0 %979, %v826
      %v981 = vpop.permute.xlu0 %980
      %984 = vset.pattern.permute.xlu0 0
      %985 = vperm.xlu0 %984, %v827
      %v986 = vpop.permute.xlu0 %985
      %v988 = vmul.f32 %v407, %v831
      %v989 = vmul.f32 %v408, %v836
      %v990 = vmul.f32 %v377, %v841
      %v991 = vmul.f32 %v378, %v846
      %v992 = vmul.f32 %v379, %v851
      %v993 = vmul.f32 %v380, %v856
      %v994 = vmul.f32 %v381, %v861
      %v995 = vmul.f32 %v382, %v866
      %v996 = vmul.f32 %v383, %v871
      %v997 = vmul.f32 %v384, %v876
      %v998 = vmul.f32 %v385, %v881
      %v999 = vmul.f32 %v386, %v886
      %v1000 = vmul.f32 %v387, %v891
      %v1001 = vmul.f32 %v388, %v896
      %v1002 = vmul.f32 %v389, %v901
      %v1003 = vmul.f32 %v390, %v906
      %v1004 = vmul.f32 %v391, %v911
      %v1005 = vmul.f32 %v392, %v916
      %v1006 = vmul.f32 %v393, %v921
      %v1007 = vmul.f32 %v394, %v926
      %v1008 = vmul.f32 %v395, %v931
      %v1009 = vmul.f32 %v396, %v936
      %v1010 = vmul.f32 %v397, %v941
      %v1011 = vmul.f32 %v398, %v946
      %v1012 = vmul.f32 %v399, %v951
      %v1013 = vmul.f32 %v400, %v956
      %v1014 = vmul.f32 %v401, %v961
      %v1015 = vmul.f32 %v402, %v966
      %v1016 = vmul.f32 %v403, %v971
      %v1017 = vmul.f32 %v404, %v976
      %v1018 = vmul.f32 %v405, %v981
      %v1019 = vmul.f32 %v406, %v986
      %v1020 = vpack.c.bf16 %v989, %v988
      %v1021 = vpack.c.bf16 %v991, %v990
      %v1022 = vpack.c.bf16 %v993, %v992
      %v1023 = vpack.c.bf16 %v995, %v994
      %v1024 = vpack.c.bf16 %v997, %v996
      %v1025 = vpack.c.bf16 %v999, %v998
      %v1026 = vpack.c.bf16 %v1001, %v1000
      %v1027 = vpack.c.bf16 %v1003, %v1002
      %v1028 = vpack.c.bf16 %v1005, %v1004
      %v1029 = vpack.c.bf16 %v1007, %v1006
      %v1030 = vpack.c.bf16 %v1009, %v1008
      %v1031 = vpack.c.bf16 %v1011, %v1010
      %v1032 = vpack.c.bf16 %v1013, %v1012
      %v1033 = vpack.c.bf16 %v1015, %v1014
      %v1034 = vpack.c.bf16 %v1017, %v1016
      %v1035 = vpack.c.bf16 %v1019, %v1018
      %s1036 = scalar_lea.vmem %s3, 64
      %v1037 = vld [vmem:[%s1036] sm:$0xf]
      %v1038 = vld [vmem:[%s1036 + $0x4] sm:$0xf]
      %v1039 = vld [vmem:[%s1036 + $0x8] sm:$0xf]
      %v1040 = vld [vmem:[%s1036 + $0xc] sm:$0xf]
      %v1041 = vld [vmem:[%s1036 + $0x10] sm:$0xf]
      %v1042 = vld [vmem:[%s1036 + $0x14] sm:$0xf]
      %v1043 = vld [vmem:[%s1036 + $0x18] sm:$0xf]
      %v1044 = vld [vmem:[%s1036 + $0x1c] sm:$0xf]
      %v1045 = vld [vmem:[%s1036 + $0x20] sm:$0xf]
      %v1046 = vld [vmem:[%s1036 + $0x24] sm:$0xf]
      %v1047 = vld [vmem:[%s1036 + $0x28] sm:$0xf]
      %v1048 = vld [vmem:[%s1036 + $0x2c] sm:$0xf]
      %v1049 = vld [vmem:[%s1036 + $0x30] sm:$0xf]
      %v1050 = vld [vmem:[%s1036 + $0x34] sm:$0xf]
      %v1051 = vld [vmem:[%s1036 + $0x38] sm:$0xf]
      %v1052 = vld [vmem:[%s1036 + $0x3c] sm:$0xf]
      %v1069 = vunpack.c.l.b16 %v1037
      %v1070 = vunpack.c.l.b16 %v1038
      %v1071 = vunpack.c.l.b16 %v1039
      %v1072 = vunpack.c.l.b16 %v1040
      %v1073 = vunpack.c.l.b16 %v1041
      %v1074 = vunpack.c.l.b16 %v1042
      %v1075 = vunpack.c.l.b16 %v1043
      %v1076 = vunpack.c.l.b16 %v1044
      %v1077 = vunpack.c.l.b16 %v1045
      %v1078 = vunpack.c.l.b16 %v1046
      %v1079 = vunpack.c.l.b16 %v1047
      %v1080 = vunpack.c.l.b16 %v1048
      %v1081 = vunpack.c.l.b16 %v1049
      %v1082 = vunpack.c.l.b16 %v1050
      %v1083 = vunpack.c.l.b16 %v1051
      %v1084 = vunpack.c.l.b16 %v1052
      %v1085 = vpack.c.b16 %v1070, %v1069
      %v1086 = vpack.c.b16 %v1072, %v1071
      %v1087 = vpack.c.b16 %v1074, %v1073
      %v1088 = vpack.c.b16 %v1076, %v1075
      %v1089 = vpack.c.b16 %v1078, %v1077
      %v1090 = vpack.c.b16 %v1080, %v1079
      %v1091 = vpack.c.b16 %v1082, %v1081
      %v1092 = vpack.c.b16 %v1084, %v1083
      %1101 = vmatprep.subr.bf16.mxu0 0
      %1102 = vmatpush1.bf16.msra.mxu0 %v1085
      %1103 = vmatprep.subr.bf16.mxu0 0
      %1104 = vmatpush1.bf16.msra.mxu0 %v1086
      %1105 = vmatprep.subr.bf16.mxu0 0
      %1106 = vmatpush1.bf16.msra.mxu0 %v1087
      %1107 = vmatprep.subr.bf16.mxu0 0
      %1108 = vmatpush1.bf16.msra.mxu0 %v1088
      %1109 = vmatprep.subr.bf16.mxu0 0
      %1110 = vmatpush1.bf16.msra.mxu0 %v1089
      %1111 = vmatprep.subr.bf16.mxu0 0
      %1112 = vmatpush1.bf16.msra.mxu0 %v1090
      %1113 = vmatprep.subr.bf16.mxu0 0
      %1114 = vmatpush1.bf16.msra.mxu0 %v1091
      %1115 = vmatprep.subr.bf16.mxu0 0
      %1116 = vmatpush1.bf16.msra.mxu0 %v1092
      %1117 = vmatprep.subr.bf16.mxu0 0
      %1118 = vmatpush1.bf16.msra.mxu0 0
      %1119 = vmatprep.subr.bf16.mxu0 0
      %1120 = vmatpush1.bf16.msra.mxu0 0
      %1121 = vmatprep.subr.bf16.mxu0 0
      %1122 = vmatpush1.bf16.msra.mxu0 0
      %1123 = vmatprep.subr.bf16.mxu0 0
      %1124 = vmatpush1.bf16.msra.mxu0 0
      %1125 = vmatprep.subr.bf16.mxu0 0
      %1126 = vmatpush1.bf16.msra.mxu0 0
      %1127 = vmatprep.subr.bf16.mxu0 0
      %1128 = vmatpush1.bf16.msra.mxu0 0
      %1129 = vmatprep.subr.bf16.mxu0 0
      %1130 = vmatpush1.bf16.msra.mxu0 0
      %1131 = vmatprep.subr.bf16.mxu0 0
      %1132 = vmatpush1.bf16.msra.mxu0 0
      %1133 = vmatprep.mubr.bf16.mxu0 0
      %1134 = vmatmul.mubr.bf16.gmra.mrb[0].mxu0 %v1020
      %v1135 = vpop.f32.mrb[0].mxu0
      %v1136 = vadd.f32 0.0, %v1135
      %v1137 = vpop.f32.mrb[0].mxu0
      %v1138 = vpop.f32.mrb[0].mxu0
      %v1139 = vadd.f32 0.0, %v1138
      %v1140 = vpop.f32.mrb[0].mxu0
      %1141 = vmatprep.mubr.bf16.mxu0 0
      %1142 = vmatmul.mubr.bf16.gmra.mrb[0].mxu0 %v1021
      %v1143 = vpop.f32.mrb[0].mxu0
      %v1144 = vadd.f32 0.0, %v1143
      %v1145 = vpop.f32.mrb[0].mxu0
      %v1146 = vpop.f32.mrb[0].mxu0
      %v1147 = vadd.f32 0.0, %v1146
      %v1148 = vpop.f32.mrb[0].mxu0
      %1149 = vmatprep.mubr.bf16.mxu0 0
      %1150 = vmatmul.mubr.bf16.gmra.mrb[0].mxu0 %v1022
      %v1151 = vpop.f32.mrb[0].mxu0
      %v1152 = vadd.f32 0.0, %v1151
      %v1153 = vpop.f32.mrb[0].mxu0
      %v1154 = vpop.f32.mrb[0].mxu0
      %v1155 = vadd.f32 0.0, %v1154
      %v1156 = vpop.f32.mrb[0].mxu0
      %1157 = vmatprep.mubr.bf16.mxu0 0
      %1158 = vmatmul.mubr.bf16.gmra.mrb[0].mxu0 %v1023
      %v1159 = vpop.f32.mrb[0].mxu0
      %v1160 = vadd.f32 0.0, %v1159
      %v1161 = vpop.f32.mrb[0].mxu0
      %v1162 = vpop.f32.mrb[0].mxu0
      %v1163 = vadd.f32 0.0, %v1162
      %v1164 = vpop.f32.mrb[0].mxu0
      %1165 = vmatprep.mubr.bf16.mxu0 0
      %1166 = vmatmul.mubr.bf16.gmra.mrb[0].mxu0 %v1024
      %v1167 = vpop.f32.mrb[0].mxu0
      %v1168 = vadd.f32 0.0, %v1167
      %v1169 = vpop.f32.mrb[0].mxu0
      %v1170 = vpop.f32.mrb[0].mxu0
      %v1171 = vadd.f32 0.0, %v1170
      %v1172 = vpop.f32.mrb[0].mxu0
      %1173 = vmatprep.mubr.bf16.mxu0 0
      %1174 = vmatmul.mubr.bf16.gmra.mrb[0].mxu0 %v1025
      %v1175 = vpop.f32.mrb[0].mxu0
      %v1176 = vadd.f32 0.0, %v1175
      %v1177 = vpop.f32.mrb[0].mxu0
      %v1178 = vpop.f32.mrb[0].mxu0
      %v1179 = vadd.f32 0.0, %v1178
      %v1180 = vpop.f32.mrb[0].mxu0
      %1181 = vmatprep.mubr.bf16.mxu0 0
      %1182 = vmatmul.mubr.bf16.gmra.mrb[0].mxu0 %v1026
      %v1183 = vpop.f32.mrb[0].mxu0
      %v1184 = vadd.f32 0.0, %v1183
      %v1185 = vpop.f32.mrb[0].mxu0
      %v1186 = vpop.f32.mrb[0].mxu0
      %v1187 = vadd.f32 0.0, %v1186
      %v1188 = vpop.f32.mrb[0].mxu0
      %1189 = vmatprep.mubr.bf16.mxu0 0
      %1190 = vmatmul.mubr.bf16.gmra.mrb[0].mxu0 %v1027
      %v1191 = vpop.f32.mrb[0].mxu0
      %v1192 = vadd.f32 0.0, %v1191
      %v1193 = vpop.f32.mrb[0].mxu0
      %v1194 = vpop.f32.mrb[0].mxu0
      %v1195 = vadd.f32 0.0, %v1194
      %v1196 = vpop.f32.mrb[0].mxu0
      %1197 = vmatprep.mubr.bf16.mxu0 0
      %1198 = vmatmul.mubr.bf16.gmra.mrb[0].mxu0 %v1028
      %v1199 = vpop.f32.mrb[0].mxu0
      %v1200 = vadd.f32 0.0, %v1199
      %v1201 = vpop.f32.mrb[0].mxu0
      %v1202 = vpop.f32.mrb[0].mxu0
      %v1203 = vadd.f32 0.0, %v1202
      %v1204 = vpop.f32.mrb[0].mxu0
      %1205 = vmatprep.mubr.bf16.mxu0 0
      %1206 = vmatmul.mubr.bf16.gmra.mrb[0].mxu0 %v1029
      %v1207 = vpop.f32.mrb[0].mxu0
      %v1208 = vadd.f32 0.0, %v1207
      %v1209 = vpop.f32.mrb[0].mxu0
      %v1210 = vpop.f32.mrb[0].mxu0
      %v1211 = vadd.f32 0.0, %v1210
      %v1212 = vpop.f32.mrb[0].mxu0
      %1213 = vmatprep.mubr.bf16.mxu0 0
      %1214 = vmatmul.mubr.bf16.gmra.mrb[0].mxu0 %v1030
      %v1215 = vpop.f32.mrb[0].mxu0
      %v1216 = vadd.f32 0.0, %v1215
      %v1217 = vpop.f32.mrb[0].mxu0
      %v1218 = vpop.f32.mrb[0].mxu0
      %v1219 = vadd.f32 0.0, %v1218
      %v1220 = vpop.f32.mrb[0].mxu0
      %1221 = vmatprep.mubr.bf16.mxu0 0
      %1222 = vmatmul.mubr.bf16.gmra.mrb[0].mxu0 %v1031
      %v1223 = vpop.f32.mrb[0].mxu0
      %v1224 = vadd.f32 0.0, %v1223
      %v1225 = vpop.f32.mrb[0].mxu0
      %v1226 = vpop.f32.mrb[0].mxu0
      %v1227 = vadd.f32 0.0, %v1226
      %v1228 = vpop.f32.mrb[0].mxu0
      %1229 = vmatprep.mubr.bf16.mxu0 0
      %1230 = vmatmul.mubr.bf16.gmra.mrb[0].mxu0 %v1032
      %v1231 = vpop.f32.mrb[0].mxu0
      %v1232 = vadd.f32 0.0, %v1231
      %v1233 = vpop.f32.mrb[0].mxu0
      %v1234 = vpop.f32.mrb[0].mxu0
      %v1235 = vadd.f32 0.0, %v1234
      %v1236 = vpop.f32.mrb[0].mxu0
      %1237 = vmatprep.mubr.bf16.mxu0 0
      %1238 = vmatmul.mubr.bf16.gmra.mrb[0].mxu0 %v1033
      %v1239 = vpop.f32.mrb[0].mxu0
      %v1240 = vadd.f32 0.0, %v1239
      %v1241 = vpop.f32.mrb[0].mxu0
      %v1242 = vpop.f32.mrb[0].mxu0
      %v1243 = vadd.f32 0.0, %v1242
      %v1244 = vpop.f32.mrb[0].mxu0
      %1245 = vmatprep.mubr.bf16.mxu0 0
      %1246 = vmatmul.mubr.bf16.gmra.mrb[0].mxu0 %v1034
      %v1247 = vpop.f32.mrb[0].mxu0
      %v1248 = vadd.f32 0.0, %v1247
      %v1249 = vpop.f32.mrb[0].mxu0
      %v1250 = vpop.f32.mrb[0].mxu0
      %v1251 = vadd.f32 0.0, %v1250
      %v1252 = vpop.f32.mrb[0].mxu0
      %1253 = vmatprep.mubr.bf16.mxu0 0
      %1254 = vmatmul.mubr.bf16.gmra.mrb[0].mxu0 %v1035
      %v1255 = vpop.f32.mrb[0].mxu0
      %v1256 = vadd.f32 0.0, %v1255
      %v1257 = vpop.f32.mrb[0].mxu0
      %v1258 = vpop.f32.mrb[0].mxu0
      %v1259 = vadd.f32 0.0, %v1258
      %v1260 = vpop.f32.mrb[0].mxu0
      %1261 = vdwg.mxu0
      %v1278 = vunpack.c.l.b16 %v779
      %v1279 = vunpack.c.l.b16 %v780
      %v1280 = vunpack.c.l.b16 %v781
      %v1281 = vunpack.c.l.b16 %v782
      %v1282 = vunpack.c.l.b16 %v783
      %v1283 = vunpack.c.l.b16 %v784
      %v1284 = vunpack.c.l.b16 %v785
      %v1285 = vunpack.c.l.b16 %v786
      %v1286 = vunpack.c.l.b16 %v787
      %v1287 = vunpack.c.l.b16 %v788
      %v1288 = vunpack.c.l.b16 %v789
      %v1289 = vunpack.c.l.b16 %v790
      %v1290 = vunpack.c.l.b16 %v791
      %v1291 = vunpack.c.l.b16 %v792
      %v1292 = vunpack.c.l.b16 %v793
      %v1293 = vunpack.c.l.b16 %v794
      %v1294 = vpack.c.b16 %v1279, %v1278
      %v1295 = vpack.c.b16 %v1281, %v1280
      %v1296 = vpack.c.b16 %v1283, %v1282
      %v1297 = vpack.c.b16 %v1285, %v1284
      %v1298 = vpack.c.b16 %v1287, %v1286
      %v1299 = vpack.c.b16 %v1289, %v1288
      %v1300 = vpack.c.b16 %v1291, %v1290
      %v1301 = vpack.c.b16 %v1293, %v1292
      %1310 = vmatprep.subr.bf16.mxu0 0
      %1311 = vmatpush1.bf16.msra.mxu0 %v1294
      %1312 = vmatprep.subr.bf16.mxu0 0
      %1313 = vmatpush1.bf16.msra.mxu0 %v1295
      %1314 = vmatprep.subr.bf16.mxu0 0
      %1315 = vmatpush1.bf16.msra.mxu0 %v1296
      %1316 = vmatprep.subr.bf16.mxu0 0
      %1317 = vmatpush1.bf16.msra.mxu0 %v1297
      %1318 = vmatprep.subr.bf16.mxu0 0
      %1319 = vmatpush1.bf16.msra.mxu0 %v1298
      %1320 = vmatprep.subr.bf16.mxu0 0
      %1321 = vmatpush1.bf16.msra.mxu0 %v1299
      %1322 = vmatprep.subr.bf16.mxu0 0
      %1323 = vmatpush1.bf16.msra.mxu0 %v1300
      %1324 = vmatprep.subr.bf16.mxu0 0
      %1325 = vmatpush1.bf16.msra.mxu0 %v1301
      %1326 = vmatprep.subr.bf16.mxu0 0
      %1327 = vmatpush1.bf16.msra.mxu0 0
      %1328 = vmatprep.subr.bf16.mxu0 0
      %1329 = vmatpush1.bf16.msra.mxu0 0
      %1330 = vmatprep.subr.bf16.mxu0 0
      %1331 = vmatpush1.bf16.msra.mxu0 0
      %1332 = vmatprep.subr.bf16.mxu0 0
      %1333 = vmatpush1.bf16.msra.mxu0 0
      %1334 = vmatprep.subr.bf16.mxu0 0
      %1335 = vmatpush1.bf16.msra.mxu0 0
      %1336 = vmatprep.subr.bf16.mxu0 0
      %1337 = vmatpush1.bf16.msra.mxu0 0
      %1338 = vmatprep.subr.bf16.mxu0 0
      %1339 = vmatpush1.bf16.msra.mxu0 0
      %1340 = vmatprep.subr.bf16.mxu0 0
      %1341 = vmatpush1.bf16.msra.mxu0 0
      %1342 = vmatprep.mubr.bf16.mxu0 0
      %1343 = vmatmul.mubr.bf16.gmra.mrb[0].mxu0 %v763
      %v1344 = vpop.f32.mrb[0].mxu0
      %v1345 = vadd.f32 %v1136, %v1344
      %v1346 = vpop.f32.mrb[0].mxu0
      %v1347 = vpop.f32.mrb[0].mxu0
      %v1348 = vadd.f32 %v1139, %v1347
      %v1349 = vpop.f32.mrb[0].mxu0
      %1350 = vmatprep.mubr.bf16.mxu0 0
      %1351 = vmatmul.mubr.bf16.gmra.mrb[0].mxu0 %v764
      %v1352 = vpop.f32.mrb[0].mxu0
      %v1353 = vadd.f32 %v1144, %v1352
      %v1354 = vpop.f32.mrb[0].mxu0
      %v1355 = vpop.f32.mrb[0].mxu0
      %v1356 = vadd.f32 %v1147, %v1355
      %v1357 = vpop.f32.mrb[0].mxu0
      %1358 = vmatprep.mubr.bf16.mxu0 0
      %1359 = vmatmul.mubr.bf16.gmra.mrb[0].mxu0 %v765
      %v1360 = vpop.f32.mrb[0].mxu0
      %v1361 = vadd.f32 %v1152, %v1360
      %v1362 = vpop.f32.mrb[0].mxu0
      %v1363 = vpop.f32.mrb[0].mxu0
      %v1364 = vadd.f32 %v1155, %v1363
      %v1365 = vpop.f32.mrb[0].mxu0
      %1366 = vmatprep.mubr.bf16.mxu0 0
      %1367 = vmatmul.mubr.bf16.gmra.mrb[0].mxu0 %v766
      %v1368 = vpop.f32.mrb[0].mxu0
      %v1369 = vadd.f32 %v1160, %v1368
      %v1370 = vpop.f32.mrb[0].mxu0
      %v1371 = vpop.f32.mrb[0].mxu0
      %v1372 = vadd.f32 %v1163, %v1371
      %v1373 = vpop.f32.mrb[0].mxu0
      %1374 = vmatprep.mubr.bf16.mxu0 0
      %1375 = vmatmul.mubr.bf16.gmra.mrb[0].mxu0 %v767
      %v1376 = vpop.f32.mrb[0].mxu0
      %v1377 = vadd.f32 %v1168, %v1376
      %v1378 = vpop.f32.mrb[0].mxu0
      %v1379 = vpop.f32.mrb[0].mxu0
      %v1380 = vadd.f32 %v1171, %v1379
      %v1381 = vpop.f32.mrb[0].mxu0
      %1382 = vmatprep.mubr.bf16.mxu0 0
      %1383 = vmatmul.mubr.bf16.gmra.mrb[0].mxu0 %v768
      %v1384 = vpop.f32.mrb[0].mxu0
      %v1385 = vadd.f32 %v1176, %v1384
      %v1386 = vpop.f32.mrb[0].mxu0
      %v1387 = vpop.f32.mrb[0].mxu0
      %v1388 = vadd.f32 %v1179, %v1387
      %v1389 = vpop.f32.mrb[0].mxu0
      %1390 = vmatprep.mubr.bf16.mxu0 0
      %1391 = vmatmul.mubr.bf16.gmra.mrb[0].mxu0 %v769
      %v1392 = vpop.f32.mrb[0].mxu0
      %v1393 = vadd.f32 %v1184, %v1392
      %v1394 = vpop.f32.mrb[0].mxu0
      %v1395 = vpop.f32.mrb[0].mxu0
      %v1396 = vadd.f32 %v1187, %v1395
      %v1397 = vpop.f32.mrb[0].mxu0
      %1398 = vmatprep.mubr.bf16.mxu0 0
      %1399 = vmatmul.mubr.bf16.gmra.mrb[0].mxu0 %v770
      %v1400 = vpop.f32.mrb[0].mxu0
      %v1401 = vadd.f32 %v1192, %v1400
      %v1402 = vpop.f32.mrb[0].mxu0
      %v1403 = vpop.f32.mrb[0].mxu0
      %v1404 = vadd.f32 %v1195, %v1403
      %v1405 = vpop.f32.mrb[0].mxu0
      %1406 = vmatprep.mubr.bf16.mxu0 0
      %1407 = vmatmul.mubr.bf16.gmra.mrb[0].mxu0 %v771
      %v1408 = vpop.f32.mrb[0].mxu0
      %v1409 = vadd.f32 %v1200, %v1408
      %v1410 = vpop.f32.mrb[0].mxu0
      %v1411 = vpop.f32.mrb[0].mxu0
      %v1412 = vadd.f32 %v1203, %v1411
      %v1413 = vpop.f32.mrb[0].mxu0
      %1414 = vmatprep.mubr.bf16.mxu0 0
      %1415 = vmatmul.mubr.bf16.gmra.mrb[0].mxu0 %v772
      %v1416 = vpop.f32.mrb[0].mxu0
      %v1417 = vadd.f32 %v1208, %v1416
      %v1418 = vpop.f32.mrb[0].mxu0
      %v1419 = vpop.f32.mrb[0].mxu0
      %v1420 = vadd.f32 %v1211, %v1419
      %v1421 = vpop.f32.mrb[0].mxu0
      %1422 = vmatprep.mubr.bf16.mxu0 0
      %1423 = vmatmul.mubr.bf16.gmra.mrb[0].mxu0 %v773
      %v1424 = vpop.f32.mrb[0].mxu0
      %v1425 = vadd.f32 %v1216, %v1424
      %v1426 = vpop.f32.mrb[0].mxu0
      %v1427 = vpop.f32.mrb[0].mxu0
      %v1428 = vadd.f32 %v1219, %v1427
      %v1429 = vpop.f32.mrb[0].mxu0
      %1430 = vmatprep.mubr.bf16.mxu0 0
      %1431 = vmatmul.mubr.bf16.gmra.mrb[0].mxu0 %v774
      %v1432 = vpop.f32.mrb[0].mxu0
      %v1433 = vadd.f32 %v1224, %v1432
      %v1434 = vpop.f32.mrb[0].mxu0
      %v1435 = vpop.f32.mrb[0].mxu0
      %v1436 = vadd.f32 %v1227, %v1435
      %v1437 = vpop.f32.mrb[0].mxu0
      %1438 = vmatprep.mubr.bf16.mxu0 0
      %1439 = vmatmul.mubr.bf16.gmra.mrb[0].mxu0 %v775
      %v1440 = vpop.f32.mrb[0].mxu0
      %v1441 = vadd.f32 %v1232, %v1440
      %v1442 = vpop.f32.mrb[0].mxu0
      %v1443 = vpop.f32.mrb[0].mxu0
      %v1444 = vadd.f32 %v1235, %v1443
      %v1445 = vpop.f32.mrb[0].mxu0
      %1446 = vmatprep.mubr.bf16.mxu0 0
      %1447 = vmatmul.mubr.bf16.gmra.mrb[0].mxu0 %v776
      %v1448 = vpop.f32.mrb[0].mxu0
      %v1449 = vadd.f32 %v1240, %v1448
      %v1450 = vpop.f32.mrb[0].mxu0
      %v1451 = vpop.f32.mrb[0].mxu0
      %v1452 = vadd.f32 %v1243, %v1451
      %v1453 = vpop.f32.mrb[0].mxu0
      %1454 = vmatprep.mubr.bf16.mxu0 0
      %1455 = vmatmul.mubr.bf16.gmra.mrb[0].mxu0 %v777
      %v1456 = vpop.f32.mrb[0].mxu0
      %v1457 = vadd.f32 %v1248, %v1456
      %v1458 = vpop.f32.mrb[0].mxu0
      %v1459 = vpop.f32.mrb[0].mxu0
      %v1460 = vadd.f32 %v1251, %v1459
      %v1461 = vpop.f32.mrb[0].mxu0
      %1462 = vmatprep.mubr.bf16.mxu0 0
      %1463 = vmatmul.mubr.bf16.gmra.mrb[0].mxu0 %v778
      %v1464 = vpop.f32.mrb[0].mxu0
      %v1465 = vadd.f32 %v1256, %v1464
      %v1466 = vpop.f32.mrb[0].mxu0
      %v1467 = vpop.f32.mrb[0].mxu0
      %v1468 = vadd.f32 %v1259, %v1467
      %v1469 = vpop.f32.mrb[0].mxu0
      %1470 = vdwg.mxu0
      %vm1471 = vcmask 1046528
      %v1472 = vrot.slane %v407, 1
      %v1473 = vrot.slane %v408, 1
      %v1474 = vsel %vm1471, %v1472, %v1473
      %v1477 = vrot.slane %v377, 1
      %v1478 = vrot.slane %v378, 1
      %v1479 = vsel %vm1471, %v1477, %v1478
      %v1480 = vrot.slane %v379, 1
      %v1481 = vsel %vm1471, %v1478, %v1480
      %v1482 = vrot.slane %v380, 1
      %v1483 = vsel %vm1471, %v1480, %v1482
      %v1484 = vrot.slane %v381, 1
      %v1485 = vsel %vm1471, %v1482, %v1484
      %v1486 = vrot.slane %v382, 1
      %v1487 = vsel %vm1471, %v1484, %v1486
      %v1488 = vrot.slane %v383, 1
      %v1489 = vsel %vm1471, %v1486, %v1488
      %v1490 = vrot.slane %v384, 1
      %v1491 = vsel %vm1471, %v1488, %v1490
      %v1492 = vrot.slane %v385, 1
      %v1493 = vsel %vm1471, %v1490, %v1492
      %v1494 = vrot.slane %v386, 1
      %v1495 = vsel %vm1471, %v1492, %v1494
      %v1496 = vrot.slane %v387, 1
      %v1497 = vsel %vm1471, %v1494, %v1496
      %v1498 = vrot.slane %v388, 1
      %v1499 = vsel %vm1471, %v1496, %v1498
      %v1500 = vrot.slane %v389, 1
      %v1501 = vsel %vm1471, %v1498, %v1500
      %v1502 = vrot.slane %v390, 1
      %v1503 = vsel %vm1471, %v1500, %v1502
      %v1504 = vrot.slane %v391, 1
      %v1505 = vsel %vm1471, %v1502, %v1504
      %v1506 = vrot.slane %v392, 1
      %v1507 = vsel %vm1471, %v1504, %v1506
      %v1508 = vrot.slane %v393, 1
      %v1509 = vsel %vm1471, %v1506, %v1508
      %v1510 = vrot.slane %v394, 1
      %v1511 = vsel %vm1471, %v1508, %v1510
      %v1512 = vrot.slane %v395, 1
      %v1513 = vsel %vm1471, %v1510, %v1512
      %v1514 = vrot.slane %v396, 1
      %v1515 = vsel %vm1471, %v1512, %v1514
      %v1516 = vrot.slane %v397, 1
      %v1517 = vsel %vm1471, %v1514, %v1516
      %v1518 = vrot.slane %v398, 1
      %v1519 = vsel %vm1471, %v1516, %v1518
      %v1520 = vrot.slane %v399, 1
      %v1521 = vsel %vm1471, %v1518, %v1520
      %v1522 = vrot.slane %v400, 1
      %v1523 = vsel %vm1471, %v1520, %v1522
      %v1524 = vrot.slane %v401, 1
      %v1525 = vsel %vm1471, %v1522, %v1524
      %v1526 = vrot.slane %v402, 1
      %v1527 = vsel %vm1471, %v1524, %v1526
      %v1528 = vrot.slane %v403, 1
      %v1529 = vsel %vm1471, %v1526, %v1528
      %v1530 = vrot.slane %v404, 1
      %v1531 = vsel %vm1471, %v1528, %v1530
      %v1532 = vrot.slane %v405, 1
      %v1533 = vsel %vm1471, %v1530, %v1532
      %v1534 = vrot.slane %v406, 1
      %v1535 = vsel %vm1471, %v1532, %v1534
      %v1536 = vsel %vm1471, %v1534, %v1472
      %v1568 = vsel %vm1471, %v1473, %v1477
      %s1569 = scalar_lea.vmem %s4, 512
      %v1570 = vld [vmem:[%s1569] sm:$0xff]
      %v1571 = vld [vmem:[%s1569 + $0x8] sm:$0xff]
      %v1572 = vld [vmem:[%s1569 + $0x10] sm:$0xff]
      %v1573 = vld [vmem:[%s1569 + $0x18] sm:$0xff]
      %v1574 = vld [vmem:[%s1569 + $0x20] sm:$0xff]
      %v1575 = vld [vmem:[%s1569 + $0x28] sm:$0xff]
      %v1576 = vld [vmem:[%s1569 + $0x30] sm:$0xff]
      %v1577 = vld [vmem:[%s1569 + $0x38] sm:$0xff]
      %v1578 = vld [vmem:[%s1569 + $0x40] sm:$0xff]
      %v1579 = vld [vmem:[%s1569 + $0x48] sm:$0xff]
      %v1580 = vld [vmem:[%s1569 + $0x50] sm:$0xff]
      %v1581 = vld [vmem:[%s1569 + $0x58] sm:$0xff]
      %v1582 = vld [vmem:[%s1569 + $0x60] sm:$0xff]
      %v1583 = vld [vmem:[%s1569 + $0x68] sm:$0xff]
      %v1584 = vld [vmem:[%s1569 + $0x70] sm:$0xff]
      %v1585 = vld [vmem:[%s1569 + $0x78] sm:$0xff]
      %v1586 = vld [vmem:[%s1569 + $0x80] sm:$0xff]
      %v1587 = vld [vmem:[%s1569 + $0x88] sm:$0xff]
      %v1588 = vld [vmem:[%s1569 + $0x90] sm:$0xff]
      %v1589 = vld [vmem:[%s1569 + $0x98] sm:$0xff]
      %v1590 = vld [vmem:[%s1569 + $0xa0] sm:$0xff]
      %v1591 = vld [vmem:[%s1569 + $0xa8] sm:$0xff]
      %v1592 = vld [vmem:[%s1569 + $0xb0] sm:$0xff]
      %v1593 = vld [vmem:[%s1569 + $0xb8] sm:$0xff]
      %v1594 = vld [vmem:[%s1569 + $0xc0] sm:$0xff]
      %v1595 = vld [vmem:[%s1569 + $0xc8] sm:$0xff]
      %v1596 = vld [vmem:[%s1569 + $0xd0] sm:$0xff]
      %v1597 = vld [vmem:[%s1569 + $0xd8] sm:$0xff]
      %v1598 = vld [vmem:[%s1569 + $0xe0] sm:$0xff]
      %v1599 = vld [vmem:[%s1569 + $0xe8] sm:$0xff]
      %v1600 = vld [vmem:[%s1569 + $0xf0] sm:$0xff]
      %v1601 = vld [vmem:[%s1569 + $0xf8] sm:$0xff]
      %1603 = vset.pattern.permute.xlu0 0
      %1604 = vperm.xlu0 %1603, %v1570
      %v1605 = vpop.permute.xlu0 %1604
      %1608 = vset.pattern.permute.xlu0 0
      %1609 = vperm.xlu0 %1608, %v1571
      %v1610 = vpop.permute.xlu0 %1609
      %1613 = vset.pattern.permute.xlu0 0
      %1614 = vperm.xlu0 %1613, %v1572
      %v1615 = vpop.permute.xlu0 %1614
      %1618 = vset.pattern.permute.xlu0 0
      %1619 = vperm.xlu0 %1618, %v1573
      %v1620 = vpop.permute.xlu0 %1619
      %1623 = vset.pattern.permute.xlu0 0
      %1624 = vperm.xlu0 %1623, %v1574
      %v1625 = vpop.permute.xlu0 %1624
      %1628 = vset.pattern.permute.xlu0 0
      %1629 = vperm.xlu0 %1628, %v1575
      %v1630 = vpop.permute.xlu0 %1629
      %1633 = vset.pattern.permute.xlu0 0
      %1634 = vperm.xlu0 %1633, %v1576
      %v1635 = vpop.permute.xlu0 %1634
      %1638 = vset.pattern.permute.xlu0 0
      %1639 = vperm.xlu0 %1638, %v1577
      %v1640 = vpop.permute.xlu0 %1639
      %1643 = vset.pattern.permute.xlu0 0
      %1644 = vperm.xlu0 %1643, %v1578
      %v1645 = vpop.permute.xlu0 %1644
      %1648 = vset.pattern.permute.xlu0 0
      %1649 = vperm.xlu0 %1648, %v1579
      %v1650 = vpop.permute.xlu0 %1649
      %1653 = vset.pattern.permute.xlu0 0
      %1654 = vperm.xlu0 %1653, %v1580
      %v1655 = vpop.permute.xlu0 %1654
      %1658 = vset.pattern.permute.xlu0 0
      %1659 = vperm.xlu0 %1658, %v1581
      %v1660 = vpop.permute.xlu0 %1659
      %1663 = vset.pattern.permute.xlu0 0
      %1664 = vperm.xlu0 %1663, %v1582
      %v1665 = vpop.permute.xlu0 %1664
      %1668 = vset.pattern.permute.xlu0 0
      %1669 = vperm.xlu0 %1668, %v1583
      %v1670 = vpop.permute.xlu0 %1669
      %1673 = vset.pattern.permute.xlu0 0
      %1674 = vperm.xlu0 %1673, %v1584
      %v1675 = vpop.permute.xlu0 %1674
      %1678 = vset.pattern.permute.xlu0 0
      %1679 = vperm.xlu0 %1678, %v1585
      %v1680 = vpop.permute.xlu0 %1679
      %1683 = vset.pattern.permute.xlu0 0
      %1684 = vperm.xlu0 %1683, %v1586
      %v1685 = vpop.permute.xlu0 %1684
      %1688 = vset.pattern.permute.xlu0 0
      %1689 = vperm.xlu0 %1688, %v1587
      %v1690 = vpop.permute.xlu0 %1689
      %1693 = vset.pattern.permute.xlu0 0
      %1694 = vperm.xlu0 %1693, %v1588
      %v1695 = vpop.permute.xlu0 %1694
      %1698 = vset.pattern.permute.xlu0 0
      %1699 = vperm.xlu0 %1698, %v1589
      %v1700 = vpop.permute.xlu0 %1699
      %1703 = vset.pattern.permute.xlu0 0
      %1704 = vperm.xlu0 %1703, %v1590
      %v1705 = vpop.permute.xlu0 %1704
      %1708 = vset.pattern.permute.xlu0 0
      %1709 = vperm.xlu0 %1708, %v1591
      %v1710 = vpop.permute.xlu0 %1709
      %1713 = vset.pattern.permute.xlu0 0
      %1714 = vperm.xlu0 %1713, %v1592
      %v1715 = vpop.permute.xlu0 %1714
      %1718 = vset.pattern.permute.xlu0 0
      %1719 = vperm.xlu0 %1718, %v1593
      %v1720 = vpop.permute.xlu0 %1719
      %1723 = vset.pattern.permute.xlu0 0
      %1724 = vperm.xlu0 %1723, %v1594
      %v1725 = vpop.permute.xlu0 %1724
      %1728 = vset.pattern.permute.xlu0 0
      %1729 = vperm.xlu0 %1728, %v1595
      %v1730 = vpop.permute.xlu0 %1729
      %1733 = vset.pattern.permute.xlu0 0
      %1734 = vperm.xlu0 %1733, %v1596
      %v1735 = vpop.permute.xlu0 %1734
      %1738 = vset.pattern.permute.xlu0 0
      %1739 = vperm.xlu0 %1738, %v1597
      %v1740 = vpop.permute.xlu0 %1739
      %1743 = vset.pattern.permute.xlu0 0
      %1744 = vperm.xlu0 %1743, %v1598
      %v1745 = vpop.permute.xlu0 %1744
      %1748 = vset.pattern.permute.xlu0 0
      %1749 = vperm.xlu0 %1748, %v1599
      %v1750 = vpop.permute.xlu0 %1749
      %1753 = vset.pattern.permute.xlu0 0
      %1754 = vperm.xlu0 %1753, %v1600
      %v1755 = vpop.permute.xlu0 %1754
      %1758 = vset.pattern.permute.xlu0 0
      %1759 = vperm.xlu0 %1758, %v1601
      %v1760 = vpop.permute.xlu0 %1759
      %v1762 = vmul.f32 %v1474, %v1605
      %v1763 = vmul.f32 %v1568, %v1610
      %v1764 = vmul.f32 %v1479, %v1615
      %v1765 = vmul.f32 %v1481, %v1620
      %v1766 = vmul.f32 %v1483, %v1625
      %v1767 = vmul.f32 %v1485, %v1630
      %v1768 = vmul.f32 %v1487, %v1635
      %v1769 = vmul.f32 %v1489, %v1640
      %v1770 = vmul.f32 %v1491, %v1645
      %v1771 = vmul.f32 %v1493, %v1650
      %v1772 = vmul.f32 %v1495, %v1655
      %v1773 = vmul.f32 %v1497, %v1660
      %v1774 = vmul.f32 %v1499, %v1665
      %v1775 = vmul.f32 %v1501, %v1670
      %v1776 = vmul.f32 %v1503, %v1675
      %v1777 = vmul.f32 %v1505, %v1680
      %v1778 = vmul.f32 %v1507, %v1685
      %v1779 = vmul.f32 %v1509, %v1690
      %v1780 = vmul.f32 %v1511, %v1695
      %v1781 = vmul.f32 %v1513, %v1700
      %v1782 = vmul.f32 %v1515, %v1705
      %v1783 = vmul.f32 %v1517, %v1710
      %v1784 = vmul.f32 %v1519, %v1715
      %v1785 = vmul.f32 %v1521, %v1720
      %v1786 = vmul.f32 %v1523, %v1725
      %v1787 = vmul.f32 %v1525, %v1730
      %v1788 = vmul.f32 %v1527, %v1735
      %v1789 = vmul.f32 %v1529, %v1740
      %v1790 = vmul.f32 %v1531, %v1745
      %v1791 = vmul.f32 %v1533, %v1750
      %v1792 = vmul.f32 %v1535, %v1755
      %v1793 = vmul.f32 %v1536, %v1760
      %v1794 = vpack.c.bf16 %v1763, %v1762
      %v1795 = vpack.c.bf16 %v1765, %v1764
      %v1796 = vpack.c.bf16 %v1767, %v1766
      %v1797 = vpack.c.bf16 %v1769, %v1768
      %v1798 = vpack.c.bf16 %v1771, %v1770
      %v1799 = vpack.c.bf16 %v1773, %v1772
      %v1800 = vpack.c.bf16 %v1775, %v1774
      %v1801 = vpack.c.bf16 %v1777, %v1776
      %v1802 = vpack.c.bf16 %v1779, %v1778
      %v1803 = vpack.c.bf16 %v1781, %v1780
      %v1804 = vpack.c.bf16 %v1783, %v1782
      %v1805 = vpack.c.bf16 %v1785, %v1784
      %v1806 = vpack.c.bf16 %v1787, %v1786
      %v1807 = vpack.c.bf16 %v1789, %v1788
      %v1808 = vpack.c.bf16 %v1791, %v1790
      %v1809 = vpack.c.bf16 %v1793, %v1792
      %s1810 = scalar_lea.vmem %s3, 128
      %v1811 = vld [vmem:[%s1810] sm:$0xf]
      %v1812 = vld [vmem:[%s1810 + $0x4] sm:$0xf]
      %v1813 = vld [vmem:[%s1810 + $0x8] sm:$0xf]
      %v1814 = vld [vmem:[%s1810 + $0xc] sm:$0xf]
      %v1815 = vld [vmem:[%s1810 + $0x10] sm:$0xf]
      %v1816 = vld [vmem:[%s1810 + $0x14] sm:$0xf]
      %v1817 = vld [vmem:[%s1810 + $0x18] sm:$0xf]
      %v1818 = vld [vmem:[%s1810 + $0x1c] sm:$0xf]
      %v1819 = vld [vmem:[%s1810 + $0x20] sm:$0xf]
      %v1820 = vld [vmem:[%s1810 + $0x24] sm:$0xf]
      %v1821 = vld [vmem:[%s1810 + $0x28] sm:$0xf]
      %v1822 = vld [vmem:[%s1810 + $0x2c] sm:$0xf]
      %v1823 = vld [vmem:[%s1810 + $0x30] sm:$0xf]
      %v1824 = vld [vmem:[%s1810 + $0x34] sm:$0xf]
      %v1825 = vld [vmem:[%s1810 + $0x38] sm:$0xf]
      %v1826 = vld [vmem:[%s1810 + $0x3c] sm:$0xf]
      %v1843 = vunpack.c.l.b16 %v1811
      %v1844 = vunpack.c.l.b16 %v1812
      %v1845 = vunpack.c.l.b16 %v1813
      %v1846 = vunpack.c.l.b16 %v1814
      %v1847 = vunpack.c.l.b16 %v1815
      %v1848 = vunpack.c.l.b16 %v1816
      %v1849 = vunpack.c.l.b16 %v1817
      %v1850 = vunpack.c.l.b16 %v1818
      %v1851 = vunpack.c.l.b16 %v1819
      %v1852 = vunpack.c.l.b16 %v1820
      %v1853 = vunpack.c.l.b16 %v1821
      %v1854 = vunpack.c.l.b16 %v1822
      %v1855 = vunpack.c.l.b16 %v1823
      %v1856 = vunpack.c.l.b16 %v1824
      %v1857 = vunpack.c.l.b16 %v1825
      %v1858 = vunpack.c.l.b16 %v1826
      %v1859 = vpack.c.b16 %v1844, %v1843
      %v1860 = vpack.c.b16 %v1846, %v1845
      %v1861 = vpack.c.b16 %v1848, %v1847
      %v1862 = vpack.c.b16 %v1850, %v1849
      %v1863 = vpack.c.b16 %v1852, %v1851
      %v1864 = vpack.c.b16 %v1854, %v1853
      %v1865 = vpack.c.b16 %v1856, %v1855
      %v1866 = vpack.c.b16 %v1858, %v1857
      %1875 = vmatprep.subr.bf16.mxu0 0
      %1876 = vmatpush1.bf16.msra.mxu0 %v1859
      %1877 = vmatprep.subr.bf16.mxu0 0
      %1878 = vmatpush1.bf16.msra.mxu0 %v1860
      %1879 = vmatprep.subr.bf16.mxu0 0
      %1880 = vmatpush1.bf16.msra.mxu0 %v1861
      %1881 = vmatprep.subr.bf16.mxu0 0
      %1882 = vmatpush1.bf16.msra.mxu0 %v1862
      %1883 = vmatprep.subr.bf16.mxu0 0
      %1884 = vmatpush1.bf16.msra.mxu0 %v1863
      %1885 = vmatprep.subr.bf16.mxu0 0
      %1886 = vmatpush1.bf16.msra.mxu0 %v1864
      %1887 = vmatprep.subr.bf16.mxu0 0
      %1888 = vmatpush1.bf16.msra.mxu0 %v1865
      %1889 = vmatprep.subr.bf16.mxu0 0
      %1890 = vmatpush1.bf16.msra.mxu0 %v1866
      %1891 = vmatprep.subr.bf16.mxu0 0
      %1892 = vmatpush1.bf16.msra.mxu0 0
      %1893 = vmatprep.subr.bf16.mxu0 0
      %1894 = vmatpush1.bf16.msra.mxu0 0
      %1895 = vmatprep.subr.bf16.mxu0 0
      %1896 = vmatpush1.bf16.msra.mxu0 0
      %1897 = vmatprep.subr.bf16.mxu0 0
      %1898 = vmatpush1.bf16.msra.mxu0 0
      %1899 = vmatprep.subr.bf16.mxu0 0
      %1900 = vmatpush1.bf16.msra.mxu0 0
      %1901 = vmatprep.subr.bf16.mxu0 0
      %1902 = vmatpush1.bf16.msra.mxu0 0
      %1903 = vmatprep.subr.bf16.mxu0 0
      %1904 = vmatpush1.bf16.msra.mxu0 0
      %1905 = vmatprep.subr.bf16.mxu0 0
      %1906 = vmatpush1.bf16.msra.mxu0 0
      %1907 = vmatprep.mubr.bf16.mxu0 0
      %1908 = vmatmul.mubr.bf16.gmra.mrb[0].mxu0 %v1794
      %v1909 = vpop.f32.mrb[0].mxu0
      %v1910 = vadd.f32 0.0, %v1909
      %v1911 = vpop.f32.mrb[0].mxu0
      %v1912 = vpop.f32.mrb[0].mxu0
      %v1913 = vadd.f32 0.0, %v1912
      %v1914 = vpop.f32.mrb[0].mxu0
      %1915 = vmatprep.mubr.bf16.mxu0 0
      %1916 = vmatmul.mubr.bf16.gmra.mrb[0].mxu0 %v1795
      %v1917 = vpop.f32.mrb[0].mxu0
      %v1918 = vadd.f32 0.0, %v1917
      %v1919 = vpop.f32.mrb[0].mxu0
      %v1920 = vpop.f32.mrb[0].mxu0
      %v1921 = vadd.f32 0.0, %v1920
      %v1922 = vpop.f32.mrb[0].mxu0
      %1923 = vmatprep.mubr.bf16.mxu0 0
      %1924 = vmatmul.mubr.bf16.gmra.mrb[0].mxu0 %v1796
      %v1925 = vpop.f32.mrb[0].mxu0
      %v1926 = vadd.f32 0.0, %v1925
      %v1927 = vpop.f32.mrb[0].mxu0
      %v1928 = vpop.f32.mrb[0].mxu0
      %v1929 = vadd.f32 0.0, %v1928
      %v1930 = vpop.f32.mrb[0].mxu0
      %1931 = vmatprep.mubr.bf16.mxu0 0
      %1932 = vmatmul.mubr.bf16.gmra.mrb[0].mxu0 %v1797
      %v1933 = vpop.f32.mrb[0].mxu0
      %v1934 = vadd.f32 0.0, %v1933
      %v1935 = vpop.f32.mrb[0].mxu0
      %v1936 = vpop.f32.mrb[0].mxu0
      %v1937 = vadd.f32 0.0, %v1936
      %v1938 = vpop.f32.mrb[0].mxu0
      %1939 = vmatprep.mubr.bf16.mxu0 0
      %1940 = vmatmul.mubr.bf16.gmra.mrb[0].mxu0 %v1798
      %v1941 = vpop.f32.mrb[0].mxu0
      %v1942 = vadd.f32 0.0, %v1941
      %v1943 = vpop.f32.mrb[0].mxu0
      %v1944 = vpop.f32.mrb[0].mxu0
      %v1945 = vadd.f32 0.0, %v1944
      %v1946 = vpop.f32.mrb[0].mxu0
      %1947 = vmatprep.mubr.bf16.mxu0 0
      %1948 = vmatmul.mubr.bf16.gmra.mrb[0].mxu0 %v1799
      %v1949 = vpop.f32.mrb[0].mxu0
      %v1950 = vadd.f32 0.0, %v1949
      %v1951 = vpop.f32.mrb[0].mxu0
      %v1952 = vpop.f32.mrb[0].mxu0
      %v1953 = vadd.f32 0.0, %v1952
      %v1954 = vpop.f32.mrb[0].mxu0
      %1955 = vmatprep.mubr.bf16.mxu0 0
      %1956 = vmatmul.mubr.bf16.gmra.mrb[0].mxu0 %v1800
      %v1957 = vpop.f32.mrb[0].mxu0
      %v1958 = vadd.f32 0.0, %v1957
      %v1959 = vpop.f32.mrb[0].mxu0
      %v1960 = vpop.f32.mrb[0].mxu0
      %v1961 = vadd.f32 0.0, %v1960
      %v1962 = vpop.f32.mrb[0].mxu0
      %1963 = vmatprep.mubr.bf16.mxu0 0
      %1964 = vmatmul.mubr.bf16.gmra.mrb[0].mxu0 %v1801
      %v1965 = vpop.f32.mrb[0].mxu0
      %v1966 = vadd.f32 0.0, %v1965
      %v1967 = vpop.f32.mrb[0].mxu0
      %v1968 = vpop.f32.mrb[0].mxu0
      %v1969 = vadd.f32 0.0, %v1968
      %v1970 = vpop.f32.mrb[0].mxu0
      %1971 = vmatprep.mubr.bf16.mxu0 0
      %1972 = vmatmul.mubr.bf16.gmra.mrb[0].mxu0 %v1802
      %v1973 = vpop.f32.mrb[0].mxu0
      %v1974 = vadd.f32 0.0, %v1973
      %v1975 = vpop.f32.mrb[0].mxu0
      %v1976 = vpop.f32.mrb[0].mxu0
      %v1977 = vadd.f32 0.0, %v1976
      %v1978 = vpop.f32.mrb[0].mxu0
      %1979 = vmatprep.mubr.bf16.mxu0 0
      %1980 = vmatmul.mubr.bf16.gmra.mrb[0].mxu0 %v1803
      %v1981 = vpop.f32.mrb[0].mxu0
      %v1982 = vadd.f32 0.0, %v1981
      %v1983 = vpop.f32.mrb[0].mxu0
      %v1984 = vpop.f32.mrb[0].mxu0
      %v1985 = vadd.f32 0.0, %v1984
      %v1986 = vpop.f32.mrb[0].mxu0
      %1987 = vmatprep.mubr.bf16.mxu0 0
      %1988 = vmatmul.mubr.bf16.gmra.mrb[0].mxu0 %v1804
      %v1989 = vpop.f32.mrb[0].mxu0
      %v1990 = vadd.f32 0.0, %v1989
      %v1991 = vpop.f32.mrb[0].mxu0
      %v1992 = vpop.f32.mrb[0].mxu0
      %v1993 = vadd.f32 0.0, %v1992
      %v1994 = vpop.f32.mrb[0].mxu0
      %1995 = vmatprep.mubr.bf16.mxu0 0
      %1996 = vmatmul.mubr.bf16.gmra.mrb[0].mxu0 %v1805
      %v1997 = vpop.f32.mrb[0].mxu0
      %v1998 = vadd.f32 0.0, %v1997
      %v1999 = vpop.f32.mrb[0].mxu0
      %v2000 = vpop.f32.mrb[0].mxu0
      %v2001 = vadd.f32 0.0, %v2000
      %v2002 = vpop.f32.mrb[0].mxu0
      %2003 = vmatprep.mubr.bf16.mxu0 0
      %2004 = vmatmul.mubr.bf16.gmra.mrb[0].mxu0 %v1806
      %v2005 = vpop.f32.mrb[0].mxu0
      %v2006 = vadd.f32 0.0, %v2005
      %v2007 = vpop.f32.mrb[0].mxu0
      %v2008 = vpop.f32.mrb[0].mxu0
      %v2009 = vadd.f32 0.0, %v2008
      %v2010 = vpop.f32.mrb[0].mxu0
      %2011 = vmatprep.mubr.bf16.mxu0 0
      %2012 = vmatmul.mubr.bf16.gmra.mrb[0].mxu0 %v1807
      %v2013 = vpop.f32.mrb[0].mxu0
      %v2014 = vadd.f32 0.0, %v2013
      %v2015 = vpop.f32.mrb[0].mxu0
      %v2016 = vpop.f32.mrb[0].mxu0
      %v2017 = vadd.f32 0.0, %v2016
      %v2018 = vpop.f32.mrb[0].mxu0
      %2019 = vmatprep.mubr.bf16.mxu0 0
      %2020 = vmatmul.mubr.bf16.gmra.mrb[0].mxu0 %v1808
      %v2021 = vpop.f32.mrb[0].mxu0
      %v2022 = vadd.f32 0.0, %v2021
      %v2023 = vpop.f32.mrb[0].mxu0
      %v2024 = vpop.f32.mrb[0].mxu0
      %v2025 = vadd.f32 0.0, %v2024
      %v2026 = vpop.f32.mrb[0].mxu0
      %2027 = vmatprep.mubr.bf16.mxu0 0
      %2028 = vmatmul.mubr.bf16.gmra.mrb[0].mxu0 %v1809
      %v2029 = vpop.f32.mrb[0].mxu0
      %v2030 = vadd.f32 0.0, %v2029
      %v2031 = vpop.f32.mrb[0].mxu0
      %v2032 = vpop.f32.mrb[0].mxu0
      %v2033 = vadd.f32 0.0, %v2032
      %v2034 = vpop.f32.mrb[0].mxu0
      %2035 = vdwg.mxu0
      %v2036 = vadd.f32 %v1345, %v1910
      %v2037 = vadd.f32 %v1348, %v1913
      %v2038 = vadd.f32 %v1353, %v1918
      %v2039 = vadd.f32 %v1356, %v1921
      %v2040 = vadd.f32 %v1361, %v1926
      %v2041 = vadd.f32 %v1364, %v1929
      %v2042 = vadd.f32 %v1369, %v1934
      %v2043 = vadd.f32 %v1372, %v1937
      %v2044 = vadd.f32 %v1377, %v1942
      %v2045 = vadd.f32 %v1380, %v1945
      %v2046 = vadd.f32 %v1385, %v1950
      %v2047 = vadd.f32 %v1388, %v1953
      %v2048 = vadd.f32 %v1393, %v1958
      %v2049 = vadd.f32 %v1396, %v1961
      %v2050 = vadd.f32 %v1401, %v1966
      %v2051 = vadd.f32 %v1404, %v1969
      %v2052 = vadd.f32 %v1409, %v1974
      %v2053 = vadd.f32 %v1412, %v1977
      %v2054 = vadd.f32 %v1417, %v1982
      %v2055 = vadd.f32 %v1420, %v1985
      %v2056 = vadd.f32 %v1425, %v1990
      %v2057 = vadd.f32 %v1428, %v1993
      %v2058 = vadd.f32 %v1433, %v1998
      %v2059 = vadd.f32 %v1436, %v2001
      %v2060 = vadd.f32 %v1441, %v2006
      %v2061 = vadd.f32 %v1444, %v2009
      %v2062 = vadd.f32 %v1449, %v2014
      %v2063 = vadd.f32 %v1452, %v2017
      %v2064 = vadd.f32 %v1457, %v2022
      %v2065 = vadd.f32 %v1460, %v2025
      %v2066 = vadd.f32 %v1465, %v2030
      %v2067 = vadd.f32 %v1468, %v2033
      %s2068 = scalar_lea.vmem %s4, 768
      %v2069 = vld [vmem:[%s2068] sm:$0xff]
      %v2070 = vld [vmem:[%s2068 + $0x8] sm:$0xff]
      %v2071 = vld [vmem:[%s2068 + $0x10] sm:$0xff]
      %v2072 = vld [vmem:[%s2068 + $0x18] sm:$0xff]
      %v2073 = vld [vmem:[%s2068 + $0x20] sm:$0xff]
      %v2074 = vld [vmem:[%s2068 + $0x28] sm:$0xff]
      %v2075 = vld [vmem:[%s2068 + $0x30] sm:$0xff]
      %v2076 = vld [vmem:[%s2068 + $0x38] sm:$0xff]
      %v2077 = vld [vmem:[%s2068 + $0x40] sm:$0xff]
      %v2078 = vld [vmem:[%s2068 + $0x48] sm:$0xff]
      %v2079 = vld [vmem:[%s2068 + $0x50] sm:$0xff]
      %v2080 = vld [vmem:[%s2068 + $0x58] sm:$0xff]
      %v2081 = vld [vmem:[%s2068 + $0x60] sm:$0xff]
      %v2082 = vld [vmem:[%s2068 + $0x68] sm:$0xff]
      %v2083 = vld [vmem:[%s2068 + $0x70] sm:$0xff]
      %v2084 = vld [vmem:[%s2068 + $0x78] sm:$0xff]
      %v2085 = vld [vmem:[%s2068 + $0x80] sm:$0xff]
      %v2086 = vld [vmem:[%s2068 + $0x88] sm:$0xff]
      %v2087 = vld [vmem:[%s2068 + $0x90] sm:$0xff]
      %v2088 = vld [vmem:[%s2068 + $0x98] sm:$0xff]
      %v2089 = vld [vmem:[%s2068 + $0xa0] sm:$0xff]
      %v2090 = vld [vmem:[%s2068 + $0xa8] sm:$0xff]
      %v2091 = vld [vmem:[%s2068 + $0xb0] sm:$0xff]
      %v2092 = vld [vmem:[%s2068 + $0xb8] sm:$0xff]
      %v2093 = vld [vmem:[%s2068 + $0xc0] sm:$0xff]
      %v2094 = vld [vmem:[%s2068 + $0xc8] sm:$0xff]
      %v2095 = vld [vmem:[%s2068 + $0xd0] sm:$0xff]
      %v2096 = vld [vmem:[%s2068 + $0xd8] sm:$0xff]
      %v2097 = vld [vmem:[%s2068 + $0xe0] sm:$0xff]
      %v2098 = vld [vmem:[%s2068 + $0xe8] sm:$0xff]
      %v2099 = vld [vmem:[%s2068 + $0xf0] sm:$0xff]
      %v2100 = vld [vmem:[%s2068 + $0xf8] sm:$0xff]
      %2102 = vset.pattern.permute.xlu0 0
      %2103 = vperm.xlu0 %2102, %v2069
      %v2104 = vpop.permute.xlu0 %2103
      %2107 = vset.pattern.permute.xlu0 0
      %2108 = vperm.xlu0 %2107, %v2070
      %v2109 = vpop.permute.xlu0 %2108
      %2112 = vset.pattern.permute.xlu0 0
      %2113 = vperm.xlu0 %2112, %v2071
      %v2114 = vpop.permute.xlu0 %2113
      %2117 = vset.pattern.permute.xlu0 0
      %2118 = vperm.xlu0 %2117, %v2072
      %v2119 = vpop.permute.xlu0 %2118
      %2122 = vset.pattern.permute.xlu0 0
      %2123 = vperm.xlu0 %2122, %v2073
      %v2124 = vpop.permute.xlu0 %2123
      %2127 = vset.pattern.permute.xlu0 0
      %2128 = vperm.xlu0 %2127, %v2074
      %v2129 = vpop.permute.xlu0 %2128
      %2132 = vset.pattern.permute.xlu0 0
      %2133 = vperm.xlu0 %2132, %v2075
      %v2134 = vpop.permute.xlu0 %2133
      %2137 = vset.pattern.permute.xlu0 0
      %2138 = vperm.xlu0 %2137, %v2076
      %v2139 = vpop.permute.xlu0 %2138
      %2142 = vset.pattern.permute.xlu0 0
      %2143 = vperm.xlu0 %2142, %v2077
      %v2144 = vpop.permute.xlu0 %2143
      %2147 = vset.pattern.permute.xlu0 0
      %2148 = vperm.xlu0 %2147, %v2078
      %v2149 = vpop.permute.xlu0 %2148
      %2152 = vset.pattern.permute.xlu0 0
      %2153 = vperm.xlu0 %2152, %v2079
      %v2154 = vpop.permute.xlu0 %2153
      %2157 = vset.pattern.permute.xlu0 0
      %2158 = vperm.xlu0 %2157, %v2080
      %v2159 = vpop.permute.xlu0 %2158
      %2162 = vset.pattern.permute.xlu0 0
      %2163 = vperm.xlu0 %2162, %v2081
      %v2164 = vpop.permute.xlu0 %2163
      %2167 = vset.pattern.permute.xlu0 0
      %2168 = vperm.xlu0 %2167, %v2082
      %v2169 = vpop.permute.xlu0 %2168
      %2172 = vset.pattern.permute.xlu0 0
      %2173 = vperm.xlu0 %2172, %v2083
      %v2174 = vpop.permute.xlu0 %2173
      %2177 = vset.pattern.permute.xlu0 0
      %2178 = vperm.xlu0 %2177, %v2084
      %v2179 = vpop.permute.xlu0 %2178
      %2182 = vset.pattern.permute.xlu0 0
      %2183 = vperm.xlu0 %2182, %v2085
      %v2184 = vpop.permute.xlu0 %2183
      %2187 = vset.pattern.permute.xlu0 0
      %2188 = vperm.xlu0 %2187, %v2086
      %v2189 = vpop.permute.xlu0 %2188
      %2192 = vset.pattern.permute.xlu0 0
      %2193 = vperm.xlu0 %2192, %v2087
      %v2194 = vpop.permute.xlu0 %2193
      %2197 = vset.pattern.permute.xlu0 0
      %2198 = vperm.xlu0 %2197, %v2088
      %v2199 = vpop.permute.xlu0 %2198
      %2202 = vset.pattern.permute.xlu0 0
      %2203 = vperm.xlu0 %2202, %v2089
      %v2204 = vpop.permute.xlu0 %2203
      %2207 = vset.pattern.permute.xlu0 0
      %2208 = vperm.xlu0 %2207, %v2090
      %v2209 = vpop.permute.xlu0 %2208
      %2212 = vset.pattern.permute.xlu0 0
      %2213 = vperm.xlu0 %2212, %v2091
      %v2214 = vpop.permute.xlu0 %2213
      %2217 = vset.pattern.permute.xlu0 0
      %2218 = vperm.xlu0 %2217, %v2092
      %v2219 = vpop.permute.xlu0 %2218
      %2222 = vset.pattern.permute.xlu0 0
      %2223 = vperm.xlu0 %2222, %v2093
      %v2224 = vpop.permute.xlu0 %2223
      %2227 = vset.pattern.permute.xlu0 0
      %2228 = vperm.xlu0 %2227, %v2094
      %v2229 = vpop.permute.xlu0 %2228
      %2232 = vset.pattern.permute.xlu0 0
      %2233 = vperm.xlu0 %2232, %v2095
      %v2234 = vpop.permute.xlu0 %2233
      %2237 = vset.pattern.permute.xlu0 0
      %2238 = vperm.xlu0 %2237, %v2096
      %v2239 = vpop.permute.xlu0 %2238
      %2242 = vset.pattern.permute.xlu0 0
      %2243 = vperm.xlu0 %2242, %v2097
      %v2244 = vpop.permute.xlu0 %2243
      %2247 = vset.pattern.permute.xlu0 0
      %2248 = vperm.xlu0 %2247, %v2098
      %v2249 = vpop.permute.xlu0 %2248
      %2252 = vset.pattern.permute.xlu0 0
      %2253 = vperm.xlu0 %2252, %v2099
      %v2254 = vpop.permute.xlu0 %2253
      %2257 = vset.pattern.permute.xlu0 0
      %2258 = vperm.xlu0 %2257, %v2100
      %v2259 = vpop.permute.xlu0 %2258
      %v2261 = vmul.f32 %v538, %v2104
      %v2262 = vmul.f32 %v452, %v2109
      %v2263 = vmul.f32 %v454, %v2114
      %v2264 = vmul.f32 %v456, %v2119
      %v2265 = vmul.f32 %v458, %v2124
      %v2266 = vmul.f32 %v460, %v2129
      %v2267 = vmul.f32 %v462, %v2134
      %v2268 = vmul.f32 %v464, %v2139
      %v2269 = vmul.f32 %v466, %v2144
      %v2270 = vmul.f32 %v468, %v2149
      %v2271 = vmul.f32 %v470, %v2154
      %v2272 = vmul.f32 %v472, %v2159
      %v2273 = vmul.f32 %v474, %v2164
      %v2274 = vmul.f32 %v476, %v2169
      %v2275 = vmul.f32 %v478, %v2174
      %v2276 = vmul.f32 %v480, %v2179
      %v2277 = vmul.f32 %v482, %v2184
      %v2278 = vmul.f32 %v484, %v2189
      %v2279 = vmul.f32 %v486, %v2194
      %v2280 = vmul.f32 %v488, %v2199
      %v2281 = vmul.f32 %v490, %v2204
      %v2282 = vmul.f32 %v492, %v2209
      %v2283 = vmul.f32 %v494, %v2214
      %v2284 = vmul.f32 %v496, %v2219
      %v2285 = vmul.f32 %v498, %v2224
      %v2286 = vmul.f32 %v500, %v2229
      %v2287 = vmul.f32 %v502, %v2234
      %v2288 = vmul.f32 %v504, %v2239
      %v2289 = vmul.f32 %v506, %v2244
      %v2290 = vmul.f32 %v507, %v2249
      %v2291 = vmul.f32 %v415, %v2254
      %v2292 = vmul.f32 %v417, %v2259
      %v2293 = vpack.c.bf16 %v2262, %v2261
      %v2294 = vpack.c.bf16 %v2264, %v2263
      %v2295 = vpack.c.bf16 %v2266, %v2265
      %v2296 = vpack.c.bf16 %v2268, %v2267
      %v2297 = vpack.c.bf16 %v2270, %v2269
      %v2298 = vpack.c.bf16 %v2272, %v2271
      %v2299 = vpack.c.bf16 %v2274, %v2273
      %v2300 = vpack.c.bf16 %v2276, %v2275
      %v2301 = vpack.c.bf16 %v2278, %v2277
      %v2302 = vpack.c.bf16 %v2280, %v2279
      %v2303 = vpack.c.bf16 %v2282, %v2281
      %v2304 = vpack.c.bf16 %v2284, %v2283
      %v2305 = vpack.c.bf16 %v2286, %v2285
      %v2306 = vpack.c.bf16 %v2288, %v2287
      %v2307 = vpack.c.bf16 %v2290, %v2289
      %v2308 = vpack.c.bf16 %v2292, %v2291
      %s2309 = scalar_lea.vmem %s3, 192
      %v2310 = vld [vmem:[%s2309] sm:$0xf]
      %v2311 = vld [vmem:[%s2309 + $0x4] sm:$0xf]
      %v2312 = vld [vmem:[%s2309 + $0x8] sm:$0xf]
      %v2313 = vld [vmem:[%s2309 + $0xc] sm:$0xf]
      %v2314 = vld [vmem:[%s2309 + $0x10] sm:$0xf]
      %v2315 = vld [vmem:[%s2309 + $0x14] sm:$0xf]
      %v2316 = vld [vmem:[%s2309 + $0x18] sm:$0xf]
      %v2317 = vld [vmem:[%s2309 + $0x1c] sm:$0xf]
      %v2318 = vld [vmem:[%s2309 + $0x20] sm:$0xf]
      %v2319 = vld [vmem:[%s2309 + $0x24] sm:$0xf]
      %v2320 = vld [vmem:[%s2309 + $0x28] sm:$0xf]
      %v2321 = vld [vmem:[%s2309 + $0x2c] sm:$0xf]
      %v2322 = vld [vmem:[%s2309 + $0x30] sm:$0xf]
      %v2323 = vld [vmem:[%s2309 + $0x34] sm:$0xf]
      %v2324 = vld [vmem:[%s2309 + $0x38] sm:$0xf]
      %v2325 = vld [vmem:[%s2309 + $0x3c] sm:$0xf]
      %v2342 = vunpack.c.l.b16 %v2310
      %v2343 = vunpack.c.l.b16 %v2311
      %v2344 = vunpack.c.l.b16 %v2312
      %v2345 = vunpack.c.l.b16 %v2313
      %v2346 = vunpack.c.l.b16 %v2314
      %v2347 = vunpack.c.l.b16 %v2315
      %v2348 = vunpack.c.l.b16 %v2316
      %v2349 = vunpack.c.l.b16 %v2317
      %v2350 = vunpack.c.l.b16 %v2318
      %v2351 = vunpack.c.l.b16 %v2319
      %v2352 = vunpack.c.l.b16 %v2320
      %v2353 = vunpack.c.l.b16 %v2321
      %v2354 = vunpack.c.l.b16 %v2322
      %v2355 = vunpack.c.l.b16 %v2323
      %v2356 = vunpack.c.l.b16 %v2324
      %v2357 = vunpack.c.l.b16 %v2325
      %v2358 = vpack.c.b16 %v2343, %v2342
      %v2359 = vpack.c.b16 %v2345, %v2344
      %v2360 = vpack.c.b16 %v2347, %v2346
      %v2361 = vpack.c.b16 %v2349, %v2348
      %v2362 = vpack.c.b16 %v2351, %v2350
      %v2363 = vpack.c.b16 %v2353, %v2352
      %v2364 = vpack.c.b16 %v2355, %v2354
      %v2365 = vpack.c.b16 %v2357, %v2356
      %2374 = vmatprep.subr.bf16.mxu0 0
      %2375 = vmatpush1.bf16.msra.mxu0 %v2358
      %2376 = vmatprep.subr.bf16.mxu0 0
      %2377 = vmatpush1.bf16.msra.mxu0 %v2359
      %2378 = vmatprep.subr.bf16.mxu0 0
      %2379 = vmatpush1.bf16.msra.mxu0 %v2360
      %2380 = vmatprep.subr.bf16.mxu0 0
      %2381 = vmatpush1.bf16.msra.mxu0 %v2361
      %2382 = vmatprep.subr.bf16.mxu0 0
      %2383 = vmatpush1.bf16.msra.mxu0 %v2362
      %2384 = vmatprep.subr.bf16.mxu0 0
      %2385 = vmatpush1.bf16.msra.mxu0 %v2363
      %2386 = vmatprep.subr.bf16.mxu0 0
      %2387 = vmatpush1.bf16.msra.mxu0 %v2364
      %2388 = vmatprep.subr.bf16.mxu0 0
      %2389 = vmatpush1.bf16.msra.mxu0 %v2365
      %2390 = vmatprep.subr.bf16.mxu0 0
      %2391 = vmatpush1.bf16.msra.mxu0 0
      %2392 = vmatprep.subr.bf16.mxu0 0
      %2393 = vmatpush1.bf16.msra.mxu0 0
      %2394 = vmatprep.subr.bf16.mxu0 0
      %2395 = vmatpush1.bf16.msra.mxu0 0
      %2396 = vmatprep.subr.bf16.mxu0 0
      %2397 = vmatpush1.bf16.msra.mxu0 0
      %2398 = vmatprep.subr.bf16.mxu0 0
      %2399 = vmatpush1.bf16.msra.mxu0 0
      %2400 = vmatprep.subr.bf16.mxu0 0
      %2401 = vmatpush1.bf16.msra.mxu0 0
      %2402 = vmatprep.subr.bf16.mxu0 0
      %2403 = vmatpush1.bf16.msra.mxu0 0
      %2404 = vmatprep.subr.bf16.mxu0 0
      %2405 = vmatpush1.bf16.msra.mxu0 0
      %2406 = vmatprep.mubr.bf16.mxu0 0
      %2407 = vmatmul.mubr.bf16.gmra.mrb[0].mxu0 %v2293
      %v2408 = vpop.f32.mrb[0].mxu0
      %v2409 = vadd.f32 0.0, %v2408
      %v2410 = vpop.f32.mrb[0].mxu0
      %v2411 = vpop.f32.mrb[0].mxu0
      %v2412 = vadd.f32 0.0, %v2411
      %v2413 = vpop.f32.mrb[0].mxu0
      %2414 = vmatprep.mubr.bf16.mxu0 0
      %2415 = vmatmul.mubr.bf16.gmra.mrb[0].mxu0 %v2294
      %v2416 = vpop.f32.mrb[0].mxu0
      %v2417 = vadd.f32 0.0, %v2416
      %v2418 = vpop.f32.mrb[0].mxu0
      %v2419 = vpop.f32.mrb[0].mxu0
      %v2420 = vadd.f32 0.0, %v2419
      %v2421 = vpop.f32.mrb[0].mxu0
      %2422 = vmatprep.mubr.bf16.mxu0 0
      %2423 = vmatmul.mubr.bf16.gmra.mrb[0].mxu0 %v2295
      %v2424 = vpop.f32.mrb[0].mxu0
      %v2425 = vadd.f32 0.0, %v2424
      %v2426 = vpop.f32.mrb[0].mxu0
      %v2427 = vpop.f32.mrb[0].mxu0
      %v2428 = vadd.f32 0.0, %v2427
      %v2429 = vpop.f32.mrb[0].mxu0
      %2430 = vmatprep.mubr.bf16.mxu0 0
      %2431 = vmatmul.mubr.bf16.gmra.mrb[0].mxu0 %v2296
      %v2432 = vpop.f32.mrb[0].mxu0
      %v2433 = vadd.f32 0.0, %v2432
      %v2434 = vpop.f32.mrb[0].mxu0
      %v2435 = vpop.f32.mrb[0].mxu0
      %v2436 = vadd.f32 0.0, %v2435
      %v2437 = vpop.f32.mrb[0].mxu0
      %2438 = vmatprep.mubr.bf16.mxu0 0
      %2439 = vmatmul.mubr.bf16.gmra.mrb[0].mxu0 %v2297
      %v2440 = vpop.f32.mrb[0].mxu0
      %v2441 = vadd.f32 0.0, %v2440
      %v2442 = vpop.f32.mrb[0].mxu0
      %v2443 = vpop.f32.mrb[0].mxu0
      %v2444 = vadd.f32 0.0, %v2443
      %v2445 = vpop.f32.mrb[0].mxu0
      %2446 = vmatprep.mubr.bf16.mxu0 0
      %2447 = vmatmul.mubr.bf16.gmra.mrb[0].mxu0 %v2298
      %v2448 = vpop.f32.mrb[0].mxu0
      %v2449 = vadd.f32 0.0, %v2448
      %v2450 = vpop.f32.mrb[0].mxu0
      %v2451 = vpop.f32.mrb[0].mxu0
      %v2452 = vadd.f32 0.0, %v2451
      %v2453 = vpop.f32.mrb[0].mxu0
      %2454 = vmatprep.mubr.bf16.mxu0 0
      %2455 = vmatmul.mubr.bf16.gmra.mrb[0].mxu0 %v2299
      %v2456 = vpop.f32.mrb[0].mxu0
      %v2457 = vadd.f32 0.0, %v2456
      %v2458 = vpop.f32.mrb[0].mxu0
      %v2459 = vpop.f32.mrb[0].mxu0
      %v2460 = vadd.f32 0.0, %v2459
      %v2461 = vpop.f32.mrb[0].mxu0
      %2462 = vmatprep.mubr.bf16.mxu0 0
      %2463 = vmatmul.mubr.bf16.gmra.mrb[0].mxu0 %v2300
      %v2464 = vpop.f32.mrb[0].mxu0
      %v2465 = vadd.f32 0.0, %v2464
      %v2466 = vpop.f32.mrb[0].mxu0
      %v2467 = vpop.f32.mrb[0].mxu0
      %v2468 = vadd.f32 0.0, %v2467
      %v2469 = vpop.f32.mrb[0].mxu0
      %2470 = vmatprep.mubr.bf16.mxu0 0
      %2471 = vmatmul.mubr.bf16.gmra.mrb[0].mxu0 %v2301
      %v2472 = vpop.f32.mrb[0].mxu0
      %v2473 = vadd.f32 0.0, %v2472
      %v2474 = vpop.f32.mrb[0].mxu0
      %v2475 = vpop.f32.mrb[0].mxu0
      %v2476 = vadd.f32 0.0, %v2475
      %v2477 = vpop.f32.mrb[0].mxu0
      %2478 = vmatprep.mubr.bf16.mxu0 0
      %2479 = vmatmul.mubr.bf16.gmra.mrb[0].mxu0 %v2302
      %v2480 = vpop.f32.mrb[0].mxu0
      %v2481 = vadd.f32 0.0, %v2480
      %v2482 = vpop.f32.mrb[0].mxu0
      %v2483 = vpop.f32.mrb[0].mxu0
      %v2484 = vadd.f32 0.0, %v2483
      %v2485 = vpop.f32.mrb[0].mxu0
      %2486 = vmatprep.mubr.bf16.mxu0 0
      %2487 = vmatmul.mubr.bf16.gmra.mrb[0].mxu0 %v2303
      %v2488 = vpop.f32.mrb[0].mxu0
      %v2489 = vadd.f32 0.0, %v2488
      %v2490 = vpop.f32.mrb[0].mxu0
      %v2491 = vpop.f32.mrb[0].mxu0
      %v2492 = vadd.f32 0.0, %v2491
      %v2493 = vpop.f32.mrb[0].mxu0
      %2494 = vmatprep.mubr.bf16.mxu0 0
      %2495 = vmatmul.mubr.bf16.gmra.mrb[0].mxu0 %v2304
      %v2496 = vpop.f32.mrb[0].mxu0
      %v2497 = vadd.f32 0.0, %v2496
      %v2498 = vpop.f32.mrb[0].mxu0
      %v2499 = vpop.f32.mrb[0].mxu0
      %v2500 = vadd.f32 0.0, %v2499
      %v2501 = vpop.f32.mrb[0].mxu0
      %2502 = vmatprep.mubr.bf16.mxu0 0
      %2503 = vmatmul.mubr.bf16.gmra.mrb[0].mxu0 %v2305
      %v2504 = vpop.f32.mrb[0].mxu0
      %v2505 = vadd.f32 0.0, %v2504
      %v2506 = vpop.f32.mrb[0].mxu0
      %v2507 = vpop.f32.mrb[0].mxu0
      %v2508 = vadd.f32 0.0, %v2507
      %v2509 = vpop.f32.mrb[0].mxu0
      %2510 = vmatprep.mubr.bf16.mxu0 0
      %2511 = vmatmul.mubr.bf16.gmra.mrb[0].mxu0 %v2306
      %v2512 = vpop.f32.mrb[0].mxu0
      %v2513 = vadd.f32 0.0, %v2512
      %v2514 = vpop.f32.mrb[0].mxu0
      %v2515 = vpop.f32.mrb[0].mxu0
      %v2516 = vadd.f32 0.0, %v2515
      %v2517 = vpop.f32.mrb[0].mxu0
      %2518 = vmatprep.mubr.bf16.mxu0 0
      %2519 = vmatmul.mubr.bf16.gmra.mrb[0].mxu0 %v2307
      %v2520 = vpop.f32.mrb[0].mxu0
      %v2521 = vadd.f32 0.0, %v2520
      %v2522 = vpop.f32.mrb[0].mxu0
      %v2523 = vpop.f32.mrb[0].mxu0
      %v2524 = vadd.f32 0.0, %v2523
      %v2525 = vpop.f32.mrb[0].mxu0
      %2526 = vmatprep.mubr.bf16.mxu0 0
      %2527 = vmatmul.mubr.bf16.gmra.mrb[0].mxu0 %v2308
      %v2528 = vpop.f32.mrb[0].mxu0
      %v2529 = vadd.f32 0.0, %v2528
      %v2530 = vpop.f32.mrb[0].mxu0
      %v2531 = vpop.f32.mrb[0].mxu0
      %v2532 = vadd.f32 0.0, %v2531
      %v2533 = vpop.f32.mrb[0].mxu0
      %2534 = vdwg.mxu0
      %v2535 = vadd.f32 %v2036, %v2409
      %v2536 = vadd.f32 %v2037, %v2412
      %v2537 = vadd.f32 %v2038, %v2417
      %v2538 = vadd.f32 %v2039, %v2420
      %v2539 = vadd.f32 %v2040, %v2425
      %v2540 = vadd.f32 %v2041, %v2428
      %v2541 = vadd.f32 %v2042, %v2433
      %v2542 = vadd.f32 %v2043, %v2436
      %v2543 = vadd.f32 %v2044, %v2441
      %v2544 = vadd.f32 %v2045, %v2444
      %v2545 = vadd.f32 %v2046, %v2449
      %v2546 = vadd.f32 %v2047, %v2452
      %v2547 = vadd.f32 %v2048, %v2457
      %v2548 = vadd.f32 %v2049, %v2460
      %v2549 = vadd.f32 %v2050, %v2465
      %v2550 = vadd.f32 %v2051, %v2468
      %v2551 = vadd.f32 %v2052, %v2473
      %v2552 = vadd.f32 %v2053, %v2476
      %v2553 = vadd.f32 %v2054, %v2481
      %v2554 = vadd.f32 %v2055, %v2484
      %v2555 = vadd.f32 %v2056, %v2489
      %v2556 = vadd.f32 %v2057, %v2492
      %v2557 = vadd.f32 %v2058, %v2497
      %v2558 = vadd.f32 %v2059, %v2500
      %v2559 = vadd.f32 %v2060, %v2505
      %v2560 = vadd.f32 %v2061, %v2508
      %v2561 = vadd.f32 %v2062, %v2513
      %v2562 = vadd.f32 %v2063, %v2516
      %v2563 = vadd.f32 %v2064, %v2521
      %v2564 = vadd.f32 %v2065, %v2524
      %v2565 = vadd.f32 %v2066, %v2529
      %v2566 = vadd.f32 %v2067, %v2532
      %v2567 = vpack.c.bf16 %v378, %v377
      %v2568 = vpack.c.bf16 %v380, %v379
      %v2569 = vpack.c.bf16 %v382, %v381
      %v2570 = vpack.c.bf16 %v384, %v383
      %v2571 = vpack.c.bf16 %v386, %v385
      %v2572 = vpack.c.bf16 %v388, %v387
      %v2573 = vpack.c.bf16 %v390, %v389
      %v2574 = vpack.c.bf16 %v392, %v391
      %v2575 = vpack.c.bf16 %v394, %v393
      %v2576 = vpack.c.bf16 %v396, %v395
      %v2577 = vpack.c.bf16 %v398, %v397
      %v2578 = vpack.c.bf16 %v400, %v399
      %v2579 = vpack.c.bf16 %v402, %v401
      %v2580 = vpack.c.bf16 %v404, %v403
      %v2581 = vpack.c.bf16 %v406, %v405
      %v2582 = vpack.c.bf16 %v408, %v407
      %s2583 = scalar_lea.vmem %s3, 256
      %v2584 = vld [vmem:[%s2583] sm:$0xf]
      %v2585 = vld [vmem:[%s2583 + $0x4] sm:$0xf]
      %v2586 = vld [vmem:[%s2583 + $0x8] sm:$0xf]
      %v2587 = vld [vmem:[%s2583 + $0xc] sm:$0xf]
      %v2588 = vld [vmem:[%s2583 + $0x10] sm:$0xf]
      %v2589 = vld [vmem:[%s2583 + $0x14] sm:$0xf]
      %v2590 = vld [vmem:[%s2583 + $0x18] sm:$0xf]
      %v2591 = vld [vmem:[%s2583 + $0x1c] sm:$0xf]
      %v2592 = vld [vmem:[%s2583 + $0x20] sm:$0xf]
      %v2593 = vld [vmem:[%s2583 + $0x24] sm:$0xf]
      %v2594 = vld [vmem:[%s2583 + $0x28] sm:$0xf]
      %v2595 = vld [vmem:[%s2583 + $0x2c] sm:$0xf]
      %v2596 = vld [vmem:[%s2583 + $0x30] sm:$0xf]
      %v2597 = vld [vmem:[%s2583 + $0x34] sm:$0xf]
      %v2598 = vld [vmem:[%s2583 + $0x38] sm:$0xf]
      %v2599 = vld [vmem:[%s2583 + $0x3c] sm:$0xf]
      %v2616 = vunpack.c.l.b16 %v2584
      %v2617 = vunpack.c.l.b16 %v2585
      %v2618 = vunpack.c.l.b16 %v2586
      %v2619 = vunpack.c.l.b16 %v2587
      %v2620 = vunpack.c.l.b16 %v2588
      %v2621 = vunpack.c.l.b16 %v2589
      %v2622 = vunpack.c.l.b16 %v2590
      %v2623 = vunpack.c.l.b16 %v2591
      %v2624 = vunpack.c.l.b16 %v2592
      %v2625 = vunpack.c.l.b16 %v2593
      %v2626 = vunpack.c.l.b16 %v2594
      %v2627 = vunpack.c.l.b16 %v2595
      %v2628 = vunpack.c.l.b16 %v2596
      %v2629 = vunpack.c.l.b16 %v2597
      %v2630 = vunpack.c.l.b16 %v2598
      %v2631 = vunpack.c.l.b16 %v2599
      %v2632 = vpack.c.b16 %v2617, %v2616
      %v2633 = vpack.c.b16 %v2619, %v2618
      %v2634 = vpack.c.b16 %v2621, %v2620
      %v2635 = vpack.c.b16 %v2623, %v2622
      %v2636 = vpack.c.b16 %v2625, %v2624
      %v2637 = vpack.c.b16 %v2627, %v2626
      %v2638 = vpack.c.b16 %v2629, %v2628
      %v2639 = vpack.c.b16 %v2631, %v2630
      %2648 = vmatprep.subr.bf16.mxu0 0
      %2649 = vmatpush1.bf16.msra.mxu0 %v2632
      %2650 = vmatprep.subr.bf16.mxu0 0
      %2651 = vmatpush1.bf16.msra.mxu0 %v2633
      %2652 = vmatprep.subr.bf16.mxu0 0
      %2653 = vmatpush1.bf16.msra.mxu0 %v2634
      %2654 = vmatprep.subr.bf16.mxu0 0
      %2655 = vmatpush1.bf16.msra.mxu0 %v2635
      %2656 = vmatprep.subr.bf16.mxu0 0
      %2657 = vmatpush1.bf16.msra.mxu0 %v2636
      %2658 = vmatprep.subr.bf16.mxu0 0
      %2659 = vmatpush1.bf16.msra.mxu0 %v2637
      %2660 = vmatprep.subr.bf16.mxu0 0
      %2661 = vmatpush1.bf16.msra.mxu0 %v2638
      %2662 = vmatprep.subr.bf16.mxu0 0
      %2663 = vmatpush1.bf16.msra.mxu0 %v2639
      %2664 = vmatprep.subr.bf16.mxu0 0
      %2665 = vmatpush1.bf16.msra.mxu0 0
      %2666 = vmatprep.subr.bf16.mxu0 0
      %2667 = vmatpush1.bf16.msra.mxu0 0
      %2668 = vmatprep.subr.bf16.mxu0 0
      %2669 = vmatpush1.bf16.msra.mxu0 0
      %2670 = vmatprep.subr.bf16.mxu0 0
      %2671 = vmatpush1.bf16.msra.mxu0 0
      %2672 = vmatprep.subr.bf16.mxu0 0
      %2673 = vmatpush1.bf16.msra.mxu0 0
      %2674 = vmatprep.subr.bf16.mxu0 0
      %2675 = vmatpush1.bf16.msra.mxu0 0
      %2676 = vmatprep.subr.bf16.mxu0 0
      %2677 = vmatpush1.bf16.msra.mxu0 0
      %2678 = vmatprep.subr.bf16.mxu0 0
      %2679 = vmatpush1.bf16.msra.mxu0 0
      %2680 = vmatprep.mubr.bf16.mxu0 0
      %2681 = vmatmul.mubr.bf16.gmra.mrb[0].mxu0 %v2567
      %v2682 = vpop.f32.mrb[0].mxu0
      %v2683 = vadd.f32 0.0, %v2682
      %v2684 = vpop.f32.mrb[0].mxu0
      %v2685 = vpop.f32.mrb[0].mxu0
      %v2686 = vadd.f32 0.0, %v2685
      %v2687 = vpop.f32.mrb[0].mxu0
      %2688 = vmatprep.mubr.bf16.mxu0 0
      %2689 = vmatmul.mubr.bf16.gmra.mrb[0].mxu0 %v2568
      %v2690 = vpop.f32.mrb[0].mxu0
      %v2691 = vadd.f32 0.0, %v2690
      %v2692 = vpop.f32.mrb[0].mxu0
      %v2693 = vpop.f32.mrb[0].mxu0
      %v2694 = vadd.f32 0.0, %v2693
      %v2695 = vpop.f32.mrb[0].mxu0
      %2696 = vmatprep.mubr.bf16.mxu0 0
      %2697 = vmatmul.mubr.bf16.gmra.mrb[0].mxu0 %v2569
      %v2698 = vpop.f32.mrb[0].mxu0
      %v2699 = vadd.f32 0.0, %v2698
      %v2700 = vpop.f32.mrb[0].mxu0
      %v2701 = vpop.f32.mrb[0].mxu0
      %v2702 = vadd.f32 0.0, %v2701
      %v2703 = vpop.f32.mrb[0].mxu0
      %2704 = vmatprep.mubr.bf16.mxu0 0
      %2705 = vmatmul.mubr.bf16.gmra.mrb[0].mxu0 %v2570
      %v2706 = vpop.f32.mrb[0].mxu0
      %v2707 = vadd.f32 0.0, %v2706
      %v2708 = vpop.f32.mrb[0].mxu0
      %v2709 = vpop.f32.mrb[0].mxu0
      %v2710 = vadd.f32 0.0, %v2709
      %v2711 = vpop.f32.mrb[0].mxu0
      %2712 = vmatprep.mubr.bf16.mxu0 0
      %2713 = vmatmul.mubr.bf16.gmra.mrb[0].mxu0 %v2571
      %v2714 = vpop.f32.mrb[0].mxu0
      %v2715 = vadd.f32 0.0, %v2714
      %v2716 = vpop.f32.mrb[0].mxu0
      %v2717 = vpop.f32.mrb[0].mxu0
      %v2718 = vadd.f32 0.0, %v2717
      %v2719 = vpop.f32.mrb[0].mxu0
      %2720 = vmatprep.mubr.bf16.mxu0 0
      %2721 = vmatmul.mubr.bf16.gmra.mrb[0].mxu0 %v2572
      %v2722 = vpop.f32.mrb[0].mxu0
      %v2723 = vadd.f32 0.0, %v2722
      %v2724 = vpop.f32.mrb[0].mxu0
      %v2725 = vpop.f32.mrb[0].mxu0
      %v2726 = vadd.f32 0.0, %v2725
      %v2727 = vpop.f32.mrb[0].mxu0
      %2728 = vmatprep.mubr.bf16.mxu0 0
      %2729 = vmatmul.mubr.bf16.gmra.mrb[0].mxu0 %v2573
      %v2730 = vpop.f32.mrb[0].mxu0
      %v2731 = vadd.f32 0.0, %v2730
      %v2732 = vpop.f32.mrb[0].mxu0
      %v2733 = vpop.f32.mrb[0].mxu0
      %v2734 = vadd.f32 0.0, %v2733
      %v2735 = vpop.f32.mrb[0].mxu0
      %2736 = vmatprep.mubr.bf16.mxu0 0
      %2737 = vmatmul.mubr.bf16.gmra.mrb[0].mxu0 %v2574
      %v2738 = vpop.f32.mrb[0].mxu0
      %v2739 = vadd.f32 0.0, %v2738
      %v2740 = vpop.f32.mrb[0].mxu0
      %v2741 = vpop.f32.mrb[0].mxu0
      %v2742 = vadd.f32 0.0, %v2741
      %v2743 = vpop.f32.mrb[0].mxu0
      %2744 = vmatprep.mubr.bf16.mxu0 0
      %2745 = vmatmul.mubr.bf16.gmra.mrb[0].mxu0 %v2575
      %v2746 = vpop.f32.mrb[0].mxu0
      %v2747 = vadd.f32 0.0, %v2746
      %v2748 = vpop.f32.mrb[0].mxu0
      %v2749 = vpop.f32.mrb[0].mxu0
      %v2750 = vadd.f32 0.0, %v2749
      %v2751 = vpop.f32.mrb[0].mxu0
      %2752 = vmatprep.mubr.bf16.mxu0 0
      %2753 = vmatmul.mubr.bf16.gmra.mrb[0].mxu0 %v2576
      %v2754 = vpop.f32.mrb[0].mxu0
      %v2755 = vadd.f32 0.0, %v2754
      %v2756 = vpop.f32.mrb[0].mxu0
      %v2757 = vpop.f32.mrb[0].mxu0
      %v2758 = vadd.f32 0.0, %v2757
      %v2759 = vpop.f32.mrb[0].mxu0
      %2760 = vmatprep.mubr.bf16.mxu0 0
      %2761 = vmatmul.mubr.bf16.gmra.mrb[0].mxu0 %v2577
      %v2762 = vpop.f32.mrb[0].mxu0
      %v2763 = vadd.f32 0.0, %v2762
      %v2764 = vpop.f32.mrb[0].mxu0
      %v2765 = vpop.f32.mrb[0].mxu0
      %v2766 = vadd.f32 0.0, %v2765
      %v2767 = vpop.f32.mrb[0].mxu0
      %2768 = vmatprep.mubr.bf16.mxu0 0
      %2769 = vmatmul.mubr.bf16.gmra.mrb[0].mxu0 %v2578
      %v2770 = vpop.f32.mrb[0].mxu0
      %v2771 = vadd.f32 0.0, %v2770
      %v2772 = vpop.f32.mrb[0].mxu0
      %v2773 = vpop.f32.mrb[0].mxu0
      %v2774 = vadd.f32 0.0, %v2773
      %v2775 = vpop.f32.mrb[0].mxu0
      %2776 = vmatprep.mubr.bf16.mxu0 0
      %2777 = vmatmul.mubr.bf16.gmra.mrb[0].mxu0 %v2579
      %v2778 = vpop.f32.mrb[0].mxu0
      %v2779 = vadd.f32 0.0, %v2778
      %v2780 = vpop.f32.mrb[0].mxu0
      %v2781 = vpop.f32.mrb[0].mxu0
      %v2782 = vadd.f32 0.0, %v2781
      %v2783 = vpop.f32.mrb[0].mxu0
      %2784 = vmatprep.mubr.bf16.mxu0 0
      %2785 = vmatmul.mubr.bf16.gmra.mrb[0].mxu0 %v2580
      %v2786 = vpop.f32.mrb[0].mxu0
      %v2787 = vadd.f32 0.0, %v2786
      %v2788 = vpop.f32.mrb[0].mxu0
      %v2789 = vpop.f32.mrb[0].mxu0
      %v2790 = vadd.f32 0.0, %v2789
      %v2791 = vpop.f32.mrb[0].mxu0
      %2792 = vmatprep.mubr.bf16.mxu0 0
      %2793 = vmatmul.mubr.bf16.gmra.mrb[0].mxu0 %v2581
      %v2794 = vpop.f32.mrb[0].mxu0
      %v2795 = vadd.f32 0.0, %v2794
      %v2796 = vpop.f32.mrb[0].mxu0
      %v2797 = vpop.f32.mrb[0].mxu0
      %v2798 = vadd.f32 0.0, %v2797
      %v2799 = vpop.f32.mrb[0].mxu0
      %2800 = vmatprep.mubr.bf16.mxu0 0
      %2801 = vmatmul.mubr.bf16.gmra.mrb[0].mxu0 %v2582
      %v2802 = vpop.f32.mrb[0].mxu0
      %v2803 = vadd.f32 0.0, %v2802
      %v2804 = vpop.f32.mrb[0].mxu0
      %v2805 = vpop.f32.mrb[0].mxu0
      %v2806 = vadd.f32 0.0, %v2805
      %v2807 = vpop.f32.mrb[0].mxu0
      %2808 = vdwg.mxu0
      %v2809 = vadd.f32 %v2535, %v2683
      %v2810 = vadd.f32 %v2536, %v2686
      %v2811 = vadd.f32 %v2537, %v2691
      %v2812 = vadd.f32 %v2538, %v2694
      %v2813 = vadd.f32 %v2539, %v2699
      %v2814 = vadd.f32 %v2540, %v2702
      %v2815 = vadd.f32 %v2541, %v2707
      %v2816 = vadd.f32 %v2542, %v2710
      %v2817 = vadd.f32 %v2543, %v2715
      %v2818 = vadd.f32 %v2544, %v2718
      %v2819 = vadd.f32 %v2545, %v2723
      %v2820 = vadd.f32 %v2546, %v2726
      %v2821 = vadd.f32 %v2547, %v2731
      %v2822 = vadd.f32 %v2548, %v2734
      %v2823 = vadd.f32 %v2549, %v2739
      %v2824 = vadd.f32 %v2550, %v2742
      %v2825 = vadd.f32 %v2551, %v2747
      %v2826 = vadd.f32 %v2552, %v2750
      %v2827 = vadd.f32 %v2553, %v2755
      %v2828 = vadd.f32 %v2554, %v2758
      %v2829 = vadd.f32 %v2555, %v2763
      %v2830 = vadd.f32 %v2556, %v2766
      %v2831 = vadd.f32 %v2557, %v2771
      %v2832 = vadd.f32 %v2558, %v2774
      %v2833 = vadd.f32 %v2559, %v2779
      %v2834 = vadd.f32 %v2560, %v2782
      %v2835 = vadd.f32 %v2561, %v2787
      %v2836 = vadd.f32 %v2562, %v2790
      %v2837 = vadd.f32 %v2563, %v2795
      %v2838 = vadd.f32 %v2564, %v2798
      %v2839 = vadd.f32 %v2565, %v2803
      %v2840 = vadd.f32 %v2566, %v2806
      %s2841 = scalar_lea.vmem %s4, 1280
      %v2842 = vld [vmem:[%s2841] sm:$0xff]
      %v2843 = vld [vmem:[%s2841 + $0x8] sm:$0xff]
      %v2844 = vld [vmem:[%s2841 + $0x10] sm:$0xff]
      %v2845 = vld [vmem:[%s2841 + $0x18] sm:$0xff]
      %v2846 = vld [vmem:[%s2841 + $0x20] sm:$0xff]
      %v2847 = vld [vmem:[%s2841 + $0x28] sm:$0xff]
      %v2848 = vld [vmem:[%s2841 + $0x30] sm:$0xff]
      %v2849 = vld [vmem:[%s2841 + $0x38] sm:$0xff]
      %v2850 = vld [vmem:[%s2841 + $0x40] sm:$0xff]
      %v2851 = vld [vmem:[%s2841 + $0x48] sm:$0xff]
      %v2852 = vld [vmem:[%s2841 + $0x50] sm:$0xff]
      %v2853 = vld [vmem:[%s2841 + $0x58] sm:$0xff]
      %v2854 = vld [vmem:[%s2841 + $0x60] sm:$0xff]
      %v2855 = vld [vmem:[%s2841 + $0x68] sm:$0xff]
      %v2856 = vld [vmem:[%s2841 + $0x70] sm:$0xff]
      %v2857 = vld [vmem:[%s2841 + $0x78] sm:$0xff]
      %v2858 = vld [vmem:[%s2841 + $0x80] sm:$0xff]
      %v2859 = vld [vmem:[%s2841 + $0x88] sm:$0xff]
      %v2860 = vld [vmem:[%s2841 + $0x90] sm:$0xff]
      %v2861 = vld [vmem:[%s2841 + $0x98] sm:$0xff]
      %v2862 = vld [vmem:[%s2841 + $0xa0] sm:$0xff]
      %v2863 = vld [vmem:[%s2841 + $0xa8] sm:$0xff]
      %v2864 = vld [vmem:[%s2841 + $0xb0] sm:$0xff]
      %v2865 = vld [vmem:[%s2841 + $0xb8] sm:$0xff]
      %v2866 = vld [vmem:[%s2841 + $0xc0] sm:$0xff]
      %v2867 = vld [vmem:[%s2841 + $0xc8] sm:$0xff]
      %v2868 = vld [vmem:[%s2841 + $0xd0] sm:$0xff]
      %v2869 = vld [vmem:[%s2841 + $0xd8] sm:$0xff]
      %v2870 = vld [vmem:[%s2841 + $0xe0] sm:$0xff]
      %v2871 = vld [vmem:[%s2841 + $0xe8] sm:$0xff]
      %v2872 = vld [vmem:[%s2841 + $0xf0] sm:$0xff]
      %v2873 = vld [vmem:[%s2841 + $0xf8] sm:$0xff]
      %2875 = vset.pattern.permute.xlu0 0
      %2876 = vperm.xlu0 %2875, %v2842
      %v2877 = vpop.permute.xlu0 %2876
      %2880 = vset.pattern.permute.xlu0 0
      %2881 = vperm.xlu0 %2880, %v2843
      %v2882 = vpop.permute.xlu0 %2881
      %2885 = vset.pattern.permute.xlu0 0
      %2886 = vperm.xlu0 %2885, %v2844
      %v2887 = vpop.permute.xlu0 %2886
      %2890 = vset.pattern.permute.xlu0 0
      %2891 = vperm.xlu0 %2890, %v2845
      %v2892 = vpop.permute.xlu0 %2891
      %2895 = vset.pattern.permute.xlu0 0
      %2896 = vperm.xlu0 %2895, %v2846
      %v2897 = vpop.permute.xlu0 %2896
      %2900 = vset.pattern.permute.xlu0 0
      %2901 = vperm.xlu0 %2900, %v2847
      %v2902 = vpop.permute.xlu0 %2901
      %2905 = vset.pattern.permute.xlu0 0
      %2906 = vperm.xlu0 %2905, %v2848
      %v2907 = vpop.permute.xlu0 %2906
      %2910 = vset.pattern.permute.xlu0 0
      %2911 = vperm.xlu0 %2910, %v2849
      %v2912 = vpop.permute.xlu0 %2911
      %2915 = vset.pattern.permute.xlu0 0
      %2916 = vperm.xlu0 %2915, %v2850
      %v2917 = vpop.permute.xlu0 %2916
      %2920 = vset.pattern.permute.xlu0 0
      %2921 = vperm.xlu0 %2920, %v2851
      %v2922 = vpop.permute.xlu0 %2921
      %2925 = vset.pattern.permute.xlu0 0
      %2926 = vperm.xlu0 %2925, %v2852
      %v2927 = vpop.permute.xlu0 %2926
      %2930 = vset.pattern.permute.xlu0 0
      %2931 = vperm.xlu0 %2930, %v2853
      %v2932 = vpop.permute.xlu0 %2931
      %2935 = vset.pattern.permute.xlu0 0
      %2936 = vperm.xlu0 %2935, %v2854
      %v2937 = vpop.permute.xlu0 %2936
      %2940 = vset.pattern.permute.xlu0 0
      %2941 = vperm.xlu0 %2940, %v2855
      %v2942 = vpop.permute.xlu0 %2941
      %2945 = vset.pattern.permute.xlu0 0
      %2946 = vperm.xlu0 %2945, %v2856
      %v2947 = vpop.permute.xlu0 %2946
      %2950 = vset.pattern.permute.xlu0 0
      %2951 = vperm.xlu0 %2950, %v2857
      %v2952 = vpop.permute.xlu0 %2951
      %2955 = vset.pattern.permute.xlu0 0
      %2956 = vperm.xlu0 %2955, %v2858
      %v2957 = vpop.permute.xlu0 %2956
      %2960 = vset.pattern.permute.xlu0 0
      %2961 = vperm.xlu0 %2960, %v2859
      %v2962 = vpop.permute.xlu0 %2961
      %2965 = vset.pattern.permute.xlu0 0
      %2966 = vperm.xlu0 %2965, %v2860
      %v2967 = vpop.permute.xlu0 %2966
      %2970 = vset.pattern.permute.xlu0 0
      %2971 = vperm.xlu0 %2970, %v2861
      %v2972 = vpop.permute.xlu0 %2971
      %2975 = vset.pattern.permute.xlu0 0
      %2976 = vperm.xlu0 %2975, %v2862
      %v2977 = vpop.permute.xlu0 %2976
      %2980 = vset.pattern.permute.xlu0 0
      %2981 = vperm.xlu0 %2980, %v2863
      %v2982 = vpop.permute.xlu0 %2981
      %2985 = vset.pattern.permute.xlu0 0
      %2986 = vperm.xlu0 %2985, %v2864
      %v2987 = vpop.permute.xlu0 %2986
      %2990 = vset.pattern.permute.xlu0 0
      %2991 = vperm.xlu0 %2990, %v2865
      %v2992 = vpop.permute.xlu0 %2991
      %2995 = vset.pattern.permute.xlu0 0
      %2996 = vperm.xlu0 %2995, %v2866
      %v2997 = vpop.permute.xlu0 %2996
      %3000 = vset.pattern.permute.xlu0 0
      %3001 = vperm.xlu0 %3000, %v2867
      %v3002 = vpop.permute.xlu0 %3001
      %3005 = vset.pattern.permute.xlu0 0
      %3006 = vperm.xlu0 %3005, %v2868
      %v3007 = vpop.permute.xlu0 %3006
      %3010 = vset.pattern.permute.xlu0 0
      %3011 = vperm.xlu0 %3010, %v2869
      %v3012 = vpop.permute.xlu0 %3011
      %3015 = vset.pattern.permute.xlu0 0
      %3016 = vperm.xlu0 %3015, %v2870
      %v3017 = vpop.permute.xlu0 %3016
      %3020 = vset.pattern.permute.xlu0 0
      %3021 = vperm.xlu0 %3020, %v2871
      %v3022 = vpop.permute.xlu0 %3021
      %3025 = vset.pattern.permute.xlu0 0
      %3026 = vperm.xlu0 %3025, %v2872
      %v3027 = vpop.permute.xlu0 %3026
      %3030 = vset.pattern.permute.xlu0 0
      %3031 = vperm.xlu0 %3030, %v2873
      %v3032 = vpop.permute.xlu0 %3031
      %v3034 = vmul.f32 %v1479, %v2877
      %v3035 = vmul.f32 %v1481, %v2882
      %v3036 = vmul.f32 %v1483, %v2887
      %v3037 = vmul.f32 %v1485, %v2892
      %v3038 = vmul.f32 %v1487, %v2897
      %v3039 = vmul.f32 %v1489, %v2902
      %v3040 = vmul.f32 %v1491, %v2907
      %v3041 = vmul.f32 %v1493, %v2912
      %v3042 = vmul.f32 %v1495, %v2917
      %v3043 = vmul.f32 %v1497, %v2922
      %v3044 = vmul.f32 %v1499, %v2927
      %v3045 = vmul.f32 %v1501, %v2932
      %v3046 = vmul.f32 %v1503, %v2937
      %v3047 = vmul.f32 %v1505, %v2942
      %v3048 = vmul.f32 %v1507, %v2947
      %v3049 = vmul.f32 %v1509, %v2952
      %v3050 = vmul.f32 %v1511, %v2957
      %v3051 = vmul.f32 %v1513, %v2962
      %v3052 = vmul.f32 %v1515, %v2967
      %v3053 = vmul.f32 %v1517, %v2972
      %v3054 = vmul.f32 %v1519, %v2977
      %v3055 = vmul.f32 %v1521, %v2982
      %v3056 = vmul.f32 %v1523, %v2987
      %v3057 = vmul.f32 %v1525, %v2992
      %v3058 = vmul.f32 %v1527, %v2997
      %v3059 = vmul.f32 %v1529, %v3002
      %v3060 = vmul.f32 %v1531, %v3007
      %v3061 = vmul.f32 %v1533, %v3012
      %v3062 = vmul.f32 %v1535, %v3017
      %v3063 = vmul.f32 %v1536, %v3022
      %v3064 = vmul.f32 %v1474, %v3027
      %v3065 = vmul.f32 %v1568, %v3032
      %v3066 = vpack.c.bf16 %v3035, %v3034
      %v3067 = vpack.c.bf16 %v3037, %v3036
      %v3068 = vpack.c.bf16 %v3039, %v3038
      %v3069 = vpack.c.bf16 %v3041, %v3040
      %v3070 = vpack.c.bf16 %v3043, %v3042
      %v3071 = vpack.c.bf16 %v3045, %v3044
      %v3072 = vpack.c.bf16 %v3047, %v3046
      %v3073 = vpack.c.bf16 %v3049, %v3048
      %v3074 = vpack.c.bf16 %v3051, %v3050
      %v3075 = vpack.c.bf16 %v3053, %v3052
      %v3076 = vpack.c.bf16 %v3055, %v3054
      %v3077 = vpack.c.bf16 %v3057, %v3056
      %v3078 = vpack.c.bf16 %v3059, %v3058
      %v3079 = vpack.c.bf16 %v3061, %v3060
      %v3080 = vpack.c.bf16 %v3063, %v3062
      %v3081 = vpack.c.bf16 %v3065, %v3064
      %s3082 = scalar_lea.vmem %s3, 320
      %v3083 = vld [vmem:[%s3082] sm:$0xf]
      %v3084 = vld [vmem:[%s3082 + $0x4] sm:$0xf]
      %v3085 = vld [vmem:[%s3082 + $0x8] sm:$0xf]
      %v3086 = vld [vmem:[%s3082 + $0xc] sm:$0xf]
      %v3087 = vld [vmem:[%s3082 + $0x10] sm:$0xf]
      %v3088 = vld [vmem:[%s3082 + $0x14] sm:$0xf]
      %v3089 = vld [vmem:[%s3082 + $0x18] sm:$0xf]
      %v3090 = vld [vmem:[%s3082 + $0x1c] sm:$0xf]
      %v3091 = vld [vmem:[%s3082 + $0x20] sm:$0xf]
      %v3092 = vld [vmem:[%s3082 + $0x24] sm:$0xf]
      %v3093 = vld [vmem:[%s3082 + $0x28] sm:$0xf]
      %v3094 = vld [vmem:[%s3082 + $0x2c] sm:$0xf]
      %v3095 = vld [vmem:[%s3082 + $0x30] sm:$0xf]
      %v3096 = vld [vmem:[%s3082 + $0x34] sm:$0xf]
      %v3097 = vld [vmem:[%s3082 + $0x38] sm:$0xf]
      %v3098 = vld [vmem:[%s3082 + $0x3c] sm:$0xf]
      %v3115 = vunpack.c.l.b16 %v3083
      %v3116 = vunpack.c.l.b16 %v3084
      %v3117 = vunpack.c.l.b16 %v3085
      %v3118 = vunpack.c.l.b16 %v3086
      %v3119 = vunpack.c.l.b16 %v3087
      %v3120 = vunpack.c.l.b16 %v3088
      %v3121 = vunpack.c.l.b16 %v3089
      %v3122 = vunpack.c.l.b16 %v3090
      %v3123 = vunpack.c.l.b16 %v3091
      %v3124 = vunpack.c.l.b16 %v3092
      %v3125 = vunpack.c.l.b16 %v3093
      %v3126 = vunpack.c.l.b16 %v3094
      %v3127 = vunpack.c.l.b16 %v3095
      %v3128 = vunpack.c.l.b16 %v3096
      %v3129 = vunpack.c.l.b16 %v3097
      %v3130 = vunpack.c.l.b16 %v3098
      %v3131 = vpack.c.b16 %v3116, %v3115
      %v3132 = vpack.c.b16 %v3118, %v3117
      %v3133 = vpack.c.b16 %v3120, %v3119
      %v3134 = vpack.c.b16 %v3122, %v3121
      %v3135 = vpack.c.b16 %v3124, %v3123
      %v3136 = vpack.c.b16 %v3126, %v3125
      %v3137 = vpack.c.b16 %v3128, %v3127
      %v3138 = vpack.c.b16 %v3130, %v3129
      %3147 = vmatprep.subr.bf16.mxu0 0
      %3148 = vmatpush1.bf16.msra.mxu0 %v3131
      %3149 = vmatprep.subr.bf16.mxu0 0
      %3150 = vmatpush1.bf16.msra.mxu0 %v3132
      %3151 = vmatprep.subr.bf16.mxu0 0
      %3152 = vmatpush1.bf16.msra.mxu0 %v3133
      %3153 = vmatprep.subr.bf16.mxu0 0
      %3154 = vmatpush1.bf16.msra.mxu0 %v3134
      %3155 = vmatprep.subr.bf16.mxu0 0
      %3156 = vmatpush1.bf16.msra.mxu0 %v3135
      %3157 = vmatprep.subr.bf16.mxu0 0
      %3158 = vmatpush1.bf16.msra.mxu0 %v3136
      %3159 = vmatprep.subr.bf16.mxu0 0
      %3160 = vmatpush1.bf16.msra.mxu0 %v3137
      %3161 = vmatprep.subr.bf16.mxu0 0
      %3162 = vmatpush1.bf16.msra.mxu0 %v3138
      %3163 = vmatprep.subr.bf16.mxu0 0
      %3164 = vmatpush1.bf16.msra.mxu0 0
      %3165 = vmatprep.subr.bf16.mxu0 0
      %3166 = vmatpush1.bf16.msra.mxu0 0
      %3167 = vmatprep.subr.bf16.mxu0 0
      %3168 = vmatpush1.bf16.msra.mxu0 0
      %3169 = vmatprep.subr.bf16.mxu0 0
      %3170 = vmatpush1.bf16.msra.mxu0 0
      %3171 = vmatprep.subr.bf16.mxu0 0
      %3172 = vmatpush1.bf16.msra.mxu0 0
      %3173 = vmatprep.subr.bf16.mxu0 0
      %3174 = vmatpush1.bf16.msra.mxu0 0
      %3175 = vmatprep.subr.bf16.mxu0 0
      %3176 = vmatpush1.bf16.msra.mxu0 0
      %3177 = vmatprep.subr.bf16.mxu0 0
      %3178 = vmatpush1.bf16.msra.mxu0 0
      %3179 = vmatprep.mubr.bf16.mxu0 0
      %3180 = vmatmul.mubr.bf16.gmra.mrb[0].mxu0 %v3066
      %v3181 = vpop.f32.mrb[0].mxu0
      %v3182 = vadd.f32 0.0, %v3181
      %v3183 = vpop.f32.mrb[0].mxu0
      %v3184 = vpop.f32.mrb[0].mxu0
      %v3185 = vadd.f32 0.0, %v3184
      %v3186 = vpop.f32.mrb[0].mxu0
      %3187 = vmatprep.mubr.bf16.mxu0 0
      %3188 = vmatmul.mubr.bf16.gmra.mrb[0].mxu0 %v3067
      %v3189 = vpop.f32.mrb[0].mxu0
      %v3190 = vadd.f32 0.0, %v3189
      %v3191 = vpop.f32.mrb[0].mxu0
      %v3192 = vpop.f32.mrb[0].mxu0
      %v3193 = vadd.f32 0.0, %v3192
      %v3194 = vpop.f32.mrb[0].mxu0
      %3195 = vmatprep.mubr.bf16.mxu0 0
      %3196 = vmatmul.mubr.bf16.gmra.mrb[0].mxu0 %v3068
      %v3197 = vpop.f32.mrb[0].mxu0
      %v3198 = vadd.f32 0.0, %v3197
      %v3199 = vpop.f32.mrb[0].mxu0
      %v3200 = vpop.f32.mrb[0].mxu0
      %v3201 = vadd.f32 0.0, %v3200
      %v3202 = vpop.f32.mrb[0].mxu0
      %3203 = vmatprep.mubr.bf16.mxu0 0
      %3204 = vmatmul.mubr.bf16.gmra.mrb[0].mxu0 %v3069
      %v3205 = vpop.f32.mrb[0].mxu0
      %v3206 = vadd.f32 0.0, %v3205
      %v3207 = vpop.f32.mrb[0].mxu0
      %v3208 = vpop.f32.mrb[0].mxu0
      %v3209 = vadd.f32 0.0, %v3208
      %v3210 = vpop.f32.mrb[0].mxu0
      %3211 = vmatprep.mubr.bf16.mxu0 0
      %3212 = vmatmul.mubr.bf16.gmra.mrb[0].mxu0 %v3070
      %v3213 = vpop.f32.mrb[0].mxu0
      %v3214 = vadd.f32 0.0, %v3213
      %v3215 = vpop.f32.mrb[0].mxu0
      %v3216 = vpop.f32.mrb[0].mxu0
      %v3217 = vadd.f32 0.0, %v3216
      %v3218 = vpop.f32.mrb[0].mxu0
      %3219 = vmatprep.mubr.bf16.mxu0 0
      %3220 = vmatmul.mubr.bf16.gmra.mrb[0].mxu0 %v3071
      %v3221 = vpop.f32.mrb[0].mxu0
      %v3222 = vadd.f32 0.0, %v3221
      %v3223 = vpop.f32.mrb[0].mxu0
      %v3224 = vpop.f32.mrb[0].mxu0
      %v3225 = vadd.f32 0.0, %v3224
      %v3226 = vpop.f32.mrb[0].mxu0
      %3227 = vmatprep.mubr.bf16.mxu0 0
      %3228 = vmatmul.mubr.bf16.gmra.mrb[0].mxu0 %v3072
      %v3229 = vpop.f32.mrb[0].mxu0
      %v3230 = vadd.f32 0.0, %v3229
      %v3231 = vpop.f32.mrb[0].mxu0
      %v3232 = vpop.f32.mrb[0].mxu0
      %v3233 = vadd.f32 0.0, %v3232
      %v3234 = vpop.f32.mrb[0].mxu0
      %3235 = vmatprep.mubr.bf16.mxu0 0
      %3236 = vmatmul.mubr.bf16.gmra.mrb[0].mxu0 %v3073
      %v3237 = vpop.f32.mrb[0].mxu0
      %v3238 = vadd.f32 0.0, %v3237
      %v3239 = vpop.f32.mrb[0].mxu0
      %v3240 = vpop.f32.mrb[0].mxu0
      %v3241 = vadd.f32 0.0, %v3240
      %v3242 = vpop.f32.mrb[0].mxu0
      %3243 = vmatprep.mubr.bf16.mxu0 0
      %3244 = vmatmul.mubr.bf16.gmra.mrb[0].mxu0 %v3074
      %v3245 = vpop.f32.mrb[0].mxu0
      %v3246 = vadd.f32 0.0, %v3245
      %v3247 = vpop.f32.mrb[0].mxu0
      %v3248 = vpop.f32.mrb[0].mxu0
      %v3249 = vadd.f32 0.0, %v3248
      %v3250 = vpop.f32.mrb[0].mxu0
      %3251 = vmatprep.mubr.bf16.mxu0 0
      %3252 = vmatmul.mubr.bf16.gmra.mrb[0].mxu0 %v3075
      %v3253 = vpop.f32.mrb[0].mxu0
      %v3254 = vadd.f32 0.0, %v3253
      %v3255 = vpop.f32.mrb[0].mxu0
      %v3256 = vpop.f32.mrb[0].mxu0
      %v3257 = vadd.f32 0.0, %v3256
      %v3258 = vpop.f32.mrb[0].mxu0
      %3259 = vmatprep.mubr.bf16.mxu0 0
      %3260 = vmatmul.mubr.bf16.gmra.mrb[0].mxu0 %v3076
      %v3261 = vpop.f32.mrb[0].mxu0
      %v3262 = vadd.f32 0.0, %v3261
      %v3263 = vpop.f32.mrb[0].mxu0
      %v3264 = vpop.f32.mrb[0].mxu0
      %v3265 = vadd.f32 0.0, %v3264
      %v3266 = vpop.f32.mrb[0].mxu0
      %3267 = vmatprep.mubr.bf16.mxu0 0
      %3268 = vmatmul.mubr.bf16.gmra.mrb[0].mxu0 %v3077
      %v3269 = vpop.f32.mrb[0].mxu0
      %v3270 = vadd.f32 0.0, %v3269
      %v3271 = vpop.f32.mrb[0].mxu0
      %v3272 = vpop.f32.mrb[0].mxu0
      %v3273 = vadd.f32 0.0, %v3272
      %v3274 = vpop.f32.mrb[0].mxu0
      %3275 = vmatprep.mubr.bf16.mxu0 0
      %3276 = vmatmul.mubr.bf16.gmra.mrb[0].mxu0 %v3078
      %v3277 = vpop.f32.mrb[0].mxu0
      %v3278 = vadd.f32 0.0, %v3277
      %v3279 = vpop.f32.mrb[0].mxu0
      %v3280 = vpop.f32.mrb[0].mxu0
      %v3281 = vadd.f32 0.0, %v3280
      %v3282 = vpop.f32.mrb[0].mxu0
      %3283 = vmatprep.mubr.bf16.mxu0 0
      %3284 = vmatmul.mubr.bf16.gmra.mrb[0].mxu0 %v3079
      %v3285 = vpop.f32.mrb[0].mxu0
      %v3286 = vadd.f32 0.0, %v3285
      %v3287 = vpop.f32.mrb[0].mxu0
      %v3288 = vpop.f32.mrb[0].mxu0
      %v3289 = vadd.f32 0.0, %v3288
      %v3290 = vpop.f32.mrb[0].mxu0
      %3291 = vmatprep.mubr.bf16.mxu0 0
      %3292 = vmatmul.mubr.bf16.gmra.mrb[0].mxu0 %v3080
      %v3293 = vpop.f32.mrb[0].mxu0
      %v3294 = vadd.f32 0.0, %v3293
      %v3295 = vpop.f32.mrb[0].mxu0
      %v3296 = vpop.f32.mrb[0].mxu0
      %v3297 = vadd.f32 0.0, %v3296
      %v3298 = vpop.f32.mrb[0].mxu0
      %3299 = vmatprep.mubr.bf16.mxu0 0
      %3300 = vmatmul.mubr.bf16.gmra.mrb[0].mxu0 %v3081
      %v3301 = vpop.f32.mrb[0].mxu0
      %v3302 = vadd.f32 0.0, %v3301
      %v3303 = vpop.f32.mrb[0].mxu0
      %v3304 = vpop.f32.mrb[0].mxu0
      %v3305 = vadd.f32 0.0, %v3304
      %v3306 = vpop.f32.mrb[0].mxu0
      %3307 = vdwg.mxu0
      %v3308 = vadd.f32 %v2809, %v3182
      %v3309 = vadd.f32 %v2810, %v3185
      %v3310 = vadd.f32 %v2811, %v3190
      %v3311 = vadd.f32 %v2812, %v3193
      %v3312 = vadd.f32 %v2813, %v3198
      %v3313 = vadd.f32 %v2814, %v3201
      %v3314 = vadd.f32 %v2815, %v3206
      %v3315 = vadd.f32 %v2816, %v3209
      %v3316 = vadd.f32 %v2817, %v3214
      %v3317 = vadd.f32 %v2818, %v3217
      %v3318 = vadd.f32 %v2819, %v3222
      %v3319 = vadd.f32 %v2820, %v3225
      %v3320 = vadd.f32 %v2821, %v3230
      %v3321 = vadd.f32 %v2822, %v3233
      %v3322 = vadd.f32 %v2823, %v3238
      %v3323 = vadd.f32 %v2824, %v3241
      %v3324 = vadd.f32 %v2825, %v3246
      %v3325 = vadd.f32 %v2826, %v3249
      %v3326 = vadd.f32 %v2827, %v3254
      %v3327 = vadd.f32 %v2828, %v3257
      %v3328 = vadd.f32 %v2829, %v3262
      %v3329 = vadd.f32 %v2830, %v3265
      %v3330 = vadd.f32 %v2831, %v3270
      %v3331 = vadd.f32 %v2832, %v3273
      %v3332 = vadd.f32 %v2833, %v3278
      %v3333 = vadd.f32 %v2834, %v3281
      %v3334 = vadd.f32 %v2835, %v3286
      %v3335 = vadd.f32 %v2836, %v3289
      %v3336 = vadd.f32 %v2837, %v3294
      %v3337 = vadd.f32 %v2838, %v3297
      %v3338 = vadd.f32 %v2839, %v3302
      %v3339 = vadd.f32 %v2840, %v3305
      %s3340 = scalar_lea.vmem %s4, 1536
      %v3341 = vld [vmem:[%s3340] sm:$0xff]
      %v3342 = vld [vmem:[%s3340 + $0x8] sm:$0xff]
      %v3343 = vld [vmem:[%s3340 + $0x10] sm:$0xff]
      %v3344 = vld [vmem:[%s3340 + $0x18] sm:$0xff]
      %v3345 = vld [vmem:[%s3340 + $0x20] sm:$0xff]
      %v3346 = vld [vmem:[%s3340 + $0x28] sm:$0xff]
      %v3347 = vld [vmem:[%s3340 + $0x30] sm:$0xff]
      %v3348 = vld [vmem:[%s3340 + $0x38] sm:$0xff]
      %v3349 = vld [vmem:[%s3340 + $0x40] sm:$0xff]
      %v3350 = vld [vmem:[%s3340 + $0x48] sm:$0xff]
      %v3351 = vld [vmem:[%s3340 + $0x50] sm:$0xff]
      %v3352 = vld [vmem:[%s3340 + $0x58] sm:$0xff]
      %v3353 = vld [vmem:[%s3340 + $0x60] sm:$0xff]
      %v3354 = vld [vmem:[%s3340 + $0x68] sm:$0xff]
      %v3355 = vld [vmem:[%s3340 + $0x70] sm:$0xff]
      %v3356 = vld [vmem:[%s3340 + $0x78] sm:$0xff]
      %v3357 = vld [vmem:[%s3340 + $0x80] sm:$0xff]
      %v3358 = vld [vmem:[%s3340 + $0x88] sm:$0xff]
      %v3359 = vld [vmem:[%s3340 + $0x90] sm:$0xff]
      %v3360 = vld [vmem:[%s3340 + $0x98] sm:$0xff]
      %v3361 = vld [vmem:[%s3340 + $0xa0] sm:$0xff]
      %v3362 = vld [vmem:[%s3340 + $0xa8] sm:$0xff]
      %v3363 = vld [vmem:[%s3340 + $0xb0] sm:$0xff]
      %v3364 = vld [vmem:[%s3340 + $0xb8] sm:$0xff]
      %v3365 = vld [vmem:[%s3340 + $0xc0] sm:$0xff]
      %v3366 = vld [vmem:[%s3340 + $0xc8] sm:$0xff]
      %v3367 = vld [vmem:[%s3340 + $0xd0] sm:$0xff]
      %v3368 = vld [vmem:[%s3340 + $0xd8] sm:$0xff]
      %v3369 = vld [vmem:[%s3340 + $0xe0] sm:$0xff]
      %v3370 = vld [vmem:[%s3340 + $0xe8] sm:$0xff]
      %v3371 = vld [vmem:[%s3340 + $0xf0] sm:$0xff]
      %v3372 = vld [vmem:[%s3340 + $0xf8] sm:$0xff]
      %3374 = vset.pattern.permute.xlu0 0
      %3375 = vperm.xlu0 %3374, %v3341
      %v3376 = vpop.permute.xlu0 %3375
      %3379 = vset.pattern.permute.xlu0 0
      %3380 = vperm.xlu0 %3379, %v3342
      %v3381 = vpop.permute.xlu0 %3380
      %3384 = vset.pattern.permute.xlu0 0
      %3385 = vperm.xlu0 %3384, %v3343
      %v3386 = vpop.permute.xlu0 %3385
      %3389 = vset.pattern.permute.xlu0 0
      %3390 = vperm.xlu0 %3389, %v3344
      %v3391 = vpop.permute.xlu0 %3390
      %3394 = vset.pattern.permute.xlu0 0
      %3395 = vperm.xlu0 %3394, %v3345
      %v3396 = vpop.permute.xlu0 %3395
      %3399 = vset.pattern.permute.xlu0 0
      %3400 = vperm.xlu0 %3399, %v3346
      %v3401 = vpop.permute.xlu0 %3400
      %3404 = vset.pattern.permute.xlu0 0
      %3405 = vperm.xlu0 %3404, %v3347
      %v3406 = vpop.permute.xlu0 %3405
      %3409 = vset.pattern.permute.xlu0 0
      %3410 = vperm.xlu0 %3409, %v3348
      %v3411 = vpop.permute.xlu0 %3410
      %3414 = vset.pattern.permute.xlu0 0
      %3415 = vperm.xlu0 %3414, %v3349
      %v3416 = vpop.permute.xlu0 %3415
      %3419 = vset.pattern.permute.xlu0 0
      %3420 = vperm.xlu0 %3419, %v3350
      %v3421 = vpop.permute.xlu0 %3420
      %3424 = vset.pattern.permute.xlu0 0
      %3425 = vperm.xlu0 %3424, %v3351
      %v3426 = vpop.permute.xlu0 %3425
      %3429 = vset.pattern.permute.xlu0 0
      %3430 = vperm.xlu0 %3429, %v3352
      %v3431 = vpop.permute.xlu0 %3430
      %3434 = vset.pattern.permute.xlu0 0
      %3435 = vperm.xlu0 %3434, %v3353
      %v3436 = vpop.permute.xlu0 %3435
      %3439 = vset.pattern.permute.xlu0 0
      %3440 = vperm.xlu0 %3439, %v3354
      %v3441 = vpop.permute.xlu0 %3440
      %3444 = vset.pattern.permute.xlu0 0
      %3445 = vperm.xlu0 %3444, %v3355
      %v3446 = vpop.permute.xlu0 %3445
      %3449 = vset.pattern.permute.xlu0 0
      %3450 = vperm.xlu0 %3449, %v3356
      %v3451 = vpop.permute.xlu0 %3450
      %3454 = vset.pattern.permute.xlu0 0
      %3455 = vperm.xlu0 %3454, %v3357
      %v3456 = vpop.permute.xlu0 %3455
      %3459 = vset.pattern.permute.xlu0 0
      %3460 = vperm.xlu0 %3459, %v3358
      %v3461 = vpop.permute.xlu0 %3460
      %3464 = vset.pattern.permute.xlu0 0
      %3465 = vperm.xlu0 %3464, %v3359
      %v3466 = vpop.permute.xlu0 %3465
      %3469 = vset.pattern.permute.xlu0 0
      %3470 = vperm.xlu0 %3469, %v3360
      %v3471 = vpop.permute.xlu0 %3470
      %3474 = vset.pattern.permute.xlu0 0
      %3475 = vperm.xlu0 %3474, %v3361
      %v3476 = vpop.permute.xlu0 %3475
      %3479 = vset.pattern.permute.xlu0 0
      %3480 = vperm.xlu0 %3479, %v3362
      %v3481 = vpop.permute.xlu0 %3480
      %3484 = vset.pattern.permute.xlu0 0
      %3485 = vperm.xlu0 %3484, %v3363
      %v3486 = vpop.permute.xlu0 %3485
      %3489 = vset.pattern.permute.xlu0 0
      %3490 = vperm.xlu0 %3489, %v3364
      %v3491 = vpop.permute.xlu0 %3490
      %3494 = vset.pattern.permute.xlu0 0
      %3495 = vperm.xlu0 %3494, %v3365
      %v3496 = vpop.permute.xlu0 %3495
      %3499 = vset.pattern.permute.xlu0 0
      %3500 = vperm.xlu0 %3499, %v3366
      %v3501 = vpop.permute.xlu0 %3500
      %3504 = vset.pattern.permute.xlu0 0
      %3505 = vperm.xlu0 %3504, %v3367
      %v3506 = vpop.permute.xlu0 %3505
      %3509 = vset.pattern.permute.xlu0 0
      %3510 = vperm.xlu0 %3509, %v3368
      %v3511 = vpop.permute.xlu0 %3510
      %3514 = vset.pattern.permute.xlu0 0
      %3515 = vperm.xlu0 %3514, %v3369
      %v3516 = vpop.permute.xlu0 %3515
      %3519 = vset.pattern.permute.xlu0 0
      %3520 = vperm.xlu0 %3519, %v3370
      %v3521 = vpop.permute.xlu0 %3520
      %3524 = vset.pattern.permute.xlu0 0
      %3525 = vperm.xlu0 %3524, %v3371
      %v3526 = vpop.permute.xlu0 %3525
      %3529 = vset.pattern.permute.xlu0 0
      %3530 = vperm.xlu0 %3529, %v3372
      %v3531 = vpop.permute.xlu0 %3530
      %v3533 = vmul.f32 %v454, %v3376
      %v3534 = vmul.f32 %v456, %v3381
      %v3535 = vmul.f32 %v458, %v3386
      %v3536 = vmul.f32 %v460, %v3391
      %v3537 = vmul.f32 %v462, %v3396
      %v3538 = vmul.f32 %v464, %v3401
      %v3539 = vmul.f32 %v466, %v3406
      %v3540 = vmul.f32 %v468, %v3411
      %v3541 = vmul.f32 %v470, %v3416
      %v3542 = vmul.f32 %v472, %v3421
      %v3543 = vmul.f32 %v474, %v3426
      %v3544 = vmul.f32 %v476, %v3431
      %v3545 = vmul.f32 %v478, %v3436
      %v3546 = vmul.f32 %v480, %v3441
      %v3547 = vmul.f32 %v482, %v3446
      %v3548 = vmul.f32 %v484, %v3451
      %v3549 = vmul.f32 %v486, %v3456
      %v3550 = vmul.f32 %v488, %v3461
      %v3551 = vmul.f32 %v490, %v3466
      %v3552 = vmul.f32 %v492, %v3471
      %v3553 = vmul.f32 %v494, %v3476
      %v3554 = vmul.f32 %v496, %v3481
      %v3555 = vmul.f32 %v498, %v3486
      %v3556 = vmul.f32 %v500, %v3491
      %v3557 = vmul.f32 %v502, %v3496
      %v3558 = vmul.f32 %v504, %v3501
      %v3559 = vmul.f32 %v506, %v3506
      %v3560 = vmul.f32 %v507, %v3511
      %v3561 = vmul.f32 %v415, %v3516
      %v3562 = vmul.f32 %v417, %v3521
      %v3563 = vmul.f32 %v538, %v3526
      %v3564 = vmul.f32 %v452, %v3531
      %v3565 = vpack.c.bf16 %v3534, %v3533
      %v3566 = vpack.c.bf16 %v3536, %v3535
      %v3567 = vpack.c.bf16 %v3538, %v3537
      %v3568 = vpack.c.bf16 %v3540, %v3539
      %v3569 = vpack.c.bf16 %v3542, %v3541
      %v3570 = vpack.c.bf16 %v3544, %v3543
      %v3571 = vpack.c.bf16 %v3546, %v3545
      %v3572 = vpack.c.bf16 %v3548, %v3547
      %v3573 = vpack.c.bf16 %v3550, %v3549
      %v3574 = vpack.c.bf16 %v3552, %v3551
      %v3575 = vpack.c.bf16 %v3554, %v3553
      %v3576 = vpack.c.bf16 %v3556, %v3555
      %v3577 = vpack.c.bf16 %v3558, %v3557
      %v3578 = vpack.c.bf16 %v3560, %v3559
      %v3579 = vpack.c.bf16 %v3562, %v3561
      %v3580 = vpack.c.bf16 %v3564, %v3563
      %s3581 = scalar_lea.vmem %s3, 384
      %v3582 = vld [vmem:[%s3581] sm:$0xf]
      %v3583 = vld [vmem:[%s3581 + $0x4] sm:$0xf]
      %v3584 = vld [vmem:[%s3581 + $0x8] sm:$0xf]
      %v3585 = vld [vmem:[%s3581 + $0xc] sm:$0xf]
      %v3586 = vld [vmem:[%s3581 + $0x10] sm:$0xf]
      %v3587 = vld [vmem:[%s3581 + $0x14] sm:$0xf]
      %v3588 = vld [vmem:[%s3581 + $0x18] sm:$0xf]
      %v3589 = vld [vmem:[%s3581 + $0x1c] sm:$0xf]
      %v3590 = vld [vmem:[%s3581 + $0x20] sm:$0xf]
      %v3591 = vld [vmem:[%s3581 + $0x24] sm:$0xf]
      %v3592 = vld [vmem:[%s3581 + $0x28] sm:$0xf]
      %v3593 = vld [vmem:[%s3581 + $0x2c] sm:$0xf]
      %v3594 = vld [vmem:[%s3581 + $0x30] sm:$0xf]
      %v3595 = vld [vmem:[%s3581 + $0x34] sm:$0xf]
      %v3596 = vld [vmem:[%s3581 + $0x38] sm:$0xf]
      %v3597 = vld [vmem:[%s3581 + $0x3c] sm:$0xf]
      %v3614 = vunpack.c.l.b16 %v3582
      %v3615 = vunpack.c.l.b16 %v3583
      %v3616 = vunpack.c.l.b16 %v3584
      %v3617 = vunpack.c.l.b16 %v3585
      %v3618 = vunpack.c.l.b16 %v3586
      %v3619 = vunpack.c.l.b16 %v3587
      %v3620 = vunpack.c.l.b16 %v3588
      %v3621 = vunpack.c.l.b16 %v3589
      %v3622 = vunpack.c.l.b16 %v3590
      %v3623 = vunpack.c.l.b16 %v3591
      %v3624 = vunpack.c.l.b16 %v3592
      %v3625 = vunpack.c.l.b16 %v3593
      %v3626 = vunpack.c.l.b16 %v3594
      %v3627 = vunpack.c.l.b16 %v3595
      %v3628 = vunpack.c.l.b16 %v3596
      %v3629 = vunpack.c.l.b16 %v3597
      %v3630 = vpack.c.b16 %v3615, %v3614
      %v3631 = vpack.c.b16 %v3617, %v3616
      %v3632 = vpack.c.b16 %v3619, %v3618
      %v3633 = vpack.c.b16 %v3621, %v3620
      %v3634 = vpack.c.b16 %v3623, %v3622
      %v3635 = vpack.c.b16 %v3625, %v3624
      %v3636 = vpack.c.b16 %v3627, %v3626
      %v3637 = vpack.c.b16 %v3629, %v3628
      %3646 = vmatprep.subr.bf16.mxu0 0
      %3647 = vmatpush1.bf16.msra.mxu0 %v3630
      %3648 = vmatprep.subr.bf16.mxu0 0
      %3649 = vmatpush1.bf16.msra.mxu0 %v3631
      %3650 = vmatprep.subr.bf16.mxu0 0
      %3651 = vmatpush1.bf16.msra.mxu0 %v3632
      %3652 = vmatprep.subr.bf16.mxu0 0
      %3653 = vmatpush1.bf16.msra.mxu0 %v3633
      %3654 = vmatprep.subr.bf16.mxu0 0
      %3655 = vmatpush1.bf16.msra.mxu0 %v3634
      %3656 = vmatprep.subr.bf16.mxu0 0
      %3657 = vmatpush1.bf16.msra.mxu0 %v3635
      %3658 = vmatprep.subr.bf16.mxu0 0
      %3659 = vmatpush1.bf16.msra.mxu0 %v3636
      %3660 = vmatprep.subr.bf16.mxu0 0
      %3661 = vmatpush1.bf16.msra.mxu0 %v3637
      %3662 = vmatprep.subr.bf16.mxu0 0
      %3663 = vmatpush1.bf16.msra.mxu0 0
      %3664 = vmatprep.subr.bf16.mxu0 0
      %3665 = vmatpush1.bf16.msra.mxu0 0
      %3666 = vmatprep.subr.bf16.mxu0 0
      %3667 = vmatpush1.bf16.msra.mxu0 0
      %3668 = vmatprep.subr.bf16.mxu0 0
      %3669 = vmatpush1.bf16.msra.mxu0 0
      %3670 = vmatprep.subr.bf16.mxu0 0
      %3671 = vmatpush1.bf16.msra.mxu0 0
      %3672 = vmatprep.subr.bf16.mxu0 0
      %3673 = vmatpush1.bf16.msra.mxu0 0
      %3674 = vmatprep.subr.bf16.mxu0 0
      %3675 = vmatpush1.bf16.msra.mxu0 0
      %3676 = vmatprep.subr.bf16.mxu0 0
      %3677 = vmatpush1.bf16.msra.mxu0 0
      %3678 = vmatprep.mubr.bf16.mxu0 0
      %3679 = vmatmul.mubr.bf16.gmra.mrb[0].mxu0 %v3565
      %v3680 = vpop.f32.mrb[0].mxu0
      %v3681 = vadd.f32 0.0, %v3680
      %v3682 = vpop.f32.mrb[0].mxu0
      %v3683 = vpop.f32.mrb[0].mxu0
      %v3684 = vadd.f32 0.0, %v3683
      %v3685 = vpop.f32.mrb[0].mxu0
      %3686 = vmatprep.mubr.bf16.mxu0 0
      %3687 = vmatmul.mubr.bf16.gmra.mrb[0].mxu0 %v3566
      %v3688 = vpop.f32.mrb[0].mxu0
      %v3689 = vadd.f32 0.0, %v3688
      %v3690 = vpop.f32.mrb[0].mxu0
      %v3691 = vpop.f32.mrb[0].mxu0
      %v3692 = vadd.f32 0.0, %v3691
      %v3693 = vpop.f32.mrb[0].mxu0
      %3694 = vmatprep.mubr.bf16.mxu0 0
      %3695 = vmatmul.mubr.bf16.gmra.mrb[0].mxu0 %v3567
      %v3696 = vpop.f32.mrb[0].mxu0
      %v3697 = vadd.f32 0.0, %v3696
      %v3698 = vpop.f32.mrb[0].mxu0
      %v3699 = vpop.f32.mrb[0].mxu0
      %v3700 = vadd.f32 0.0, %v3699
      %v3701 = vpop.f32.mrb[0].mxu0
      %3702 = vmatprep.mubr.bf16.mxu0 0
      %3703 = vmatmul.mubr.bf16.gmra.mrb[0].mxu0 %v3568
      %v3704 = vpop.f32.mrb[0].mxu0
      %v3705 = vadd.f32 0.0, %v3704
      %v3706 = vpop.f32.mrb[0].mxu0
      %v3707 = vpop.f32.mrb[0].mxu0
      %v3708 = vadd.f32 0.0, %v3707
      %v3709 = vpop.f32.mrb[0].mxu0
      %3710 = vmatprep.mubr.bf16.mxu0 0
      %3711 = vmatmul.mubr.bf16.gmra.mrb[0].mxu0 %v3569
      %v3712 = vpop.f32.mrb[0].mxu0
      %v3713 = vadd.f32 0.0, %v3712
      %v3714 = vpop.f32.mrb[0].mxu0
      %v3715 = vpop.f32.mrb[0].mxu0
      %v3716 = vadd.f32 0.0, %v3715
      %v3717 = vpop.f32.mrb[0].mxu0
      %3718 = vmatprep.mubr.bf16.mxu0 0
      %3719 = vmatmul.mubr.bf16.gmra.mrb[0].mxu0 %v3570
      %v3720 = vpop.f32.mrb[0].mxu0
      %v3721 = vadd.f32 0.0, %v3720
      %v3722 = vpop.f32.mrb[0].mxu0
      %v3723 = vpop.f32.mrb[0].mxu0
      %v3724 = vadd.f32 0.0, %v3723
      %v3725 = vpop.f32.mrb[0].mxu0
      %3726 = vmatprep.mubr.bf16.mxu0 0
      %3727 = vmatmul.mubr.bf16.gmra.mrb[0].mxu0 %v3571
      %v3728 = vpop.f32.mrb[0].mxu0
      %v3729 = vadd.f32 0.0, %v3728
      %v3730 = vpop.f32.mrb[0].mxu0
      %v3731 = vpop.f32.mrb[0].mxu0
      %v3732 = vadd.f32 0.0, %v3731
      %v3733 = vpop.f32.mrb[0].mxu0
      %3734 = vmatprep.mubr.bf16.mxu0 0
      %3735 = vmatmul.mubr.bf16.gmra.mrb[0].mxu0 %v3572
      %v3736 = vpop.f32.mrb[0].mxu0
      %v3737 = vadd.f32 0.0, %v3736
      %v3738 = vpop.f32.mrb[0].mxu0
      %v3739 = vpop.f32.mrb[0].mxu0
      %v3740 = vadd.f32 0.0, %v3739
      %v3741 = vpop.f32.mrb[0].mxu0
      %3742 = vmatprep.mubr.bf16.mxu0 0
      %3743 = vmatmul.mubr.bf16.gmra.mrb[0].mxu0 %v3573
      %v3744 = vpop.f32.mrb[0].mxu0
      %v3745 = vadd.f32 0.0, %v3744
      %v3746 = vpop.f32.mrb[0].mxu0
      %v3747 = vpop.f32.mrb[0].mxu0
      %v3748 = vadd.f32 0.0, %v3747
      %v3749 = vpop.f32.mrb[0].mxu0
      %3750 = vmatprep.mubr.bf16.mxu0 0
      %3751 = vmatmul.mubr.bf16.gmra.mrb[0].mxu0 %v3574
      %v3752 = vpop.f32.mrb[0].mxu0
      %v3753 = vadd.f32 0.0, %v3752
      %v3754 = vpop.f32.mrb[0].mxu0
      %v3755 = vpop.f32.mrb[0].mxu0
      %v3756 = vadd.f32 0.0, %v3755
      %v3757 = vpop.f32.mrb[0].mxu0
      %3758 = vmatprep.mubr.bf16.mxu0 0
      %3759 = vmatmul.mubr.bf16.gmra.mrb[0].mxu0 %v3575
      %v3760 = vpop.f32.mrb[0].mxu0
      %v3761 = vadd.f32 0.0, %v3760
      %v3762 = vpop.f32.mrb[0].mxu0
      %v3763 = vpop.f32.mrb[0].mxu0
      %v3764 = vadd.f32 0.0, %v3763
      %v3765 = vpop.f32.mrb[0].mxu0
      %3766 = vmatprep.mubr.bf16.mxu0 0
      %3767 = vmatmul.mubr.bf16.gmra.mrb[0].mxu0 %v3576
      %v3768 = vpop.f32.mrb[0].mxu0
      %v3769 = vadd.f32 0.0, %v3768
      %v3770 = vpop.f32.mrb[0].mxu0
      %v3771 = vpop.f32.mrb[0].mxu0
      %v3772 = vadd.f32 0.0, %v3771
      %v3773 = vpop.f32.mrb[0].mxu0
      %3774 = vmatprep.mubr.bf16.mxu0 0
      %3775 = vmatmul.mubr.bf16.gmra.mrb[0].mxu0 %v3577
      %v3776 = vpop.f32.mrb[0].mxu0
      %v3777 = vadd.f32 0.0, %v3776
      %v3778 = vpop.f32.mrb[0].mxu0
      %v3779 = vpop.f32.mrb[0].mxu0
      %v3780 = vadd.f32 0.0, %v3779
      %v3781 = vpop.f32.mrb[0].mxu0
      %3782 = vmatprep.mubr.bf16.mxu0 0
      %3783 = vmatmul.mubr.bf16.gmra.mrb[0].mxu0 %v3578
      %v3784 = vpop.f32.mrb[0].mxu0
      %v3785 = vadd.f32 0.0, %v3784
      %v3786 = vpop.f32.mrb[0].mxu0
      %v3787 = vpop.f32.mrb[0].mxu0
      %v3788 = vadd.f32 0.0, %v3787
      %v3789 = vpop.f32.mrb[0].mxu0
      %3790 = vmatprep.mubr.bf16.mxu0 0
      %3791 = vmatmul.mubr.bf16.gmra.mrb[0].mxu0 %v3579
      %v3792 = vpop.f32.mrb[0].mxu0
      %v3793 = vadd.f32 0.0, %v3792
      %v3794 = vpop.f32.mrb[0].mxu0
      %v3795 = vpop.f32.mrb[0].mxu0
      %v3796 = vadd.f32 0.0, %v3795
      %v3797 = vpop.f32.mrb[0].mxu0
      %3798 = vmatprep.mubr.bf16.mxu0 0
      %3799 = vmatmul.mubr.bf16.gmra.mrb[0].mxu0 %v3580
      %v3800 = vpop.f32.mrb[0].mxu0
      %v3801 = vadd.f32 0.0, %v3800
      %v3802 = vpop.f32.mrb[0].mxu0
      %v3803 = vpop.f32.mrb[0].mxu0
      %v3804 = vadd.f32 0.0, %v3803
      %v3805 = vpop.f32.mrb[0].mxu0
      %3806 = vdwg.mxu0
      %v3807 = vadd.f32 %v3308, %v3681
      %v3808 = vadd.f32 %v3309, %v3684
      %v3809 = vadd.f32 %v3310, %v3689
      %v3810 = vadd.f32 %v3311, %v3692
      %v3811 = vadd.f32 %v3312, %v3697
      %v3812 = vadd.f32 %v3313, %v3700
      %v3813 = vadd.f32 %v3314, %v3705
      %v3814 = vadd.f32 %v3315, %v3708
      %v3815 = vadd.f32 %v3316, %v3713
      %v3816 = vadd.f32 %v3317, %v3716
      %v3817 = vadd.f32 %v3318, %v3721
      %v3818 = vadd.f32 %v3319, %v3724
      %v3819 = vadd.f32 %v3320, %v3729
      %v3820 = vadd.f32 %v3321, %v3732
      %v3821 = vadd.f32 %v3322, %v3737
      %v3822 = vadd.f32 %v3323, %v3740
      %v3823 = vadd.f32 %v3324, %v3745
      %v3824 = vadd.f32 %v3325, %v3748
      %v3825 = vadd.f32 %v3326, %v3753
      %v3826 = vadd.f32 %v3327, %v3756
      %v3827 = vadd.f32 %v3328, %v3761
      %v3828 = vadd.f32 %v3329, %v3764
      %v3829 = vadd.f32 %v3330, %v3769
      %v3830 = vadd.f32 %v3331, %v3772
      %v3831 = vadd.f32 %v3332, %v3777
      %v3832 = vadd.f32 %v3333, %v3780
      %v3833 = vadd.f32 %v3334, %v3785
      %v3834 = vadd.f32 %v3335, %v3788
      %v3835 = vadd.f32 %v3336, %v3793
      %v3836 = vadd.f32 %v3337, %v3796
      %v3837 = vadd.f32 %v3338, %v3801
      %v3838 = vadd.f32 %v3339, %v3804
      %s3839 = scalar_lea.vmem %s4, 1792
      %v3840 = vld [vmem:[%s3839] sm:$0xff]
      %v3841 = vld [vmem:[%s3839 + $0x8] sm:$0xff]
      %v3842 = vld [vmem:[%s3839 + $0x10] sm:$0xff]
      %v3843 = vld [vmem:[%s3839 + $0x18] sm:$0xff]
      %v3844 = vld [vmem:[%s3839 + $0x20] sm:$0xff]
      %v3845 = vld [vmem:[%s3839 + $0x28] sm:$0xff]
      %v3846 = vld [vmem:[%s3839 + $0x30] sm:$0xff]
      %v3847 = vld [vmem:[%s3839 + $0x38] sm:$0xff]
      %v3848 = vld [vmem:[%s3839 + $0x40] sm:$0xff]
      %v3849 = vld [vmem:[%s3839 + $0x48] sm:$0xff]
      %v3850 = vld [vmem:[%s3839 + $0x50] sm:$0xff]
      %v3851 = vld [vmem:[%s3839 + $0x58] sm:$0xff]
      %v3852 = vld [vmem:[%s3839 + $0x60] sm:$0xff]
      %v3853 = vld [vmem:[%s3839 + $0x68] sm:$0xff]
      %v3854 = vld [vmem:[%s3839 + $0x70] sm:$0xff]
      %v3855 = vld [vmem:[%s3839 + $0x78] sm:$0xff]
      %v3856 = vld [vmem:[%s3839 + $0x80] sm:$0xff]
      %v3857 = vld [vmem:[%s3839 + $0x88] sm:$0xff]
      %v3858 = vld [vmem:[%s3839 + $0x90] sm:$0xff]
      %v3859 = vld [vmem:[%s3839 + $0x98] sm:$0xff]
      %v3860 = vld [vmem:[%s3839 + $0xa0] sm:$0xff]
      %v3861 = vld [vmem:[%s3839 + $0xa8] sm:$0xff]
      %v3862 = vld [vmem:[%s3839 + $0xb0] sm:$0xff]
      %v3863 = vld [vmem:[%s3839 + $0xb8] sm:$0xff]
      %v3864 = vld [vmem:[%s3839 + $0xc0] sm:$0xff]
      %v3865 = vld [vmem:[%s3839 + $0xc8] sm:$0xff]
      %v3866 = vld [vmem:[%s3839 + $0xd0] sm:$0xff]
      %v3867 = vld [vmem:[%s3839 + $0xd8] sm:$0xff]
      %v3868 = vld [vmem:[%s3839 + $0xe0] sm:$0xff]
      %v3869 = vld [vmem:[%s3839 + $0xe8] sm:$0xff]
      %v3870 = vld [vmem:[%s3839 + $0xf0] sm:$0xff]
      %v3871 = vld [vmem:[%s3839 + $0xf8] sm:$0xff]
      %3873 = vset.pattern.permute.xlu0 0
      %3874 = vperm.xlu0 %3873, %v3840
      %v3875 = vpop.permute.xlu0 %3874
      %3878 = vset.pattern.permute.xlu0 0
      %3879 = vperm.xlu0 %3878, %v3841
      %v3880 = vpop.permute.xlu0 %3879
      %3883 = vset.pattern.permute.xlu0 0
      %3884 = vperm.xlu0 %3883, %v3842
      %v3885 = vpop.permute.xlu0 %3884
      %3888 = vset.pattern.permute.xlu0 0
      %3889 = vperm.xlu0 %3888, %v3843
      %v3890 = vpop.permute.xlu0 %3889
      %3893 = vset.pattern.permute.xlu0 0
      %3894 = vperm.xlu0 %3893, %v3844
      %v3895 = vpop.permute.xlu0 %3894
      %3898 = vset.pattern.permute.xlu0 0
      %3899 = vperm.xlu0 %3898, %v3845
      %v3900 = vpop.permute.xlu0 %3899
      %3903 = vset.pattern.permute.xlu0 0
      %3904 = vperm.xlu0 %3903, %v3846
      %v3905 = vpop.permute.xlu0 %3904
      %3908 = vset.pattern.permute.xlu0 0
      %3909 = vperm.xlu0 %3908, %v3847
      %v3910 = vpop.permute.xlu0 %3909
      %3913 = vset.pattern.permute.xlu0 0
      %3914 = vperm.xlu0 %3913, %v3848
      %v3915 = vpop.permute.xlu0 %3914
      %3918 = vset.pattern.permute.xlu0 0
      %3919 = vperm.xlu0 %3918, %v3849
      %v3920 = vpop.permute.xlu0 %3919
      %3923 = vset.pattern.permute.xlu0 0
      %3924 = vperm.xlu0 %3923, %v3850
      %v3925 = vpop.permute.xlu0 %3924
      %3928 = vset.pattern.permute.xlu0 0
      %3929 = vperm.xlu0 %3928, %v3851
      %v3930 = vpop.permute.xlu0 %3929
      %3933 = vset.pattern.permute.xlu0 0
      %3934 = vperm.xlu0 %3933, %v3852
      %v3935 = vpop.permute.xlu0 %3934
      %3938 = vset.pattern.permute.xlu0 0
      %3939 = vperm.xlu0 %3938, %v3853
      %v3940 = vpop.permute.xlu0 %3939
      %3943 = vset.pattern.permute.xlu0 0
      %3944 = vperm.xlu0 %3943, %v3854
      %v3945 = vpop.permute.xlu0 %3944
      %3948 = vset.pattern.permute.xlu0 0
      %3949 = vperm.xlu0 %3948, %v3855
      %v3950 = vpop.permute.xlu0 %3949
      %3953 = vset.pattern.permute.xlu0 0
      %3954 = vperm.xlu0 %3953, %v3856
      %v3955 = vpop.permute.xlu0 %3954
      %3958 = vset.pattern.permute.xlu0 0
      %3959 = vperm.xlu0 %3958, %v3857
      %v3960 = vpop.permute.xlu0 %3959
      %3963 = vset.pattern.permute.xlu0 0
      %3964 = vperm.xlu0 %3963, %v3858
      %v3965 = vpop.permute.xlu0 %3964
      %3968 = vset.pattern.permute.xlu0 0
      %3969 = vperm.xlu0 %3968, %v3859
      %v3970 = vpop.permute.xlu0 %3969
      %3973 = vset.pattern.permute.xlu0 0
      %3974 = vperm.xlu0 %3973, %v3860
      %v3975 = vpop.permute.xlu0 %3974
      %3978 = vset.pattern.permute.xlu0 0
      %3979 = vperm.xlu0 %3978, %v3861
      %v3980 = vpop.permute.xlu0 %3979
      %3983 = vset.pattern.permute.xlu0 0
      %3984 = vperm.xlu0 %3983, %v3862
      %v3985 = vpop.permute.xlu0 %3984
      %3988 = vset.pattern.permute.xlu0 0
      %3989 = vperm.xlu0 %3988, %v3863
      %v3990 = vpop.permute.xlu0 %3989
      %3993 = vset.pattern.permute.xlu0 0
      %3994 = vperm.xlu0 %3993, %v3864
      %v3995 = vpop.permute.xlu0 %3994
      %3998 = vset.pattern.permute.xlu0 0
      %3999 = vperm.xlu0 %3998, %v3865
      %v4000 = vpop.permute.xlu0 %3999
      %4003 = vset.pattern.permute.xlu0 0
      %4004 = vperm.xlu0 %4003, %v3866
      %v4005 = vpop.permute.xlu0 %4004
      %4008 = vset.pattern.permute.xlu0 0
      %4009 = vperm.xlu0 %4008, %v3867
      %v4010 = vpop.permute.xlu0 %4009
      %4013 = vset.pattern.permute.xlu0 0
      %4014 = vperm.xlu0 %4013, %v3868
      %v4015 = vpop.permute.xlu0 %4014
      %4018 = vset.pattern.permute.xlu0 0
      %4019 = vperm.xlu0 %4018, %v3869
      %v4020 = vpop.permute.xlu0 %4019
      %4023 = vset.pattern.permute.xlu0 0
      %4024 = vperm.xlu0 %4023, %v3870
      %v4025 = vpop.permute.xlu0 %4024
      %4028 = vset.pattern.permute.xlu0 0
      %4029 = vperm.xlu0 %4028, %v3871
      %v4030 = vpop.permute.xlu0 %4029
      %v4032 = vmul.f32 %v379, %v3875
      %v4033 = vmul.f32 %v380, %v3880
      %v4034 = vmul.f32 %v381, %v3885
      %v4035 = vmul.f32 %v382, %v3890
      %v4036 = vmul.f32 %v383, %v3895
      %v4037 = vmul.f32 %v384, %v3900
      %v4038 = vmul.f32 %v385, %v3905
      %v4039 = vmul.f32 %v386, %v3910
      %v4040 = vmul.f32 %v387, %v3915
      %v4041 = vmul.f32 %v388, %v3920
      %v4042 = vmul.f32 %v389, %v3925
      %v4043 = vmul.f32 %v390, %v3930
      %v4044 = vmul.f32 %v391, %v3935
      %v4045 = vmul.f32 %v392, %v3940
      %v4046 = vmul.f32 %v393, %v3945
      %v4047 = vmul.f32 %v394, %v3950
      %v4048 = vmul.f32 %v395, %v3955
      %v4049 = vmul.f32 %v396, %v3960
      %v4050 = vmul.f32 %v397, %v3965
      %v4051 = vmul.f32 %v398, %v3970
      %v4052 = vmul.f32 %v399, %v3975
      %v4053 = vmul.f32 %v400, %v3980
      %v4054 = vmul.f32 %v401, %v3985
      %v4055 = vmul.f32 %v402, %v3990
      %v4056 = vmul.f32 %v403, %v3995
      %v4057 = vmul.f32 %v404, %v4000
      %v4058 = vmul.f32 %v405, %v4005
      %v4059 = vmul.f32 %v406, %v4010
      %v4060 = vmul.f32 %v407, %v4015
      %v4061 = vmul.f32 %v408, %v4020
      %v4062 = vmul.f32 %v377, %v4025
      %v4063 = vmul.f32 %v378, %v4030
      %v4064 = vpack.c.bf16 %v4033, %v4032
      %v4065 = vpack.c.bf16 %v4035, %v4034
      %v4066 = vpack.c.bf16 %v4037, %v4036
      %v4067 = vpack.c.bf16 %v4039, %v4038
      %v4068 = vpack.c.bf16 %v4041, %v4040
      %v4069 = vpack.c.bf16 %v4043, %v4042
      %v4070 = vpack.c.bf16 %v4045, %v4044
      %v4071 = vpack.c.bf16 %v4047, %v4046
      %v4072 = vpack.c.bf16 %v4049, %v4048
      %v4073 = vpack.c.bf16 %v4051, %v4050
      %v4074 = vpack.c.bf16 %v4053, %v4052
      %v4075 = vpack.c.bf16 %v4055, %v4054
      %v4076 = vpack.c.bf16 %v4057, %v4056
      %v4077 = vpack.c.bf16 %v4059, %v4058
      %v4078 = vpack.c.bf16 %v4061, %v4060
      %v4079 = vpack.c.bf16 %v4063, %v4062
      %s4080 = scalar_lea.vmem %s3, 448
      %v4081 = vld [vmem:[%s4080] sm:$0xf]
      %v4082 = vld [vmem:[%s4080 + $0x4] sm:$0xf]
      %v4083 = vld [vmem:[%s4080 + $0x8] sm:$0xf]
      %v4084 = vld [vmem:[%s4080 + $0xc] sm:$0xf]
      %v4085 = vld [vmem:[%s4080 + $0x10] sm:$0xf]
      %v4086 = vld [vmem:[%s4080 + $0x14] sm:$0xf]
      %v4087 = vld [vmem:[%s4080 + $0x18] sm:$0xf]
      %v4088 = vld [vmem:[%s4080 + $0x1c] sm:$0xf]
      %v4089 = vld [vmem:[%s4080 + $0x20] sm:$0xf]
      %v4090 = vld [vmem:[%s4080 + $0x24] sm:$0xf]
      %v4091 = vld [vmem:[%s4080 + $0x28] sm:$0xf]
      %v4092 = vld [vmem:[%s4080 + $0x2c] sm:$0xf]
      %v4093 = vld [vmem:[%s4080 + $0x30] sm:$0xf]
      %v4094 = vld [vmem:[%s4080 + $0x34] sm:$0xf]
      %v4095 = vld [vmem:[%s4080 + $0x38] sm:$0xf]
      %v4096 = vld [vmem:[%s4080 + $0x3c] sm:$0xf]
      %v4113 = vunpack.c.l.b16 %v4081
      %v4114 = vunpack.c.l.b16 %v4082
      %v4115 = vunpack.c.l.b16 %v4083
      %v4116 = vunpack.c.l.b16 %v4084
      %v4117 = vunpack.c.l.b16 %v4085
      %v4118 = vunpack.c.l.b16 %v4086
      %v4119 = vunpack.c.l.b16 %v4087
      %v4120 = vunpack.c.l.b16 %v4088
      %v4121 = vunpack.c.l.b16 %v4089
      %v4122 = vunpack.c.l.b16 %v4090
      %v4123 = vunpack.c.l.b16 %v4091
      %v4124 = vunpack.c.l.b16 %v4092
      %v4125 = vunpack.c.l.b16 %v4093
      %v4126 = vunpack.c.l.b16 %v4094
      %v4127 = vunpack.c.l.b16 %v4095
      %v4128 = vunpack.c.l.b16 %v4096
      %v4129 = vpack.c.b16 %v4114, %v4113
      %v4130 = vpack.c.b16 %v4116, %v4115
      %v4131 = vpack.c.b16 %v4118, %v4117
      %v4132 = vpack.c.b16 %v4120, %v4119
      %v4133 = vpack.c.b16 %v4122, %v4121
      %v4134 = vpack.c.b16 %v4124, %v4123
      %v4135 = vpack.c.b16 %v4126, %v4125
      %v4136 = vpack.c.b16 %v4128, %v4127
      %4145 = vmatprep.subr.bf16.mxu0 0
      %4146 = vmatpush1.bf16.msra.mxu0 %v4129
      %4147 = vmatprep.subr.bf16.mxu0 0
      %4148 = vmatpush1.bf16.msra.mxu0 %v4130
      %4149 = vmatprep.subr.bf16.mxu0 0
      %4150 = vmatpush1.bf16.msra.mxu0 %v4131
      %4151 = vmatprep.subr.bf16.mxu0 0
      %4152 = vmatpush1.bf16.msra.mxu0 %v4132
      %4153 = vmatprep.subr.bf16.mxu0 0
      %4154 = vmatpush1.bf16.msra.mxu0 %v4133
      %4155 = vmatprep.subr.bf16.mxu0 0
      %4156 = vmatpush1.bf16.msra.mxu0 %v4134
      %4157 = vmatprep.subr.bf16.mxu0 0
      %4158 = vmatpush1.bf16.msra.mxu0 %v4135
      %4159 = vmatprep.subr.bf16.mxu0 0
      %4160 = vmatpush1.bf16.msra.mxu0 %v4136
      %4161 = vmatprep.subr.bf16.mxu0 0
      %4162 = vmatpush1.bf16.msra.mxu0 0
      %4163 = vmatprep.subr.bf16.mxu0 0
      %4164 = vmatpush1.bf16.msra.mxu0 0
      %4165 = vmatprep.subr.bf16.mxu0 0
      %4166 = vmatpush1.bf16.msra.mxu0 0
      %4167 = vmatprep.subr.bf16.mxu0 0
      %4168 = vmatpush1.bf16.msra.mxu0 0
      %4169 = vmatprep.subr.bf16.mxu0 0
      %4170 = vmatpush1.bf16.msra.mxu0 0
      %4171 = vmatprep.subr.bf16.mxu0 0
      %4172 = vmatpush1.bf16.msra.mxu0 0
      %4173 = vmatprep.subr.bf16.mxu0 0
      %4174 = vmatpush1.bf16.msra.mxu0 0
      %4175 = vmatprep.subr.bf16.mxu0 0
      %4176 = vmatpush1.bf16.msra.mxu0 0
      %4177 = vmatprep.mubr.bf16.mxu0 0
      %4178 = vmatmul.mubr.bf16.gmra.mrb[0].mxu0 %v4064
      %v4179 = vpop.f32.mrb[0].mxu0
      %v4180 = vadd.f32 0.0, %v4179
      %v4181 = vpop.f32.mrb[0].mxu0
      %v4182 = vpop.f32.mrb[0].mxu0
      %v4183 = vadd.f32 0.0, %v4182
      %v4184 = vpop.f32.mrb[0].mxu0
      %4185 = vmatprep.mubr.bf16.mxu0 0
      %4186 = vmatmul.mubr.bf16.gmra.mrb[0].mxu0 %v4065
      %v4187 = vpop.f32.mrb[0].mxu0
      %v4188 = vadd.f32 0.0, %v4187
      %v4189 = vpop.f32.mrb[0].mxu0
      %v4190 = vpop.f32.mrb[0].mxu0
      %v4191 = vadd.f32 0.0, %v4190
      %v4192 = vpop.f32.mrb[0].mxu0
      %4193 = vmatprep.mubr.bf16.mxu0 0
      %4194 = vmatmul.mubr.bf16.gmra.mrb[0].mxu0 %v4066
      %v4195 = vpop.f32.mrb[0].mxu0
      %v4196 = vadd.f32 0.0, %v4195
      %v4197 = vpop.f32.mrb[0].mxu0
      %v4198 = vpop.f32.mrb[0].mxu0
      %v4199 = vadd.f32 0.0, %v4198
      %v4200 = vpop.f32.mrb[0].mxu0
      %4201 = vmatprep.mubr.bf16.mxu0 0
      %4202 = vmatmul.mubr.bf16.gmra.mrb[0].mxu0 %v4067
      %v4203 = vpop.f32.mrb[0].mxu0
      %v4204 = vadd.f32 0.0, %v4203
      %v4205 = vpop.f32.mrb[0].mxu0
      %v4206 = vpop.f32.mrb[0].mxu0
      %v4207 = vadd.f32 0.0, %v4206
      %v4208 = vpop.f32.mrb[0].mxu0
      %4209 = vmatprep.mubr.bf16.mxu0 0
      %4210 = vmatmul.mubr.bf16.gmra.mrb[0].mxu0 %v4068
      %v4211 = vpop.f32.mrb[0].mxu0
      %v4212 = vadd.f32 0.0, %v4211
      %v4213 = vpop.f32.mrb[0].mxu0
      %v4214 = vpop.f32.mrb[0].mxu0
      %v4215 = vadd.f32 0.0, %v4214
      %v4216 = vpop.f32.mrb[0].mxu0
      %4217 = vmatprep.mubr.bf16.mxu0 0
      %4218 = vmatmul.mubr.bf16.gmra.mrb[0].mxu0 %v4069
      %v4219 = vpop.f32.mrb[0].mxu0
      %v4220 = vadd.f32 0.0, %v4219
      %v4221 = vpop.f32.mrb[0].mxu0
      %v4222 = vpop.f32.mrb[0].mxu0
      %v4223 = vadd.f32 0.0, %v4222
      %v4224 = vpop.f32.mrb[0].mxu0
      %4225 = vmatprep.mubr.bf16.mxu0 0
      %4226 = vmatmul.mubr.bf16.gmra.mrb[0].mxu0 %v4070
      %v4227 = vpop.f32.mrb[0].mxu0
      %v4228 = vadd.f32 0.0, %v4227
      %v4229 = vpop.f32.mrb[0].mxu0
      %v4230 = vpop.f32.mrb[0].mxu0
      %v4231 = vadd.f32 0.0, %v4230
      %v4232 = vpop.f32.mrb[0].mxu0
      %4233 = vmatprep.mubr.bf16.mxu0 0
      %4234 = vmatmul.mubr.bf16.gmra.mrb[0].mxu0 %v4071
      %v4235 = vpop.f32.mrb[0].mxu0
      %v4236 = vadd.f32 0.0, %v4235
      %v4237 = vpop.f32.mrb[0].mxu0
      %v4238 = vpop.f32.mrb[0].mxu0
      %v4239 = vadd.f32 0.0, %v4238
      %v4240 = vpop.f32.mrb[0].mxu0
      %4241 = vmatprep.mubr.bf16.mxu0 0
      %4242 = vmatmul.mubr.bf16.gmra.mrb[0].mxu0 %v4072
      %v4243 = vpop.f32.mrb[0].mxu0
      %v4244 = vadd.f32 0.0, %v4243
      %v4245 = vpop.f32.mrb[0].mxu0
      %v4246 = vpop.f32.mrb[0].mxu0
      %v4247 = vadd.f32 0.0, %v4246
      %v4248 = vpop.f32.mrb[0].mxu0
      %4249 = vmatprep.mubr.bf16.mxu0 0
      %4250 = vmatmul.mubr.bf16.gmra.mrb[0].mxu0 %v4073
      %v4251 = vpop.f32.mrb[0].mxu0
      %v4252 = vadd.f32 0.0, %v4251
      %v4253 = vpop.f32.mrb[0].mxu0
      %v4254 = vpop.f32.mrb[0].mxu0
      %v4255 = vadd.f32 0.0, %v4254
      %v4256 = vpop.f32.mrb[0].mxu0
      %4257 = vmatprep.mubr.bf16.mxu0 0
      %4258 = vmatmul.mubr.bf16.gmra.mrb[0].mxu0 %v4074
      %v4259 = vpop.f32.mrb[0].mxu0
      %v4260 = vadd.f32 0.0, %v4259
      %v4261 = vpop.f32.mrb[0].mxu0
      %v4262 = vpop.f32.mrb[0].mxu0
      %v4263 = vadd.f32 0.0, %v4262
      %v4264 = vpop.f32.mrb[0].mxu0
      %4265 = vmatprep.mubr.bf16.mxu0 0
      %4266 = vmatmul.mubr.bf16.gmra.mrb[0].mxu0 %v4075
      %v4267 = vpop.f32.mrb[0].mxu0
      %v4268 = vadd.f32 0.0, %v4267
      %v4269 = vpop.f32.mrb[0].mxu0
      %v4270 = vpop.f32.mrb[0].mxu0
      %v4271 = vadd.f32 0.0, %v4270
      %v4272 = vpop.f32.mrb[0].mxu0
      %4273 = vmatprep.mubr.bf16.mxu0 0
      %4274 = vmatmul.mubr.bf16.gmra.mrb[0].mxu0 %v4076
      %v4275 = vpop.f32.mrb[0].mxu0
      %v4276 = vadd.f32 0.0, %v4275
      %v4277 = vpop.f32.mrb[0].mxu0
      %v4278 = vpop.f32.mrb[0].mxu0
      %v4279 = vadd.f32 0.0, %v4278
      %v4280 = vpop.f32.mrb[0].mxu0
      %4281 = vmatprep.mubr.bf16.mxu0 0
      %4282 = vmatmul.mubr.bf16.gmra.mrb[0].mxu0 %v4077
      %v4283 = vpop.f32.mrb[0].mxu0
      %v4284 = vadd.f32 0.0, %v4283
      %v4285 = vpop.f32.mrb[0].mxu0
      %v4286 = vpop.f32.mrb[0].mxu0
      %v4287 = vadd.f32 0.0, %v4286
      %v4288 = vpop.f32.mrb[0].mxu0
      %4289 = vmatprep.mubr.bf16.mxu0 0
      %4290 = vmatmul.mubr.bf16.gmra.mrb[0].mxu0 %v4078
      %v4291 = vpop.f32.mrb[0].mxu0
      %v4292 = vadd.f32 0.0, %v4291
      %v4293 = vpop.f32.mrb[0].mxu0
      %v4294 = vpop.f32.mrb[0].mxu0
      %v4295 = vadd.f32 0.0, %v4294
      %v4296 = vpop.f32.mrb[0].mxu0
      %4297 = vmatprep.mubr.bf16.mxu0 0
      %4298 = vmatmul.mubr.bf16.gmra.mrb[0].mxu0 %v4079
      %v4299 = vpop.f32.mrb[0].mxu0
      %v4300 = vadd.f32 0.0, %v4299
      %v4301 = vpop.f32.mrb[0].mxu0
      %v4302 = vpop.f32.mrb[0].mxu0
      %v4303 = vadd.f32 0.0, %v4302
      %v4304 = vpop.f32.mrb[0].mxu0
      %4305 = vdwg.mxu0
      %v4306 = vadd.f32 %v3807, %v4180
      %v4307 = vadd.f32 %v3808, %v4183
      %v4308 = vadd.f32 %v3809, %v4188
      %v4309 = vadd.f32 %v3810, %v4191
      %v4310 = vadd.f32 %v3811, %v4196
      %v4311 = vadd.f32 %v3812, %v4199
      %v4312 = vadd.f32 %v3813, %v4204
      %v4313 = vadd.f32 %v3814, %v4207
      %v4314 = vadd.f32 %v3815, %v4212
      %v4315 = vadd.f32 %v3816, %v4215
      %v4316 = vadd.f32 %v3817, %v4220
      %v4317 = vadd.f32 %v3818, %v4223
      %v4318 = vadd.f32 %v3819, %v4228
      %v4319 = vadd.f32 %v3820, %v4231
      %v4320 = vadd.f32 %v3821, %v4236
      %v4321 = vadd.f32 %v3822, %v4239
      %v4322 = vadd.f32 %v3823, %v4244
      %v4323 = vadd.f32 %v3824, %v4247
      %v4324 = vadd.f32 %v3825, %v4252
      %v4325 = vadd.f32 %v3826, %v4255
      %v4326 = vadd.f32 %v3827, %v4260
      %v4327 = vadd.f32 %v3828, %v4263
      %v4328 = vadd.f32 %v3829, %v4268
      %v4329 = vadd.f32 %v3830, %v4271
      %v4330 = vadd.f32 %v3831, %v4276
      %v4331 = vadd.f32 %v3832, %v4279
      %v4332 = vadd.f32 %v3833, %v4284
      %v4333 = vadd.f32 %v3834, %v4287
      %v4334 = vadd.f32 %v3835, %v4292
      %v4335 = vadd.f32 %v3836, %v4295
      %v4336 = vadd.f32 %v3837, %v4300
      %v4337 = vadd.f32 %v3838, %v4303
      %s4338 = scalar_lea.vmem %s4, 2048
      %v4339 = vld [vmem:[%s4338] sm:$0xff]
      %v4340 = vld [vmem:[%s4338 + $0x8] sm:$0xff]
      %v4341 = vld [vmem:[%s4338 + $0x10] sm:$0xff]
      %v4342 = vld [vmem:[%s4338 + $0x18] sm:$0xff]
      %v4343 = vld [vmem:[%s4338 + $0x20] sm:$0xff]
      %v4344 = vld [vmem:[%s4338 + $0x28] sm:$0xff]
      %v4345 = vld [vmem:[%s4338 + $0x30] sm:$0xff]
      %v4346 = vld [vmem:[%s4338 + $0x38] sm:$0xff]
      %v4347 = vld [vmem:[%s4338 + $0x40] sm:$0xff]
      %v4348 = vld [vmem:[%s4338 + $0x48] sm:$0xff]
      %v4349 = vld [vmem:[%s4338 + $0x50] sm:$0xff]
      %v4350 = vld [vmem:[%s4338 + $0x58] sm:$0xff]
      %v4351 = vld [vmem:[%s4338 + $0x60] sm:$0xff]
      %v4352 = vld [vmem:[%s4338 + $0x68] sm:$0xff]
      %v4353 = vld [vmem:[%s4338 + $0x70] sm:$0xff]
      %v4354 = vld [vmem:[%s4338 + $0x78] sm:$0xff]
      %v4355 = vld [vmem:[%s4338 + $0x80] sm:$0xff]
      %v4356 = vld [vmem:[%s4338 + $0x88] sm:$0xff]
      %v4357 = vld [vmem:[%s4338 + $0x90] sm:$0xff]
      %v4358 = vld [vmem:[%s4338 + $0x98] sm:$0xff]
      %v4359 = vld [vmem:[%s4338 + $0xa0] sm:$0xff]
      %v4360 = vld [vmem:[%s4338 + $0xa8] sm:$0xff]
      %v4361 = vld [vmem:[%s4338 + $0xb0] sm:$0xff]
      %v4362 = vld [vmem:[%s4338 + $0xb8] sm:$0xff]
      %v4363 = vld [vmem:[%s4338 + $0xc0] sm:$0xff]
      %v4364 = vld [vmem:[%s4338 + $0xc8] sm:$0xff]
      %v4365 = vld [vmem:[%s4338 + $0xd0] sm:$0xff]
      %v4366 = vld [vmem:[%s4338 + $0xd8] sm:$0xff]
      %v4367 = vld [vmem:[%s4338 + $0xe0] sm:$0xff]
      %v4368 = vld [vmem:[%s4338 + $0xe8] sm:$0xff]
      %v4369 = vld [vmem:[%s4338 + $0xf0] sm:$0xff]
      %v4370 = vld [vmem:[%s4338 + $0xf8] sm:$0xff]
      %4372 = vset.pattern.permute.xlu0 0
      %4373 = vperm.xlu0 %4372, %v4339
      %v4374 = vpop.permute.xlu0 %4373
      %4377 = vset.pattern.permute.xlu0 0
      %4378 = vperm.xlu0 %4377, %v4340
      %v4379 = vpop.permute.xlu0 %4378
      %4382 = vset.pattern.permute.xlu0 0
      %4383 = vperm.xlu0 %4382, %v4341
      %v4384 = vpop.permute.xlu0 %4383
      %4387 = vset.pattern.permute.xlu0 0
      %4388 = vperm.xlu0 %4387, %v4342
      %v4389 = vpop.permute.xlu0 %4388
      %4392 = vset.pattern.permute.xlu0 0
      %4393 = vperm.xlu0 %4392, %v4343
      %v4394 = vpop.permute.xlu0 %4393
      %4397 = vset.pattern.permute.xlu0 0
      %4398 = vperm.xlu0 %4397, %v4344
      %v4399 = vpop.permute.xlu0 %4398
      %4402 = vset.pattern.permute.xlu0 0
      %4403 = vperm.xlu0 %4402, %v4345
      %v4404 = vpop.permute.xlu0 %4403
      %4407 = vset.pattern.permute.xlu0 0
      %4408 = vperm.xlu0 %4407, %v4346
      %v4409 = vpop.permute.xlu0 %4408
      %4412 = vset.pattern.permute.xlu0 0
      %4413 = vperm.xlu0 %4412, %v4347
      %v4414 = vpop.permute.xlu0 %4413
      %4417 = vset.pattern.permute.xlu0 0
      %4418 = vperm.xlu0 %4417, %v4348
      %v4419 = vpop.permute.xlu0 %4418
      %4422 = vset.pattern.permute.xlu0 0
      %4423 = vperm.xlu0 %4422, %v4349
      %v4424 = vpop.permute.xlu0 %4423
      %4427 = vset.pattern.permute.xlu0 0
      %4428 = vperm.xlu0 %4427, %v4350
      %v4429 = vpop.permute.xlu0 %4428
      %4432 = vset.pattern.permute.xlu0 0
      %4433 = vperm.xlu0 %4432, %v4351
      %v4434 = vpop.permute.xlu0 %4433
      %4437 = vset.pattern.permute.xlu0 0
      %4438 = vperm.xlu0 %4437, %v4352
      %v4439 = vpop.permute.xlu0 %4438
      %4442 = vset.pattern.permute.xlu0 0
      %4443 = vperm.xlu0 %4442, %v4353
      %v4444 = vpop.permute.xlu0 %4443
      %4447 = vset.pattern.permute.xlu0 0
      %4448 = vperm.xlu0 %4447, %v4354
      %v4449 = vpop.permute.xlu0 %4448
      %4452 = vset.pattern.permute.xlu0 0
      %4453 = vperm.xlu0 %4452, %v4355
      %v4454 = vpop.permute.xlu0 %4453
      %4457 = vset.pattern.permute.xlu0 0
      %4458 = vperm.xlu0 %4457, %v4356
      %v4459 = vpop.permute.xlu0 %4458
      %4462 = vset.pattern.permute.xlu0 0
      %4463 = vperm.xlu0 %4462, %v4357
      %v4464 = vpop.permute.xlu0 %4463
      %4467 = vset.pattern.permute.xlu0 0
      %4468 = vperm.xlu0 %4467, %v4358
      %v4469 = vpop.permute.xlu0 %4468
      %4472 = vset.pattern.permute.xlu0 0
      %4473 = vperm.xlu0 %4472, %v4359
      %v4474 = vpop.permute.xlu0 %4473
      %4477 = vset.pattern.permute.xlu0 0
      %4478 = vperm.xlu0 %4477, %v4360
      %v4479 = vpop.permute.xlu0 %4478
      %4482 = vset.pattern.permute.xlu0 0
      %4483 = vperm.xlu0 %4482, %v4361
      %v4484 = vpop.permute.xlu0 %4483
      %4487 = vset.pattern.permute.xlu0 0
      %4488 = vperm.xlu0 %4487, %v4362
      %v4489 = vpop.permute.xlu0 %4488
      %4492 = vset.pattern.permute.xlu0 0
      %4493 = vperm.xlu0 %4492, %v4363
      %v4494 = vpop.permute.xlu0 %4493
      %4497 = vset.pattern.permute.xlu0 0
      %4498 = vperm.xlu0 %4497, %v4364
      %v4499 = vpop.permute.xlu0 %4498
      %4502 = vset.pattern.permute.xlu0 0
      %4503 = vperm.xlu0 %4502, %v4365
      %v4504 = vpop.permute.xlu0 %4503
      %4507 = vset.pattern.permute.xlu0 0
      %4508 = vperm.xlu0 %4507, %v4366
      %v4509 = vpop.permute.xlu0 %4508
      %4512 = vset.pattern.permute.xlu0 0
      %4513 = vperm.xlu0 %4512, %v4367
      %v4514 = vpop.permute.xlu0 %4513
      %4517 = vset.pattern.permute.xlu0 0
      %4518 = vperm.xlu0 %4517, %v4368
      %v4519 = vpop.permute.xlu0 %4518
      %4522 = vset.pattern.permute.xlu0 0
      %4523 = vperm.xlu0 %4522, %v4369
      %v4524 = vpop.permute.xlu0 %4523
      %4527 = vset.pattern.permute.xlu0 0
      %4528 = vperm.xlu0 %4527, %v4370
      %v4529 = vpop.permute.xlu0 %4528
      %v4531 = vmul.f32 %v1483, %v4374
      %v4532 = vmul.f32 %v1485, %v4379
      %v4533 = vmul.f32 %v1487, %v4384
      %v4534 = vmul.f32 %v1489, %v4389
      %v4535 = vmul.f32 %v1491, %v4394
      %v4536 = vmul.f32 %v1493, %v4399
      %v4537 = vmul.f32 %v1495, %v4404
      %v4538 = vmul.f32 %v1497, %v4409
      %v4539 = vmul.f32 %v1499, %v4414
      %v4540 = vmul.f32 %v1501, %v4419
      %v4541 = vmul.f32 %v1503, %v4424
      %v4542 = vmul.f32 %v1505, %v4429
      %v4543 = vmul.f32 %v1507, %v4434
      %v4544 = vmul.f32 %v1509, %v4439
      %v4545 = vmul.f32 %v1511, %v4444
      %v4546 = vmul.f32 %v1513, %v4449
      %v4547 = vmul.f32 %v1515, %v4454
      %v4548 = vmul.f32 %v1517, %v4459
      %v4549 = vmul.f32 %v1519, %v4464
      %v4550 = vmul.f32 %v1521, %v4469
      %v4551 = vmul.f32 %v1523, %v4474
      %v4552 = vmul.f32 %v1525, %v4479
      %v4553 = vmul.f32 %v1527, %v4484
      %v4554 = vmul.f32 %v1529, %v4489
      %v4555 = vmul.f32 %v1531, %v4494
      %v4556 = vmul.f32 %v1533, %v4499
      %v4557 = vmul.f32 %v1535, %v4504
      %v4558 = vmul.f32 %v1536, %v4509
      %v4559 = vmul.f32 %v1474, %v4514
      %v4560 = vmul.f32 %v1568, %v4519
      %v4561 = vmul.f32 %v1479, %v4524
      %v4562 = vmul.f32 %v1481, %v4529
      %v4563 = vpack.c.bf16 %v4532, %v4531
      %v4564 = vpack.c.bf16 %v4534, %v4533
      %v4565 = vpack.c.bf16 %v4536, %v4535
      %v4566 = vpack.c.bf16 %v4538, %v4537
      %v4567 = vpack.c.bf16 %v4540, %v4539
      %v4568 = vpack.c.bf16 %v4542, %v4541
      %v4569 = vpack.c.bf16 %v4544, %v4543
      %v4570 = vpack.c.bf16 %v4546, %v4545
      %v4571 = vpack.c.bf16 %v4548, %v4547
      %v4572 = vpack.c.bf16 %v4550, %v4549
      %v4573 = vpack.c.bf16 %v4552, %v4551
      %v4574 = vpack.c.bf16 %v4554, %v4553
      %v4575 = vpack.c.bf16 %v4556, %v4555
      %v4576 = vpack.c.bf16 %v4558, %v4557
      %v4577 = vpack.c.bf16 %v4560, %v4559
      %v4578 = vpack.c.bf16 %v4562, %v4561
      %s4579 = scalar_lea.vmem %s3, 512
      %v4580 = vld [vmem:[%s4579] sm:$0xf]
      %v4581 = vld [vmem:[%s4579 + $0x4] sm:$0xf]
      %v4582 = vld [vmem:[%s4579 + $0x8] sm:$0xf]
      %v4583 = vld [vmem:[%s4579 + $0xc] sm:$0xf]
      %v4584 = vld [vmem:[%s4579 + $0x10] sm:$0xf]
      %v4585 = vld [vmem:[%s4579 + $0x14] sm:$0xf]
      %v4586 = vld [vmem:[%s4579 + $0x18] sm:$0xf]
      %v4587 = vld [vmem:[%s4579 + $0x1c] sm:$0xf]
      %v4588 = vld [vmem:[%s4579 + $0x20] sm:$0xf]
      %v4589 = vld [vmem:[%s4579 + $0x24] sm:$0xf]
      %v4590 = vld [vmem:[%s4579 + $0x28] sm:$0xf]
      %v4591 = vld [vmem:[%s4579 + $0x2c] sm:$0xf]
      %v4592 = vld [vmem:[%s4579 + $0x30] sm:$0xf]
      %v4593 = vld [vmem:[%s4579 + $0x34] sm:$0xf]
      %v4594 = vld [vmem:[%s4579 + $0x38] sm:$0xf]
      %v4595 = vld [vmem:[%s4579 + $0x3c] sm:$0xf]
      %v4612 = vunpack.c.l.b16 %v4580
      %v4613 = vunpack.c.l.b16 %v4581
      %v4614 = vunpack.c.l.b16 %v4582
      %v4615 = vunpack.c.l.b16 %v4583
      %v4616 = vunpack.c.l.b16 %v4584
      %v4617 = vunpack.c.l.b16 %v4585
      %v4618 = vunpack.c.l.b16 %v4586
      %v4619 = vunpack.c.l.b16 %v4587
      %v4620 = vunpack.c.l.b16 %v4588
      %v4621 = vunpack.c.l.b16 %v4589
      %v4622 = vunpack.c.l.b16 %v4590
      %v4623 = vunpack.c.l.b16 %v4591
      %v4624 = vunpack.c.l.b16 %v4592
      %v4625 = vunpack.c.l.b16 %v4593
      %v4626 = vunpack.c.l.b16 %v4594
      %v4627 = vunpack.c.l.b16 %v4595
      %v4628 = vpack.c.b16 %v4613, %v4612
      %v4629 = vpack.c.b16 %v4615, %v4614
      %v4630 = vpack.c.b16 %v4617, %v4616
      %v4631 = vpack.c.b16 %v4619, %v4618
      %v4632 = vpack.c.b16 %v4621, %v4620
      %v4633 = vpack.c.b16 %v4623, %v4622
      %v4634 = vpack.c.b16 %v4625, %v4624
      %v4635 = vpack.c.b16 %v4627, %v4626
      %4644 = vmatprep.subr.bf16.mxu0 0
      %4645 = vmatpush1.bf16.msra.mxu0 %v4628
      %4646 = vmatprep.subr.bf16.mxu0 0
      %4647 = vmatpush1.bf16.msra.mxu0 %v4629
      %4648 = vmatprep.subr.bf16.mxu0 0
      %4649 = vmatpush1.bf16.msra.mxu0 %v4630
      %4650 = vmatprep.subr.bf16.mxu0 0
      %4651 = vmatpush1.bf16.msra.mxu0 %v4631
      %4652 = vmatprep.subr.bf16.mxu0 0
      %4653 = vmatpush1.bf16.msra.mxu0 %v4632
      %4654 = vmatprep.subr.bf16.mxu0 0
      %4655 = vmatpush1.bf16.msra.mxu0 %v4633
      %4656 = vmatprep.subr.bf16.mxu0 0
      %4657 = vmatpush1.bf16.msra.mxu0 %v4634
      %4658 = vmatprep.subr.bf16.mxu0 0
      %4659 = vmatpush1.bf16.msra.mxu0 %v4635
      %4660 = vmatprep.subr.bf16.mxu0 0
      %4661 = vmatpush1.bf16.msra.mxu0 0
      %4662 = vmatprep.subr.bf16.mxu0 0
      %4663 = vmatpush1.bf16.msra.mxu0 0
      %4664 = vmatprep.subr.bf16.mxu0 0
      %4665 = vmatpush1.bf16.msra.mxu0 0
      %4666 = vmatprep.subr.bf16.mxu0 0
      %4667 = vmatpush1.bf16.msra.mxu0 0
      %4668 = vmatprep.subr.bf16.mxu0 0
      %4669 = vmatpush1.bf16.msra.mxu0 0
      %4670 = vmatprep.subr.bf16.mxu0 0
      %4671 = vmatpush1.bf16.msra.mxu0 0
      %4672 = vmatprep.subr.bf16.mxu0 0
      %4673 = vmatpush1.bf16.msra.mxu0 0
      %4674 = vmatprep.subr.bf16.mxu0 0
      %4675 = vmatpush1.bf16.msra.mxu0 0
      %4676 = vmatprep.mubr.bf16.mxu0 0
      %4677 = vmatmul.mubr.bf16.gmra.mrb[0].mxu0 %v4563
      %v4678 = vpop.f32.mrb[0].mxu0
      %v4679 = vadd.f32 0.0, %v4678
      %v4680 = vpop.f32.mrb[0].mxu0
      %v4681 = vpop.f32.mrb[0].mxu0
      %v4682 = vadd.f32 0.0, %v4681
      %v4683 = vpop.f32.mrb[0].mxu0
      %4684 = vmatprep.mubr.bf16.mxu0 0
      %4685 = vmatmul.mubr.bf16.gmra.mrb[0].mxu0 %v4564
      %v4686 = vpop.f32.mrb[0].mxu0
      %v4687 = vadd.f32 0.0, %v4686
      %v4688 = vpop.f32.mrb[0].mxu0
      %v4689 = vpop.f32.mrb[0].mxu0
      %v4690 = vadd.f32 0.0, %v4689
      %v4691 = vpop.f32.mrb[0].mxu0
      %4692 = vmatprep.mubr.bf16.mxu0 0
      %4693 = vmatmul.mubr.bf16.gmra.mrb[0].mxu0 %v4565
      %v4694 = vpop.f32.mrb[0].mxu0
      %v4695 = vadd.f32 0.0, %v4694
      %v4696 = vpop.f32.mrb[0].mxu0
      %v4697 = vpop.f32.mrb[0].mxu0
      %v4698 = vadd.f32 0.0, %v4697
      %v4699 = vpop.f32.mrb[0].mxu0
      %4700 = vmatprep.mubr.bf16.mxu0 0
      %4701 = vmatmul.mubr.bf16.gmra.mrb[0].mxu0 %v4566
      %v4702 = vpop.f32.mrb[0].mxu0
      %v4703 = vadd.f32 0.0, %v4702
      %v4704 = vpop.f32.mrb[0].mxu0
      %v4705 = vpop.f32.mrb[0].mxu0
      %v4706 = vadd.f32 0.0, %v4705
      %v4707 = vpop.f32.mrb[0].mxu0
      %4708 = vmatprep.mubr.bf16.mxu0 0
      %4709 = vmatmul.mubr.bf16.gmra.mrb[0].mxu0 %v4567
      %v4710 = vpop.f32.mrb[0].mxu0
      %v4711 = vadd.f32 0.0, %v4710
      %v4712 = vpop.f32.mrb[0].mxu0
      %v4713 = vpop.f32.mrb[0].mxu0
      %v4714 = vadd.f32 0.0, %v4713
      %v4715 = vpop.f32.mrb[0].mxu0
      %4716 = vmatprep.mubr.bf16.mxu0 0
      %4717 = vmatmul.mubr.bf16.gmra.mrb[0].mxu0 %v4568
      %v4718 = vpop.f32.mrb[0].mxu0
      %v4719 = vadd.f32 0.0, %v4718
      %v4720 = vpop.f32.mrb[0].mxu0
      %v4721 = vpop.f32.mrb[0].mxu0
      %v4722 = vadd.f32 0.0, %v4721
      %v4723 = vpop.f32.mrb[0].mxu0
      %4724 = vmatprep.mubr.bf16.mxu0 0
      %4725 = vmatmul.mubr.bf16.gmra.mrb[0].mxu0 %v4569
      %v4726 = vpop.f32.mrb[0].mxu0
      %v4727 = vadd.f32 0.0, %v4726
      %v4728 = vpop.f32.mrb[0].mxu0
      %v4729 = vpop.f32.mrb[0].mxu0
      %v4730 = vadd.f32 0.0, %v4729
      %v4731 = vpop.f32.mrb[0].mxu0
      %4732 = vmatprep.mubr.bf16.mxu0 0
      %4733 = vmatmul.mubr.bf16.gmra.mrb[0].mxu0 %v4570
      %v4734 = vpop.f32.mrb[0].mxu0
      %v4735 = vadd.f32 0.0, %v4734
      %v4736 = vpop.f32.mrb[0].mxu0
      %v4737 = vpop.f32.mrb[0].mxu0
      %v4738 = vadd.f32 0.0, %v4737
      %v4739 = vpop.f32.mrb[0].mxu0
      %4740 = vmatprep.mubr.bf16.mxu0 0
      %4741 = vmatmul.mubr.bf16.gmra.mrb[0].mxu0 %v4571
      %v4742 = vpop.f32.mrb[0].mxu0
      %v4743 = vadd.f32 0.0, %v4742
      %v4744 = vpop.f32.mrb[0].mxu0
      %v4745 = vpop.f32.mrb[0].mxu0
      %v4746 = vadd.f32 0.0, %v4745
      %v4747 = vpop.f32.mrb[0].mxu0
      %4748 = vmatprep.mubr.bf16.mxu0 0
      %4749 = vmatmul.mubr.bf16.gmra.mrb[0].mxu0 %v4572
      %v4750 = vpop.f32.mrb[0].mxu0
      %v4751 = vadd.f32 0.0, %v4750
      %v4752 = vpop.f32.mrb[0].mxu0
      %v4753 = vpop.f32.mrb[0].mxu0
      %v4754 = vadd.f32 0.0, %v4753
      %v4755 = vpop.f32.mrb[0].mxu0
      %4756 = vmatprep.mubr.bf16.mxu0 0
      %4757 = vmatmul.mubr.bf16.gmra.mrb[0].mxu0 %v4573
      %v4758 = vpop.f32.mrb[0].mxu0
      %v4759 = vadd.f32 0.0, %v4758
      %v4760 = vpop.f32.mrb[0].mxu0
      %v4761 = vpop.f32.mrb[0].mxu0
      %v4762 = vadd.f32 0.0, %v4761
      %v4763 = vpop.f32.mrb[0].mxu0
      %4764 = vmatprep.mubr.bf16.mxu0 0
      %4765 = vmatmul.mubr.bf16.gmra.mrb[0].mxu0 %v4574
      %v4766 = vpop.f32.mrb[0].mxu0
      %v4767 = vadd.f32 0.0, %v4766
      %v4768 = vpop.f32.mrb[0].mxu0
      %v4769 = vpop.f32.mrb[0].mxu0
      %v4770 = vadd.f32 0.0, %v4769
      %v4771 = vpop.f32.mrb[0].mxu0
      %4772 = vmatprep.mubr.bf16.mxu0 0
      %4773 = vmatmul.mubr.bf16.gmra.mrb[0].mxu0 %v4575
      %v4774 = vpop.f32.mrb[0].mxu0
      %v4775 = vadd.f32 0.0, %v4774
      %v4776 = vpop.f32.mrb[0].mxu0
      %v4777 = vpop.f32.mrb[0].mxu0
      %v4778 = vadd.f32 0.0, %v4777
      %v4779 = vpop.f32.mrb[0].mxu0
      %4780 = vmatprep.mubr.bf16.mxu0 0
      %4781 = vmatmul.mubr.bf16.gmra.mrb[0].mxu0 %v4576
      %v4782 = vpop.f32.mrb[0].mxu0
      %v4783 = vadd.f32 0.0, %v4782
      %v4784 = vpop.f32.mrb[0].mxu0
      %v4785 = vpop.f32.mrb[0].mxu0
      %v4786 = vadd.f32 0.0, %v4785
      %v4787 = vpop.f32.mrb[0].mxu0
      %4788 = vmatprep.mubr.bf16.mxu0 0
      %4789 = vmatmul.mubr.bf16.gmra.mrb[0].mxu0 %v4577
      %v4790 = vpop.f32.mrb[0].mxu0
      %v4791 = vadd.f32 0.0, %v4790
      %v4792 = vpop.f32.mrb[0].mxu0
      %v4793 = vpop.f32.mrb[0].mxu0
      %v4794 = vadd.f32 0.0, %v4793
      %v4795 = vpop.f32.mrb[0].mxu0
      %4796 = vmatprep.mubr.bf16.mxu0 0
      %4797 = vmatmul.mubr.bf16.gmra.mrb[0].mxu0 %v4578
      %v4798 = vpop.f32.mrb[0].mxu0
      %v4799 = vadd.f32 0.0, %v4798
      %v4800 = vpop.f32.mrb[0].mxu0
      %v4801 = vpop.f32.mrb[0].mxu0
      %v4802 = vadd.f32 0.0, %v4801
      %v4803 = vpop.f32.mrb[0].mxu0
      %4804 = vdwg.mxu0
      %v4805 = vadd.f32 %v4306, %v4679
      %v4806 = vadd.f32 %v4307, %v4682
      %v4807 = vadd.f32 %v4308, %v4687
      %v4808 = vadd.f32 %v4309, %v4690
      %v4809 = vadd.f32 %v4310, %v4695
      %v4810 = vadd.f32 %v4311, %v4698
      %v4811 = vadd.f32 %v4312, %v4703
      %v4812 = vadd.f32 %v4313, %v4706
      %v4813 = vadd.f32 %v4314, %v4711
      %v4814 = vadd.f32 %v4315, %v4714
      %v4815 = vadd.f32 %v4316, %v4719
      %v4816 = vadd.f32 %v4317, %v4722
      %v4817 = vadd.f32 %v4318, %v4727
      %v4818 = vadd.f32 %v4319, %v4730
      %v4819 = vadd.f32 %v4320, %v4735
      %v4820 = vadd.f32 %v4321, %v4738
      %v4821 = vadd.f32 %v4322, %v4743
      %v4822 = vadd.f32 %v4323, %v4746
      %v4823 = vadd.f32 %v4324, %v4751
      %v4824 = vadd.f32 %v4325, %v4754
      %v4825 = vadd.f32 %v4326, %v4759
      %v4826 = vadd.f32 %v4327, %v4762
      %v4827 = vadd.f32 %v4328, %v4767
      %v4828 = vadd.f32 %v4329, %v4770
      %v4829 = vadd.f32 %v4330, %v4775
      %v4830 = vadd.f32 %v4331, %v4778
      %v4831 = vadd.f32 %v4332, %v4783
      %v4832 = vadd.f32 %v4333, %v4786
      %v4833 = vadd.f32 %v4334, %v4791
      %v4834 = vadd.f32 %v4335, %v4794
      %v4835 = vadd.f32 %v4336, %v4799
      %v4836 = vadd.f32 %v4337, %v4802
      %4837 = vst [vmem:[%s260] sm:$0xff] %v4805
      %4838 = vst [vmem:[%s260 + $0x8] sm:$0xff] %v4806
      %4839 = vst [vmem:[%s260 + $0x10] sm:$0xff] %v4807
      %4840 = vst [vmem:[%s260 + $0x18] sm:$0xff] %v4808
      %4841 = vst [vmem:[%s260 + $0x20] sm:$0xff] %v4809
      %4842 = vst [vmem:[%s260 + $0x28] sm:$0xff] %v4810
      %4843 = vst [vmem:[%s260 + $0x30] sm:$0xff] %v4811
      %4844 = vst [vmem:[%s260 + $0x38] sm:$0xff] %v4812
      %4845 = vst [vmem:[%s260 + $0x40] sm:$0xff] %v4813
      %4846 = vst [vmem:[%s260 + $0x48] sm:$0xff] %v4814
      %4847 = vst [vmem:[%s260 + $0x50] sm:$0xff] %v4815
      %4848 = vst [vmem:[%s260 + $0x58] sm:$0xff] %v4816
      %4849 = vst [vmem:[%s260 + $0x60] sm:$0xff] %v4817
      %4850 = vst [vmem:[%s260 + $0x68] sm:$0xff] %v4818
      %4851 = vst [vmem:[%s260 + $0x70] sm:$0xff] %v4819
      %4852 = vst [vmem:[%s260 + $0x78] sm:$0xff] %v4820
      %4853 = vst [vmem:[%s260 + $0x80] sm:$0xff] %v4821
      %4854 = vst [vmem:[%s260 + $0x88] sm:$0xff] %v4822
      %4855 = vst [vmem:[%s260 + $0x90] sm:$0xff] %v4823
      %4856 = vst [vmem:[%s260 + $0x98] sm:$0xff] %v4824
      %4857 = vst [vmem:[%s260 + $0xa0] sm:$0xff] %v4825
      %4858 = vst [vmem:[%s260 + $0xa8] sm:$0xff] %v4826
      %4859 = vst [vmem:[%s260 + $0xb0] sm:$0xff] %v4827
      %4860 = vst [vmem:[%s260 + $0xb8] sm:$0xff] %v4828
      %4861 = vst [vmem:[%s260 + $0xc0] sm:$0xff] %v4829
      %4862 = vst [vmem:[%s260 + $0xc8] sm:$0xff] %v4830
      %4863 = vst [vmem:[%s260 + $0xd0] sm:$0xff] %v4831
      %4864 = vst [vmem:[%s260 + $0xd8] sm:$0xff] %v4832
      %4865 = vst [vmem:[%s260 + $0xe0] sm:$0xff] %v4833
      %4866 = vst [vmem:[%s260 + $0xe8] sm:$0xff] %v4834
      %4867 = vst [vmem:[%s260 + $0xf0] sm:$0xff] %v4835
      %4868 = vst [vmem:[%s260 + $0xf8] sm:$0xff] %v4836
      %v4869 = vadd.f32 %v4805, %v4806
      %v4870 = vadd.f32 %v4869, %v4807
      %v4871 = vadd.f32 %v4870, %v4808
      %v4872 = vadd.f32 %v4871, %v4809
      %v4873 = vadd.f32 %v4872, %v4810
      %v4874 = vadd.f32 %v4873, %v4811
      %v4875 = vadd.f32 %v4874, %v4812
      %v4876 = vadd.f32 %v4875, %v4813
      %v4877 = vadd.f32 %v4876, %v4814
      %v4878 = vadd.f32 %v4877, %v4815
      %v4879 = vadd.f32 %v4878, %v4816
      %v4880 = vadd.f32 %v4879, %v4817
      %v4881 = vadd.f32 %v4880, %v4818
      %v4882 = vadd.f32 %v4881, %v4819
      %v4883 = vadd.f32 %v4882, %v4820
      %v4884 = vadd.f32 %v4883, %v4821
      %v4885 = vadd.f32 %v4884, %v4822
      %v4886 = vadd.f32 %v4885, %v4823
      %v4887 = vadd.f32 %v4886, %v4824
      %v4888 = vadd.f32 %v4887, %v4825
      %v4889 = vadd.f32 %v4888, %v4826
      %v4890 = vadd.f32 %v4889, %v4827
      %v4891 = vadd.f32 %v4890, %v4828
      %v4892 = vadd.f32 %v4891, %v4829
      %v4893 = vadd.f32 %v4892, %v4830
      %v4894 = vadd.f32 %v4893, %v4831
      %v4895 = vadd.f32 %v4894, %v4832
      %v4896 = vadd.f32 %v4895, %v4833
      %v4897 = vadd.f32 %v4896, %v4834
      %v4898 = vadd.f32 %v4897, %v4835
      %v4899 = vadd.f32 %v4898, %v4836
      %v4900 = vrot.slane %v4899, 4
      %v4901 = vadd.f32 %v4899, %v4900
      %v4902 = vrot.slane %v4901, 2
      %v4903 = vadd.f32 %v4901, %v4902
      %v4904 = vrot.slane %v4903, 1
      %v4905 = vadd.f32 %v4903, %v4904
      %v4906 = vmul.f32 %v4805, %v4805
      %v4907 = vmul.f32 %v4806, %v4806
      %v4908 = vmul.f32 %v4807, %v4807
      %v4909 = vmul.f32 %v4808, %v4808
      %v4910 = vmul.f32 %v4809, %v4809
      %v4911 = vmul.f32 %v4810, %v4810
      %v4912 = vmul.f32 %v4811, %v4811
      %v4913 = vmul.f32 %v4812, %v4812
      %v4914 = vmul.f32 %v4813, %v4813
      %v4915 = vmul.f32 %v4814, %v4814
      %v4916 = vmul.f32 %v4815, %v4815
      %v4917 = vmul.f32 %v4816, %v4816
      %v4918 = vmul.f32 %v4817, %v4817
      %v4919 = vmul.f32 %v4818, %v4818
      %v4920 = vmul.f32 %v4819, %v4819
      %v4921 = vmul.f32 %v4820, %v4820
      %v4922 = vmul.f32 %v4821, %v4821
      %v4923 = vmul.f32 %v4822, %v4822
      %v4924 = vmul.f32 %v4823, %v4823
      %v4925 = vmul.f32 %v4824, %v4824
      %v4926 = vmul.f32 %v4825, %v4825
      %v4927 = vmul.f32 %v4826, %v4826
      %v4928 = vmul.f32 %v4827, %v4827
      %v4929 = vmul.f32 %v4828, %v4828
      %v4930 = vmul.f32 %v4829, %v4829
      %v4931 = vmul.f32 %v4830, %v4830
      %v4932 = vmul.f32 %v4831, %v4831
      %v4933 = vmul.f32 %v4832, %v4832
      %v4934 = vmul.f32 %v4833, %v4833
      %v4935 = vmul.f32 %v4834, %v4834
      %v4936 = vmul.f32 %v4835, %v4835
      %v4937 = vmul.f32 %v4836, %v4836
      %v4938 = vadd.f32 %v4906, %v4907
      %v4939 = vadd.f32 %v4938, %v4908
      %v4940 = vadd.f32 %v4939, %v4909
      %v4941 = vadd.f32 %v4940, %v4910
      %v4942 = vadd.f32 %v4941, %v4911
      %v4943 = vadd.f32 %v4942, %v4912
      %v4944 = vadd.f32 %v4943, %v4913
      %v4945 = vadd.f32 %v4944, %v4914
      %v4946 = vadd.f32 %v4945, %v4915
      %v4947 = vadd.f32 %v4946, %v4916
      %v4948 = vadd.f32 %v4947, %v4917
      %v4949 = vadd.f32 %v4948, %v4918
      %v4950 = vadd.f32 %v4949, %v4919
      %v4951 = vadd.f32 %v4950, %v4920
      %v4952 = vadd.f32 %v4951, %v4921
      %v4953 = vadd.f32 %v4952, %v4922
      %v4954 = vadd.f32 %v4953, %v4923
      %v4955 = vadd.f32 %v4954, %v4924
      %v4956 = vadd.f32 %v4955, %v4925
      %v4957 = vadd.f32 %v4956, %v4926
      %v4958 = vadd.f32 %v4957, %v4927
      %v4959 = vadd.f32 %v4958, %v4928
      %v4960 = vadd.f32 %v4959, %v4929
      %v4961 = vadd.f32 %v4960, %v4930
      %v4962 = vadd.f32 %v4961, %v4931
      %v4963 = vadd.f32 %v4962, %v4932
      %v4964 = vadd.f32 %v4963, %v4933
      %v4965 = vadd.f32 %v4964, %v4934
      %v4966 = vadd.f32 %v4965, %v4935
      %v4967 = vadd.f32 %v4966, %v4936
      %v4968 = vadd.f32 %v4967, %v4937
      %v4969 = vrot.slane %v4968, 4
      %v4970 = vadd.f32 %v4968, %v4969
      %v4971 = vrot.slane %v4970, 2
      %v4972 = vadd.f32 %v4970, %v4971
      %v4973 = vrot.slane %v4972, 1
      %v4974 = vadd.f32 %v4972, %v4973
      %v4977 = vcombine.low %v4905, %v4974
      %v4979 = vunpack.c.l.s4 1966171168
      %v4980 = vunpack.c.0.s8 %v4979
      %v4981 = vlaneseq
      %v4982 = vshrl.u32 %v4981, 7
      %v4983 = vsub.s32 %v4980, %v4982
      %v4984 = vrot.slane %v4977, %v4983
      %v4986 = vunpack.c.l.s4 1966171168
      %v4987 = vunpack.c.0.s8 %v4986
      %v4988 = vlaneseq
      %v4989 = vshrl.u32 %v4988, 7
      %v4990 = vsub.s32 %v4987, %v4989
      %v4991 = vrot.slane %v4984, %v4990
      %v4993 = vlaneseq
      %vm4994 = vcmp.ge.s32.totalorder %v4993, 0
      %vm4995 = vcmp.lt.s32.totalorder %v4993, 256
      %vm4996 = vmand %vm4994, %vm4995
      %4997 = vst.msk [vmem:[%s265] sm:$0x3] %vm4996, %v4991
      %s4998 = smul.u32 32, %s18
      %p4999 = scmp.lt.s32.totalorder %s4998, 63
      %s5000 = scalar_select %p4999, %s4998, 63
      %s5001 = smul.addr %s5000, 8
      %s5002 = scalar_lea.vmem %s5, %s5001
      %p5003 = scmp.lt.s32.totalorder %s18, 1
      %s5004 = scalar_select %p5003, %s18, 1
      %s5005 = smul.addr %s5004, 2
      %s5006 = scalar_lea.vmem %s6, %s5005
      // Predicated region
      $region41: #{bottleneck_forward.6} parent=39 // pred_check
        %p5007 = pneg %p146
      $region42: #{bottleneck_forward.6} parent=39 // pred_check_branch
        %5009 = sbr.rel (%p5007) target = $region44
      $region43: #{bottleneck_forward.6} parent=39 // pred_region
        %s5010 = smul.u32 32, %s18
      $region44: #{bottleneck_forward.6} parent=39 // pred_fallthru
        _
      // Predicated region
      $region45: #{bottleneck_forward.6} parent=39 // pred_check
        %p5011 = pneg %p172
      $region46: #{bottleneck_forward.6} parent=39 // pred_check_branch
        %5013 = sbr.rel (%p5011) target = $region48
      $region47: #{bottleneck_forward.6} parent=39 // pred_region
        _
      $region48: #{bottleneck_forward.6} parent=39 // pred_fallthru
        _
    $region40: #{bottleneck_forward.6} parent=5 // pred_fallthru
      _
    %p5014 = scmp.le.s32.totalorder 2, %s13
    // Predicated region
    $region49: #{bottleneck_forward.6} parent=5 // pred_check
      %p5015 = pneg %p5014
    $region50: #{bottleneck_forward.6} parent=5 // pred_check_branch
      %5017 = sbr.rel (%p5015) target = $region52
    $region51: #{bottleneck_forward.6} parent=5 // pred_region
      %s5018 = ssub.s32 %s13, 2
      // Predicated region
      $region53: #{bottleneck_forward.6} parent=51 // pred_check
        %p5019 = pneg %p152
      $region54: #{bottleneck_forward.6} parent=51 // pred_check_branch
        %5021 = sbr.rel (%p5019) target = $region56
      $region55: #{bottleneck_forward.6} parent=51 // pred_region
        %s5022 = smul.u32 32, %s19
        %p5023 = scmp.lt.s32.totalorder %s5022, 63
        %s5024 = scalar_select %p5023, %s5022, 63
        %s5025 = smul.addr %s5024, 8
        %s5026 = scalar_lea.vmem %s5, %s5025
      $region56: #{bottleneck_forward.6} parent=51 // pred_fallthru
        _
      // Predicated region
      $region57: #{bottleneck_forward.6} parent=51 // pred_check
        %p5027 = pneg %p178
      $region58: #{bottleneck_forward.6} parent=51 // pred_check_branch
        %5029 = sbr.rel (%p5027) target = $region60
      $region59: #{bottleneck_forward.6} parent=51 // pred_region
        %p5030 = scmp.lt.s32.totalorder %s19, 1
        %s5031 = scalar_select %p5030, %s19, 1
        %s5032 = smul.addr %s5031, 2
        %s5033 = scalar_lea.vmem %s6, %s5032
      $region60: #{bottleneck_forward.6} parent=51 // pred_fallthru
        _
    $region52: #{bottleneck_forward.6} parent=5 // pred_fallthru
      _
  $region6: #{bottleneck_forward.6} parent=0 // loop_footer
    %s17 = sadd.s32 1, %s13
  $region7: #{bottleneck_forward.6} parent=0 // loop_footer_branch
    %12 = sbr.rel target = $region3
  $region8: #{bottleneck_forward.6} parent=0 // loop_exit
    _

</llo_original>
